<compile_context>
chip_gen: v7x
topology: tpu7x:2x2x1
jax: 0.10.0
libtpu: 0.0.40
codegen_flags: <defaults>
</compile_context>

<pallas_src>
import jax
import jax.numpy as jnp
from jax.experimental import pallas as pl
from jax.experimental.pallas import tpu as pltpu

EPS = 1e-5     # nn.BatchNorm2d default eps
TM = 512       # rows per M-tile (512-1024 reaches ~85% of HBM roofline)


def _pick_tm(m, cap=TM):
    """Largest power-of-two tile <= cap that divides m (keeps stats tiles exact)."""
    for t in (1024, 512, 256, 128, 64, 32, 16, 8):
        if t <= cap and t <= m and m % t == 0:
            return t
    return m


def _spec(shape, index_map, mode=None):
    """BlockSpec, optionally with deeper multi-buffering for streamed inputs."""
    if mode is None:
        return pl.BlockSpec(shape, index_map)
    return pl.BlockSpec(shape, index_map, pipeline_mode=mode)


# ---------------------------------------------------------------------------
# Fused 1x1 stem (branches 1-3): one (M,K)@(K,Cstem) bf16 MXU matmul.
# Emits three separate branch pre-activations + per-tile BN {sum, sum^2}.
# ---------------------------------------------------------------------------
def stem_matmul_1x1(x2d, w, b, c_splits, tm):
    M, K = x2d.shape
    Cstem = w.shape[1]
    c1, c2, c3 = c_splits
    assert c1 + c2 + c3 == Cstem and M % tm == 0
    n_tiles = M // tm
    mode = pl.Buffered(3) if n_tiles >= 4 else None

    def kernel(x_ref, w_ref, b_ref, o1_ref, o2_ref, o3_ref, st_ref):
        y = jnp.dot(x_ref[...].astype(jnp.bfloat16), w_ref[...],
                    preferred_element_type=jnp.float32) + b_ref[...]
        o1_ref[...] = y[:, :c1]
        o2_ref[...] = y[:, c1:c1 + c2]
        o3_ref[...] = y[:, c1 + c2:]
        st_ref[0] = jnp.concatenate(
            [jnp.sum(y, axis=0, keepdims=True),
             jnp.sum(y * y, axis=0, keepdims=True)], axis=0)

    return pl.pallas_call(
        kernel,
        out_shape=(
            jax.ShapeDtypeStruct((M, c1), jnp.float32),
            jax.ShapeDtypeStruct((M, c2), jnp.float32),
            jax.ShapeDtypeStruct((M, c3), jnp.float32),
            jax.ShapeDtypeStruct((n_tiles, 2, Cstem), jnp.float32),
        ),
        grid=(n_tiles,),
        in_specs=[
            _spec((tm, K), lambda i: (i, 0), mode),        # streamed activations
            pl.BlockSpec((K, Cstem), lambda i: (0, 0)),    # resident bf16 weight
            pl.BlockSpec((1, Cstem), lambda i: (0, 0)),    # resident bias
        ],
        out_specs=(
            pl.BlockSpec((tm, c1), lambda i: (i, 0)),
            pl.BlockSpec((tm, c2), lambda i: (i, 0)),
            pl.BlockSpec((tm, c3), lambda i: (i, 0)),
            pl.BlockSpec((1, 2, Cstem), lambda i: (i, 0, 0)),
        ),
        compiler_params=pltpu.CompilerParams(dimension_semantics=("parallel",)),
    )(x2d, w.astype(jnp.bfloat16), b.reshape(1, Cstem))


# ---------------------------------------------------------------------------
# 3x3 conv (pad=1, stride=1) with the INPUT's BN+ReLU fused in-kernel.
#   - input is the previous layer's pre-activation (unpadded f32 NHWC); the
#     zero padding of the activation is built inside the kernel (no XLA pad,
#     no mask input, no extra HBM pass).
#   - 9 shifted taps packed along K -> single bf16 MXU matmul.
#   - emits per-image BN {sum, sum^2} for the following BatchNorm.
# ---------------------------------------------------------------------------
def conv3x3_bnrelu_in(x_pre, in_scale, in_shift, w4, b):
    N, H, W, Cin = x_pre.shape
    Cout = w4.shape[-1]
    wk = w4.reshape(9 * Cin, Cout).astype(jnp.bfloat16)

    def kernel(x_ref, s_ref, t_ref, w_ref, b_ref, o_ref, st_ref):
        s = s_ref[...].reshape(1, 1, Cin)
        t = t_ref[...].reshape(1, 1, Cin)
        a = jnp.maximum(x_ref[0] * s + t, 0.0).astype(jnp.bfloat16)    # (H, W, Cin)
        zr = jnp.zeros((1, W, Cin), jnp.bfloat16)
        zc = jnp.zeros((H + 2, 1, Cin), jnp.bfloat16)
        ap = jnp.concatenate([zc, jnp.concatenate([zr, a, zr], axis=0), zc], axis=1)
        taps = [ap[dy:dy + H, dx:dx + W, :].reshape(H * W, Cin)
                for dy in range(3) for dx in range(3)]
        patches = jnp.concatenate(taps, axis=-1)                        # (H*W, 9*Cin)
        y = jnp.dot(patches, w_ref[...],
                    preferred_element_type=jnp.float32) + b_ref[...]
        o_ref[0] = y
        st_ref[0] = jnp.concatenate(
            [jnp.sum(y, axis=0, keepdims=True),
             jnp.sum(y * y, axis=0, keepdims=True)], axis=0)

    # TODO(synk): add halo row-tiling (grid=(N, H//TH)) for large H so the live
    # block + accumulator fit vregs / v7x's 64 MiB VMEM; one image per step is
    # fine at these toy sizes.
    return pl.pallas_call(
        kernel,
        out_shape=(
            jax.ShapeDtypeStruct((N, H * W, Cout), jnp.float32),
            jax.ShapeDtypeStruct((N, 2, Cout), jnp.float32),
        ),
        grid=(N,),
        in_specs=[
            pl.BlockSpec((1, H, W, Cin), lambda n: (n, 0, 0, 0)),
            pl.BlockSpec((1, Cin), lambda n: (0, 0)),
            pl.BlockSpec((1, Cin), lambda n: (0, 0)),
            pl.BlockSpec((9 * Cin, Cout), lambda n: (0, 0)),            # resident
            pl.BlockSpec((1, Cout), lambda n: (0, 0)),                  # resident
        ],
        out_specs=(
            pl.BlockSpec((1, H * W, Cout), lambda n: (n, 0, 0)),
            pl.BlockSpec((1, 2, Cout), lambda n: (n, 0, 0)),
        ),
        compiler_params=pltpu.CompilerParams(dimension_semantics=("parallel",)),
    )(x_pre, in_scale, in_shift, wk, b.reshape(1, Cout))


# ---------------------------------------------------------------------------
# Fused maxpool(3x3, s=1, p=1) + 1x1 conv.  Pool is computed in-register on a
# -inf padded copy built inside the kernel (no XLA pad, no pooled tensor in
# HBM) and fed straight to the MXU.  Also emits BN {sum, sum^2}.
# ---------------------------------------------------------------------------
def maxpool3x3_conv1x1(x_nhwc, w, b):
    N, H, W, C = x_nhwc.shape
    Cout = w.shape[1]
    neg = float(jnp.finfo(jnp.float32).min)

    def kernel(x_ref, w_ref, b_ref, o_ref, st_ref):
        x = x_ref[0]                                                    # (H, W, C)
        nr = jnp.full((1, W, C), neg, jnp.float32)
        nc = jnp.full((H + 2, 1, C), neg, jnp.float32)
        p = jnp.concatenate([nc, jnp.concatenate([nr, x, nr], axis=0), nc], axis=1)
        rmax = jnp.maximum(jnp.maximum(p[:, 0:W, :], p[:, 1:W + 1, :]),
                           p[:, 2:W + 2, :])                            # (H+2, W, C)
        pooled = jnp.maximum(jnp.maximum(rmax[0:H], rmax[1:H + 1]),
                             rmax[2:H + 2])                             # (H, W, C)
        y = jnp.dot(pooled.reshape(H * W, C).astype(jnp.bfloat16), w_ref[...],
                    preferred_element_type=jnp.float32) + b_ref[...]
        o_ref[0] = y
        st_ref[0] = jnp.concatenate(
            [jnp.sum(y, axis=0, keepdims=True),
             jnp.sum(y * y, axis=0, keepdims=True)], axis=0)

    return pl.pallas_call(
        kernel,
        out_shape=(
            jax.ShapeDtypeStruct((N, H * W, Cout), jnp.float32),
            jax.ShapeDtypeStruct((N, 2, Cout), jnp.float32),
        ),
        grid=(N,),
        in_specs=[
            pl.BlockSpec((1, H, W, C), lambda n: (n, 0, 0, 0)),
            pl.BlockSpec((C, Cout), lambda n: (0, 0)),                  # resident
            pl.BlockSpec((1, Cout), lambda n: (0, 0)),                  # resident
        ],
        out_specs=(
            pl.BlockSpec((1, H * W, Cout), lambda n: (n, 0, 0)),
            pl.BlockSpec((1, 2, Cout), lambda n: (n, 0, 0)),
        ),
        compiler_params=pltpu.CompilerParams(dimension_semantics=("parallel",)),
    )(x_nhwc, w.astype(jnp.bfloat16), b.reshape(1, Cout))


# ---------------------------------------------------------------------------
# Final BN+ReLU of all four branches, written directly into the channel-
# concatenated (M, Ctot) slab with static channel-slice stores.
# ---------------------------------------------------------------------------
def bn_relu_concat(ys, scales, shifts, tm):
    M = ys[0].shape[0]
    cs = [int(y.shape[1]) for y in ys]
    Ctot = sum(cs)
    assert M % tm == 0
    n_tiles = M // tm
    mode = pl.Buffered(3) if n_tiles >= 4 else None
    nb = len(cs)

    def kernel(*refs):
        y_refs = refs[:nb]
        s_refs = refs[nb:2 * nb]
        t_refs = refs[2 * nb:3 * nb]
        o_ref = refs[3 * nb]
        off = 0
        for y, s, t, c in zip(y_refs, s_refs, t_refs, cs):
            o_ref[:, off:off + c] = jnp.maximum(y[...] * s[...] + t[...], 0.0)
            off += c

    # TODO(synk): pad per-branch Cout (and Ctot) to multiples of 128 for
    # lane-dense stores; real Inception configs are wide enough already.
    in_specs = ([_spec((tm, c), lambda i: (i, 0), mode) for c in cs]
                + [pl.BlockSpec((1, c), lambda i: (0, 0)) for c in cs] * 2)
    return pl.pallas_call(
        kernel,
        out_shape=jax.ShapeDtypeStruct((M, Ctot), jnp.float32),
        grid=(n_tiles,),
        in_specs=in_specs,
        out_specs=pl.BlockSpec((tm, Ctot), lambda i: (i, 0)),
        compiler_params=pltpu.CompilerParams(dimension_semantics=("parallel",)),
    )(*ys, *scales, *shifts)


# ---------------------------------------------------------------------------
# BatchNorm finalize: fold the kernel-produced per-tile {sum, sum^2} into
# per-channel scale/shift (training-mode biased variance). Tiny XLA op.
# Per-tile partials keep f32 cancellation benign at these sizes; use a
# Welford-style combine for very large M*C.
# ---------------------------------------------------------------------------
def bn_finalize(stats, count, gamma, beta):
    s = jnp.sum(stats[:, 0, :], axis=0)
    ss = jnp.sum(stats[:, 1, :], axis=0)
    mean = s / count
    var = jnp.maximum(ss / count - mean * mean, 0.0)
    scale = gamma * jax.lax.rsqrt(var + EPS)
    shift = beta - mean * scale
    return scale.reshape(1, -1), shift.reshape(1, -1)


# ---------------------------------------------------------------------------
# Parameter init (deterministic, synthetic)
# ---------------------------------------------------------------------------
def init_inception_params(key, in_planes, n1x1, n3x3red, n3x3, n5x5red, n5x5,
                          pool_planes):
    def conv_bn(k, kh, kw, cin, cout):
        k1, k2, k3, k4 = jax.random.split(k, 4)
        w4 = 0.1 * jax.random.normal(k1, (kh, kw, cin, cout), jnp.float32)
        b = 0.05 * jax.random.normal(k2, (cout,), jnp.float32)
        gamma = 1.0 + 0.1 * jax.random.normal(k3, (cout,), jnp.float32)
        beta = 0.05 * jax.random.normal(k4, (cout,), jnp.float32)
        return dict(w4=w4, b=b, gamma=gamma, beta=beta)

    ks = jax.random.split(key, 7)
    return dict(
        b1_1=conv_bn(ks[0], 1, 1, in_planes, n1x1),
        b2_1=conv_bn(ks[1], 1, 1, in_planes, n3x3red),
        b2_2=conv_bn(ks[2], 3, 3, n3x3red, n3x3),
        b3_1=conv_bn(ks[3], 1, 1, in_planes, n5x5red),
        b3_2=conv_bn(ks[4], 3, 3, n5x5red, n5x5),
        b3_3=conv_bn(ks[5], 3, 3, n5x5, n5x5),
        b4_1=conv_bn(ks[6], 1, 1, in_planes, pool_planes),
    )


# ---------------------------------------------------------------------------
# Inception forward (Pallas path)
# ---------------------------------------------------------------------------
def inception_forward(params, x_nchw, tm_cap=TM):
    N, Cin, H, W = x_nchw.shape
    M = N * H * W
    tm = _pick_tm(M, tm_cap)

    # TODO(synk): keep the surrounding model NHWC end-to-end to drop these two
    # full-tensor transposes (pure HBM traffic).
    x = jnp.transpose(x_nchw, (0, 2, 3, 1))            # NHWC
    x2d = x.reshape(M, Cin)

    p11, p21, p31 = params["b1_1"], params["b2_1"], params["b3_1"]
    p22, p32, p33, p41 = params["b2_2"], params["b3_2"], params["b3_3"], params["b4_1"]

    def w1x1(p):
        return p["w4"].reshape(p["w4"].shape[-2], p["w4"].shape[-1])

    c1 = p11["w4"].shape[-1]
    c2r = p21["w4"].shape[-1]
    c3r = p31["w4"].shape[-1]

    # ---- fused 1x1 stem (branches 1-3): x read once, 3 outputs + BN stats
    w_stem = jnp.concatenate([w1x1(p11), w1x1(p21), w1x1(p31)], axis=1)
    b_stem = jnp.concatenate([p11["b"], p21["b"], p31["b"]], axis=0)
    y1pre, y2r, y3r, st_stem = stem_matmul_1x1(x2d, w_stem, b_stem,
                                               (c1, c2r, c3r), tm)
    s_stem, t_stem = bn_finalize(
        st_stem, M,
        jnp.concatenate([p11["gamma"], p21["gamma"], p31["gamma"]]),
        jnp.concatenate([p11["beta"], p21["beta"], p31["beta"]]))
    s1, t1 = s_stem[:, :c1], t_stem[:, :c1]
    s2r, t2r = s_stem[:, c1:c1 + c2r], t_stem[:, c1:c1 + c2r]
    s3r, t3r = s_stem[:, c1 + c2r:], t_stem[:, c1 + c2r:]

    # ---- branch 2: input BN+ReLU fused into the 3x3 conv
    y2pre, st2 = conv3x3_bnrelu_in(y2r.reshape(N, H, W, c2r), s2r, t2r,
                                   p22["w4"], p22["b"])
    s2, t2 = bn_finalize(st2, M, p22["gamma"], p22["beta"])

    # ---- branch 3: two chained 3x3 convs
    u3, stu = conv3x3_bnrelu_in(y3r.reshape(N, H, W, c3r), s3r, t3r,
                                p32["w4"], p32["b"])
    su, tu = bn_finalize(stu, M, p32["gamma"], p32["beta"])
    c5 = p32["w4"].shape[-1]
    y3pre, st3 = conv3x3_bnrelu_in(u3.reshape(N, H, W, c5), su, tu,
                                   p33["w4"], p33["b"])
    s3, t3 = bn_finalize(st3, M, p33["gamma"], p33["beta"])

    # ---- branch 4: maxpool + 1x1 conv fused in one kernel
    y4pre, st4 = maxpool3x3_conv1x1(x, w1x1(p41), p41["b"])
    s4, t4 = bn_finalize(st4, M, p41["gamma"], p41["beta"])

    # ---- final fused BN+ReLU + channel concat (writes the concat slab directly)
    out2d = bn_relu_concat(
        [y1pre, y2pre.reshape(M, -1), y3pre.reshape(M, -1), y4pre.reshape(M, -1)],
        [s1, s2, s3, s4], [t1, t2, t3, t4], tm)
    Ctot = out2d.shape[-1]
    return jnp.transpose(out2d.reshape(N, H, W, Ctot), (0, 3, 1, 2))   # NCHW


# ---------------------------------------------------------------------------
# Pure-JAX reference (bf16 conv operands / f32 accumulate, matching the kernels)
# ---------------------------------------------------------------------------
def _ref_conv_bn_relu(x_nhwc, w_hwio, b, gamma, beta):
    y = jax.lax.conv_general_dilated(
        x_nhwc.astype(jnp.bfloat16), w_hwio.astype(jnp.bfloat16),
        window_strides=(1, 1), padding="SAME",
        dimension_numbers=("NHWC", "HWIO", "NHWC"),
        preferred_element_type=jnp.float32,
        precision=jax.lax.Precision.HIGHEST) + b
    mean = jnp.mean(y, axis=(0, 1, 2), keepdims=True)
    var = jnp.mean(jnp.square(y - mean), axis=(0, 1, 2), keepdims=True)
    y = (y - mean) * jax.lax.rsqrt(var + EPS) * gamma + beta
    return jnp.maximum(y, 0.0)


def ref_inception_forward(params, x_nchw):
    x = jnp.transpose(x_nchw, (0, 2, 3, 1))

    def cbr(p, t):
        return _ref_conv_bn_relu(t, p["w4"], p["b"], p["gamma"], p["beta"])

    y1 = cbr(params["b1_1"], x)
    y2 = cbr(params["b2_2"], cbr(params["b2_1"], x))
    y3 = cbr(params["b3_3"], cbr(params["b3_2"], cbr(params["b3_1"], x)))
    pooled = jax.lax.reduce_window(x, -jnp.inf, jax.lax.max,
                                   (1, 3, 3, 1), (1, 1, 1, 1), "SAME")
    y4 = cbr(params["b4_1"], pooled)
    y = jnp.concatenate([y1, y2, y3, y4], axis=-1)
    return jnp.transpose(y, (0, 3, 1, 2))


# ---------------------------------------------------------------------------
if __name__ == "__main__":
    key = jax.random.PRNGKey(0)
    kx, kp = jax.random.split(key)

    # Small Inception config: in=4, n1x1=8, n3x3red=6, n3x3=8, n5x5red=4, n5x5=8, pool=8
    in_planes, n1x1, n3x3red, n3x3, n5x5red, n5x5, pool_planes = 4, 8, 6, 8, 4, 8, 8
    N, H, W = 2, 16, 16

    x = jax.random.normal(kx, (N, in_planes, H, W), jnp.float32)
    params = init_inception_params(kp, in_planes, n1x1, n3x3red, n3x3,
                                   n5x5red, n5x5, pool_planes)

    out = jax.jit(inception_forward)(params, x)
    out = jax.block_until_ready(out)

    assert out.shape == (N, n1x1 + n3x3 + n5x5 + pool_planes, H, W), out.shape

    ref = ref_inception_forward(params, x)
    max_err = float(jnp.max(jnp.abs(out - ref)))
    # bf16 MXU operands vs bf16-operand reference: tolerance loosened accordingly.
    assert jnp.allclose(out, ref, atol=3e-2, rtol=3e-2), f"max_err={max_err}"

    print("KERNEL_OK")
</pallas_src>

<mosaic_0001>
module attributes {stable_mosaic.version = 11 : i64} {
  func.func @kernel(%arg0: i32, %arg1: memref<512x4xf32, #tpu.memory_space<vmem>>, %arg2: memref<4x18xbf16, #tpu.memory_space<vmem>>, %arg3: memref<1x18xf32, #tpu.memory_space<vmem>>, %arg4: memref<512x8xf32, #tpu.memory_space<vmem>>, %arg5: memref<512x6xf32, #tpu.memory_space<vmem>>, %arg6: memref<512x4xf32, #tpu.memory_space<vmem>>, %arg7: memref<1x2x18xf32, #tpu.memory_space<vmem>>) attributes {dimension_semantics = [#tpu.dimension_semantics<parallel>], iteration_bounds = array<i64: 1>, scalar_prefetch = 0 : i64, scratch_operands = 0 : i64, tpu.core_type = #tpu.core_type<tc>, window_params = [{transform_indices = @transform_0, window_bounds = array<i64: 512, 4>}, {pipeline_mode = #tpu.pipeline_mode<synchronous>, transform_indices = @transform_1, window_bounds = array<i64: 4, 18>}, {pipeline_mode = #tpu.pipeline_mode<synchronous>, transform_indices = @transform_2, window_bounds = array<i64: 1, 18>}, {transform_indices = @transform_3, window_bounds = array<i64: 512, 8>}, {transform_indices = @transform_4, window_bounds = array<i64: 512, 6>}, {transform_indices = @transform_5, window_bounds = array<i64: 512, 4>}, {transform_indices = @transform_6, window_bounds = array<i64: 1, 2, 18>}]} {
    %c0 = arith.constant 0 : index
    %c0_0 = arith.constant 0 : index
    %0 = vector.load %arg1[%c0, %c0_0] : memref<512x4xf32, #tpu.memory_space<vmem>>, vector<512x4xf32>
    %1 = arith.truncf %0 : vector<512x4xf32> to vector<512x4xbf16>
    %c0_1 = arith.constant 0 : index
    %c0_2 = arith.constant 0 : index
    %2 = vector.load %arg2[%c0_1, %c0_2] : memref<4x18xbf16, #tpu.memory_space<vmem>>, vector<4x18xbf16>
    %cst = arith.constant dense<0.000000e+00> : vector<512x18xf32>
    %3 = tpu.matmul %1, %2, %cst {dimension_numbers = #tpu.dot_dimension_numbers<[1], [0], [0], [1], [0, 0, 1, 1], [], []>} : vector<512x4xbf16>, vector<4x18xbf16>, vector<512x18xf32> -> vector<512x18xf32>
    %c0_3 = arith.constant 0 : index
    %c0_4 = arith.constant 0 : index
    %4 = vector.load %arg3[%c0_3, %c0_4] : memref<1x18xf32, #tpu.memory_space<vmem>>, vector<1x18xf32>
    %5 = vector.broadcast %4 : vector<1x18xf32> to vector<512x18xf32>
    %6 = arith.addf %3, %5 : vector<512x18xf32>
    %7 = vector.extract_strided_slice %6 {offsets = [0, 0], sizes = [512, 8], strides = [1, 1]} : vector<512x18xf32> to vector<512x8xf32>
    %c0_5 = arith.constant 0 : index
    %c0_6 = arith.constant 0 : index
    %8 = vector.load %arg4[%c0_5, %c0_6] : memref<512x8xf32, #tpu.memory_space<vmem>>, vector<512x8xf32>
    tpu.vector_store %arg4[%c0_5, %c0_6], %7 {strides = array<i32>} : memref<512x8xf32, #tpu.memory_space<vmem>>, vector<512x8xf32>,
    %9 = vector.extract_strided_slice %6 {offsets = [0, 8], sizes = [512, 6], strides = [1, 1]} : vector<512x18xf32> to vector<512x6xf32>
    %c0_7 = arith.constant 0 : index
    %c0_8 = arith.constant 0 : index
    %10 = vector.load %arg5[%c0_7, %c0_8] : memref<512x6xf32, #tpu.memory_space<vmem>>, vector<512x6xf32>
    tpu.vector_store %arg5[%c0_7, %c0_8], %9 {strides = array<i32>} : memref<512x6xf32, #tpu.memory_space<vmem>>, vector<512x6xf32>,
    %11 = vector.extract_strided_slice %6 {offsets = [0, 14], sizes = [512, 4], strides = [1, 1]} : vector<512x18xf32> to vector<512x4xf32>
    %c0_9 = arith.constant 0 : index
    %c0_10 = arith.constant 0 : index
    %12 = vector.load %arg6[%c0_9, %c0_10] : memref<512x4xf32, #tpu.memory_space<vmem>>, vector<512x4xf32>
    tpu.vector_store %arg6[%c0_9, %c0_10], %11 {strides = array<i32>} : memref<512x4xf32, #tpu.memory_space<vmem>>, vector<512x4xf32>,
    %cst_11 = arith.constant dense<0.000000e+00> : vector<18xf32>
    %13 = vector.multi_reduction <add>, %6, %cst_11 [0] : vector<512x18xf32> to vector<18xf32>
    %14 = vector.shape_cast %13 : vector<18xf32> to vector<1x18xf32>
    %15 = arith.mulf %6, %6 : vector<512x18xf32>
    %cst_12 = arith.constant dense<0.000000e+00> : vector<18xf32>
    %16 = vector.multi_reduction <add>, %15, %cst_12 [0] : vector<512x18xf32> to vector<18xf32>
    %17 = vector.shape_cast %16 : vector<18xf32> to vector<1x18xf32>
    %18 = tpu.concatenate %14, %17 in 0 : vector<1x18xf32>, vector<1x18xf32> -> vector<2x18xf32>
    %c0_13 = arith.constant 0 : index
    %c0_14 = arith.constant 0 : index
    %c0_15 = arith.constant 0 : index
    %19 = vector.load %arg7[%c0_13, %c0_14, %c0_15] : memref<1x2x18xf32, #tpu.memory_space<vmem>>, vector<1x2x18xf32>
    %20 = vector.shape_cast %19 : vector<1x2x18xf32> to vector<2x18xf32>
    %21 = vector.shape_cast %18 : vector<2x18xf32> to vector<1x2x18xf32>
    tpu.vector_store %arg7[%c0_13, %c0_14, %c0_15], %21 {strides = array<i32>} : memref<1x2x18xf32, #tpu.memory_space<vmem>>, vector<1x2x18xf32>,
    return
  }
  func.func @transform_0(%arg0: i32) -> (i32, i32) {
    %c0_i32 = arith.constant 0 : i32
    %c0_i32_0 = arith.constant 0 : i32
    return %arg0, %c0_i32 : i32, i32
  }
  func.func @transform_1(%arg0: i32) -> (i32, i32) {
    %c0_i32 = arith.constant 0 : i32
    %c0_i32_0 = arith.constant 0 : i32
    %c0_i32_1 = arith.constant 0 : i32
    return %c0_i32, %c0_i32_0 : i32, i32
  }
  func.func @transform_2(%arg0: i32) -> (i32, i32) {
    %c0_i32 = arith.constant 0 : i32
    %c0_i32_0 = arith.constant 0 : i32
    %c0_i32_1 = arith.constant 0 : i32
    return %c0_i32, %c0_i32_0 : i32, i32
  }
  func.func @transform_3(%arg0: i32) -> (i32, i32) {
    %c0_i32 = arith.constant 0 : i32
    %c0_i32_0 = arith.constant 0 : i32
    return %arg0, %c0_i32 : i32, i32
  }
  func.func @transform_4(%arg0: i32) -> (i32, i32) {
    %c0_i32 = arith.constant 0 : i32
    %c0_i32_0 = arith.constant 0 : i32
    return %arg0, %c0_i32 : i32, i32
  }
  func.func @transform_5(%arg0: i32) -> (i32, i32) {
    %c0_i32 = arith.constant 0 : i32
    %c0_i32_0 = arith.constant 0 : i32
    return %arg0, %c0_i32 : i32, i32
  }
  func.func @transform_6(%arg0: i32) -> (i32, i32, i32) {
    %c0_i32 = arith.constant 0 : i32
    %c0_i32_0 = arith.constant 0 : i32
    %c0_i32_1 = arith.constant 0 : i32
    return %arg0, %c0_i32, %c0_i32_0 : i32, i32, i32
  }
}

module attributes {stable_mosaic.version = 11 : i64} {
  func.func @kernel(%arg0: i32, %arg1: memref<1x16x16x4xf32, #tpu.memory_space<vmem>>, %arg2: memref<1x4xf32, #tpu.memory_space<vmem>>, %arg3: memref<1x4xf32, #tpu.memory_space<vmem>>, %arg4: memref<36x8xbf16, #tpu.memory_space<vmem>>, %arg5: memref<1x8xf32, #tpu.memory_space<vmem>>, %arg6: memref<1x256x8xf32, #tpu.memory_space<vmem>>, %arg7: memref<1x2x8xf32, #tpu.memory_space<vmem>>) attributes {dimension_semantics = [#tpu.dimension_semantics<parallel>], iteration_bounds = array<i64: 2>, scalar_prefetch = 0 : i64, scratch_operands = 0 : i64, tpu.core_type = #tpu.core_type<tc>, window_params = [{transform_indices = @transform_0, window_bounds = array<i64: 1, 16, 16, 4>}, {pipeline_mode = #tpu.pipeline_mode<synchronous>, transform_indices = @transform_1, window_bounds = array<i64: 1, 4>}, {pipeline_mode = #tpu.pipeline_mode<synchronous>, transform_indices = @transform_2, window_bounds = array<i64: 1, 4>}, {pipeline_mode = #tpu.pipeline_mode<synchronous>, transform_indices = @transform_3, window_bounds = array<i64: 36, 8>}, {pipeline_mode = #tpu.pipeline_mode<synchronous>, transform_indices = @transform_4, window_bounds = array<i64: 1, 8>}, {transform_indices = @transform_5, window_bounds = array<i64: 1, 256, 8>}, {transform_indices = @transform_6, window_bounds = array<i64: 1, 2, 8>}]} {
    %c0 = arith.constant 0 : index
    %c0_0 = arith.constant 0 : index
    %0 = vector.load %arg2[%c0, %c0_0] : memref<1x4xf32, #tpu.memory_space<vmem>>, vector<1x4xf32>
    %1 = vector.shape_cast %0 : vector<1x4xf32> to vector<1x1x4xf32>
    %c0_1 = arith.constant 0 : index
    %c0_2 = arith.constant 0 : index
    %2 = vector.load %arg3[%c0_1, %c0_2] : memref<1x4xf32, #tpu.memory_space<vmem>>, vector<1x4xf32>
    %3 = vector.shape_cast %2 : vector<1x4xf32> to vector<1x1x4xf32>
    %c0_3 = arith.constant 0 : index
    %c0_4 = arith.constant 0 : index
    %c0_5 = arith.constant 0 : index
    %c0_6 = arith.constant 0 : index
    %4 = vector.load %arg1[%c0_3, %c0_4, %c0_5, %c0_6] : memref<1x16x16x4xf32, #tpu.memory_space<vmem>>, vector<1x16x16x4xf32>
    %5 = vector.shape_cast %4 : vector<1x16x16x4xf32> to vector<16x16x4xf32>
    %6 = vector.broadcast %1 : vector<1x1x4xf32> to vector<16x16x4xf32>
    %7 = arith.mulf %5, %6 : vector<16x16x4xf32>
    %8 = vector.broadcast %3 : vector<1x1x4xf32> to vector<16x16x4xf32>
    %9 = arith.addf %7, %8 : vector<16x16x4xf32>
    %cst = arith.constant 0.000000e+00 : f32
    %10 = vector.broadcast %cst : f32 to vector<16x16x4xf32>
    %11 = arith.maximumf %9, %10 : vector<16x16x4xf32>
    %12 = arith.truncf %11 : vector<16x16x4xf32> to vector<16x16x4xbf16>
    %cst_7 = arith.constant 0.000000e+00 : bf16
    %13 = vector.broadcast %cst_7 : bf16 to vector<1x16x4xbf16>
    %cst_8 = arith.constant 0.000000e+00 : bf16
    %14 = vector.broadcast %cst_8 : bf16 to vector<18x1x4xbf16>
    %15 = tpu.concatenate %13, %12, %13 in 0 : vector<1x16x4xbf16>, vector<16x16x4xbf16>, vector<1x16x4xbf16> -> vector<18x16x4xbf16>
    %16 = tpu.concatenate %14, %15, %14 in 1 : vector<18x1x4xbf16>, vector<18x16x4xbf16>, vector<18x1x4xbf16> -> vector<18x18x4xbf16>
    %17 = vector.extract_strided_slice %16 {offsets = [0, 0, 0], sizes = [16, 16, 4], strides = [1, 1, 1]} : vector<18x18x4xbf16> to vector<16x16x4xbf16>
    %18 = vector.shape_cast %17 : vector<16x16x4xbf16> to vector<256x4xbf16>
    %19 = vector.extract_strided_slice %16 {offsets = [0, 1, 0], sizes = [16, 16, 4], strides = [1, 1, 1]} : vector<18x18x4xbf16> to vector<16x16x4xbf16>
    %20 = vector.shape_cast %19 : vector<16x16x4xbf16> to vector<256x4xbf16>
    %21 = vector.extract_strided_slice %16 {offsets = [0, 2, 0], sizes = [16, 16, 4], strides = [1, 1, 1]} : vector<18x18x4xbf16> to vector<16x16x4xbf16>
    %22 = vector.shape_cast %21 : vector<16x16x4xbf16> to vector<256x4xbf16>
    %23 = vector.extract_strided_slice %16 {offsets = [1, 0, 0], sizes = [16, 16, 4], strides = [1, 1, 1]} : vector<18x18x4xbf16> to vector<16x16x4xbf16>
    %24 = vector.shape_cast %23 : vector<16x16x4xbf16> to vector<256x4xbf16>
    %25 = vector.extract_strided_slice %16 {offsets = [1, 1, 0], sizes = [16, 16, 4], strides = [1, 1, 1]} : vector<18x18x4xbf16> to vector<16x16x4xbf16>
    %26 = vector.shape_cast %25 : vector<16x16x4xbf16> to vector<256x4xbf16>
    %27 = vector.extract_strided_slice %16 {offsets = [1, 2, 0], sizes = [16, 16, 4], strides = [1, 1, 1]} : vector<18x18x4xbf16> to vector<16x16x4xbf16>
    %28 = vector.shape_cast %27 : vector<16x16x4xbf16> to vector<256x4xbf16>
    %29 = vector.extract_strided_slice %16 {offsets = [2, 0, 0], sizes = [16, 16, 4], strides = [1, 1, 1]} : vector<18x18x4xbf16> to vector<16x16x4xbf16>
    %30 = vector.shape_cast %29 : vector<16x16x4xbf16> to vector<256x4xbf16>
    %31 = vector.extract_strided_slice %16 {offsets = [2, 1, 0], sizes = [16, 16, 4], strides = [1, 1, 1]} : vector<18x18x4xbf16> to vector<16x16x4xbf16>
    %32 = vector.shape_cast %31 : vector<16x16x4xbf16> to vector<256x4xbf16>
    %33 = vector.extract_strided_slice %16 {offsets = [2, 2, 0], sizes = [16, 16, 4], strides = [1, 1, 1]} : vector<18x18x4xbf16> to vector<16x16x4xbf16>
    %34 = vector.shape_cast %33 : vector<16x16x4xbf16> to vector<256x4xbf16>
    %35 = tpu.concatenate %18, %20, %22, %24, %26, %28, %30, %32, %34 in 1 : vector<256x4xbf16>, vector<256x4xbf16>, vector<256x4xbf16>, vector<256x4xbf16>, vector<256x4xbf16>, vector<256x4xbf16>, vector<256x4xbf16>, vector<256x4xbf16>, vector<256x4xbf16> -> vector<256x36xbf16>
    %c0_9 = arith.constant 0 : index
    %c0_10 = arith.constant 0 : index
    %36 = vector.load %arg4[%c0_9, %c0_10] : memref<36x8xbf16, #tpu.memory_space<vmem>>, vector<36x8xbf16>
    %cst_11 = arith.constant dense<0.000000e+00> : vector<256x8xf32>
    %37 = tpu.matmul %35, %36, %cst_11 {dimension_numbers = #tpu.dot_dimension_numbers<[1], [0], [0], [1], [0, 0, 1, 1], [], []>} : vector<256x36xbf16>, vector<36x8xbf16>, vector<256x8xf32> -> vector<256x8xf32>
    %c0_12 = arith.constant 0 : index
    %c0_13 = arith.constant 0 : index
    %38 = vector.load %arg5[%c0_12, %c0_13] : memref<1x8xf32, #tpu.memory_space<vmem>>, vector<1x8xf32>
    %39 = vector.broadcast %38 : vector<1x8xf32> to vector<256x8xf32>
    %40 = arith.addf %37, %39 : vector<256x8xf32>
    %c0_14 = arith.constant 0 : index
    %c0_15 = arith.constant 0 : index
    %c0_16 = arith.constant 0 : index
    %41 = vector.load %arg6[%c0_14, %c0_15, %c0_16] : memref<1x256x8xf32, #tpu.memory_space<vmem>>, vector<1x256x8xf32>
    %42 = vector.shape_cast %41 : vector<1x256x8xf32> to vector<256x8xf32>
    %43 = vector.shape_cast %40 : vector<256x8xf32> to vector<1x256x8xf32>
    tpu.vector_store %arg6[%c0_14, %c0_15, %c0_16], %43 {strides = array<i32>} : memref<1x256x8xf32, #tpu.memory_space<vmem>>, vector<1x256x8xf32>,
    %cst_17 = arith.constant dense<0.000000e+00> : vector<8xf32>
    %44 = vector.multi_reduction <add>, %40, %cst_17 [0] : vector<256x8xf32> to vector<8xf32>
    %45 = vector.shape_cast %44 : vector<8xf32> to vector<1x8xf32>
    %46 = arith.mulf %40, %40 : vector<256x8xf32>
    %cst_18 = arith.constant dense<0.000000e+00> : vector<8xf32>
    %47 = vector.multi_reduction <add>, %46, %cst_18 [0] : vector<256x8xf32> to vector<8xf32>
    %48 = vector.shape_cast %47 : vector<8xf32> to vector<1x8xf32>
    %49 = tpu.concatenate %45, %48 in 0 : vector<1x8xf32>, vector<1x8xf32> -> vector<2x8xf32>
    %c0_19 = arith.constant 0 : index
    %c0_20 = arith.constant 0 : index
    %c0_21 = arith.constant 0 : index
    %50 = vector.load %arg7[%c0_19, %c0_20, %c0_21] : memref<1x2x8xf32, #tpu.memory_space<vmem>>, vector<1x2x8xf32>
    %51 = vector.shape_cast %50 : vector<1x2x8xf32> to vector<2x8xf32>
    %52 = vector.shape_cast %49 : vector<2x8xf32> to vector<1x2x8xf32>
    tpu.vector_store %arg7[%c0_19, %c0_20, %c0_21], %52 {strides = array<i32>} : memref<1x2x8xf32, #tpu.memory_space<vmem>>, vector<1x2x8xf32>,
    return
  }
  func.func @transform_0(%arg0: i32) -> (i32, i32, i32, i32) {
    %c0_i32 = arith.constant 0 : i32
    %c0_i32_0 = arith.constant 0 : i32
    %c0_i32_1 = arith.constant 0 : i32
    %c0_i32_2 = arith.constant 0 : i32
    return %arg0, %c0_i32, %c0_i32_0, %c0_i32_1 : i32, i32, i32, i32
  }
  func.func @transform_1(%arg0: i32) -> (i32, i32) {
    %c0_i32 = arith.constant 0 : i32
    %c0_i32_0 = arith.constant 0 : i32
    %c0_i32_1 = arith.constant 0 : i32
    return %c0_i32, %c0_i32_0 : i32, i32
  }
  func.func @transform_2(%arg0: i32) -> (i32, i32) {
    %c0_i32 = arith.constant 0 : i32
    %c0_i32_0 = arith.constant 0 : i32
    %c0_i32_1 = arith.constant 0 : i32
    return %c0_i32, %c0_i32_0 : i32, i32
  }
  func.func @transform_3(%arg0: i32) -> (i32, i32) {
    %c0_i32 = arith.constant 0 : i32
    %c0_i32_0 = arith.constant 0 : i32
    %c0_i32_1 = arith.constant 0 : i32
    return %c0_i32, %c0_i32_0 : i32, i32
  }
  func.func @transform_4(%arg0: i32) -> (i32, i32) {
    %c0_i32 = arith.constant 0 : i32
    %c0_i32_0 = arith.constant 0 : i32
    %c0_i32_1 = arith.constant 0 : i32
    return %c0_i32, %c0_i32_0 : i32, i32
  }
  func.func @transform_5(%arg0: i32) -> (i32, i32, i32) {
    %c0_i32 = arith.constant 0 : i32
    %c0_i32_0 = arith.constant 0 : i32
    %c0_i32_1 = arith.constant 0 : i32
    return %arg0, %c0_i32, %c0_i32_0 : i32, i32, i32
  }
  func.func @transform_6(%arg0: i32) -> (i32, i32, i32) {
    %c0_i32 = arith.constant 0 : i32
    %c0_i32_0 = arith.constant 0 : i32
    %c0_i32_1 = arith.constant 0 : i32
    return %arg0, %c0_i32, %c0_i32_0 : i32, i32, i32
  }
}

module attributes {stable_mosaic.version = 11 : i64} {
  func.func @kernel(%arg0: i32, %arg1: memref<1x16x16x4xf32, #tpu.memory_space<vmem>>, %arg2: memref<4x8xbf16, #tpu.memory_space<vmem>>, %arg3: memref<1x8xf32, #tpu.memory_space<vmem>>, %arg4: memref<1x256x8xf32, #tpu.memory_space<vmem>>, %arg5: memref<1x2x8xf32, #tpu.memory_space<vmem>>) attributes {dimension_semantics = [#tpu.dimension_semantics<parallel>], iteration_bounds = array<i64: 2>, scalar_prefetch = 0 : i64, scratch_operands = 0 : i64, tpu.core_type = #tpu.core_type<tc>, window_params = [{transform_indices = @transform_0, window_bounds = array<i64: 1, 16, 16, 4>}, {pipeline_mode = #tpu.pipeline_mode<synchronous>, transform_indices = @transform_1, window_bounds = array<i64: 4, 8>}, {pipeline_mode = #tpu.pipeline_mode<synchronous>, transform_indices = @transform_2, window_bounds = array<i64: 1, 8>}, {transform_indices = @transform_3, window_bounds = array<i64: 1, 256, 8>}, {transform_indices = @transform_4, window_bounds = array<i64: 1, 2, 8>}]} {
    %c0 = arith.constant 0 : index
    %c0_0 = arith.constant 0 : index
    %c0_1 = arith.constant 0 : index
    %c0_2 = arith.constant 0 : index
    %0 = vector.load %arg1[%c0, %c0_0, %c0_1, %c0_2] : memref<1x16x16x4xf32, #tpu.memory_space<vmem>>, vector<1x16x16x4xf32>
    %1 = vector.shape_cast %0 : vector<1x16x16x4xf32> to vector<16x16x4xf32>
    %cst = arith.constant -3.40282347E+38 : f32
    %2 = vector.broadcast %cst : f32 to vector<1x16x4xf32>
    %cst_3 = arith.constant -3.40282347E+38 : f32
    %3 = vector.broadcast %cst_3 : f32 to vector<18x1x4xf32>
    %4 = tpu.concatenate %2, %1, %2 in 0 : vector<1x16x4xf32>, vector<16x16x4xf32>, vector<1x16x4xf32> -> vector<18x16x4xf32>
    %5 = tpu.concatenate %3, %4, %3 in 1 : vector<18x1x4xf32>, vector<18x16x4xf32>, vector<18x1x4xf32> -> vector<18x18x4xf32>
    %6 = vector.extract_strided_slice %5 {offsets = [0, 0, 0], sizes = [18, 16, 4], strides = [1, 1, 1]} : vector<18x18x4xf32> to vector<18x16x4xf32>
    %7 = vector.extract_strided_slice %5 {offsets = [0, 1, 0], sizes = [18, 16, 4], strides = [1, 1, 1]} : vector<18x18x4xf32> to vector<18x16x4xf32>
    %8 = arith.maximumf %6, %7 : vector<18x16x4xf32>
    %9 = vector.extract_strided_slice %5 {offsets = [0, 2, 0], sizes = [18, 16, 4], strides = [1, 1, 1]} : vector<18x18x4xf32> to vector<18x16x4xf32>
    %10 = arith.maximumf %8, %9 : vector<18x16x4xf32>
    %11 = vector.extract_strided_slice %10 {offsets = [0, 0, 0], sizes = [16, 16, 4], strides = [1, 1, 1]} : vector<18x16x4xf32> to vector<16x16x4xf32>
    %12 = vector.extract_strided_slice %10 {offsets = [1, 0, 0], sizes = [16, 16, 4], strides = [1, 1, 1]} : vector<18x16x4xf32> to vector<16x16x4xf32>
    %13 = arith.maximumf %11, %12 : vector<16x16x4xf32>
    %14 = vector.extract_strided_slice %10 {offsets = [2, 0, 0], sizes = [16, 16, 4], strides = [1, 1, 1]} : vector<18x16x4xf32> to vector<16x16x4xf32>
    %15 = arith.maximumf %13, %14 : vector<16x16x4xf32>
    %16 = vector.shape_cast %15 : vector<16x16x4xf32> to vector<256x4xf32>
    %17 = arith.truncf %16 : vector<256x4xf32> to vector<256x4xbf16>
    %c0_4 = arith.constant 0 : index
    %c0_5 = arith.constant 0 : index
    %18 = vector.load %arg2[%c0_4, %c0_5] : memref<4x8xbf16, #tpu.memory_space<vmem>>, vector<4x8xbf16>
    %cst_6 = arith.constant dense<0.000000e+00> : vector<256x8xf32>
    %19 = tpu.matmul %17, %18, %cst_6 {dimension_numbers = #tpu.dot_dimension_numbers<[1], [0], [0], [1], [0, 0, 1, 1], [], []>} : vector<256x4xbf16>, vector<4x8xbf16>, vector<256x8xf32> -> vector<256x8xf32>
    %c0_7 = arith.constant 0 : index
    %c0_8 = arith.constant 0 : index
    %20 = vector.load %arg3[%c0_7, %c0_8] : memref<1x8xf32, #tpu.memory_space<vmem>>, vector<1x8xf32>
    %21 = vector.broadcast %20 : vector<1x8xf32> to vector<256x8xf32>
    %22 = arith.addf %19, %21 : vector<256x8xf32>
    %c0_9 = arith.constant 0 : index
    %c0_10 = arith.constant 0 : index
    %c0_11 = arith.constant 0 : index
    %23 = vector.load %arg4[%c0_9, %c0_10, %c0_11] : memref<1x256x8xf32, #tpu.memory_space<vmem>>, vector<1x256x8xf32>
    %24 = vector.shape_cast %23 : vector<1x256x8xf32> to vector<256x8xf32>
    %25 = vector.shape_cast %22 : vector<256x8xf32> to vector<1x256x8xf32>
    tpu.vector_store %arg4[%c0_9, %c0_10, %c0_11], %25 {strides = array<i32>} : memref<1x256x8xf32, #tpu.memory_space<vmem>>, vector<1x256x8xf32>,
    %cst_12 = arith.constant dense<0.000000e+00> : vector<8xf32>
    %26 = vector.multi_reduction <add>, %22, %cst_12 [0] : vector<256x8xf32> to vector<8xf32>
    %27 = vector.shape_cast %26 : vector<8xf32> to vector<1x8xf32>
    %28 = arith.mulf %22, %22 : vector<256x8xf32>
    %cst_13 = arith.constant dense<0.000000e+00> : vector<8xf32>
    %29 = vector.multi_reduction <add>, %28, %cst_13 [0] : vector<256x8xf32> to vector<8xf32>
    %30 = vector.shape_cast %29 : vector<8xf32> to vector<1x8xf32>
    %31 = tpu.concatenate %27, %30 in 0 : vector<1x8xf32>, vector<1x8xf32> -> vector<2x8xf32>
    %c0_14 = arith.constant 0 : index
    %c0_15 = arith.constant 0 : index
    %c0_16 = arith.constant 0 : index
    %32 = vector.load %arg5[%c0_14, %c0_15, %c0_16] : memref<1x2x8xf32, #tpu.memory_space<vmem>>, vector<1x2x8xf32>
    %33 = vector.shape_cast %32 : vector<1x2x8xf32> to vector<2x8xf32>
    %34 = vector.shape_cast %31 : vector<2x8xf32> to vector<1x2x8xf32>
    tpu.vector_store %arg5[%c0_14, %c0_15, %c0_16], %34 {strides = array<i32>} : memref<1x2x8xf32, #tpu.memory_space<vmem>>, vector<1x2x8xf32>,
    return
  }
  func.func @transform_0(%arg0: i32) -> (i32, i32, i32, i32) {
    %c0_i32 = arith.constant 0 : i32
    %c0_i32_0 = arith.constant 0 : i32
    %c0_i32_1 = arith.constant 0 : i32
    %c0_i32_2 = arith.constant 0 : i32
    return %arg0, %c0_i32, %c0_i32_0, %c0_i32_1 : i32, i32, i32, i32
  }
  func.func @transform_1(%arg0: i32) -> (i32, i32) {
    %c0_i32 = arith.constant 0 : i32
    %c0_i32_0 = arith.constant 0 : i32
    %c0_i32_1 = arith.constant 0 : i32
    return %c0_i32, %c0_i32_0 : i32, i32
  }
  func.func @transform_2(%arg0: i32) -> (i32, i32) {
    %c0_i32 = arith.constant 0 : i32
    %c0_i32_0 = arith.constant 0 : i32
    %c0_i32_1 = arith.constant 0 : i32
    return %c0_i32, %c0_i32_0 : i32, i32
  }
  func.func @transform_3(%arg0: i32) -> (i32, i32, i32) {
    %c0_i32 = arith.constant 0 : i32
    %c0_i32_0 = arith.constant 0 : i32
    %c0_i32_1 = arith.constant 0 : i32
    return %arg0, %c0_i32, %c0_i32_0 : i32, i32, i32
  }
  func.func @transform_4(%arg0: i32) -> (i32, i32, i32) {
    %c0_i32 = arith.constant 0 : i32
    %c0_i32_0 = arith.constant 0 : i32
    %c0_i32_1 = arith.constant 0 : i32
    return %arg0, %c0_i32, %c0_i32_0 : i32, i32, i32
  }
}

module attributes {stable_mosaic.version = 11 : i64} {
  func.func @kernel(%arg0: i32, %arg1: memref<1x16x16x8xf32, #tpu.memory_space<vmem>>, %arg2: memref<1x8xf32, #tpu.memory_space<vmem>>, %arg3: memref<1x8xf32, #tpu.memory_space<vmem>>, %arg4: memref<72x8xbf16, #tpu.memory_space<vmem>>, %arg5: memref<1x8xf32, #tpu.memory_space<vmem>>, %arg6: memref<1x256x8xf32, #tpu.memory_space<vmem>>, %arg7: memref<1x2x8xf32, #tpu.memory_space<vmem>>) attributes {dimension_semantics = [#tpu.dimension_semantics<parallel>], iteration_bounds = array<i64: 2>, scalar_prefetch = 0 : i64, scratch_operands = 0 : i64, tpu.core_type = #tpu.core_type<tc>, window_params = [{transform_indices = @transform_0, window_bounds = array<i64: 1, 16, 16, 8>}, {pipeline_mode = #tpu.pipeline_mode<synchronous>, transform_indices = @transform_1, window_bounds = array<i64: 1, 8>}, {pipeline_mode = #tpu.pipeline_mode<synchronous>, transform_indices = @transform_2, window_bounds = array<i64: 1, 8>}, {pipeline_mode = #tpu.pipeline_mode<synchronous>, transform_indices = @transform_3, window_bounds = array<i64: 72, 8>}, {pipeline_mode = #tpu.pipeline_mode<synchronous>, transform_indices = @transform_4, window_bounds = array<i64: 1, 8>}, {transform_indices = @transform_5, window_bounds = array<i64: 1, 256, 8>}, {transform_indices = @transform_6, window_bounds = array<i64: 1, 2, 8>}]} {
    %c0 = arith.constant 0 : index
    %c0_0 = arith.constant 0 : index
    %0 = vector.load %arg2[%c0, %c0_0] : memref<1x8xf32, #tpu.memory_space<vmem>>, vector<1x8xf32>
    %1 = vector.shape_cast %0 : vector<1x8xf32> to vector<1x1x8xf32>
    %c0_1 = arith.constant 0 : index
    %c0_2 = arith.constant 0 : index
    %2 = vector.load %arg3[%c0_1, %c0_2] : memref<1x8xf32, #tpu.memory_space<vmem>>, vector<1x8xf32>
    %3 = vector.shape_cast %2 : vector<1x8xf32> to vector<1x1x8xf32>
    %c0_3 = arith.constant 0 : index
    %c0_4 = arith.constant 0 : index
    %c0_5 = arith.constant 0 : index
    %c0_6 = arith.constant 0 : index
    %4 = vector.load %arg1[%c0_3, %c0_4, %c0_5, %c0_6] : memref<1x16x16x8xf32, #tpu.memory_space<vmem>>, vector<1x16x16x8xf32>
    %5 = vector.shape_cast %4 : vector<1x16x16x8xf32> to vector<16x16x8xf32>
    %6 = vector.broadcast %1 : vector<1x1x8xf32> to vector<16x16x8xf32>
    %7 = arith.mulf %5, %6 : vector<16x16x8xf32>
    %8 = vector.broadcast %3 : vector<1x1x8xf32> to vector<16x16x8xf32>
    %9 = arith.addf %7, %8 : vector<16x16x8xf32>
    %cst = arith.constant 0.000000e+00 : f32
    %10 = vector.broadcast %cst : f32 to vector<16x16x8xf32>
    %11 = arith.maximumf %9, %10 : vector<16x16x8xf32>
    %12 = arith.truncf %11 : vector<16x16x8xf32> to vector<16x16x8xbf16>
    %cst_7 = arith.constant 0.000000e+00 : bf16
    %13 = vector.broadcast %cst_7 : bf16 to vector<1x16x8xbf16>
    %cst_8 = arith.constant 0.000000e+00 : bf16
    %14 = vector.broadcast %cst_8 : bf16 to vector<18x1x8xbf16>
    %15 = tpu.concatenate %13, %12, %13 in 0 : vector<1x16x8xbf16>, vector<16x16x8xbf16>, vector<1x16x8xbf16> -> vector<18x16x8xbf16>
    %16 = tpu.concatenate %14, %15, %14 in 1 : vector<18x1x8xbf16>, vector<18x16x8xbf16>, vector<18x1x8xbf16> -> vector<18x18x8xbf16>
    %17 = vector.extract_strided_slice %16 {offsets = [0, 0, 0], sizes = [16, 16, 8], strides = [1, 1, 1]} : vector<18x18x8xbf16> to vector<16x16x8xbf16>
    %18 = vector.shape_cast %17 : vector<16x16x8xbf16> to vector<256x8xbf16>
    %19 = vector.extract_strided_slice %16 {offsets = [0, 1, 0], sizes = [16, 16, 8], strides = [1, 1, 1]} : vector<18x18x8xbf16> to vector<16x16x8xbf16>
    %20 = vector.shape_cast %19 : vector<16x16x8xbf16> to vector<256x8xbf16>
    %21 = vector.extract_strided_slice %16 {offsets = [0, 2, 0], sizes = [16, 16, 8], strides = [1, 1, 1]} : vector<18x18x8xbf16> to vector<16x16x8xbf16>
    %22 = vector.shape_cast %21 : vector<16x16x8xbf16> to vector<256x8xbf16>
    %23 = vector.extract_strided_slice %16 {offsets = [1, 0, 0], sizes = [16, 16, 8], strides = [1, 1, 1]} : vector<18x18x8xbf16> to vector<16x16x8xbf16>
    %24 = vector.shape_cast %23 : vector<16x16x8xbf16> to vector<256x8xbf16>
    %25 = vector.extract_strided_slice %16 {offsets = [1, 1, 0], sizes = [16, 16, 8], strides = [1, 1, 1]} : vector<18x18x8xbf16> to vector<16x16x8xbf16>
    %26 = vector.shape_cast %25 : vector<16x16x8xbf16> to vector<256x8xbf16>
    %27 = vector.extract_strided_slice %16 {offsets = [1, 2, 0], sizes = [16, 16, 8], strides = [1, 1, 1]} : vector<18x18x8xbf16> to vector<16x16x8xbf16>
    %28 = vector.shape_cast %27 : vector<16x16x8xbf16> to vector<256x8xbf16>
    %29 = vector.extract_strided_slice %16 {offsets = [2, 0, 0], sizes = [16, 16, 8], strides = [1, 1, 1]} : vector<18x18x8xbf16> to vector<16x16x8xbf16>
    %30 = vector.shape_cast %29 : vector<16x16x8xbf16> to vector<256x8xbf16>
    %31 = vector.extract_strided_slice %16 {offsets = [2, 1, 0], sizes = [16, 16, 8], strides = [1, 1, 1]} : vector<18x18x8xbf16> to vector<16x16x8xbf16>
    %32 = vector.shape_cast %31 : vector<16x16x8xbf16> to vector<256x8xbf16>
    %33 = vector.extract_strided_slice %16 {offsets = [2, 2, 0], sizes = [16, 16, 8], strides = [1, 1, 1]} : vector<18x18x8xbf16> to vector<16x16x8xbf16>
    %34 = vector.shape_cast %33 : vector<16x16x8xbf16> to vector<256x8xbf16>
    %35 = tpu.concatenate %18, %20, %22, %24, %26, %28, %30, %32, %34 in 1 : vector<256x8xbf16>, vector<256x8xbf16>, vector<256x8xbf16>, vector<256x8xbf16>, vector<256x8xbf16>, vector<256x8xbf16>, vector<256x8xbf16>, vector<256x8xbf16>, vector<256x8xbf16> -> vector<256x72xbf16>
    %c0_9 = arith.constant 0 : index
    %c0_10 = arith.constant 0 : index
    %36 = vector.load %arg4[%c0_9, %c0_10] : memref<72x8xbf16, #tpu.memory_space<vmem>>, vector<72x8xbf16>
    %cst_11 = arith.constant dense<0.000000e+00> : vector<256x8xf32>
    %37 = tpu.matmul %35, %36, %cst_11 {dimension_numbers = #tpu.dot_dimension_numbers<[1], [0], [0], [1], [0, 0, 1, 1], [], []>} : vector<256x72xbf16>, vector<72x8xbf16>, vector<256x8xf32> -> vector<256x8xf32>
    %c0_12 = arith.constant 0 : index
    %c0_13 = arith.constant 0 : index
    %38 = vector.load %arg5[%c0_12, %c0_13] : memref<1x8xf32, #tpu.memory_space<vmem>>, vector<1x8xf32>
    %39 = vector.broadcast %38 : vector<1x8xf32> to vector<256x8xf32>
    %40 = arith.addf %37, %39 : vector<256x8xf32>
    %c0_14 = arith.constant 0 : index
    %c0_15 = arith.constant 0 : index
    %c0_16 = arith.constant 0 : index
    %41 = vector.load %arg6[%c0_14, %c0_15, %c0_16] : memref<1x256x8xf32, #tpu.memory_space<vmem>>, vector<1x256x8xf32>
    %42 = vector.shape_cast %41 : vector<1x256x8xf32> to vector<256x8xf32>
    %43 = vector.shape_cast %40 : vector<256x8xf32> to vector<1x256x8xf32>
    tpu.vector_store %arg6[%c0_14, %c0_15, %c0_16], %43 {strides = array<i32>} : memref<1x256x8xf32, #tpu.memory_space<vmem>>, vector<1x256x8xf32>,
    %cst_17 = arith.constant dense<0.000000e+00> : vector<8xf32>
    %44 = vector.multi_reduction <add>, %40, %cst_17 [0] : vector<256x8xf32> to vector<8xf32>
    %45 = vector.shape_cast %44 : vector<8xf32> to vector<1x8xf32>
    %46 = arith.mulf %40, %40 : vector<256x8xf32>
    %cst_18 = arith.constant dense<0.000000e+00> : vector<8xf32>
    %47 = vector.multi_reduction <add>, %46, %cst_18 [0] : vector<256x8xf32> to vector<8xf32>
    %48 = vector.shape_cast %47 : vector<8xf32> to vector<1x8xf32>
    %49 = tpu.concatenate %45, %48 in 0 : vector<1x8xf32>, vector<1x8xf32> -> vector<2x8xf32>
    %c0_19 = arith.constant 0 : index
    %c0_20 = arith.constant 0 : index
    %c0_21 = arith.constant 0 : index
    %50 = vector.load %arg7[%c0_19, %c0_20, %c0_21] : memref<1x2x8xf32, #tpu.memory_space<vmem>>, vector<1x2x8xf32>
    %51 = vector.shape_cast %50 : vector<1x2x8xf32> to vector<2x8xf32>
    %52 = vector.shape_cast %49 : vector<2x8xf32> to vector<1x2x8xf32>
    tpu.vector_store %arg7[%c0_19, %c0_20, %c0_21], %52 {strides = array<i32>} : memref<1x2x8xf32, #tpu.memory_space<vmem>>, vector<1x2x8xf32>,
    return
  }
  func.func @transform_0(%arg0: i32) -> (i32, i32, i32, i32) {
    %c0_i32 = arith.constant 0 : i32
    %c0_i32_0 = arith.constant 0 : i32
    %c0_i32_1 = arith.constant 0 : i32
    %c0_i32_2 = arith.constant 0 : i32
    return %arg0, %c0_i32, %c0_i32_0, %c0_i32_1 : i32, i32, i32, i32
  }
  func.func @transform_1(%arg0: i32) -> (i32, i32) {
    %c0_i32 = arith.constant 0 : i32
    %c0_i32_0 = arith.constant 0 : i32
    %c0_i32_1 = arith.constant 0 : i32
    return %c0_i32, %c0_i32_0 : i32, i32
  }
  func.func @transform_2(%arg0: i32) -> (i32, i32) {
    %c0_i32 = arith.constant 0 : i32
    %c0_i32_0 = arith.constant 0 : i32
    %c0_i32_1 = arith.constant 0 : i32
    return %c0_i32, %c0_i32_0 : i32, i32
  }
  func.func @transform_3(%arg0: i32) -> (i32, i32) {
    %c0_i32 = arith.constant 0 : i32
    %c0_i32_0 = arith.constant 0 : i32
    %c0_i32_1 = arith.constant 0 : i32
    return %c0_i32, %c0_i32_0 : i32, i32
  }
  func.func @transform_4(%arg0: i32) -> (i32, i32) {
    %c0_i32 = arith.constant 0 : i32
    %c0_i32_0 = arith.constant 0 : i32
    %c0_i32_1 = arith.constant 0 : i32
    return %c0_i32, %c0_i32_0 : i32, i32
  }
  func.func @transform_5(%arg0: i32) -> (i32, i32, i32) {
    %c0_i32 = arith.constant 0 : i32
    %c0_i32_0 = arith.constant 0 : i32
    %c0_i32_1 = arith.constant 0 : i32
    return %arg0, %c0_i32, %c0_i32_0 : i32, i32, i32
  }
  func.func @transform_6(%arg0: i32) -> (i32, i32, i32) {
    %c0_i32 = arith.constant 0 : i32
    %c0_i32_0 = arith.constant 0 : i32
    %c0_i32_1 = arith.constant 0 : i32
    return %arg0, %c0_i32, %c0_i32_0 : i32, i32, i32
  }
}

module attributes {stable_mosaic.version = 11 : i64} {
  func.func @kernel(%arg0: i32, %arg1: memref<512x8xf32, #tpu.memory_space<vmem>>, %arg2: memref<512x8xf32, #tpu.memory_space<vmem>>, %arg3: memref<512x8xf32, #tpu.memory_space<vmem>>, %arg4: memref<512x8xf32, #tpu.memory_space<vmem>>, %arg5: memref<1x8xf32, #tpu.memory_space<vmem>>, %arg6: memref<1x8xf32, #tpu.memory_space<vmem>>, %arg7: memref<1x8xf32, #tpu.memory_space<vmem>>, %arg8: memref<1x8xf32, #tpu.memory_space<vmem>>, %arg9: memref<1x8xf32, #tpu.memory_space<vmem>>, %arg10: memref<1x8xf32, #tpu.memory_space<vmem>>, %arg11: memref<1x8xf32, #tpu.memory_space<vmem>>, %arg12: memref<1x8xf32, #tpu.memory_space<vmem>>, %arg13: memref<512x32xf32, #tpu.memory_space<vmem>>) attributes {dimension_semantics = [#tpu.dimension_semantics<parallel>], iteration_bounds = array<i64: 1>, scalar_prefetch = 0 : i64, scratch_operands = 0 : i64, tpu.core_type = #tpu.core_type<tc>, window_params = [{transform_indices = @transform_0, window_bounds = array<i64: 512, 8>}, {transform_indices = @transform_1, window_bounds = array<i64: 512, 8>}, {transform_indices = @transform_2, window_bounds = array<i64: 512, 8>}, {transform_indices = @transform_3, window_bounds = array<i64: 512, 8>}, {pipeline_mode = #tpu.pipeline_mode<synchronous>, transform_indices = @transform_4, window_bounds = array<i64: 1, 8>}, {pipeline_mode = #tpu.pipeline_mode<synchronous>, transform_indices = @transform_5, window_bounds = array<i64: 1, 8>}, {pipeline_mode = #tpu.pipeline_mode<synchronous>, transform_indices = @transform_6, window_bounds = array<i64: 1, 8>}, {pipeline_mode = #tpu.pipeline_mode<synchronous>, transform_indices = @transform_7, window_bounds = array<i64: 1, 8>}, {pipeline_mode = #tpu.pipeline_mode<synchronous>, transform_indices = @transform_8, window_bounds = array<i64: 1, 8>}, {pipeline_mode = #tpu.pipeline_mode<synchronous>, transform_indices = @transform_9, window_bounds = array<i64: 1, 8>}, {pipeline_mode = #tpu.pipeline_mode<synchronous>, transform_indices = @transform_10, window_bounds = array<i64: 1, 8>}, {pipeline_mode = #tpu.pipeline_mode<synchronous>, transform_indices = @transform_11, window_bounds = array<i64: 1, 8>}, {transform_indices = @transform_12, window_bounds = array<i64: 512, 32>}]} {
    %c0 = arith.constant 0 : index
    %c0_0 = arith.constant 0 : index
    %0 = vector.load %arg1[%c0, %c0_0] : memref<512x8xf32, #tpu.memory_space<vmem>>, vector<512x8xf32>
    %c0_1 = arith.constant 0 : index
    %c0_2 = arith.constant 0 : index
    %1 = vector.load %arg5[%c0_1, %c0_2] : memref<1x8xf32, #tpu.memory_space<vmem>>, vector<1x8xf32>
    %2 = vector.broadcast %1 : vector<1x8xf32> to vector<512x8xf32>
    %3 = arith.mulf %0, %2 : vector<512x8xf32>
    %c0_3 = arith.constant 0 : index
    %c0_4 = arith.constant 0 : index
    %4 = vector.load %arg9[%c0_3, %c0_4] : memref<1x8xf32, #tpu.memory_space<vmem>>, vector<1x8xf32>
    %5 = vector.broadcast %4 : vector<1x8xf32> to vector<512x8xf32>
    %6 = arith.addf %3, %5 : vector<512x8xf32>
    %cst = arith.constant 0.000000e+00 : f32
    %7 = vector.broadcast %cst : f32 to vector<512x8xf32>
    %8 = arith.maximumf %6, %7 : vector<512x8xf32>
    %c0_5 = arith.constant 0 : index
    %c0_6 = arith.constant 0 : index
    %9 = vector.load %arg13[%c0_5, %c0_6] : memref<512x32xf32, #tpu.memory_space<vmem>>, vector<512x8xf32>
    tpu.vector_store %arg13[%c0_5, %c0_6], %8 {strides = array<i32>} : memref<512x32xf32, #tpu.memory_space<vmem>>, vector<512x8xf32>,
    %c0_7 = arith.constant 0 : index
    %c0_8 = arith.constant 0 : index
    %10 = vector.load %arg2[%c0_7, %c0_8] : memref<512x8xf32, #tpu.memory_space<vmem>>, vector<512x8xf32>
    %c0_9 = arith.constant 0 : index
    %c0_10 = arith.constant 0 : index
    %11 = vector.load %arg6[%c0_9, %c0_10] : memref<1x8xf32, #tpu.memory_space<vmem>>, vector<1x8xf32>
    %12 = vector.broadcast %11 : vector<1x8xf32> to vector<512x8xf32>
    %13 = arith.mulf %10, %12 : vector<512x8xf32>
    %c0_11 = arith.constant 0 : index
    %c0_12 = arith.constant 0 : index
    %14 = vector.load %arg10[%c0_11, %c0_12] : memref<1x8xf32, #tpu.memory_space<vmem>>, vector<1x8xf32>
    %15 = vector.broadcast %14 : vector<1x8xf32> to vector<512x8xf32>
    %16 = arith.addf %13, %15 : vector<512x8xf32>
    %cst_13 = arith.constant 0.000000e+00 : f32
    %17 = vector.broadcast %cst_13 : f32 to vector<512x8xf32>
    %18 = arith.maximumf %16, %17 : vector<512x8xf32>
    %c0_14 = arith.constant 0 : index
    %c8 = arith.constant 8 : index
    %19 = vector.load %arg13[%c0_14, %c8] : memref<512x32xf32, #tpu.memory_space<vmem>>, vector<512x8xf32>
    tpu.vector_store %arg13[%c0_14, %c8], %18 {strides = array<i32>} : memref<512x32xf32, #tpu.memory_space<vmem>>, vector<512x8xf32>,
    %c0_15 = arith.constant 0 : index
    %c0_16 = arith.constant 0 : index
    %20 = vector.load %arg3[%c0_15, %c0_16] : memref<512x8xf32, #tpu.memory_space<vmem>>, vector<512x8xf32>
    %c0_17 = arith.constant 0 : index
    %c0_18 = arith.constant 0 : index
    %21 = vector.load %arg7[%c0_17, %c0_18] : memref<1x8xf32, #tpu.memory_space<vmem>>, vector<1x8xf32>
    %22 = vector.broadcast %21 : vector<1x8xf32> to vector<512x8xf32>
    %23 = arith.mulf %20, %22 : vector<512x8xf32>
    %c0_19 = arith.constant 0 : index
    %c0_20 = arith.constant 0 : index
    %24 = vector.load %arg11[%c0_19, %c0_20] : memref<1x8xf32, #tpu.memory_space<vmem>>, vector<1x8xf32>
    %25 = vector.broadcast %24 : vector<1x8xf32> to vector<512x8xf32>
    %26 = arith.addf %23, %25 : vector<512x8xf32>
    %cst_21 = arith.constant 0.000000e+00 : f32
    %27 = vector.broadcast %cst_21 : f32 to vector<512x8xf32>
    %28 = arith.maximumf %26, %27 : vector<512x8xf32>
    %c0_22 = arith.constant 0 : index
    %c16 = arith.constant 16 : index
    %29 = vector.load %arg13[%c0_22, %c16] : memref<512x32xf32, #tpu.memory_space<vmem>>, vector<512x8xf32>
    tpu.vector_store %arg13[%c0_22, %c16], %28 {strides = array<i32>} : memref<512x32xf32, #tpu.memory_space<vmem>>, vector<512x8xf32>,
    %c0_23 = arith.constant 0 : index
    %c0_24 = arith.constant 0 : index
    %30 = vector.load %arg4[%c0_23, %c0_24] : memref<512x8xf32, #tpu.memory_space<vmem>>, vector<512x8xf32>
    %c0_25 = arith.constant 0 : index
    %c0_26 = arith.constant 0 : index
    %31 = vector.load %arg8[%c0_25, %c0_26] : memref<1x8xf32, #tpu.memory_space<vmem>>, vector<1x8xf32>
    %32 = vector.broadcast %31 : vector<1x8xf32> to vector<512x8xf32>
    %33 = arith.mulf %30, %32 : vector<512x8xf32>
    %c0_27 = arith.constant 0 : index
    %c0_28 = arith.constant 0 : index
    %34 = vector.load %arg12[%c0_27, %c0_28] : memref<1x8xf32, #tpu.memory_space<vmem>>, vector<1x8xf32>
    %35 = vector.broadcast %34 : vector<1x8xf32> to vector<512x8xf32>
    %36 = arith.addf %33, %35 : vector<512x8xf32>
    %cst_29 = arith.constant 0.000000e+00 : f32
    %37 = vector.broadcast %cst_29 : f32 to vector<512x8xf32>
    %38 = arith.maximumf %36, %37 : vector<512x8xf32>
    %c0_30 = arith.constant 0 : index
    %c24 = arith.constant 24 : index
    %39 = vector.load %arg13[%c0_30, %c24] : memref<512x32xf32, #tpu.memory_space<vmem>>, vector<512x8xf32>
    tpu.vector_store %arg13[%c0_30, %c24], %38 {strides = array<i32>} : memref<512x32xf32, #tpu.memory_space<vmem>>, vector<512x8xf32>,
    return
  }
  func.func @transform_0(%arg0: i32) -> (i32, i32) {
    %c0_i32 = arith.constant 0 : i32
    %c0_i32_0 = arith.constant 0 : i32
    return %arg0, %c0_i32 : i32, i32
  }
  func.func @transform_1(%arg0: i32) -> (i32, i32) {
    %c0_i32 = arith.constant 0 : i32
    %c0_i32_0 = arith.constant 0 : i32
    return %arg0, %c0_i32 : i32, i32
  }
  func.func @transform_2(%arg0: i32) -> (i32, i32) {
    %c0_i32 = arith.constant 0 : i32
    %c0_i32_0 = arith.constant 0 : i32
    return %arg0, %c0_i32 : i32, i32
  }
  func.func @transform_3(%arg0: i32) -> (i32, i32) {
    %c0_i32 = arith.constant 0 : i32
    %c0_i32_0 = arith.constant 0 : i32
    return %arg0, %c0_i32 : i32, i32
  }
  func.func @transform_4(%arg0: i32) -> (i32, i32) {
    %c0_i32 = arith.constant 0 : i32
    %c0_i32_0 = arith.constant 0 : i32
    %c0_i32_1 = arith.constant 0 : i32
    return %c0_i32, %c0_i32_0 : i32, i32
  }
  func.func @transform_5(%arg0: i32) -> (i32, i32) {
    %c0_i32 = arith.constant 0 : i32
    %c0_i32_0 = arith.constant 0 : i32
    %c0_i32_1 = arith.constant 0 : i32
    return %c0_i32, %c0_i32_0 : i32, i32
  }
  func.func @transform_6(%arg0: i32) -> (i32, i32) {
    %c0_i32 = arith.constant 0 : i32
    %c0_i32_0 = arith.constant 0 : i32
    %c0_i32_1 = arith.constant 0 : i32
    return %c0_i32, %c0_i32_0 : i32, i32
  }
  func.func @transform_7(%arg0: i32) -> (i32, i32) {
    %c0_i32 = arith.constant 0 : i32
    %c0_i32_0 = arith.constant 0 : i32
    %c0_i32_1 = arith.constant 0 : i32
    return %c0_i32, %c0_i32_0 : i32, i32
  }
  func.func @transform_8(%arg0: i32) -> (i32, i32) {
    %c0_i32 = arith.constant 0 : i32
    %c0_i32_0 = arith.constant 0 : i32
    %c0_i32_1 = arith.constant 0 : i32
    return %c0_i32, %c0_i32_0 : i32, i32
  }
  func.func @transform_9(%arg0: i32) -> (i32, i32) {
    %c0_i32 = arith.constant 0 : i32
    %c0_i32_0 = arith.constant 0 : i32
    %c0_i32_1 = arith.constant 0 : i32
    return %c0_i32, %c0_i32_0 : i32, i32
  }
  func.func @transform_10(%arg0: i32) -> (i32, i32) {
    %c0_i32 = arith.constant 0 : i32
    %c0_i32_0 = arith.constant 0 : i32
    %c0_i32_1 = arith.constant 0 : i32
    return %c0_i32, %c0_i32_0 : i32, i32
  }
  func.func @transform_11(%arg0: i32) -> (i32, i32) {
    %c0_i32 = arith.constant 0 : i32
    %c0_i32_0 = arith.constant 0 : i32
    %c0_i32_1 = arith.constant 0 : i32
    return %c0_i32, %c0_i32_0 : i32, i32
  }
  func.func @transform_12(%arg0: i32) -> (i32, i32) {
    %c0_i32 = arith.constant 0 : i32
    %c0_i32_0 = arith.constant 0 : i32
    return %arg0, %c0_i32 : i32, i32
  }
}

module attributes {stable_mosaic.version = 11 : i64} {
  func.func @kernel(%arg0: i32, %arg1: memref<1x16x16x6xf32, #tpu.memory_space<vmem>>, %arg2: memref<1x6xf32, #tpu.memory_space<vmem>>, %arg3: memref<1x6xf32, #tpu.memory_space<vmem>>, %arg4: memref<54x8xbf16, #tpu.memory_space<vmem>>, %arg5: memref<1x8xf32, #tpu.memory_space<vmem>>, %arg6: memref<1x256x8xf32, #tpu.memory_space<vmem>>, %arg7: memref<1x2x8xf32, #tpu.memory_space<vmem>>) attributes {dimension_semantics = [#tpu.dimension_semantics<parallel>], iteration_bounds = array<i64: 2>, scalar_prefetch = 0 : i64, scratch_operands = 0 : i64, tpu.core_type = #tpu.core_type<tc>, window_params = [{transform_indices = @transform_0, window_bounds = array<i64: 1, 16, 16, 6>}, {pipeline_mode = #tpu.pipeline_mode<synchronous>, transform_indices = @transform_1, window_bounds = array<i64: 1, 6>}, {pipeline_mode = #tpu.pipeline_mode<synchronous>, transform_indices = @transform_2, window_bounds = array<i64: 1, 6>}, {pipeline_mode = #tpu.pipeline_mode<synchronous>, transform_indices = @transform_3, window_bounds = array<i64: 54, 8>}, {pipeline_mode = #tpu.pipeline_mode<synchronous>, transform_indices = @transform_4, window_bounds = array<i64: 1, 8>}, {transform_indices = @transform_5, window_bounds = array<i64: 1, 256, 8>}, {transform_indices = @transform_6, window_bounds = array<i64: 1, 2, 8>}]} {
    %c0 = arith.constant 0 : index
    %c0_0 = arith.constant 0 : index
    %0 = vector.load %arg2[%c0, %c0_0] : memref<1x6xf32, #tpu.memory_space<vmem>>, vector<1x6xf32>
    %1 = vector.shape_cast %0 : vector<1x6xf32> to vector<1x1x6xf32>
    %c0_1 = arith.constant 0 : index
    %c0_2 = arith.constant 0 : index
    %2 = vector.load %arg3[%c0_1, %c0_2] : memref<1x6xf32, #tpu.memory_space<vmem>>, vector<1x6xf32>
    %3 = vector.shape_cast %2 : vector<1x6xf32> to vector<1x1x6xf32>
    %c0_3 = arith.constant 0 : index
    %c0_4 = arith.constant 0 : index
    %c0_5 = arith.constant 0 : index
    %c0_6 = arith.constant 0 : index
    %4 = vector.load %arg1[%c0_3, %c0_4, %c0_5, %c0_6] : memref<1x16x16x6xf32, #tpu.memory_space<vmem>>, vector<1x16x16x6xf32>
    %5 = vector.shape_cast %4 : vector<1x16x16x6xf32> to vector<16x16x6xf32>
    %6 = vector.broadcast %1 : vector<1x1x6xf32> to vector<16x16x6xf32>
    %7 = arith.mulf %5, %6 : vector<16x16x6xf32>
    %8 = vector.broadcast %3 : vector<1x1x6xf32> to vector<16x16x6xf32>
    %9 = arith.addf %7, %8 : vector<16x16x6xf32>
    %cst = arith.constant 0.000000e+00 : f32
    %10 = vector.broadcast %cst : f32 to vector<16x16x6xf32>
    %11 = arith.maximumf %9, %10 : vector<16x16x6xf32>
    %12 = arith.truncf %11 : vector<16x16x6xf32> to vector<16x16x6xbf16>
    %cst_7 = arith.constant 0.000000e+00 : bf16
    %13 = vector.broadcast %cst_7 : bf16 to vector<1x16x6xbf16>
    %cst_8 = arith.constant 0.000000e+00 : bf16
    %14 = vector.broadcast %cst_8 : bf16 to vector<18x1x6xbf16>
    %15 = tpu.concatenate %13, %12, %13 in 0 : vector<1x16x6xbf16>, vector<16x16x6xbf16>, vector<1x16x6xbf16> -> vector<18x16x6xbf16>
    %16 = tpu.concatenate %14, %15, %14 in 1 : vector<18x1x6xbf16>, vector<18x16x6xbf16>, vector<18x1x6xbf16> -> vector<18x18x6xbf16>
    %17 = vector.extract_strided_slice %16 {offsets = [0, 0, 0], sizes = [16, 16, 6], strides = [1, 1, 1]} : vector<18x18x6xbf16> to vector<16x16x6xbf16>
    %18 = vector.shape_cast %17 : vector<16x16x6xbf16> to vector<256x6xbf16>
    %19 = vector.extract_strided_slice %16 {offsets = [0, 1, 0], sizes = [16, 16, 6], strides = [1, 1, 1]} : vector<18x18x6xbf16> to vector<16x16x6xbf16>
    %20 = vector.shape_cast %19 : vector<16x16x6xbf16> to vector<256x6xbf16>
    %21 = vector.extract_strided_slice %16 {offsets = [0, 2, 0], sizes = [16, 16, 6], strides = [1, 1, 1]} : vector<18x18x6xbf16> to vector<16x16x6xbf16>
    %22 = vector.shape_cast %21 : vector<16x16x6xbf16> to vector<256x6xbf16>
    %23 = vector.extract_strided_slice %16 {offsets = [1, 0, 0], sizes = [16, 16, 6], strides = [1, 1, 1]} : vector<18x18x6xbf16> to vector<16x16x6xbf16>
    %24 = vector.shape_cast %23 : vector<16x16x6xbf16> to vector<256x6xbf16>
    %25 = vector.extract_strided_slice %16 {offsets = [1, 1, 0], sizes = [16, 16, 6], strides = [1, 1, 1]} : vector<18x18x6xbf16> to vector<16x16x6xbf16>
    %26 = vector.shape_cast %25 : vector<16x16x6xbf16> to vector<256x6xbf16>
    %27 = vector.extract_strided_slice %16 {offsets = [1, 2, 0], sizes = [16, 16, 6], strides = [1, 1, 1]} : vector<18x18x6xbf16> to vector<16x16x6xbf16>
    %28 = vector.shape_cast %27 : vector<16x16x6xbf16> to vector<256x6xbf16>
    %29 = vector.extract_strided_slice %16 {offsets = [2, 0, 0], sizes = [16, 16, 6], strides = [1, 1, 1]} : vector<18x18x6xbf16> to vector<16x16x6xbf16>
    %30 = vector.shape_cast %29 : vector<16x16x6xbf16> to vector<256x6xbf16>
    %31 = vector.extract_strided_slice %16 {offsets = [2, 1, 0], sizes = [16, 16, 6], strides = [1, 1, 1]} : vector<18x18x6xbf16> to vector<16x16x6xbf16>
    %32 = vector.shape_cast %31 : vector<16x16x6xbf16> to vector<256x6xbf16>
    %33 = vector.extract_strided_slice %16 {offsets = [2, 2, 0], sizes = [16, 16, 6], strides = [1, 1, 1]} : vector<18x18x6xbf16> to vector<16x16x6xbf16>
    %34 = vector.shape_cast %33 : vector<16x16x6xbf16> to vector<256x6xbf16>
    %35 = tpu.concatenate %18, %20, %22, %24, %26, %28, %30, %32, %34 in 1 : vector<256x6xbf16>, vector<256x6xbf16>, vector<256x6xbf16>, vector<256x6xbf16>, vector<256x6xbf16>, vector<256x6xbf16>, vector<256x6xbf16>, vector<256x6xbf16>, vector<256x6xbf16> -> vector<256x54xbf16>
    %c0_9 = arith.constant 0 : index
    %c0_10 = arith.constant 0 : index
    %36 = vector.load %arg4[%c0_9, %c0_10] : memref<54x8xbf16, #tpu.memory_space<vmem>>, vector<54x8xbf16>
    %cst_11 = arith.constant dense<0.000000e+00> : vector<256x8xf32>
    %37 = tpu.matmul %35, %36, %cst_11 {dimension_numbers = #tpu.dot_dimension_numbers<[1], [0], [0], [1], [0, 0, 1, 1], [], []>} : vector<256x54xbf16>, vector<54x8xbf16>, vector<256x8xf32> -> vector<256x8xf32>
    %c0_12 = arith.constant 0 : index
    %c0_13 = arith.constant 0 : index
    %38 = vector.load %arg5[%c0_12, %c0_13] : memref<1x8xf32, #tpu.memory_space<vmem>>, vector<1x8xf32>
    %39 = vector.broadcast %38 : vector<1x8xf32> to vector<256x8xf32>
    %40 = arith.addf %37, %39 : vector<256x8xf32>
    %c0_14 = arith.constant 0 : index
    %c0_15 = arith.constant 0 : index
    %c0_16 = arith.constant 0 : index
    %41 = vector.load %arg6[%c0_14, %c0_15, %c0_16] : memref<1x256x8xf32, #tpu.memory_space<vmem>>, vector<1x256x8xf32>
    %42 = vector.shape_cast %41 : vector<1x256x8xf32> to vector<256x8xf32>
    %43 = vector.shape_cast %40 : vector<256x8xf32> to vector<1x256x8xf32>
    tpu.vector_store %arg6[%c0_14, %c0_15, %c0_16], %43 {strides = array<i32>} : memref<1x256x8xf32, #tpu.memory_space<vmem>>, vector<1x256x8xf32>,
    %cst_17 = arith.constant dense<0.000000e+00> : vector<8xf32>
    %44 = vector.multi_reduction <add>, %40, %cst_17 [0] : vector<256x8xf32> to vector<8xf32>
    %45 = vector.shape_cast %44 : vector<8xf32> to vector<1x8xf32>
    %46 = arith.mulf %40, %40 : vector<256x8xf32>
    %cst_18 = arith.constant dense<0.000000e+00> : vector<8xf32>
    %47 = vector.multi_reduction <add>, %46, %cst_18 [0] : vector<256x8xf32> to vector<8xf32>
    %48 = vector.shape_cast %47 : vector<8xf32> to vector<1x8xf32>
    %49 = tpu.concatenate %45, %48 in 0 : vector<1x8xf32>, vector<1x8xf32> -> vector<2x8xf32>
    %c0_19 = arith.constant 0 : index
    %c0_20 = arith.constant 0 : index
    %c0_21 = arith.constant 0 : index
    %50 = vector.load %arg7[%c0_19, %c0_20, %c0_21] : memref<1x2x8xf32, #tpu.memory_space<vmem>>, vector<1x2x8xf32>
    %51 = vector.shape_cast %50 : vector<1x2x8xf32> to vector<2x8xf32>
    %52 = vector.shape_cast %49 : vector<2x8xf32> to vector<1x2x8xf32>
    tpu.vector_store %arg7[%c0_19, %c0_20, %c0_21], %52 {strides = array<i32>} : memref<1x2x8xf32, #tpu.memory_space<vmem>>, vector<1x2x8xf32>,
    return
  }
  func.func @transform_0(%arg0: i32) -> (i32, i32, i32, i32) {
    %c0_i32 = arith.constant 0 : i32
    %c0_i32_0 = arith.constant 0 : i32
    %c0_i32_1 = arith.constant 0 : i32
    %c0_i32_2 = arith.constant 0 : i32
    return %arg0, %c0_i32, %c0_i32_0, %c0_i32_1 : i32, i32, i32, i32
  }
  func.func @transform_1(%arg0: i32) -> (i32, i32) {
    %c0_i32 = arith.constant 0 : i32
    %c0_i32_0 = arith.constant 0 : i32
    %c0_i32_1 = arith.constant 0 : i32
    return %c0_i32, %c0_i32_0 : i32, i32
  }
  func.func @transform_2(%arg0: i32) -> (i32, i32) {
    %c0_i32 = arith.constant 0 : i32
    %c0_i32_0 = arith.constant 0 : i32
    %c0_i32_1 = arith.constant 0 : i32
    return %c0_i32, %c0_i32_0 : i32, i32
  }
  func.func @transform_3(%arg0: i32) -> (i32, i32) {
    %c0_i32 = arith.constant 0 : i32
    %c0_i32_0 = arith.constant 0 : i32
    %c0_i32_1 = arith.constant 0 : i32
    return %c0_i32, %c0_i32_0 : i32, i32
  }
  func.func @transform_4(%arg0: i32) -> (i32, i32) {
    %c0_i32 = arith.constant 0 : i32
    %c0_i32_0 = arith.constant 0 : i32
    %c0_i32_1 = arith.constant 0 : i32
    return %c0_i32, %c0_i32_0 : i32, i32
  }
  func.func @transform_5(%arg0: i32) -> (i32, i32, i32) {
    %c0_i32 = arith.constant 0 : i32
    %c0_i32_0 = arith.constant 0 : i32
    %c0_i32_1 = arith.constant 0 : i32
    return %arg0, %c0_i32, %c0_i32_0 : i32, i32, i32
  }
  func.func @transform_6(%arg0: i32) -> (i32, i32, i32) {
    %c0_i32 = arith.constant 0 : i32
    %c0_i32_0 = arith.constant 0 : i32
    %c0_i32_1 = arith.constant 0 : i32
    return %arg0, %c0_i32, %c0_i32_0 : i32, i32, i32
  }
}

</mosaic_0001>

<llo_original>
// kernel: inception_forward.6
$region0: #{inception_forward.6}
  #allocation0 [shape = 'u32[]', space=smem, size = 0x4, offset = 0x4, fixed_abs, tag = 'smem constant byte address 0x4 - core index']
  #allocation1 [shape = 'u32[144,128]{1,0:T(1,128)}', space=vmem, size = 0x12000, scoped, tag = 'internal scratch']
  %s0 = inlined_call_operand.vmem [shape: f32[512,4], index: 0, kind: input, shape index: {}]
  %s1 = inlined_call_operand.vmem [shape: bf16[4,18], index: 1, kind: input, shape index: {}]
  %s2 = inlined_call_operand.vmem [shape: f32[1,18], index: 2, kind: input, shape index: {}]
  %s3 = inlined_call_operand.vmem [shape: f32[512,8], index: 3, kind: output, shape index: {0}]
  %s4 = inlined_call_operand.vmem [shape: f32[512,6], index: 4, kind: output, shape index: {1}]
  %s5 = inlined_call_operand.vmem [shape: f32[512,4], index: 5, kind: output, shape index: {2}]
  %s6 = inlined_call_operand.vmem [shape: f32[1,2,18], index: 6, kind: output, shape index: {3}]
  %7 = xla_tuple %s3, %s4, %s5, %s6
  %s8 = sld [smem:[#allocation0]]
  $region46: #{inception_forward.6} parent=0
    _
  %s10 = ssub.s32 1, %s8
  %s11 = scalar_select 0, %s10, %s8
  // Predicated region
  $region2: #{inception_forward.6} parent=0 // pred_check
    _
  $region3: #{inception_forward.6} parent=0 // pred_check_branch
    %13 = sbr.rel (0) target = $region5
  $region4: #{inception_forward.6} parent=0 // pred_region
    _
  $region5: #{inception_forward.6} parent=0 // pred_fallthru
    _
  // Predicated region
  $region6: #{inception_forward.6} parent=0 // pred_check
    _
  $region7: #{inception_forward.6} parent=0 // pred_check_branch
    %15 = sbr.rel (0) target = $region9
  $region8: #{inception_forward.6} parent=0 // pred_region
    _
  $region9: #{inception_forward.6} parent=0 // pred_fallthru
    _
  // Predicated region
  $region10: #{inception_forward.6} parent=0 // pred_check
    _
  $region11: #{inception_forward.6} parent=0 // pred_check_branch
    %17 = sbr.rel (0) target = $region13
  $region12: #{inception_forward.6} parent=0 // pred_region
    _
  $region13: #{inception_forward.6} parent=0 // pred_fallthru
    _
  %v19 = vld [vmem:[%s0] sm:$0xff]
  %v20 = vld [vmem:[%s0 + $0x8] sm:$0xff]
  %v21 = vld [vmem:[%s0 + $0x10] sm:$0xff]
  %v22 = vld [vmem:[%s0 + $0x18] sm:$0xff]
  %v23 = vld [vmem:[%s0 + $0x20] sm:$0xff]
  %v24 = vld [vmem:[%s0 + $0x28] sm:$0xff]
  %v25 = vld [vmem:[%s0 + $0x30] sm:$0xff]
  %v26 = vld [vmem:[%s0 + $0x38] sm:$0xff]
  %v27 = vld [vmem:[%s0 + $0x40] sm:$0xff]
  %v28 = vld [vmem:[%s0 + $0x48] sm:$0xff]
  %v29 = vld [vmem:[%s0 + $0x50] sm:$0xff]
  %v30 = vld [vmem:[%s0 + $0x58] sm:$0xff]
  %v31 = vld [vmem:[%s0 + $0x60] sm:$0xff]
  %v32 = vld [vmem:[%s0 + $0x68] sm:$0xff]
  %v33 = vld [vmem:[%s0 + $0x70] sm:$0xff]
  %v34 = vld [vmem:[%s0 + $0x78] sm:$0xff]
  %v35 = vld [vmem:[%s0 + $0x80] sm:$0xff]
  %v36 = vld [vmem:[%s0 + $0x88] sm:$0xff]
  %v37 = vld [vmem:[%s0 + $0x90] sm:$0xff]
  %v38 = vld [vmem:[%s0 + $0x98] sm:$0xff]
  %v39 = vld [vmem:[%s0 + $0xa0] sm:$0xff]
  %v40 = vld [vmem:[%s0 + $0xa8] sm:$0xff]
  %v41 = vld [vmem:[%s0 + $0xb0] sm:$0xff]
  %v42 = vld [vmem:[%s0 + $0xb8] sm:$0xff]
  %v43 = vld [vmem:[%s0 + $0xc0] sm:$0xff]
  %v44 = vld [vmem:[%s0 + $0xc8] sm:$0xff]
  %v45 = vld [vmem:[%s0 + $0xd0] sm:$0xff]
  %v46 = vld [vmem:[%s0 + $0xd8] sm:$0xff]
  %v47 = vld [vmem:[%s0 + $0xe0] sm:$0xff]
  %v48 = vld [vmem:[%s0 + $0xe8] sm:$0xff]
  %v49 = vld [vmem:[%s0 + $0xf0] sm:$0xff]
  %v50 = vld [vmem:[%s0 + $0xf8] sm:$0xff]
  %v51 = vld [vmem:[%s0 + $0x100] sm:$0xff]
  %v52 = vld [vmem:[%s0 + $0x108] sm:$0xff]
  %v53 = vld [vmem:[%s0 + $0x110] sm:$0xff]
  %v54 = vld [vmem:[%s0 + $0x118] sm:$0xff]
  %v55 = vld [vmem:[%s0 + $0x120] sm:$0xff]
  %v56 = vld [vmem:[%s0 + $0x128] sm:$0xff]
  %v57 = vld [vmem:[%s0 + $0x130] sm:$0xff]
  %v58 = vld [vmem:[%s0 + $0x138] sm:$0xff]
  %v59 = vld [vmem:[%s0 + $0x140] sm:$0xff]
  %v60 = vld [vmem:[%s0 + $0x148] sm:$0xff]
  %v61 = vld [vmem:[%s0 + $0x150] sm:$0xff]
  %v62 = vld [vmem:[%s0 + $0x158] sm:$0xff]
  %v63 = vld [vmem:[%s0 + $0x160] sm:$0xff]
  %v64 = vld [vmem:[%s0 + $0x168] sm:$0xff]
  %v65 = vld [vmem:[%s0 + $0x170] sm:$0xff]
  %v66 = vld [vmem:[%s0 + $0x178] sm:$0xff]
  %v67 = vld [vmem:[%s0 + $0x180] sm:$0xff]
  %v68 = vld [vmem:[%s0 + $0x188] sm:$0xff]
  %v69 = vld [vmem:[%s0 + $0x190] sm:$0xff]
  %v70 = vld [vmem:[%s0 + $0x198] sm:$0xff]
  %v71 = vld [vmem:[%s0 + $0x1a0] sm:$0xff]
  %v72 = vld [vmem:[%s0 + $0x1a8] sm:$0xff]
  %v73 = vld [vmem:[%s0 + $0x1b0] sm:$0xff]
  %v74 = vld [vmem:[%s0 + $0x1b8] sm:$0xff]
  %v75 = vld [vmem:[%s0 + $0x1c0] sm:$0xff]
  %v76 = vld [vmem:[%s0 + $0x1c8] sm:$0xff]
  %v77 = vld [vmem:[%s0 + $0x1d0] sm:$0xff]
  %v78 = vld [vmem:[%s0 + $0x1d8] sm:$0xff]
  %v79 = vld [vmem:[%s0 + $0x1e0] sm:$0xff]
  %v80 = vld [vmem:[%s0 + $0x1e8] sm:$0xff]
  %v81 = vld [vmem:[%s0 + $0x1f0] sm:$0xff]
  %v82 = vld [vmem:[%s0 + $0x1f8] sm:$0xff]
  %v83 = vpack.c.bf16 %v20, %v19
  %v84 = vpack.c.bf16 %v22, %v21
  %v85 = vpack.c.bf16 %v24, %v23
  %v86 = vpack.c.bf16 %v26, %v25
  %v87 = vpack.c.bf16 %v28, %v27
  %v88 = vpack.c.bf16 %v30, %v29
  %v89 = vpack.c.bf16 %v32, %v31
  %v90 = vpack.c.bf16 %v34, %v33
  %v91 = vpack.c.bf16 %v36, %v35
  %v92 = vpack.c.bf16 %v38, %v37
  %v93 = vpack.c.bf16 %v40, %v39
  %v94 = vpack.c.bf16 %v42, %v41
  %v95 = vpack.c.bf16 %v44, %v43
  %v96 = vpack.c.bf16 %v46, %v45
  %v97 = vpack.c.bf16 %v48, %v47
  %v98 = vpack.c.bf16 %v50, %v49
  %v99 = vpack.c.bf16 %v52, %v51
  %v100 = vpack.c.bf16 %v54, %v53
  %v101 = vpack.c.bf16 %v56, %v55
  %v102 = vpack.c.bf16 %v58, %v57
  %v103 = vpack.c.bf16 %v60, %v59
  %v104 = vpack.c.bf16 %v62, %v61
  %v105 = vpack.c.bf16 %v64, %v63
  %v106 = vpack.c.bf16 %v66, %v65
  %v107 = vpack.c.bf16 %v68, %v67
  %v108 = vpack.c.bf16 %v70, %v69
  %v109 = vpack.c.bf16 %v72, %v71
  %v110 = vpack.c.bf16 %v74, %v73
  %v111 = vpack.c.bf16 %v76, %v75
  %v112 = vpack.c.bf16 %v78, %v77
  %v113 = vpack.c.bf16 %v80, %v79
  %v114 = vpack.c.bf16 %v82, %v81
  %v115 = vld [vmem:[%s1] sm:$0x3]
  %v116 = vld [vmem:[%s2] sm:$0x1]
  %v118 = vlaneseq
  %v119 = vshrl.u32 %v118, 7
  %v120 = vsub.s32 0, %v119
  %v121 = vrot.slane %v116, %v120
  %vm123 = vcmask 31744
  %v125 = vsel %vm123, %v83, 0
  %v128 = vsel %vm123, %v84, 0
  %v131 = vsel %vm123, %v85, 0
  %v134 = vsel %vm123, %v86, 0
  %v137 = vsel %vm123, %v87, 0
  %v140 = vsel %vm123, %v88, 0
  %v143 = vsel %vm123, %v89, 0
  %v146 = vsel %vm123, %v90, 0
  %v149 = vsel %vm123, %v91, 0
  %v152 = vsel %vm123, %v92, 0
  %v155 = vsel %vm123, %v93, 0
  %v158 = vsel %vm123, %v94, 0
  %v161 = vsel %vm123, %v95, 0
  %v164 = vsel %vm123, %v96, 0
  %v167 = vsel %vm123, %v97, 0
  %v170 = vsel %vm123, %v98, 0
  %v173 = vsel %vm123, %v99, 0
  %v176 = vsel %vm123, %v100, 0
  %v179 = vsel %vm123, %v101, 0
  %v182 = vsel %vm123, %v102, 0
  %v185 = vsel %vm123, %v103, 0
  %v188 = vsel %vm123, %v104, 0
  %v191 = vsel %vm123, %v105, 0
  %v194 = vsel %vm123, %v106, 0
  %v197 = vsel %vm123, %v107, 0
  %v200 = vsel %vm123, %v108, 0
  %v203 = vsel %vm123, %v109, 0
  %v206 = vsel %vm123, %v110, 0
  %v209 = vsel %vm123, %v111, 0
  %v212 = vsel %vm123, %v112, 0
  %v215 = vsel %vm123, %v113, 0
  %v218 = vsel %vm123, %v114, 0
  %vm220 = vcmask 1041408
  %v222 = vsel %vm220, %v115, 0
  %224 = vmatprep.subr.bf16.mxu0 0
  %225 = vmatpush1.bf16.msra.mxu0 %v222
  %226 = vmatprep.subr.bf16.mxu0 0
  %227 = vmatpush1.bf16.msra.mxu0 0
  %228 = vmatprep.subr.bf16.mxu0 0
  %229 = vmatpush1.bf16.msra.mxu0 0
  %230 = vmatprep.subr.bf16.mxu0 0
  %231 = vmatpush1.bf16.msra.mxu0 0
  %232 = vmatprep.subr.bf16.mxu0 0
  %233 = vmatpush1.bf16.msra.mxu0 0
  %234 = vmatprep.subr.bf16.mxu0 0
  %235 = vmatpush1.bf16.msra.mxu0 0
  %236 = vmatprep.subr.bf16.mxu0 0
  %237 = vmatpush1.bf16.msra.mxu0 0
  %238 = vmatprep.subr.bf16.mxu0 0
  %239 = vmatpush1.bf16.msra.mxu0 0
  %240 = vmatprep.subr.bf16.mxu0 0
  %241 = vmatpush1.bf16.msra.mxu0 0
  %242 = vmatprep.subr.bf16.mxu0 0
  %243 = vmatpush1.bf16.msra.mxu0 0
  %244 = vmatprep.subr.bf16.mxu0 0
  %245 = vmatpush1.bf16.msra.mxu0 0
  %246 = vmatprep.subr.bf16.mxu0 0
  %247 = vmatpush1.bf16.msra.mxu0 0
  %248 = vmatprep.subr.bf16.mxu0 0
  %249 = vmatpush1.bf16.msra.mxu0 0
  %250 = vmatprep.subr.bf16.mxu0 0
  %251 = vmatpush1.bf16.msra.mxu0 0
  %252 = vmatprep.subr.bf16.mxu0 0
  %253 = vmatpush1.bf16.msra.mxu0 0
  %254 = vmatprep.subr.bf16.mxu0 0
  %255 = vmatpush1.bf16.msra.mxu0 0
  %256 = vmatprep.mubr.bf16.mxu0 0
  %257 = vmatmul.mubr.bf16.gmra.mrb[0].mxu0 %v125
  %v258 = vpop.f32.mrb[0].mxu0
  %v259 = vadd.f32 %v121, %v258
  %v260 = vpop.f32.mrb[0].mxu0
  %v261 = vpop.f32.mrb[0].mxu0
  %v262 = vadd.f32 %v121, %v261
  %v263 = vpop.f32.mrb[0].mxu0
  %264 = vmatprep.mubr.bf16.mxu0 0
  %265 = vmatmul.mubr.bf16.gmra.mrb[0].mxu0 %v128
  %v266 = vpop.f32.mrb[0].mxu0
  %v267 = vadd.f32 %v121, %v266
  %v268 = vpop.f32.mrb[0].mxu0
  %v269 = vpop.f32.mrb[0].mxu0
  %v270 = vadd.f32 %v121, %v269
  %v271 = vpop.f32.mrb[0].mxu0
  %272 = vmatprep.mubr.bf16.mxu0 0
  %273 = vmatmul.mubr.bf16.gmra.mrb[0].mxu0 %v131
  %v274 = vpop.f32.mrb[0].mxu0
  %v275 = vadd.f32 %v121, %v274
  %v276 = vpop.f32.mrb[0].mxu0
  %v277 = vpop.f32.mrb[0].mxu0
  %v278 = vadd.f32 %v121, %v277
  %v279 = vpop.f32.mrb[0].mxu0
  %280 = vmatprep.mubr.bf16.mxu0 0
  %281 = vmatmul.mubr.bf16.gmra.mrb[0].mxu0 %v134
  %v282 = vpop.f32.mrb[0].mxu0
  %v283 = vadd.f32 %v121, %v282
  %v284 = vpop.f32.mrb[0].mxu0
  %v285 = vpop.f32.mrb[0].mxu0
  %v286 = vadd.f32 %v121, %v285
  %v287 = vpop.f32.mrb[0].mxu0
  %288 = vmatprep.mubr.bf16.mxu0 0
  %289 = vmatmul.mubr.bf16.gmra.mrb[0].mxu0 %v137
  %v290 = vpop.f32.mrb[0].mxu0
  %v291 = vadd.f32 %v121, %v290
  %v292 = vpop.f32.mrb[0].mxu0
  %v293 = vpop.f32.mrb[0].mxu0
  %v294 = vadd.f32 %v121, %v293
  %v295 = vpop.f32.mrb[0].mxu0
  %296 = vmatprep.mubr.bf16.mxu0 0
  %297 = vmatmul.mubr.bf16.gmra.mrb[0].mxu0 %v140
  %v298 = vpop.f32.mrb[0].mxu0
  %v299 = vadd.f32 %v121, %v298
  %v300 = vpop.f32.mrb[0].mxu0
  %v301 = vpop.f32.mrb[0].mxu0
  %v302 = vadd.f32 %v121, %v301
  %v303 = vpop.f32.mrb[0].mxu0
  %304 = vmatprep.mubr.bf16.mxu0 0
  %305 = vmatmul.mubr.bf16.gmra.mrb[0].mxu0 %v143
  %v306 = vpop.f32.mrb[0].mxu0
  %v307 = vadd.f32 %v121, %v306
  %v308 = vpop.f32.mrb[0].mxu0
  %v309 = vpop.f32.mrb[0].mxu0
  %v310 = vadd.f32 %v121, %v309
  %v311 = vpop.f32.mrb[0].mxu0
  %312 = vmatprep.mubr.bf16.mxu0 0
  %313 = vmatmul.mubr.bf16.gmra.mrb[0].mxu0 %v146
  %v314 = vpop.f32.mrb[0].mxu0
  %v315 = vadd.f32 %v121, %v314
  %v316 = vpop.f32.mrb[0].mxu0
  %v317 = vpop.f32.mrb[0].mxu0
  %v318 = vadd.f32 %v121, %v317
  %v319 = vpop.f32.mrb[0].mxu0
  %320 = vmatprep.mubr.bf16.mxu0 0
  %321 = vmatmul.mubr.bf16.gmra.mrb[0].mxu0 %v149
  %v322 = vpop.f32.mrb[0].mxu0
  %v323 = vadd.f32 %v121, %v322
  %v324 = vpop.f32.mrb[0].mxu0
  %v325 = vpop.f32.mrb[0].mxu0
  %v326 = vadd.f32 %v121, %v325
  %v327 = vpop.f32.mrb[0].mxu0
  %328 = vmatprep.mubr.bf16.mxu0 0
  %329 = vmatmul.mubr.bf16.gmra.mrb[0].mxu0 %v152
  %v330 = vpop.f32.mrb[0].mxu0
  %v331 = vadd.f32 %v121, %v330
  %v332 = vpop.f32.mrb[0].mxu0
  %v333 = vpop.f32.mrb[0].mxu0
  %v334 = vadd.f32 %v121, %v333
  %v335 = vpop.f32.mrb[0].mxu0
  %336 = vmatprep.mubr.bf16.mxu0 0
  %337 = vmatmul.mubr.bf16.gmra.mrb[0].mxu0 %v155
  %v338 = vpop.f32.mrb[0].mxu0
  %v339 = vadd.f32 %v121, %v338
  %v340 = vpop.f32.mrb[0].mxu0
  %v341 = vpop.f32.mrb[0].mxu0
  %v342 = vadd.f32 %v121, %v341
  %v343 = vpop.f32.mrb[0].mxu0
  %344 = vmatprep.mubr.bf16.mxu0 0
  %345 = vmatmul.mubr.bf16.gmra.mrb[0].mxu0 %v158
  %v346 = vpop.f32.mrb[0].mxu0
  %v347 = vadd.f32 %v121, %v346
  %v348 = vpop.f32.mrb[0].mxu0
  %v349 = vpop.f32.mrb[0].mxu0
  %v350 = vadd.f32 %v121, %v349
  %v351 = vpop.f32.mrb[0].mxu0
  %352 = vmatprep.mubr.bf16.mxu0 0
  %353 = vmatmul.mubr.bf16.gmra.mrb[0].mxu0 %v161
  %v354 = vpop.f32.mrb[0].mxu0
  %v355 = vadd.f32 %v121, %v354
  %v356 = vpop.f32.mrb[0].mxu0
  %v357 = vpop.f32.mrb[0].mxu0
  %v358 = vadd.f32 %v121, %v357
  %v359 = vpop.f32.mrb[0].mxu0
  %360 = vmatprep.mubr.bf16.mxu0 0
  %361 = vmatmul.mubr.bf16.gmra.mrb[0].mxu0 %v164
  %v362 = vpop.f32.mrb[0].mxu0
  %v363 = vadd.f32 %v121, %v362
  %v364 = vpop.f32.mrb[0].mxu0
  %v365 = vpop.f32.mrb[0].mxu0
  %v366 = vadd.f32 %v121, %v365
  %v367 = vpop.f32.mrb[0].mxu0
  %368 = vmatprep.mubr.bf16.mxu0 0
  %369 = vmatmul.mubr.bf16.gmra.mrb[0].mxu0 %v167
  %v370 = vpop.f32.mrb[0].mxu0
  %v371 = vadd.f32 %v121, %v370
  %v372 = vpop.f32.mrb[0].mxu0
  %v373 = vpop.f32.mrb[0].mxu0
  %v374 = vadd.f32 %v121, %v373
  %v375 = vpop.f32.mrb[0].mxu0
  %376 = vmatprep.mubr.bf16.mxu0 0
  %377 = vmatmul.mubr.bf16.gmra.mrb[0].mxu0 %v170
  %v378 = vpop.f32.mrb[0].mxu0
  %v379 = vadd.f32 %v121, %v378
  %v380 = vpop.f32.mrb[0].mxu0
  %v381 = vpop.f32.mrb[0].mxu0
  %v382 = vadd.f32 %v121, %v381
  %v383 = vpop.f32.mrb[0].mxu0
  %384 = vmatprep.mubr.bf16.mxu0 0
  %385 = vmatmul.mubr.bf16.gmra.mrb[0].mxu0 %v173
  %v386 = vpop.f32.mrb[0].mxu0
  %v387 = vadd.f32 %v121, %v386
  %v388 = vpop.f32.mrb[0].mxu0
  %v389 = vpop.f32.mrb[0].mxu0
  %v390 = vadd.f32 %v121, %v389
  %v391 = vpop.f32.mrb[0].mxu0
  %392 = vmatprep.mubr.bf16.mxu0 0
  %393 = vmatmul.mubr.bf16.gmra.mrb[0].mxu0 %v176
  %v394 = vpop.f32.mrb[0].mxu0
  %v395 = vadd.f32 %v121, %v394
  %v396 = vpop.f32.mrb[0].mxu0
  %v397 = vpop.f32.mrb[0].mxu0
  %v398 = vadd.f32 %v121, %v397
  %v399 = vpop.f32.mrb[0].mxu0
  %400 = vmatprep.mubr.bf16.mxu0 0
  %401 = vmatmul.mubr.bf16.gmra.mrb[0].mxu0 %v179
  %v402 = vpop.f32.mrb[0].mxu0
  %v403 = vadd.f32 %v121, %v402
  %v404 = vpop.f32.mrb[0].mxu0
  %v405 = vpop.f32.mrb[0].mxu0
  %v406 = vadd.f32 %v121, %v405
  %v407 = vpop.f32.mrb[0].mxu0
  %408 = vmatprep.mubr.bf16.mxu0 0
  %409 = vmatmul.mubr.bf16.gmra.mrb[0].mxu0 %v182
  %v410 = vpop.f32.mrb[0].mxu0
  %v411 = vadd.f32 %v121, %v410
  %v412 = vpop.f32.mrb[0].mxu0
  %v413 = vpop.f32.mrb[0].mxu0
  %v414 = vadd.f32 %v121, %v413
  %v415 = vpop.f32.mrb[0].mxu0
  %416 = vmatprep.mubr.bf16.mxu0 0
  %417 = vmatmul.mubr.bf16.gmra.mrb[0].mxu0 %v185
  %v418 = vpop.f32.mrb[0].mxu0
  %v419 = vadd.f32 %v121, %v418
  %v420 = vpop.f32.mrb[0].mxu0
  %v421 = vpop.f32.mrb[0].mxu0
  %v422 = vadd.f32 %v121, %v421
  %v423 = vpop.f32.mrb[0].mxu0
  %424 = vmatprep.mubr.bf16.mxu0 0
  %425 = vmatmul.mubr.bf16.gmra.mrb[0].mxu0 %v188
  %v426 = vpop.f32.mrb[0].mxu0
  %v427 = vadd.f32 %v121, %v426
  %v428 = vpop.f32.mrb[0].mxu0
  %v429 = vpop.f32.mrb[0].mxu0
  %v430 = vadd.f32 %v121, %v429
  %v431 = vpop.f32.mrb[0].mxu0
  %432 = vmatprep.mubr.bf16.mxu0 0
  %433 = vmatmul.mubr.bf16.gmra.mrb[0].mxu0 %v191
  %v434 = vpop.f32.mrb[0].mxu0
  %v435 = vadd.f32 %v121, %v434
  %v436 = vpop.f32.mrb[0].mxu0
  %v437 = vpop.f32.mrb[0].mxu0
  %v438 = vadd.f32 %v121, %v437
  %v439 = vpop.f32.mrb[0].mxu0
  %440 = vmatprep.mubr.bf16.mxu0 0
  %441 = vmatmul.mubr.bf16.gmra.mrb[0].mxu0 %v194
  %v442 = vpop.f32.mrb[0].mxu0
  %v443 = vadd.f32 %v121, %v442
  %v444 = vpop.f32.mrb[0].mxu0
  %v445 = vpop.f32.mrb[0].mxu0
  %v446 = vadd.f32 %v121, %v445
  %v447 = vpop.f32.mrb[0].mxu0
  %448 = vmatprep.mubr.bf16.mxu0 0
  %449 = vmatmul.mubr.bf16.gmra.mrb[0].mxu0 %v197
  %v450 = vpop.f32.mrb[0].mxu0
  %v451 = vadd.f32 %v121, %v450
  %v452 = vpop.f32.mrb[0].mxu0
  %v453 = vpop.f32.mrb[0].mxu0
  %v454 = vadd.f32 %v121, %v453
  %v455 = vpop.f32.mrb[0].mxu0
  %456 = vmatprep.mubr.bf16.mxu0 0
  %457 = vmatmul.mubr.bf16.gmra.mrb[0].mxu0 %v200
  %v458 = vpop.f32.mrb[0].mxu0
  %v459 = vadd.f32 %v121, %v458
  %v460 = vpop.f32.mrb[0].mxu0
  %v461 = vpop.f32.mrb[0].mxu0
  %v462 = vadd.f32 %v121, %v461
  %v463 = vpop.f32.mrb[0].mxu0
  %464 = vmatprep.mubr.bf16.mxu0 0
  %465 = vmatmul.mubr.bf16.gmra.mrb[0].mxu0 %v203
  %v466 = vpop.f32.mrb[0].mxu0
  %v467 = vadd.f32 %v121, %v466
  %v468 = vpop.f32.mrb[0].mxu0
  %v469 = vpop.f32.mrb[0].mxu0
  %v470 = vadd.f32 %v121, %v469
  %v471 = vpop.f32.mrb[0].mxu0
  %472 = vmatprep.mubr.bf16.mxu0 0
  %473 = vmatmul.mubr.bf16.gmra.mrb[0].mxu0 %v206
  %v474 = vpop.f32.mrb[0].mxu0
  %v475 = vadd.f32 %v121, %v474
  %v476 = vpop.f32.mrb[0].mxu0
  %v477 = vpop.f32.mrb[0].mxu0
  %v478 = vadd.f32 %v121, %v477
  %v479 = vpop.f32.mrb[0].mxu0
  %480 = vmatprep.mubr.bf16.mxu0 0
  %481 = vmatmul.mubr.bf16.gmra.mrb[0].mxu0 %v209
  %v482 = vpop.f32.mrb[0].mxu0
  %v483 = vadd.f32 %v121, %v482
  %v484 = vpop.f32.mrb[0].mxu0
  %v485 = vpop.f32.mrb[0].mxu0
  %v486 = vadd.f32 %v121, %v485
  %v487 = vpop.f32.mrb[0].mxu0
  %488 = vmatprep.mubr.bf16.mxu0 0
  %489 = vmatmul.mubr.bf16.gmra.mrb[0].mxu0 %v212
  %v490 = vpop.f32.mrb[0].mxu0
  %v491 = vadd.f32 %v121, %v490
  %v492 = vpop.f32.mrb[0].mxu0
  %v493 = vpop.f32.mrb[0].mxu0
  %v494 = vadd.f32 %v121, %v493
  %v495 = vpop.f32.mrb[0].mxu0
  %496 = vmatprep.mubr.bf16.mxu0 0
  %497 = vmatmul.mubr.bf16.gmra.mrb[0].mxu0 %v215
  %v498 = vpop.f32.mrb[0].mxu0
  %v499 = vadd.f32 %v121, %v498
  %v500 = vpop.f32.mrb[0].mxu0
  %v501 = vpop.f32.mrb[0].mxu0
  %v502 = vadd.f32 %v121, %v501
  %v503 = vpop.f32.mrb[0].mxu0
  %504 = vmatprep.mubr.bf16.mxu0 0
  %505 = vmatmul.mubr.bf16.gmra.mrb[0].mxu0 %v218
  %v506 = vpop.f32.mrb[0].mxu0
  %v507 = vadd.f32 %v121, %v506
  %v508 = vpop.f32.mrb[0].mxu0
  %v509 = vpop.f32.mrb[0].mxu0
  %v510 = vadd.f32 %v121, %v509
  %v511 = vpop.f32.mrb[0].mxu0
  %512 = vdwg.mxu0
  %vm513 = vcmask 64512
  %514 = vst.msk [vmem:[%s3] sm:$0xff] %vm513, %v259
  %515 = vst.msk [vmem:[%s3 + $0x8] sm:$0xff] %vm513, %v262
  %516 = vst.msk [vmem:[%s3 + $0x10] sm:$0xff] %vm513, %v267
  %517 = vst.msk [vmem:[%s3 + $0x18] sm:$0xff] %vm513, %v270
  %518 = vst.msk [vmem:[%s3 + $0x20] sm:$0xff] %vm513, %v275
  %519 = vst.msk [vmem:[%s3 + $0x28] sm:$0xff] %vm513, %v278
  %520 = vst.msk [vmem:[%s3 + $0x30] sm:$0xff] %vm513, %v283
  %521 = vst.msk [vmem:[%s3 + $0x38] sm:$0xff] %vm513, %v286
  %522 = vst.msk [vmem:[%s3 + $0x40] sm:$0xff] %vm513, %v291
  %523 = vst.msk [vmem:[%s3 + $0x48] sm:$0xff] %vm513, %v294
  %524 = vst.msk [vmem:[%s3 + $0x50] sm:$0xff] %vm513, %v299
  %525 = vst.msk [vmem:[%s3 + $0x58] sm:$0xff] %vm513, %v302
  %526 = vst.msk [vmem:[%s3 + $0x60] sm:$0xff] %vm513, %v307
  %527 = vst.msk [vmem:[%s3 + $0x68] sm:$0xff] %vm513, %v310
  %528 = vst.msk [vmem:[%s3 + $0x70] sm:$0xff] %vm513, %v315
  %529 = vst.msk [vmem:[%s3 + $0x78] sm:$0xff] %vm513, %v318
  %530 = vst.msk [vmem:[%s3 + $0x80] sm:$0xff] %vm513, %v323
  %531 = vst.msk [vmem:[%s3 + $0x88] sm:$0xff] %vm513, %v326
  %532 = vst.msk [vmem:[%s3 + $0x90] sm:$0xff] %vm513, %v331
  %533 = vst.msk [vmem:[%s3 + $0x98] sm:$0xff] %vm513, %v334
  %534 = vst.msk [vmem:[%s3 + $0xa0] sm:$0xff] %vm513, %v339
  %535 = vst.msk [vmem:[%s3 + $0xa8] sm:$0xff] %vm513, %v342
  %536 = vst.msk [vmem:[%s3 + $0xb0] sm:$0xff] %vm513, %v347
  %537 = vst.msk [vmem:[%s3 + $0xb8] sm:$0xff] %vm513, %v350
  %538 = vst.msk [vmem:[%s3 + $0xc0] sm:$0xff] %vm513, %v355
  %539 = vst.msk [vmem:[%s3 + $0xc8] sm:$0xff] %vm513, %v358
  %540 = vst.msk [vmem:[%s3 + $0xd0] sm:$0xff] %vm513, %v363
  %541 = vst.msk [vmem:[%s3 + $0xd8] sm:$0xff] %vm513, %v366
  %542 = vst.msk [vmem:[%s3 + $0xe0] sm:$0xff] %vm513, %v371
  %543 = vst.msk [vmem:[%s3 + $0xe8] sm:$0xff] %vm513, %v374
  %544 = vst.msk [vmem:[%s3 + $0xf0] sm:$0xff] %vm513, %v379
  %545 = vst.msk [vmem:[%s3 + $0xf8] sm:$0xff] %vm513, %v382
  %546 = vst.msk [vmem:[%s3 + $0x100] sm:$0xff] %vm513, %v387
  %547 = vst.msk [vmem:[%s3 + $0x108] sm:$0xff] %vm513, %v390
  %548 = vst.msk [vmem:[%s3 + $0x110] sm:$0xff] %vm513, %v395
  %549 = vst.msk [vmem:[%s3 + $0x118] sm:$0xff] %vm513, %v398
  %550 = vst.msk [vmem:[%s3 + $0x120] sm:$0xff] %vm513, %v403
  %551 = vst.msk [vmem:[%s3 + $0x128] sm:$0xff] %vm513, %v406
  %552 = vst.msk [vmem:[%s3 + $0x130] sm:$0xff] %vm513, %v411
  %553 = vst.msk [vmem:[%s3 + $0x138] sm:$0xff] %vm513, %v414
  %554 = vst.msk [vmem:[%s3 + $0x140] sm:$0xff] %vm513, %v419
  %555 = vst.msk [vmem:[%s3 + $0x148] sm:$0xff] %vm513, %v422
  %556 = vst.msk [vmem:[%s3 + $0x150] sm:$0xff] %vm513, %v427
  %557 = vst.msk [vmem:[%s3 + $0x158] sm:$0xff] %vm513, %v430
  %558 = vst.msk [vmem:[%s3 + $0x160] sm:$0xff] %vm513, %v435
  %559 = vst.msk [vmem:[%s3 + $0x168] sm:$0xff] %vm513, %v438
  %560 = vst.msk [vmem:[%s3 + $0x170] sm:$0xff] %vm513, %v443
  %561 = vst.msk [vmem:[%s3 + $0x178] sm:$0xff] %vm513, %v446
  %562 = vst.msk [vmem:[%s3 + $0x180] sm:$0xff] %vm513, %v451
  %563 = vst.msk [vmem:[%s3 + $0x188] sm:$0xff] %vm513, %v454
  %564 = vst.msk [vmem:[%s3 + $0x190] sm:$0xff] %vm513, %v459
  %565 = vst.msk [vmem:[%s3 + $0x198] sm:$0xff] %vm513, %v462
  %566 = vst.msk [vmem:[%s3 + $0x1a0] sm:$0xff] %vm513, %v467
  %567 = vst.msk [vmem:[%s3 + $0x1a8] sm:$0xff] %vm513, %v470
  %568 = vst.msk [vmem:[%s3 + $0x1b0] sm:$0xff] %vm513, %v475
  %569 = vst.msk [vmem:[%s3 + $0x1b8] sm:$0xff] %vm513, %v478
  %570 = vst.msk [vmem:[%s3 + $0x1c0] sm:$0xff] %vm513, %v483
  %571 = vst.msk [vmem:[%s3 + $0x1c8] sm:$0xff] %vm513, %v486
  %572 = vst.msk [vmem:[%s3 + $0x1d0] sm:$0xff] %vm513, %v491
  %573 = vst.msk [vmem:[%s3 + $0x1d8] sm:$0xff] %vm513, %v494
  %574 = vst.msk [vmem:[%s3 + $0x1e0] sm:$0xff] %vm513, %v499
  %575 = vst.msk [vmem:[%s3 + $0x1e8] sm:$0xff] %vm513, %v502
  %576 = vst.msk [vmem:[%s3 + $0x1f0] sm:$0xff] %vm513, %v507
  %577 = vst.msk [vmem:[%s3 + $0x1f8] sm:$0xff] %vm513, %v510
  %642 = vrot.lane.b32.xlu0 %v259, 120
  %v643 = vpop.permute.xlu0 %642
  %644 = vrot.lane.b32.xlu0 %v262, 120
  %v645 = vpop.permute.xlu0 %644
  %646 = vrot.lane.b32.xlu0 %v267, 120
  %v647 = vpop.permute.xlu0 %646
  %648 = vrot.lane.b32.xlu0 %v270, 120
  %v649 = vpop.permute.xlu0 %648
  %650 = vrot.lane.b32.xlu0 %v275, 120
  %v651 = vpop.permute.xlu0 %650
  %652 = vrot.lane.b32.xlu0 %v278, 120
  %v653 = vpop.permute.xlu0 %652
  %654 = vrot.lane.b32.xlu0 %v283, 120
  %v655 = vpop.permute.xlu0 %654
  %656 = vrot.lane.b32.xlu0 %v286, 120
  %v657 = vpop.permute.xlu0 %656
  %658 = vrot.lane.b32.xlu0 %v291, 120
  %v659 = vpop.permute.xlu0 %658
  %660 = vrot.lane.b32.xlu0 %v294, 120
  %v661 = vpop.permute.xlu0 %660
  %662 = vrot.lane.b32.xlu0 %v299, 120
  %v663 = vpop.permute.xlu0 %662
  %664 = vrot.lane.b32.xlu0 %v302, 120
  %v665 = vpop.permute.xlu0 %664
  %666 = vrot.lane.b32.xlu0 %v307, 120
  %v667 = vpop.permute.xlu0 %666
  %668 = vrot.lane.b32.xlu0 %v310, 120
  %v669 = vpop.permute.xlu0 %668
  %670 = vrot.lane.b32.xlu0 %v315, 120
  %v671 = vpop.permute.xlu0 %670
  %672 = vrot.lane.b32.xlu0 %v318, 120
  %v673 = vpop.permute.xlu0 %672
  %674 = vrot.lane.b32.xlu0 %v323, 120
  %v675 = vpop.permute.xlu0 %674
  %676 = vrot.lane.b32.xlu0 %v326, 120
  %v677 = vpop.permute.xlu0 %676
  %678 = vrot.lane.b32.xlu0 %v331, 120
  %v679 = vpop.permute.xlu0 %678
  %680 = vrot.lane.b32.xlu0 %v334, 120
  %v681 = vpop.permute.xlu0 %680
  %682 = vrot.lane.b32.xlu0 %v339, 120
  %v683 = vpop.permute.xlu0 %682
  %684 = vrot.lane.b32.xlu0 %v342, 120
  %v685 = vpop.permute.xlu0 %684
  %686 = vrot.lane.b32.xlu0 %v347, 120
  %v687 = vpop.permute.xlu0 %686
  %688 = vrot.lane.b32.xlu0 %v350, 120
  %v689 = vpop.permute.xlu0 %688
  %690 = vrot.lane.b32.xlu0 %v355, 120
  %v691 = vpop.permute.xlu0 %690
  %692 = vrot.lane.b32.xlu0 %v358, 120
  %v693 = vpop.permute.xlu0 %692
  %694 = vrot.lane.b32.xlu0 %v363, 120
  %v695 = vpop.permute.xlu0 %694
  %696 = vrot.lane.b32.xlu0 %v366, 120
  %v697 = vpop.permute.xlu0 %696
  %698 = vrot.lane.b32.xlu0 %v371, 120
  %v699 = vpop.permute.xlu0 %698
  %700 = vrot.lane.b32.xlu0 %v374, 120
  %v701 = vpop.permute.xlu0 %700
  %702 = vrot.lane.b32.xlu0 %v379, 120
  %v703 = vpop.permute.xlu0 %702
  %704 = vrot.lane.b32.xlu0 %v382, 120
  %v705 = vpop.permute.xlu0 %704
  %706 = vrot.lane.b32.xlu0 %v387, 120
  %v707 = vpop.permute.xlu0 %706
  %708 = vrot.lane.b32.xlu0 %v390, 120
  %v709 = vpop.permute.xlu0 %708
  %710 = vrot.lane.b32.xlu0 %v395, 120
  %v711 = vpop.permute.xlu0 %710
  %712 = vrot.lane.b32.xlu0 %v398, 120
  %v713 = vpop.permute.xlu0 %712
  %714 = vrot.lane.b32.xlu0 %v403, 120
  %v715 = vpop.permute.xlu0 %714
  %716 = vrot.lane.b32.xlu0 %v406, 120
  %v717 = vpop.permute.xlu0 %716
  %718 = vrot.lane.b32.xlu0 %v411, 120
  %v719 = vpop.permute.xlu0 %718
  %720 = vrot.lane.b32.xlu0 %v414, 120
  %v721 = vpop.permute.xlu0 %720
  %722 = vrot.lane.b32.xlu0 %v419, 120
  %v723 = vpop.permute.xlu0 %722
  %724 = vrot.lane.b32.xlu0 %v422, 120
  %v725 = vpop.permute.xlu0 %724
  %726 = vrot.lane.b32.xlu0 %v427, 120
  %v727 = vpop.permute.xlu0 %726
  %728 = vrot.lane.b32.xlu0 %v430, 120
  %v729 = vpop.permute.xlu0 %728
  %730 = vrot.lane.b32.xlu0 %v435, 120
  %v731 = vpop.permute.xlu0 %730
  %732 = vrot.lane.b32.xlu0 %v438, 120
  %v733 = vpop.permute.xlu0 %732
  %734 = vrot.lane.b32.xlu0 %v443, 120
  %v735 = vpop.permute.xlu0 %734
  %736 = vrot.lane.b32.xlu0 %v446, 120
  %v737 = vpop.permute.xlu0 %736
  %738 = vrot.lane.b32.xlu0 %v451, 120
  %v739 = vpop.permute.xlu0 %738
  %740 = vrot.lane.b32.xlu0 %v454, 120
  %v741 = vpop.permute.xlu0 %740
  %742 = vrot.lane.b32.xlu0 %v459, 120
  %v743 = vpop.permute.xlu0 %742
  %744 = vrot.lane.b32.xlu0 %v462, 120
  %v745 = vpop.permute.xlu0 %744
  %746 = vrot.lane.b32.xlu0 %v467, 120
  %v747 = vpop.permute.xlu0 %746
  %748 = vrot.lane.b32.xlu0 %v470, 120
  %v749 = vpop.permute.xlu0 %748
  %750 = vrot.lane.b32.xlu0 %v475, 120
  %v751 = vpop.permute.xlu0 %750
  %752 = vrot.lane.b32.xlu0 %v478, 120
  %v753 = vpop.permute.xlu0 %752
  %754 = vrot.lane.b32.xlu0 %v483, 120
  %v755 = vpop.permute.xlu0 %754
  %756 = vrot.lane.b32.xlu0 %v486, 120
  %v757 = vpop.permute.xlu0 %756
  %758 = vrot.lane.b32.xlu0 %v491, 120
  %v759 = vpop.permute.xlu0 %758
  %760 = vrot.lane.b32.xlu0 %v494, 120
  %v761 = vpop.permute.xlu0 %760
  %762 = vrot.lane.b32.xlu0 %v499, 120
  %v763 = vpop.permute.xlu0 %762
  %764 = vrot.lane.b32.xlu0 %v502, 120
  %v765 = vpop.permute.xlu0 %764
  %766 = vrot.lane.b32.xlu0 %v507, 120
  %v767 = vpop.permute.xlu0 %766
  %768 = vrot.lane.b32.xlu0 %v510, 120
  %v769 = vpop.permute.xlu0 %768
  %vm834 = vcmask 48128
  %835 = vst.msk [vmem:[%s4] sm:$0xff] %vm834, %v643
  %836 = vst.msk [vmem:[%s4 + $0x8] sm:$0xff] %vm834, %v645
  %837 = vst.msk [vmem:[%s4 + $0x10] sm:$0xff] %vm834, %v647
  %838 = vst.msk [vmem:[%s4 + $0x18] sm:$0xff] %vm834, %v649
  %839 = vst.msk [vmem:[%s4 + $0x20] sm:$0xff] %vm834, %v651
  %840 = vst.msk [vmem:[%s4 + $0x28] sm:$0xff] %vm834, %v653
  %841 = vst.msk [vmem:[%s4 + $0x30] sm:$0xff] %vm834, %v655
  %842 = vst.msk [vmem:[%s4 + $0x38] sm:$0xff] %vm834, %v657
  %843 = vst.msk [vmem:[%s4 + $0x40] sm:$0xff] %vm834, %v659
  %844 = vst.msk [vmem:[%s4 + $0x48] sm:$0xff] %vm834, %v661
  %845 = vst.msk [vmem:[%s4 + $0x50] sm:$0xff] %vm834, %v663
  %846 = vst.msk [vmem:[%s4 + $0x58] sm:$0xff] %vm834, %v665
  %847 = vst.msk [vmem:[%s4 + $0x60] sm:$0xff] %vm834, %v667
  %848 = vst.msk [vmem:[%s4 + $0x68] sm:$0xff] %vm834, %v669
  %849 = vst.msk [vmem:[%s4 + $0x70] sm:$0xff] %vm834, %v671
  %850 = vst.msk [vmem:[%s4 + $0x78] sm:$0xff] %vm834, %v673
  %851 = vst.msk [vmem:[%s4 + $0x80] sm:$0xff] %vm834, %v675
  %852 = vst.msk [vmem:[%s4 + $0x88] sm:$0xff] %vm834, %v677
  %853 = vst.msk [vmem:[%s4 + $0x90] sm:$0xff] %vm834, %v679
  %854 = vst.msk [vmem:[%s4 + $0x98] sm:$0xff] %vm834, %v681
  %855 = vst.msk [vmem:[%s4 + $0xa0] sm:$0xff] %vm834, %v683
  %856 = vst.msk [vmem:[%s4 + $0xa8] sm:$0xff] %vm834, %v685
  %857 = vst.msk [vmem:[%s4 + $0xb0] sm:$0xff] %vm834, %v687
  %858 = vst.msk [vmem:[%s4 + $0xb8] sm:$0xff] %vm834, %v689
  %859 = vst.msk [vmem:[%s4 + $0xc0] sm:$0xff] %vm834, %v691
  %860 = vst.msk [vmem:[%s4 + $0xc8] sm:$0xff] %vm834, %v693
  %861 = vst.msk [vmem:[%s4 + $0xd0] sm:$0xff] %vm834, %v695
  %862 = vst.msk [vmem:[%s4 + $0xd8] sm:$0xff] %vm834, %v697
  %863 = vst.msk [vmem:[%s4 + $0xe0] sm:$0xff] %vm834, %v699
  %864 = vst.msk [vmem:[%s4 + $0xe8] sm:$0xff] %vm834, %v701
  %865 = vst.msk [vmem:[%s4 + $0xf0] sm:$0xff] %vm834, %v703
  %866 = vst.msk [vmem:[%s4 + $0xf8] sm:$0xff] %vm834, %v705
  %867 = vst.msk [vmem:[%s4 + $0x100] sm:$0xff] %vm834, %v707
  %868 = vst.msk [vmem:[%s4 + $0x108] sm:$0xff] %vm834, %v709
  %869 = vst.msk [vmem:[%s4 + $0x110] sm:$0xff] %vm834, %v711
  %870 = vst.msk [vmem:[%s4 + $0x118] sm:$0xff] %vm834, %v713
  %871 = vst.msk [vmem:[%s4 + $0x120] sm:$0xff] %vm834, %v715
  %872 = vst.msk [vmem:[%s4 + $0x128] sm:$0xff] %vm834, %v717
  %873 = vst.msk [vmem:[%s4 + $0x130] sm:$0xff] %vm834, %v719
  %874 = vst.msk [vmem:[%s4 + $0x138] sm:$0xff] %vm834, %v721
  %875 = vst.msk [vmem:[%s4 + $0x140] sm:$0xff] %vm834, %v723
  %876 = vst.msk [vmem:[%s4 + $0x148] sm:$0xff] %vm834, %v725
  %877 = vst.msk [vmem:[%s4 + $0x150] sm:$0xff] %vm834, %v727
  %878 = vst.msk [vmem:[%s4 + $0x158] sm:$0xff] %vm834, %v729
  %879 = vst.msk [vmem:[%s4 + $0x160] sm:$0xff] %vm834, %v731
  %880 = vst.msk [vmem:[%s4 + $0x168] sm:$0xff] %vm834, %v733
  %881 = vst.msk [vmem:[%s4 + $0x170] sm:$0xff] %vm834, %v735
  %882 = vst.msk [vmem:[%s4 + $0x178] sm:$0xff] %vm834, %v737
  %883 = vst.msk [vmem:[%s4 + $0x180] sm:$0xff] %vm834, %v739
  %884 = vst.msk [vmem:[%s4 + $0x188] sm:$0xff] %vm834, %v741
  %885 = vst.msk [vmem:[%s4 + $0x190] sm:$0xff] %vm834, %v743
  %886 = vst.msk [vmem:[%s4 + $0x198] sm:$0xff] %vm834, %v745
  %887 = vst.msk [vmem:[%s4 + $0x1a0] sm:$0xff] %vm834, %v747
  %888 = vst.msk [vmem:[%s4 + $0x1a8] sm:$0xff] %vm834, %v749
  %889 = vst.msk [vmem:[%s4 + $0x1b0] sm:$0xff] %vm834, %v751
  %890 = vst.msk [vmem:[%s4 + $0x1b8] sm:$0xff] %vm834, %v753
  %891 = vst.msk [vmem:[%s4 + $0x1c0] sm:$0xff] %vm834, %v755
  %892 = vst.msk [vmem:[%s4 + $0x1c8] sm:$0xff] %vm834, %v757
  %893 = vst.msk [vmem:[%s4 + $0x1d0] sm:$0xff] %vm834, %v759
  %894 = vst.msk [vmem:[%s4 + $0x1d8] sm:$0xff] %vm834, %v761
  %895 = vst.msk [vmem:[%s4 + $0x1e0] sm:$0xff] %vm834, %v763
  %896 = vst.msk [vmem:[%s4 + $0x1e8] sm:$0xff] %vm834, %v765
  %897 = vst.msk [vmem:[%s4 + $0x1f0] sm:$0xff] %vm834, %v767
  %898 = vst.msk [vmem:[%s4 + $0x1f8] sm:$0xff] %vm834, %v769
  %899 = vrot.lane.b32.xlu0 %v259, 114
  %v900 = vpop.permute.xlu0 %899
  %901 = vrot.lane.b32.xlu0 %v262, 114
  %v902 = vpop.permute.xlu0 %901
  %903 = vrot.lane.b32.xlu0 %v267, 114
  %v904 = vpop.permute.xlu0 %903
  %905 = vrot.lane.b32.xlu0 %v270, 114
  %v906 = vpop.permute.xlu0 %905
  %907 = vrot.lane.b32.xlu0 %v275, 114
  %v908 = vpop.permute.xlu0 %907
  %909 = vrot.lane.b32.xlu0 %v278, 114
  %v910 = vpop.permute.xlu0 %909
  %911 = vrot.lane.b32.xlu0 %v283, 114
  %v912 = vpop.permute.xlu0 %911
  %913 = vrot.lane.b32.xlu0 %v286, 114
  %v914 = vpop.permute.xlu0 %913
  %915 = vrot.lane.b32.xlu0 %v291, 114
  %v916 = vpop.permute.xlu0 %915
  %917 = vrot.lane.b32.xlu0 %v294, 114
  %v918 = vpop.permute.xlu0 %917
  %919 = vrot.lane.b32.xlu0 %v299, 114
  %v920 = vpop.permute.xlu0 %919
  %921 = vrot.lane.b32.xlu0 %v302, 114
  %v922 = vpop.permute.xlu0 %921
  %923 = vrot.lane.b32.xlu0 %v307, 114
  %v924 = vpop.permute.xlu0 %923
  %925 = vrot.lane.b32.xlu0 %v310, 114
  %v926 = vpop.permute.xlu0 %925
  %927 = vrot.lane.b32.xlu0 %v315, 114
  %v928 = vpop.permute.xlu0 %927
  %929 = vrot.lane.b32.xlu0 %v318, 114
  %v930 = vpop.permute.xlu0 %929
  %931 = vrot.lane.b32.xlu0 %v323, 114
  %v932 = vpop.permute.xlu0 %931
  %933 = vrot.lane.b32.xlu0 %v326, 114
  %v934 = vpop.permute.xlu0 %933
  %935 = vrot.lane.b32.xlu0 %v331, 114
  %v936 = vpop.permute.xlu0 %935
  %937 = vrot.lane.b32.xlu0 %v334, 114
  %v938 = vpop.permute.xlu0 %937
  %939 = vrot.lane.b32.xlu0 %v339, 114
  %v940 = vpop.permute.xlu0 %939
  %941 = vrot.lane.b32.xlu0 %v342, 114
  %v942 = vpop.permute.xlu0 %941
  %943 = vrot.lane.b32.xlu0 %v347, 114
  %v944 = vpop.permute.xlu0 %943
  %945 = vrot.lane.b32.xlu0 %v350, 114
  %v946 = vpop.permute.xlu0 %945
  %947 = vrot.lane.b32.xlu0 %v355, 114
  %v948 = vpop.permute.xlu0 %947
  %949 = vrot.lane.b32.xlu0 %v358, 114
  %v950 = vpop.permute.xlu0 %949
  %951 = vrot.lane.b32.xlu0 %v363, 114
  %v952 = vpop.permute.xlu0 %951
  %953 = vrot.lane.b32.xlu0 %v366, 114
  %v954 = vpop.permute.xlu0 %953
  %955 = vrot.lane.b32.xlu0 %v371, 114
  %v956 = vpop.permute.xlu0 %955
  %957 = vrot.lane.b32.xlu0 %v374, 114
  %v958 = vpop.permute.xlu0 %957
  %959 = vrot.lane.b32.xlu0 %v379, 114
  %v960 = vpop.permute.xlu0 %959
  %961 = vrot.lane.b32.xlu0 %v382, 114
  %v962 = vpop.permute.xlu0 %961
  %963 = vrot.lane.b32.xlu0 %v387, 114
  %v964 = vpop.permute.xlu0 %963
  %965 = vrot.lane.b32.xlu0 %v390, 114
  %v966 = vpop.permute.xlu0 %965
  %967 = vrot.lane.b32.xlu0 %v395, 114
  %v968 = vpop.permute.xlu0 %967
  %969 = vrot.lane.b32.xlu0 %v398, 114
  %v970 = vpop.permute.xlu0 %969
  %971 = vrot.lane.b32.xlu0 %v403, 114
  %v972 = vpop.permute.xlu0 %971
  %973 = vrot.lane.b32.xlu0 %v406, 114
  %v974 = vpop.permute.xlu0 %973
  %975 = vrot.lane.b32.xlu0 %v411, 114
  %v976 = vpop.permute.xlu0 %975
  %977 = vrot.lane.b32.xlu0 %v414, 114
  %v978 = vpop.permute.xlu0 %977
  %979 = vrot.lane.b32.xlu0 %v419, 114
  %v980 = vpop.permute.xlu0 %979
  %981 = vrot.lane.b32.xlu0 %v422, 114
  %v982 = vpop.permute.xlu0 %981
  %983 = vrot.lane.b32.xlu0 %v427, 114
  %v984 = vpop.permute.xlu0 %983
  %985 = vrot.lane.b32.xlu0 %v430, 114
  %v986 = vpop.permute.xlu0 %985
  %987 = vrot.lane.b32.xlu0 %v435, 114
  %v988 = vpop.permute.xlu0 %987
  %989 = vrot.lane.b32.xlu0 %v438, 114
  %v990 = vpop.permute.xlu0 %989
  %991 = vrot.lane.b32.xlu0 %v443, 114
  %v992 = vpop.permute.xlu0 %991
  %993 = vrot.lane.b32.xlu0 %v446, 114
  %v994 = vpop.permute.xlu0 %993
  %995 = vrot.lane.b32.xlu0 %v451, 114
  %v996 = vpop.permute.xlu0 %995
  %997 = vrot.lane.b32.xlu0 %v454, 114
  %v998 = vpop.permute.xlu0 %997
  %999 = vrot.lane.b32.xlu0 %v459, 114
  %v1000 = vpop.permute.xlu0 %999
  %1001 = vrot.lane.b32.xlu0 %v462, 114
  %v1002 = vpop.permute.xlu0 %1001
  %1003 = vrot.lane.b32.xlu0 %v467, 114
  %v1004 = vpop.permute.xlu0 %1003
  %1005 = vrot.lane.b32.xlu0 %v470, 114
  %v1006 = vpop.permute.xlu0 %1005
  %1007 = vrot.lane.b32.xlu0 %v475, 114
  %v1008 = vpop.permute.xlu0 %1007
  %1009 = vrot.lane.b32.xlu0 %v478, 114
  %v1010 = vpop.permute.xlu0 %1009
  %1011 = vrot.lane.b32.xlu0 %v483, 114
  %v1012 = vpop.permute.xlu0 %1011
  %1013 = vrot.lane.b32.xlu0 %v486, 114
  %v1014 = vpop.permute.xlu0 %1013
  %1015 = vrot.lane.b32.xlu0 %v491, 114
  %v1016 = vpop.permute.xlu0 %1015
  %1017 = vrot.lane.b32.xlu0 %v494, 114
  %v1018 = vpop.permute.xlu0 %1017
  %1019 = vrot.lane.b32.xlu0 %v499, 114
  %v1020 = vpop.permute.xlu0 %1019
  %1021 = vrot.lane.b32.xlu0 %v502, 114
  %v1022 = vpop.permute.xlu0 %1021
  %1023 = vrot.lane.b32.xlu0 %v507, 114
  %v1024 = vpop.permute.xlu0 %1023
  %1025 = vrot.lane.b32.xlu0 %v510, 114
  %v1026 = vpop.permute.xlu0 %1025
  %1091 = vst.msk [vmem:[%s5] sm:$0xff] %vm123, %v900
  %1092 = vst.msk [vmem:[%s5 + $0x8] sm:$0xff] %vm123, %v902
  %1093 = vst.msk [vmem:[%s5 + $0x10] sm:$0xff] %vm123, %v904
  %1094 = vst.msk [vmem:[%s5 + $0x18] sm:$0xff] %vm123, %v906
  %1095 = vst.msk [vmem:[%s5 + $0x20] sm:$0xff] %vm123, %v908
  %1096 = vst.msk [vmem:[%s5 + $0x28] sm:$0xff] %vm123, %v910
  %1097 = vst.msk [vmem:[%s5 + $0x30] sm:$0xff] %vm123, %v912
  %1098 = vst.msk [vmem:[%s5 + $0x38] sm:$0xff] %vm123, %v914
  %1099 = vst.msk [vmem:[%s5 + $0x40] sm:$0xff] %vm123, %v916
  %1100 = vst.msk [vmem:[%s5 + $0x48] sm:$0xff] %vm123, %v918
  %1101 = vst.msk [vmem:[%s5 + $0x50] sm:$0xff] %vm123, %v920
  %1102 = vst.msk [vmem:[%s5 + $0x58] sm:$0xff] %vm123, %v922
  %1103 = vst.msk [vmem:[%s5 + $0x60] sm:$0xff] %vm123, %v924
  %1104 = vst.msk [vmem:[%s5 + $0x68] sm:$0xff] %vm123, %v926
  %1105 = vst.msk [vmem:[%s5 + $0x70] sm:$0xff] %vm123, %v928
  %1106 = vst.msk [vmem:[%s5 + $0x78] sm:$0xff] %vm123, %v930
  %1107 = vst.msk [vmem:[%s5 + $0x80] sm:$0xff] %vm123, %v932
  %1108 = vst.msk [vmem:[%s5 + $0x88] sm:$0xff] %vm123, %v934
  %1109 = vst.msk [vmem:[%s5 + $0x90] sm:$0xff] %vm123, %v936
  %1110 = vst.msk [vmem:[%s5 + $0x98] sm:$0xff] %vm123, %v938
  %1111 = vst.msk [vmem:[%s5 + $0xa0] sm:$0xff] %vm123, %v940
  %1112 = vst.msk [vmem:[%s5 + $0xa8] sm:$0xff] %vm123, %v942
  %1113 = vst.msk [vmem:[%s5 + $0xb0] sm:$0xff] %vm123, %v944
  %1114 = vst.msk [vmem:[%s5 + $0xb8] sm:$0xff] %vm123, %v946
  %1115 = vst.msk [vmem:[%s5 + $0xc0] sm:$0xff] %vm123, %v948
  %1116 = vst.msk [vmem:[%s5 + $0xc8] sm:$0xff] %vm123, %v950
  %1117 = vst.msk [vmem:[%s5 + $0xd0] sm:$0xff] %vm123, %v952
  %1118 = vst.msk [vmem:[%s5 + $0xd8] sm:$0xff] %vm123, %v954
  %1119 = vst.msk [vmem:[%s5 + $0xe0] sm:$0xff] %vm123, %v956
  %1120 = vst.msk [vmem:[%s5 + $0xe8] sm:$0xff] %vm123, %v958
  %1121 = vst.msk [vmem:[%s5 + $0xf0] sm:$0xff] %vm123, %v960
  %1122 = vst.msk [vmem:[%s5 + $0xf8] sm:$0xff] %vm123, %v962
  %1123 = vst.msk [vmem:[%s5 + $0x100] sm:$0xff] %vm123, %v964
  %1124 = vst.msk [vmem:[%s5 + $0x108] sm:$0xff] %vm123, %v966
  %1125 = vst.msk [vmem:[%s5 + $0x110] sm:$0xff] %vm123, %v968
  %1126 = vst.msk [vmem:[%s5 + $0x118] sm:$0xff] %vm123, %v970
  %1127 = vst.msk [vmem:[%s5 + $0x120] sm:$0xff] %vm123, %v972
  %1128 = vst.msk [vmem:[%s5 + $0x128] sm:$0xff] %vm123, %v974
  %1129 = vst.msk [vmem:[%s5 + $0x130] sm:$0xff] %vm123, %v976
  %1130 = vst.msk [vmem:[%s5 + $0x138] sm:$0xff] %vm123, %v978
  %1131 = vst.msk [vmem:[%s5 + $0x140] sm:$0xff] %vm123, %v980
  %1132 = vst.msk [vmem:[%s5 + $0x148] sm:$0xff] %vm123, %v982
  %1133 = vst.msk [vmem:[%s5 + $0x150] sm:$0xff] %vm123, %v984
  %1134 = vst.msk [vmem:[%s5 + $0x158] sm:$0xff] %vm123, %v986
  %1135 = vst.msk [vmem:[%s5 + $0x160] sm:$0xff] %vm123, %v988
  %1136 = vst.msk [vmem:[%s5 + $0x168] sm:$0xff] %vm123, %v990
  %1137 = vst.msk [vmem:[%s5 + $0x170] sm:$0xff] %vm123, %v992
  %1138 = vst.msk [vmem:[%s5 + $0x178] sm:$0xff] %vm123, %v994
  %1139 = vst.msk [vmem:[%s5 + $0x180] sm:$0xff] %vm123, %v996
  %1140 = vst.msk [vmem:[%s5 + $0x188] sm:$0xff] %vm123, %v998
  %1141 = vst.msk [vmem:[%s5 + $0x190] sm:$0xff] %vm123, %v1000
  %1142 = vst.msk [vmem:[%s5 + $0x198] sm:$0xff] %vm123, %v1002
  %1143 = vst.msk [vmem:[%s5 + $0x1a0] sm:$0xff] %vm123, %v1004
  %1144 = vst.msk [vmem:[%s5 + $0x1a8] sm:$0xff] %vm123, %v1006
  %1145 = vst.msk [vmem:[%s5 + $0x1b0] sm:$0xff] %vm123, %v1008
  %1146 = vst.msk [vmem:[%s5 + $0x1b8] sm:$0xff] %vm123, %v1010
  %1147 = vst.msk [vmem:[%s5 + $0x1c0] sm:$0xff] %vm123, %v1012
  %1148 = vst.msk [vmem:[%s5 + $0x1c8] sm:$0xff] %vm123, %v1014
  %1149 = vst.msk [vmem:[%s5 + $0x1d0] sm:$0xff] %vm123, %v1016
  %1150 = vst.msk [vmem:[%s5 + $0x1d8] sm:$0xff] %vm123, %v1018
  %1151 = vst.msk [vmem:[%s5 + $0x1e0] sm:$0xff] %vm123, %v1020
  %1152 = vst.msk [vmem:[%s5 + $0x1e8] sm:$0xff] %vm123, %v1022
  %1153 = vst.msk [vmem:[%s5 + $0x1f0] sm:$0xff] %vm123, %v1024
  %1154 = vst.msk [vmem:[%s5 + $0x1f8] sm:$0xff] %vm123, %v1026
  %vm1155 = vcmask 146432
  %v1156 = vsel %vm1155, %v259, 0.0
  %v1157 = vsel %vm1155, %v262, 0.0
  %v1158 = vadd.f32 %v1156, %v1157
  %v1159 = vsel %vm1155, %v267, 0.0
  %v1160 = vadd.f32 %v1158, %v1159
  %v1161 = vsel %vm1155, %v270, 0.0
  %v1162 = vadd.f32 %v1160, %v1161
  %v1163 = vsel %vm1155, %v275, 0.0
  %v1164 = vadd.f32 %v1162, %v1163
  %v1165 = vsel %vm1155, %v278, 0.0
  %v1166 = vadd.f32 %v1164, %v1165
  %v1167 = vsel %vm1155, %v283, 0.0
  %v1168 = vadd.f32 %v1166, %v1167
  %v1169 = vsel %vm1155, %v286, 0.0
  %v1170 = vadd.f32 %v1168, %v1169
  %v1171 = vsel %vm1155, %v291, 0.0
  %v1172 = vadd.f32 %v1170, %v1171
  %v1173 = vsel %vm1155, %v294, 0.0
  %v1174 = vadd.f32 %v1172, %v1173
  %v1175 = vsel %vm1155, %v299, 0.0
  %v1176 = vadd.f32 %v1174, %v1175
  %v1177 = vsel %vm1155, %v302, 0.0
  %v1178 = vadd.f32 %v1176, %v1177
  %v1179 = vsel %vm1155, %v307, 0.0
  %v1180 = vadd.f32 %v1178, %v1179
  %v1181 = vsel %vm1155, %v310, 0.0
  %v1182 = vadd.f32 %v1180, %v1181
  %v1183 = vsel %vm1155, %v315, 0.0
  %v1184 = vadd.f32 %v1182, %v1183
  %v1185 = vsel %vm1155, %v318, 0.0
  %v1186 = vadd.f32 %v1184, %v1185
  %v1187 = vsel %vm1155, %v323, 0.0
  %v1188 = vadd.f32 %v1186, %v1187
  %v1189 = vsel %vm1155, %v326, 0.0
  %v1190 = vadd.f32 %v1188, %v1189
  %v1191 = vsel %vm1155, %v331, 0.0
  %v1192 = vadd.f32 %v1190, %v1191
  %v1193 = vsel %vm1155, %v334, 0.0
  %v1194 = vadd.f32 %v1192, %v1193
  %v1195 = vsel %vm1155, %v339, 0.0
  %v1196 = vadd.f32 %v1194, %v1195
  %v1197 = vsel %vm1155, %v342, 0.0
  %v1198 = vadd.f32 %v1196, %v1197
  %v1199 = vsel %vm1155, %v347, 0.0
  %v1200 = vadd.f32 %v1198, %v1199
  %v1201 = vsel %vm1155, %v350, 0.0
  %v1202 = vadd.f32 %v1200, %v1201
  %v1203 = vsel %vm1155, %v355, 0.0
  %v1204 = vadd.f32 %v1202, %v1203
  %v1205 = vsel %vm1155, %v358, 0.0
  %v1206 = vadd.f32 %v1204, %v1205
  %v1207 = vsel %vm1155, %v363, 0.0
  %v1208 = vadd.f32 %v1206, %v1207
  %v1209 = vsel %vm1155, %v366, 0.0
  %v1210 = vadd.f32 %v1208, %v1209
  %v1211 = vsel %vm1155, %v371, 0.0
  %v1212 = vadd.f32 %v1210, %v1211
  %v1213 = vsel %vm1155, %v374, 0.0
  %v1214 = vadd.f32 %v1212, %v1213
  %v1215 = vsel %vm1155, %v379, 0.0
  %v1216 = vadd.f32 %v1214, %v1215
  %v1217 = vsel %vm1155, %v382, 0.0
  %v1218 = vadd.f32 %v1216, %v1217
  %v1219 = vsel %vm1155, %v387, 0.0
  %v1220 = vadd.f32 %v1218, %v1219
  %v1221 = vsel %vm1155, %v390, 0.0
  %v1222 = vadd.f32 %v1220, %v1221
  %v1223 = vsel %vm1155, %v395, 0.0
  %v1224 = vadd.f32 %v1222, %v1223
  %v1225 = vsel %vm1155, %v398, 0.0
  %v1226 = vadd.f32 %v1224, %v1225
  %v1227 = vsel %vm1155, %v403, 0.0
  %v1228 = vadd.f32 %v1226, %v1227
  %v1229 = vsel %vm1155, %v406, 0.0
  %v1230 = vadd.f32 %v1228, %v1229
  %v1231 = vsel %vm1155, %v411, 0.0
  %v1232 = vadd.f32 %v1230, %v1231
  %v1233 = vsel %vm1155, %v414, 0.0
  %v1234 = vadd.f32 %v1232, %v1233
  %v1235 = vsel %vm1155, %v419, 0.0
  %v1236 = vadd.f32 %v1234, %v1235
  %v1237 = vsel %vm1155, %v422, 0.0
  %v1238 = vadd.f32 %v1236, %v1237
  %v1239 = vsel %vm1155, %v427, 0.0
  %v1240 = vadd.f32 %v1238, %v1239
  %v1241 = vsel %vm1155, %v430, 0.0
  %v1242 = vadd.f32 %v1240, %v1241
  %v1243 = vsel %vm1155, %v435, 0.0
  %v1244 = vadd.f32 %v1242, %v1243
  %v1245 = vsel %vm1155, %v438, 0.0
  %v1246 = vadd.f32 %v1244, %v1245
  %v1247 = vsel %vm1155, %v443, 0.0
  %v1248 = vadd.f32 %v1246, %v1247
  %v1249 = vsel %vm1155, %v446, 0.0
  %v1250 = vadd.f32 %v1248, %v1249
  %v1251 = vsel %vm1155, %v451, 0.0
  %v1252 = vadd.f32 %v1250, %v1251
  %v1253 = vsel %vm1155, %v454, 0.0
  %v1254 = vadd.f32 %v1252, %v1253
  %v1255 = vsel %vm1155, %v459, 0.0
  %v1256 = vadd.f32 %v1254, %v1255
  %v1257 = vsel %vm1155, %v462, 0.0
  %v1258 = vadd.f32 %v1256, %v1257
  %v1259 = vsel %vm1155, %v467, 0.0
  %v1260 = vadd.f32 %v1258, %v1259
  %v1261 = vsel %vm1155, %v470, 0.0
  %v1262 = vadd.f32 %v1260, %v1261
  %v1263 = vsel %vm1155, %v475, 0.0
  %v1264 = vadd.f32 %v1262, %v1263
  %v1265 = vsel %vm1155, %v478, 0.0
  %v1266 = vadd.f32 %v1264, %v1265
  %v1267 = vsel %vm1155, %v483, 0.0
  %v1268 = vadd.f32 %v1266, %v1267
  %v1269 = vsel %vm1155, %v486, 0.0
  %v1270 = vadd.f32 %v1268, %v1269
  %v1271 = vsel %vm1155, %v491, 0.0
  %v1272 = vadd.f32 %v1270, %v1271
  %v1273 = vsel %vm1155, %v494, 0.0
  %v1274 = vadd.f32 %v1272, %v1273
  %v1275 = vsel %vm1155, %v499, 0.0
  %v1276 = vadd.f32 %v1274, %v1275
  %v1277 = vsel %vm1155, %v502, 0.0
  %v1278 = vadd.f32 %v1276, %v1277
  %v1279 = vsel %vm1155, %v507, 0.0
  %v1280 = vadd.f32 %v1278, %v1279
  %v1281 = vsel %vm1155, %v510, 0.0
  %v1282 = vadd.f32 %v1280, %v1281
  %v1283 = vrot.slane %v1282, 4
  %v1284 = vadd.f32 %v1282, %v1283
  %v1285 = vrot.slane %v1284, 2
  %v1286 = vadd.f32 %v1284, %v1285
  %v1287 = vrot.slane %v1286, 1
  %v1288 = vadd.f32 %v1286, %v1287
  %v1289 = vmul.f32 %v259, %v259
  %v1290 = vmul.f32 %v262, %v262
  %v1291 = vmul.f32 %v267, %v267
  %v1292 = vmul.f32 %v270, %v270
  %v1293 = vmul.f32 %v275, %v275
  %v1294 = vmul.f32 %v278, %v278
  %v1295 = vmul.f32 %v283, %v283
  %v1296 = vmul.f32 %v286, %v286
  %v1297 = vmul.f32 %v291, %v291
  %v1298 = vmul.f32 %v294, %v294
  %v1299 = vmul.f32 %v299, %v299
  %v1300 = vmul.f32 %v302, %v302
  %v1301 = vmul.f32 %v307, %v307
  %v1302 = vmul.f32 %v310, %v310
  %v1303 = vmul.f32 %v315, %v315
  %v1304 = vmul.f32 %v318, %v318
  %v1305 = vmul.f32 %v323, %v323
  %v1306 = vmul.f32 %v326, %v326
  %v1307 = vmul.f32 %v331, %v331
  %v1308 = vmul.f32 %v334, %v334
  %v1309 = vmul.f32 %v339, %v339
  %v1310 = vmul.f32 %v342, %v342
  %v1311 = vmul.f32 %v347, %v347
  %v1312 = vmul.f32 %v350, %v350
  %v1313 = vmul.f32 %v355, %v355
  %v1314 = vmul.f32 %v358, %v358
  %v1315 = vmul.f32 %v363, %v363
  %v1316 = vmul.f32 %v366, %v366
  %v1317 = vmul.f32 %v371, %v371
  %v1318 = vmul.f32 %v374, %v374
  %v1319 = vmul.f32 %v379, %v379
  %v1320 = vmul.f32 %v382, %v382
  %v1321 = vmul.f32 %v387, %v387
  %v1322 = vmul.f32 %v390, %v390
  %v1323 = vmul.f32 %v395, %v395
  %v1324 = vmul.f32 %v398, %v398
  %v1325 = vmul.f32 %v403, %v403
  %v1326 = vmul.f32 %v406, %v406
  %v1327 = vmul.f32 %v411, %v411
  %v1328 = vmul.f32 %v414, %v414
  %v1329 = vmul.f32 %v419, %v419
  %v1330 = vmul.f32 %v422, %v422
  %v1331 = vmul.f32 %v427, %v427
  %v1332 = vmul.f32 %v430, %v430
  %v1333 = vmul.f32 %v435, %v435
  %v1334 = vmul.f32 %v438, %v438
  %v1335 = vmul.f32 %v443, %v443
  %v1336 = vmul.f32 %v446, %v446
  %v1337 = vmul.f32 %v451, %v451
  %v1338 = vmul.f32 %v454, %v454
  %v1339 = vmul.f32 %v459, %v459
  %v1340 = vmul.f32 %v462, %v462
  %v1341 = vmul.f32 %v467, %v467
  %v1342 = vmul.f32 %v470, %v470
  %v1343 = vmul.f32 %v475, %v475
  %v1344 = vmul.f32 %v478, %v478
  %v1345 = vmul.f32 %v483, %v483
  %v1346 = vmul.f32 %v486, %v486
  %v1347 = vmul.f32 %v491, %v491
  %v1348 = vmul.f32 %v494, %v494
  %v1349 = vmul.f32 %v499, %v499
  %v1350 = vmul.f32 %v502, %v502
  %v1351 = vmul.f32 %v507, %v507
  %v1352 = vmul.f32 %v510, %v510
  %v1353 = vsel %vm1155, %v1289, 0.0
  %v1354 = vsel %vm1155, %v1290, 0.0
  %v1355 = vadd.f32 %v1353, %v1354
  %v1356 = vsel %vm1155, %v1291, 0.0
  %v1357 = vadd.f32 %v1355, %v1356
  %v1358 = vsel %vm1155, %v1292, 0.0
  %v1359 = vadd.f32 %v1357, %v1358
  %v1360 = vsel %vm1155, %v1293, 0.0
  %v1361 = vadd.f32 %v1359, %v1360
  %v1362 = vsel %vm1155, %v1294, 0.0
  %v1363 = vadd.f32 %v1361, %v1362
  %v1364 = vsel %vm1155, %v1295, 0.0
  %v1365 = vadd.f32 %v1363, %v1364
  %v1366 = vsel %vm1155, %v1296, 0.0
  %v1367 = vadd.f32 %v1365, %v1366
  %v1368 = vsel %vm1155, %v1297, 0.0
  %v1369 = vadd.f32 %v1367, %v1368
  %v1370 = vsel %vm1155, %v1298, 0.0
  %v1371 = vadd.f32 %v1369, %v1370
  %v1372 = vsel %vm1155, %v1299, 0.0
  %v1373 = vadd.f32 %v1371, %v1372
  %v1374 = vsel %vm1155, %v1300, 0.0
  %v1375 = vadd.f32 %v1373, %v1374
  %v1376 = vsel %vm1155, %v1301, 0.0
  %v1377 = vadd.f32 %v1375, %v1376
  %v1378 = vsel %vm1155, %v1302, 0.0
  %v1379 = vadd.f32 %v1377, %v1378
  %v1380 = vsel %vm1155, %v1303, 0.0
  %v1381 = vadd.f32 %v1379, %v1380
  %v1382 = vsel %vm1155, %v1304, 0.0
  %v1383 = vadd.f32 %v1381, %v1382
  %v1384 = vsel %vm1155, %v1305, 0.0
  %v1385 = vadd.f32 %v1383, %v1384
  %v1386 = vsel %vm1155, %v1306, 0.0
  %v1387 = vadd.f32 %v1385, %v1386
  %v1388 = vsel %vm1155, %v1307, 0.0
  %v1389 = vadd.f32 %v1387, %v1388
  %v1390 = vsel %vm1155, %v1308, 0.0
  %v1391 = vadd.f32 %v1389, %v1390
  %v1392 = vsel %vm1155, %v1309, 0.0
  %v1393 = vadd.f32 %v1391, %v1392
  %v1394 = vsel %vm1155, %v1310, 0.0
  %v1395 = vadd.f32 %v1393, %v1394
  %v1396 = vsel %vm1155, %v1311, 0.0
  %v1397 = vadd.f32 %v1395, %v1396
  %v1398 = vsel %vm1155, %v1312, 0.0
  %v1399 = vadd.f32 %v1397, %v1398
  %v1400 = vsel %vm1155, %v1313, 0.0
  %v1401 = vadd.f32 %v1399, %v1400
  %v1402 = vsel %vm1155, %v1314, 0.0
  %v1403 = vadd.f32 %v1401, %v1402
  %v1404 = vsel %vm1155, %v1315, 0.0
  %v1405 = vadd.f32 %v1403, %v1404
  %v1406 = vsel %vm1155, %v1316, 0.0
  %v1407 = vadd.f32 %v1405, %v1406
  %v1408 = vsel %vm1155, %v1317, 0.0
  %v1409 = vadd.f32 %v1407, %v1408
  %v1410 = vsel %vm1155, %v1318, 0.0
  %v1411 = vadd.f32 %v1409, %v1410
  %v1412 = vsel %vm1155, %v1319, 0.0
  %v1413 = vadd.f32 %v1411, %v1412
  %v1414 = vsel %vm1155, %v1320, 0.0
  %v1415 = vadd.f32 %v1413, %v1414
  %v1416 = vsel %vm1155, %v1321, 0.0
  %v1417 = vadd.f32 %v1415, %v1416
  %v1418 = vsel %vm1155, %v1322, 0.0
  %v1419 = vadd.f32 %v1417, %v1418
  %v1420 = vsel %vm1155, %v1323, 0.0
  %v1421 = vadd.f32 %v1419, %v1420
  %v1422 = vsel %vm1155, %v1324, 0.0
  %v1423 = vadd.f32 %v1421, %v1422
  %v1424 = vsel %vm1155, %v1325, 0.0
  %v1425 = vadd.f32 %v1423, %v1424
  %v1426 = vsel %vm1155, %v1326, 0.0
  %v1427 = vadd.f32 %v1425, %v1426
  %v1428 = vsel %vm1155, %v1327, 0.0
  %v1429 = vadd.f32 %v1427, %v1428
  %v1430 = vsel %vm1155, %v1328, 0.0
  %v1431 = vadd.f32 %v1429, %v1430
  %v1432 = vsel %vm1155, %v1329, 0.0
  %v1433 = vadd.f32 %v1431, %v1432
  %v1434 = vsel %vm1155, %v1330, 0.0
  %v1435 = vadd.f32 %v1433, %v1434
  %v1436 = vsel %vm1155, %v1331, 0.0
  %v1437 = vadd.f32 %v1435, %v1436
  %v1438 = vsel %vm1155, %v1332, 0.0
  %v1439 = vadd.f32 %v1437, %v1438
  %v1440 = vsel %vm1155, %v1333, 0.0
  %v1441 = vadd.f32 %v1439, %v1440
  %v1442 = vsel %vm1155, %v1334, 0.0
  %v1443 = vadd.f32 %v1441, %v1442
  %v1444 = vsel %vm1155, %v1335, 0.0
  %v1445 = vadd.f32 %v1443, %v1444
  %v1446 = vsel %vm1155, %v1336, 0.0
  %v1447 = vadd.f32 %v1445, %v1446
  %v1448 = vsel %vm1155, %v1337, 0.0
  %v1449 = vadd.f32 %v1447, %v1448
  %v1450 = vsel %vm1155, %v1338, 0.0
  %v1451 = vadd.f32 %v1449, %v1450
  %v1452 = vsel %vm1155, %v1339, 0.0
  %v1453 = vadd.f32 %v1451, %v1452
  %v1454 = vsel %vm1155, %v1340, 0.0
  %v1455 = vadd.f32 %v1453, %v1454
  %v1456 = vsel %vm1155, %v1341, 0.0
  %v1457 = vadd.f32 %v1455, %v1456
  %v1458 = vsel %vm1155, %v1342, 0.0
  %v1459 = vadd.f32 %v1457, %v1458
  %v1460 = vsel %vm1155, %v1343, 0.0
  %v1461 = vadd.f32 %v1459, %v1460
  %v1462 = vsel %vm1155, %v1344, 0.0
  %v1463 = vadd.f32 %v1461, %v1462
  %v1464 = vsel %vm1155, %v1345, 0.0
  %v1465 = vadd.f32 %v1463, %v1464
  %v1466 = vsel %vm1155, %v1346, 0.0
  %v1467 = vadd.f32 %v1465, %v1466
  %v1468 = vsel %vm1155, %v1347, 0.0
  %v1469 = vadd.f32 %v1467, %v1468
  %v1470 = vsel %vm1155, %v1348, 0.0
  %v1471 = vadd.f32 %v1469, %v1470
  %v1472 = vsel %vm1155, %v1349, 0.0
  %v1473 = vadd.f32 %v1471, %v1472
  %v1474 = vsel %vm1155, %v1350, 0.0
  %v1475 = vadd.f32 %v1473, %v1474
  %v1476 = vsel %vm1155, %v1351, 0.0
  %v1477 = vadd.f32 %v1475, %v1476
  %v1478 = vsel %vm1155, %v1352, 0.0
  %v1479 = vadd.f32 %v1477, %v1478
  %v1480 = vrot.slane %v1479, 4
  %v1481 = vadd.f32 %v1479, %v1480
  %v1482 = vrot.slane %v1481, 2
  %v1483 = vadd.f32 %v1481, %v1482
  %v1484 = vrot.slane %v1483, 1
  %v1485 = vadd.f32 %v1483, %v1484
  %vm1486 = vcmask 1040384
  %v1487 = vsel %vm1486, %v1288, %v1485
  %vm1488 = vcmask 140288
  %1489 = vst.msk [vmem:[%s6] sm:$0x3] %vm1488, %v1487
  // Predicated region
  $region14: #{inception_forward.6} parent=0 // pred_check
    _
  $region15: #{inception_forward.6} parent=0 // pred_check_branch
    %1491 = sbr.rel (0) target = $region17
  $region16: #{inception_forward.6} parent=0 // pred_region
    _
  $region17: #{inception_forward.6} parent=0 // pred_fallthru
    _
  // Predicated region
  $region18: #{inception_forward.6} parent=0 // pred_check
    _
  $region19: #{inception_forward.6} parent=0 // pred_check_branch
    %1493 = sbr.rel (0) target = $region21
  $region20: #{inception_forward.6} parent=0 // pred_region
    _
  $region21: #{inception_forward.6} parent=0 // pred_fallthru
    _
  // Predicated region
  $region22: #{inception_forward.6} parent=0 // pred_check
    _
  $region23: #{inception_forward.6} parent=0 // pred_check_branch
    %1495 = sbr.rel (0) target = $region25
  $region24: #{inception_forward.6} parent=0 // pred_region
    _
  $region25: #{inception_forward.6} parent=0 // pred_fallthru
    _
  // Predicated region
  $region26: #{inception_forward.6} parent=0 // pred_check
    _
  $region27: #{inception_forward.6} parent=0 // pred_check_branch
    %1497 = sbr.rel (0) target = $region29
  $region28: #{inception_forward.6} parent=0 // pred_region
    _
  $region29: #{inception_forward.6} parent=0 // pred_fallthru
    _
  // Predicated region
  $region30: #{inception_forward.6} parent=0 // pred_check
    _
  $region31: #{inception_forward.6} parent=0 // pred_check_branch
    %1499 = sbr.rel (0) target = $region33
  $region32: #{inception_forward.6} parent=0 // pred_region
    _
  $region33: #{inception_forward.6} parent=0 // pred_fallthru
    _
  // Predicated region
  $region34: #{inception_forward.6} parent=0 // pred_check
    _
  $region35: #{inception_forward.6} parent=0 // pred_check_branch
    %1501 = sbr.rel (0) target = $region37
  $region36: #{inception_forward.6} parent=0 // pred_region
    _
  $region37: #{inception_forward.6} parent=0 // pred_fallthru
    _
  // Predicated region
  $region38: #{inception_forward.6} parent=0 // pred_check
    _
  $region39: #{inception_forward.6} parent=0 // pred_check_branch
    %1503 = sbr.rel (0) target = $region41
  $region40: #{inception_forward.6} parent=0 // pred_region
    _
  $region41: #{inception_forward.6} parent=0 // pred_fallthru
    _
  // Predicated region
  $region42: #{inception_forward.6} parent=0 // pred_check
    _
  $region43: #{inception_forward.6} parent=0 // pred_check_branch
    %1505 = sbr.rel (0) target = $region45
  $region44: #{inception_forward.6} parent=0 // pred_region
    _
  $region45: #{inception_forward.6} parent=0 // pred_fallthru
    _

// kernel: inception_forward.10
$region0: #{inception_forward.10}
  #allocation0 [shape = 'u32[]', space=smem, size = 0x4, offset = 0x4, fixed_abs, tag = 'smem constant byte address 0x4 - core index']
  #allocation1 [shape = 'u32[144,128]{1,0:T(1,128)}', space=vmem, size = 0x12000, scoped, tag = 'internal scratch']
  %s0 = inlined_call_operand.vmem [shape: f32[2,16,16,4], index: 0, kind: input, shape index: {}]
  %s1 = inlined_call_operand.vmem [shape: bf16[4,8], index: 1, kind: input, shape index: {}]
  %s2 = inlined_call_operand.vmem [shape: f32[1,8], index: 2, kind: input, shape index: {}]
  %s3 = inlined_call_operand.vmem [shape: f32[2,256,8], index: 3, kind: output, shape index: {0}]
  %s4 = inlined_call_operand.vmem [shape: f32[2,2,8], index: 4, kind: output, shape index: {1}]
  %5 = xla_tuple %s3, %s4
  %s6 = sld [smem:[#allocation0]]
  $region53: #{inception_forward.10} parent=0
    _
  %s8 = ssub.s32 1, %s6
  %s9 = scalar_select 0, %s8, %s6
  loop: start=0, step=1, limit=4
  $region2: #{inception_forward.10} parent=0 // loop_pre_header
    _
  $region3: #{inception_forward.10} parent=0 // loop_header
    %s11 = sphi 0, %s15
    %p12 = scmp.ge.s32.totalorder %s11, 4
    %s21 = sphi 0, %s23
    %s24 = sphi 0, %s21
    %s25 = sphi 0, %s24
    %s41 = sphi 0, %s25
    %s45 = sphi 0, %s45
    %s47 = sphi 0, %s45
    %s48 = sphi 0, %s47
    %s62 = sphi 0, %s48
    %s66 = sphi 0, %s66
    %s68 = sphi 0, %s66
    %s69 = sphi 0, %s68
    %s83 = sphi 0, %s69
    %s89 = sphi 0, %s91
    %s92 = sphi 0, %s89
    %s93 = sphi 0, %s92
    %s109 = sphi 0, %s93
    %s115 = sphi 0, %s117
    %s118 = sphi 0, %s115
    %s119 = sphi 0, %s118
    %s135 = sphi 0, %s119
  $region4: #{inception_forward.10} parent=0 // loop_header_branch
    %14 = sbr.rel (%p12) target = $region8
  $region5: #{inception_forward.10} parent=0 // loop_body
    %s16 = ssub.s32 %s11, 1
    %s17 = ssub.s32 %s11, 2
    %s18 = sadd.s32 %s11, 1
    %s19 = ssub.s32 %s11, %s18
    %p20 = scmp.eq.s32.totalorder %s19, 0
    %s22 = sadd.s32 %s21, 1
    %s23 = scalar_select %p20, %s21, %s22
    %p26 = pneg %p20
    %p27 = scmp.eq.s32.totalorder %s11, 1
    %p28 = por %p26, %p27
    %p29 = scmp.ne.s32.totalorder %s21, %s24
    %p30 = scmp.eq.s32.totalorder %s11, 0
    %p31 = por %p29, %p30
    %p32 = scmp.ne.s32.totalorder %s21, %s24
    %p33 = scmp.eq.s32.totalorder %s16, 1
    %p34 = por %p32, %p33
    %p35 = scmp.ne.s32.totalorder %s24, %s25
    %p36 = scmp.eq.s32.totalorder %s16, 0
    %p37 = por %p35, %p36
    %p38 = scmp.ne.s32.totalorder %s24, %s25
    %p39 = scmp.eq.s32.totalorder %s17, 1
    %p40 = por %p38, %p39
    %p42 = scmp.ne.s32.totalorder %s25, %s41
    %p43 = scmp.eq.s32.totalorder %s17, 0
    %p44 = por %p42, %p43
    %s46 = sadd.s32 %s45, 1
    %p49 = scmp.eq.s32.totalorder %s11, 1
    %p50 = scmp.ne.s32.totalorder %s45, %s47
    %p51 = scmp.eq.s32.totalorder %s11, 0
    %p52 = por %p50, %p51
    %p53 = scmp.ne.s32.totalorder %s45, %s47
    %p54 = scmp.eq.s32.totalorder %s16, 1
    %p55 = por %p53, %p54
    %p56 = scmp.ne.s32.totalorder %s47, %s48
    %p57 = scmp.eq.s32.totalorder %s16, 0
    %p58 = por %p56, %p57
    %p59 = scmp.ne.s32.totalorder %s47, %s48
    %p60 = scmp.eq.s32.totalorder %s17, 1
    %p61 = por %p59, %p60
    %p63 = scmp.ne.s32.totalorder %s48, %s62
    %p64 = scmp.eq.s32.totalorder %s17, 0
    %p65 = por %p63, %p64
    %s67 = sadd.s32 %s66, 1
    %p70 = scmp.eq.s32.totalorder %s11, 1
    %p71 = scmp.ne.s32.totalorder %s66, %s68
    %p72 = scmp.eq.s32.totalorder %s11, 0
    %p73 = por %p71, %p72
    %p74 = scmp.ne.s32.totalorder %s66, %s68
    %p75 = scmp.eq.s32.totalorder %s16, 1
    %p76 = por %p74, %p75
    %p77 = scmp.ne.s32.totalorder %s68, %s69
    %p78 = scmp.eq.s32.totalorder %s16, 0
    %p79 = por %p77, %p78
    %p80 = scmp.ne.s32.totalorder %s68, %s69
    %p81 = scmp.eq.s32.totalorder %s17, 1
    %p82 = por %p80, %p81
    %p84 = scmp.ne.s32.totalorder %s69, %s83
    %p85 = scmp.eq.s32.totalorder %s17, 0
    %p86 = por %p84, %p85
    %s87 = ssub.s32 %s11, %s18
    %p88 = scmp.eq.s32.totalorder %s87, 0
    %s90 = sadd.s32 %s89, 1
    %s91 = scalar_select %p88, %s89, %s90
    %p94 = pneg %p88
    %p95 = scmp.eq.s32.totalorder %s11, 1
    %p96 = por %p94, %p95
    %p97 = scmp.ne.s32.totalorder %s89, %s92
    %p98 = scmp.eq.s32.totalorder %s11, 0
    %p99 = por %p97, %p98
    %p100 = scmp.ne.s32.totalorder %s89, %s92
    %p101 = scmp.eq.s32.totalorder %s16, 1
    %p102 = por %p100, %p101
    %p103 = scmp.ne.s32.totalorder %s92, %s93
    %p104 = scmp.eq.s32.totalorder %s16, 0
    %p105 = por %p103, %p104
    %p106 = scmp.ne.s32.totalorder %s92, %s93
    %p107 = scmp.eq.s32.totalorder %s17, 1
    %p108 = por %p106, %p107
    %p110 = scmp.ne.s32.totalorder %s93, %s109
    %p111 = scmp.eq.s32.totalorder %s17, 0
    %p112 = por %p110, %p111
    %s113 = ssub.s32 %s11, %s18
    %p114 = scmp.eq.s32.totalorder %s113, 0
    %s116 = sadd.s32 %s115, 1
    %s117 = scalar_select %p114, %s115, %s116
    %p120 = pneg %p114
    %p121 = scmp.eq.s32.totalorder %s11, 1
    %p122 = por %p120, %p121
    %p123 = scmp.ne.s32.totalorder %s115, %s118
    %p124 = scmp.eq.s32.totalorder %s11, 0
    %p125 = por %p123, %p124
    %p126 = scmp.ne.s32.totalorder %s115, %s118
    %p127 = scmp.eq.s32.totalorder %s16, 1
    %p128 = por %p126, %p127
    %p129 = scmp.ne.s32.totalorder %s118, %s119
    %p130 = scmp.eq.s32.totalorder %s16, 0
    %p131 = por %p129, %p130
    %p132 = scmp.ne.s32.totalorder %s118, %s119
    %p133 = scmp.eq.s32.totalorder %s17, 1
    %p134 = por %p132, %p133
    %p136 = scmp.ne.s32.totalorder %s119, %s135
    %p137 = scmp.eq.s32.totalorder %s17, 0
    %p138 = por %p136, %p137
    %p139 = scmp.le.s32.totalorder 1, %s11
    %p140 = scmp.lt.s32.totalorder %s11, 3
    %p141 = pnand %p139, %p140
    %p142 = pneg %p141
    // Predicated region
    $region9: #{inception_forward.10} parent=5 // pred_check
      _
    $region10: #{inception_forward.10} parent=5 // pred_check_branch
      %144 = sbr.rel (%p141) target = $region12
    $region11: #{inception_forward.10} parent=5 // pred_region
      %s145 = ssub.s32 %s11, 1
      // Predicated region
      $region13: #{inception_forward.10} parent=11 // pred_check
        %p146 = pneg %p58
      $region14: #{inception_forward.10} parent=11 // pred_check_branch
        %148 = sbr.rel (%p146) target = $region16
      $region15: #{inception_forward.10} parent=11 // pred_region
        _
      $region16: #{inception_forward.10} parent=11 // pred_fallthru
        _
      // Predicated region
      $region17: #{inception_forward.10} parent=11 // pred_check
        %p149 = pneg %p79
      $region18: #{inception_forward.10} parent=11 // pred_check_branch
        %151 = sbr.rel (%p149) target = $region20
      $region19: #{inception_forward.10} parent=11 // pred_region
        _
      $region20: #{inception_forward.10} parent=11 // pred_fallthru
        _
    $region12: #{inception_forward.10} parent=5 // pred_fallthru
      _
    %p152 = scmp.lt.s32.totalorder %s11, 2
    // Predicated region
    $region21: #{inception_forward.10} parent=5 // pred_check
      %p153 = pneg %p152
    $region22: #{inception_forward.10} parent=5 // pred_check_branch
      %155 = sbr.rel (%p153) target = $region24
    $region23: #{inception_forward.10} parent=5 // pred_region
      // Predicated region
      $region25: #{inception_forward.10} parent=23 // pred_check
        %p156 = pneg %p31
      $region26: #{inception_forward.10} parent=23 // pred_check_branch
        %158 = sbr.rel (%p156) target = $region28
      $region27: #{inception_forward.10} parent=23 // pred_region
        %p159 = scmp.lt.s32.totalorder %s11, 1
        %s160 = scalar_select %p159, %s11, 1
        %s161 = smul.addr %s160, 32
        %s162 = smul.addr %s161, 8
        %s163 = scalar_lea.vmem %s0, %s162
      $region28: #{inception_forward.10} parent=23 // pred_fallthru
        _
    $region24: #{inception_forward.10} parent=5 // pred_fallthru
      _
    %p164 = scmp.le.s32.totalorder 1, %s11
    %p165 = scmp.lt.s32.totalorder %s11, 3
    %p166 = pnand %p164, %p165
    %p167 = pneg %p166
    // Predicated region
    $region29: #{inception_forward.10} parent=5 // pred_check
      _
    $region30: #{inception_forward.10} parent=5 // pred_check_branch
      %169 = sbr.rel (%p166) target = $region32
    $region31: #{inception_forward.10} parent=5 // pred_region
      %s170 = ssub.s32 %s11, 1
      %p171 = scmp.lt.s32.totalorder %s16, 1
      %s172 = scalar_select %p171, %s16, 1
      %s173 = smul.addr %s172, 32
      %s174 = smul.addr %s173, 8
      %s175 = scalar_lea.vmem %s0, %s174
      %p176 = pneg %p37
      %p177 = pneg %p34
      %p178 = pneg %p58
      %p179 = pneg %p55
      %p180 = pneg %p79
      %p181 = pneg %p76
      %p182 = pneg %p105
      %p183 = pneg %p102
      %p184 = scmp.lt.s32.totalorder %s16, 1
      %s185 = scalar_select %p184, %s16, 1
      %s186 = smul.addr %s185, 32
      %s187 = smul.addr %s186, 8
      %s188 = scalar_lea.vmem %s3, %s187
      %p189 = pneg %p131
      %p190 = pneg %p128
      %p191 = scmp.lt.s32.totalorder %s16, 1
      %s192 = scalar_select %p191, %s16, 1
      %s193 = smul.addr %s192, 2
      %s194 = scalar_lea.vmem %s4, %s193
      %p195 = scmp.lt.s32.totalorder %s16, 1
      %s196 = scalar_select %p195, %s16, 1
      %s197 = smul.addr %s196, 32
      %s198 = smul.addr %s197, 8
      %s199 = scalar_lea.vmem %s0, %s198
      %p200 = scmp.lt.s32.totalorder %s16, 1
      %s201 = scalar_select %p200, %s16, 1
      %s202 = smul.addr %s201, 32
      %s203 = smul.addr %s202, 8
      %s204 = scalar_lea.vmem %s3, %s203
      %p205 = scmp.lt.s32.totalorder %s16, 1
      %s206 = scalar_select %p205, %s16, 1
      %s207 = smul.addr %s206, 2
      %s208 = scalar_lea.vmem %s4, %s207
      %v210 = vld [vmem:[%s199] sm:$0xff]
      %v211 = vld [vmem:[%s199 + $0x8] sm:$0xff]
      %v212 = vld [vmem:[%s199 + $0x10] sm:$0xff]
      %v213 = vld [vmem:[%s199 + $0x18] sm:$0xff]
      %v214 = vld [vmem:[%s199 + $0x20] sm:$0xff]
      %v215 = vld [vmem:[%s199 + $0x28] sm:$0xff]
      %v216 = vld [vmem:[%s199 + $0x30] sm:$0xff]
      %v217 = vld [vmem:[%s199 + $0x38] sm:$0xff]
      %v218 = vld [vmem:[%s199 + $0x40] sm:$0xff]
      %v219 = vld [vmem:[%s199 + $0x48] sm:$0xff]
      %v220 = vld [vmem:[%s199 + $0x50] sm:$0xff]
      %v221 = vld [vmem:[%s199 + $0x58] sm:$0xff]
      %v222 = vld [vmem:[%s199 + $0x60] sm:$0xff]
      %v223 = vld [vmem:[%s199 + $0x68] sm:$0xff]
      %v224 = vld [vmem:[%s199 + $0x70] sm:$0xff]
      %v225 = vld [vmem:[%s199 + $0x78] sm:$0xff]
      %v226 = vld [vmem:[%s199 + $0x80] sm:$0xff]
      %v227 = vld [vmem:[%s199 + $0x88] sm:$0xff]
      %v228 = vld [vmem:[%s199 + $0x90] sm:$0xff]
      %v229 = vld [vmem:[%s199 + $0x98] sm:$0xff]
      %v230 = vld [vmem:[%s199 + $0xa0] sm:$0xff]
      %v231 = vld [vmem:[%s199 + $0xa8] sm:$0xff]
      %v232 = vld [vmem:[%s199 + $0xb0] sm:$0xff]
      %v233 = vld [vmem:[%s199 + $0xb8] sm:$0xff]
      %v234 = vld [vmem:[%s199 + $0xc0] sm:$0xff]
      %v235 = vld [vmem:[%s199 + $0xc8] sm:$0xff]
      %v236 = vld [vmem:[%s199 + $0xd0] sm:$0xff]
      %v237 = vld [vmem:[%s199 + $0xd8] sm:$0xff]
      %v238 = vld [vmem:[%s199 + $0xe0] sm:$0xff]
      %v239 = vld [vmem:[%s199 + $0xe8] sm:$0xff]
      %v240 = vld [vmem:[%s199 + $0xf0] sm:$0xff]
      %v241 = vld [vmem:[%s199 + $0xf8] sm:$0xff]
      %vm275 = vcmask 1040384
      %v276 = vrot.slane -3.4028235e+38, 7
      %v277 = vsel %vm275, %v276, %v276
      %v278 = vrot.slane %v210, 7
      %v279 = vrot.slane %v211, 7
      %v280 = vsel %vm275, %v278, %v279
      %v281 = vrot.slane %v212, 7
      %v282 = vrot.slane %v213, 7
      %v283 = vsel %vm275, %v281, %v282
      %v284 = vrot.slane %v214, 7
      %v285 = vrot.slane %v215, 7
      %v286 = vsel %vm275, %v284, %v285
      %v287 = vrot.slane %v216, 7
      %v288 = vrot.slane %v217, 7
      %v289 = vsel %vm275, %v287, %v288
      %v290 = vrot.slane %v218, 7
      %v291 = vrot.slane %v219, 7
      %v292 = vsel %vm275, %v290, %v291
      %v293 = vrot.slane %v220, 7
      %v294 = vrot.slane %v221, 7
      %v295 = vsel %vm275, %v293, %v294
      %v296 = vrot.slane %v222, 7
      %v297 = vrot.slane %v223, 7
      %v298 = vsel %vm275, %v296, %v297
      %v299 = vrot.slane %v224, 7
      %v300 = vrot.slane %v225, 7
      %v301 = vsel %vm275, %v299, %v300
      %v302 = vrot.slane %v226, 7
      %v303 = vrot.slane %v227, 7
      %v304 = vsel %vm275, %v302, %v303
      %v305 = vrot.slane %v228, 7
      %v306 = vrot.slane %v229, 7
      %v307 = vsel %vm275, %v305, %v306
      %v308 = vrot.slane %v230, 7
      %v309 = vrot.slane %v231, 7
      %v310 = vsel %vm275, %v308, %v309
      %v311 = vrot.slane %v232, 7
      %v312 = vrot.slane %v233, 7
      %v313 = vsel %vm275, %v311, %v312
      %v314 = vrot.slane %v234, 7
      %v315 = vrot.slane %v235, 7
      %v316 = vsel %vm275, %v314, %v315
      %v317 = vrot.slane %v236, 7
      %v318 = vrot.slane %v237, 7
      %v319 = vsel %vm275, %v317, %v318
      %v320 = vrot.slane %v238, 7
      %v321 = vrot.slane %v239, 7
      %v322 = vsel %vm275, %v320, %v321
      %v323 = vrot.slane %v240, 7
      %v324 = vrot.slane %v241, 7
      %v325 = vsel %vm275, %v323, %v324
      %v376 = vsel %vm275, -3.4028235e+38, %v276
      %v377 = vsel %vm275, -3.4028235e+38, %v278
      %v378 = vsel %vm275, -3.4028235e+38, %v281
      %v379 = vsel %vm275, -3.4028235e+38, %v284
      %v380 = vsel %vm275, -3.4028235e+38, %v287
      %v381 = vsel %vm275, -3.4028235e+38, %v290
      %v382 = vsel %vm275, -3.4028235e+38, %v293
      %v383 = vsel %vm275, -3.4028235e+38, %v296
      %v384 = vsel %vm275, -3.4028235e+38, %v299
      %v385 = vsel %vm275, -3.4028235e+38, %v302
      %v386 = vsel %vm275, -3.4028235e+38, %v305
      %v387 = vsel %vm275, -3.4028235e+38, %v308
      %v388 = vsel %vm275, -3.4028235e+38, %v311
      %v389 = vsel %vm275, -3.4028235e+38, %v314
      %v390 = vsel %vm275, -3.4028235e+38, %v317
      %v391 = vsel %vm275, -3.4028235e+38, %v320
      %v392 = vsel %vm275, -3.4028235e+38, %v323
      %v393 = vsel %vm275, %v276, -3.4028235e+38
      %v394 = vsel %vm275, %v279, -3.4028235e+38
      %v395 = vsel %vm275, %v282, -3.4028235e+38
      %v396 = vsel %vm275, %v285, -3.4028235e+38
      %v397 = vsel %vm275, %v288, -3.4028235e+38
      %v398 = vsel %vm275, %v291, -3.4028235e+38
      %v399 = vsel %vm275, %v294, -3.4028235e+38
      %v400 = vsel %vm275, %v297, -3.4028235e+38
      %v401 = vsel %vm275, %v300, -3.4028235e+38
      %v402 = vsel %vm275, %v303, -3.4028235e+38
      %v403 = vsel %vm275, %v306, -3.4028235e+38
      %v404 = vsel %vm275, %v309, -3.4028235e+38
      %v405 = vsel %vm275, %v312, -3.4028235e+38
      %v406 = vsel %vm275, %v315, -3.4028235e+38
      %v407 = vsel %vm275, %v318, -3.4028235e+38
      %v408 = vsel %vm275, %v321, -3.4028235e+38
      %v409 = vsel %vm275, %v324, -3.4028235e+38
      %vm444 = vcmask 1046528
      %v445 = vrot.slane %v376, 1
      %v446 = vrot.slane %v277, 1
      %v447 = vsel %vm444, %v445, %v446
      %v448 = vrot.slane %v393, 1
      %v449 = vsel %vm444, %v446, %v448
      %v450 = vrot.slane %v377, 1
      %v451 = vrot.slane %v280, 1
      %v452 = vsel %vm444, %v450, %v451
      %v453 = vrot.slane %v394, 1
      %v454 = vsel %vm444, %v451, %v453
      %v455 = vrot.slane %v378, 1
      %v456 = vrot.slane %v283, 1
      %v457 = vsel %vm444, %v455, %v456
      %v458 = vrot.slane %v395, 1
      %v459 = vsel %vm444, %v456, %v458
      %v460 = vrot.slane %v379, 1
      %v461 = vrot.slane %v286, 1
      %v462 = vsel %vm444, %v460, %v461
      %v463 = vrot.slane %v396, 1
      %v464 = vsel %vm444, %v461, %v463
      %v465 = vrot.slane %v380, 1
      %v466 = vrot.slane %v289, 1
      %v467 = vsel %vm444, %v465, %v466
      %v468 = vrot.slane %v397, 1
      %v469 = vsel %vm444, %v466, %v468
      %v470 = vrot.slane %v381, 1
      %v471 = vrot.slane %v292, 1
      %v472 = vsel %vm444, %v470, %v471
      %v473 = vrot.slane %v398, 1
      %v474 = vsel %vm444, %v471, %v473
      %v475 = vrot.slane %v382, 1
      %v476 = vrot.slane %v295, 1
      %v477 = vsel %vm444, %v475, %v476
      %v478 = vrot.slane %v399, 1
      %v479 = vsel %vm444, %v476, %v478
      %v480 = vrot.slane %v383, 1
      %v481 = vrot.slane %v298, 1
      %v482 = vsel %vm444, %v480, %v481
      %v483 = vrot.slane %v400, 1
      %v484 = vsel %vm444, %v481, %v483
      %v485 = vrot.slane %v384, 1
      %v486 = vrot.slane %v301, 1
      %v487 = vsel %vm444, %v485, %v486
      %v488 = vrot.slane %v401, 1
      %v489 = vsel %vm444, %v486, %v488
      %v490 = vrot.slane %v385, 1
      %v491 = vrot.slane %v304, 1
      %v492 = vsel %vm444, %v490, %v491
      %v493 = vrot.slane %v402, 1
      %v494 = vsel %vm444, %v491, %v493
      %v495 = vrot.slane %v386, 1
      %v496 = vrot.slane %v307, 1
      %v497 = vsel %vm444, %v495, %v496
      %v498 = vrot.slane %v403, 1
      %v499 = vsel %vm444, %v496, %v498
      %v500 = vrot.slane %v387, 1
      %v501 = vrot.slane %v310, 1
      %v502 = vsel %vm444, %v500, %v501
      %v503 = vrot.slane %v404, 1
      %v504 = vsel %vm444, %v501, %v503
      %v505 = vrot.slane %v388, 1
      %v506 = vrot.slane %v313, 1
      %v507 = vsel %vm444, %v505, %v506
      %v508 = vrot.slane %v405, 1
      %v509 = vsel %vm444, %v506, %v508
      %v510 = vrot.slane %v389, 1
      %v511 = vrot.slane %v316, 1
      %v512 = vsel %vm444, %v510, %v511
      %v513 = vrot.slane %v406, 1
      %v514 = vsel %vm444, %v511, %v513
      %v515 = vrot.slane %v390, 1
      %v516 = vrot.slane %v319, 1
      %v517 = vsel %vm444, %v515, %v516
      %v518 = vrot.slane %v407, 1
      %v519 = vsel %vm444, %v516, %v518
      %v520 = vrot.slane %v391, 1
      %v521 = vrot.slane %v322, 1
      %v522 = vsel %vm444, %v520, %v521
      %v523 = vrot.slane %v408, 1
      %v524 = vsel %vm444, %v521, %v523
      %v525 = vrot.slane %v392, 1
      %v526 = vrot.slane %v325, 1
      %v527 = vsel %vm444, %v525, %v526
      %v528 = vrot.slane %v409, 1
      %v529 = vsel %vm444, %v526, %v528
      %v564 = vmax.f32 %v376, %v447
      %v565 = vmax.f32 %v277, %v449
      %v566 = vmax.f32 %v377, %v452
      %v567 = vmax.f32 %v280, %v454
      %v568 = vmax.f32 %v378, %v457
      %v569 = vmax.f32 %v283, %v459
      %v570 = vmax.f32 %v379, %v462
      %v571 = vmax.f32 %v286, %v464
      %v572 = vmax.f32 %v380, %v467
      %v573 = vmax.f32 %v289, %v469
      %v574 = vmax.f32 %v381, %v472
      %v575 = vmax.f32 %v292, %v474
      %v576 = vmax.f32 %v382, %v477
      %v577 = vmax.f32 %v295, %v479
      %v578 = vmax.f32 %v383, %v482
      %v579 = vmax.f32 %v298, %v484
      %v580 = vmax.f32 %v384, %v487
      %v581 = vmax.f32 %v301, %v489
      %v582 = vmax.f32 %v385, %v492
      %v583 = vmax.f32 %v304, %v494
      %v584 = vmax.f32 %v386, %v497
      %v585 = vmax.f32 %v307, %v499
      %v586 = vmax.f32 %v387, %v502
      %v587 = vmax.f32 %v310, %v504
      %v588 = vmax.f32 %v388, %v507
      %v589 = vmax.f32 %v313, %v509
      %v590 = vmax.f32 %v389, %v512
      %v591 = vmax.f32 %v316, %v514
      %v592 = vmax.f32 %v390, %v517
      %v593 = vmax.f32 %v319, %v519
      %v594 = vmax.f32 %v391, %v522
      %v595 = vmax.f32 %v322, %v524
      %v596 = vmax.f32 %v392, %v527
      %v597 = vmax.f32 %v325, %v529
      %vm598 = vcmask 1045504
      %v599 = vrot.slane %v376, 2
      %v600 = vrot.slane %v277, 2
      %v601 = vsel %vm598, %v599, %v600
      %v602 = vrot.slane %v393, 2
      %v603 = vsel %vm598, %v600, %v602
      %v604 = vrot.slane %v377, 2
      %v605 = vrot.slane %v280, 2
      %v606 = vsel %vm598, %v604, %v605
      %v607 = vrot.slane %v394, 2
      %v608 = vsel %vm598, %v605, %v607
      %v609 = vrot.slane %v378, 2
      %v610 = vrot.slane %v283, 2
      %v611 = vsel %vm598, %v609, %v610
      %v612 = vrot.slane %v395, 2
      %v613 = vsel %vm598, %v610, %v612
      %v614 = vrot.slane %v379, 2
      %v615 = vrot.slane %v286, 2
      %v616 = vsel %vm598, %v614, %v615
      %v617 = vrot.slane %v396, 2
      %v618 = vsel %vm598, %v615, %v617
      %v619 = vrot.slane %v380, 2
      %v620 = vrot.slane %v289, 2
      %v621 = vsel %vm598, %v619, %v620
      %v622 = vrot.slane %v397, 2
      %v623 = vsel %vm598, %v620, %v622
      %v624 = vrot.slane %v381, 2
      %v625 = vrot.slane %v292, 2
      %v626 = vsel %vm598, %v624, %v625
      %v627 = vrot.slane %v398, 2
      %v628 = vsel %vm598, %v625, %v627
      %v629 = vrot.slane %v382, 2
      %v630 = vrot.slane %v295, 2
      %v631 = vsel %vm598, %v629, %v630
      %v632 = vrot.slane %v399, 2
      %v633 = vsel %vm598, %v630, %v632
      %v634 = vrot.slane %v383, 2
      %v635 = vrot.slane %v298, 2
      %v636 = vsel %vm598, %v634, %v635
      %v637 = vrot.slane %v400, 2
      %v638 = vsel %vm598, %v635, %v637
      %v639 = vrot.slane %v384, 2
      %v640 = vrot.slane %v301, 2
      %v641 = vsel %vm598, %v639, %v640
      %v642 = vrot.slane %v401, 2
      %v643 = vsel %vm598, %v640, %v642
      %v644 = vrot.slane %v385, 2
      %v645 = vrot.slane %v304, 2
      %v646 = vsel %vm598, %v644, %v645
      %v647 = vrot.slane %v402, 2
      %v648 = vsel %vm598, %v645, %v647
      %v649 = vrot.slane %v386, 2
      %v650 = vrot.slane %v307, 2
      %v651 = vsel %vm598, %v649, %v650
      %v652 = vrot.slane %v403, 2
      %v653 = vsel %vm598, %v650, %v652
      %v654 = vrot.slane %v387, 2
      %v655 = vrot.slane %v310, 2
      %v656 = vsel %vm598, %v654, %v655
      %v657 = vrot.slane %v404, 2
      %v658 = vsel %vm598, %v655, %v657
      %v659 = vrot.slane %v388, 2
      %v660 = vrot.slane %v313, 2
      %v661 = vsel %vm598, %v659, %v660
      %v662 = vrot.slane %v405, 2
      %v663 = vsel %vm598, %v660, %v662
      %v664 = vrot.slane %v389, 2
      %v665 = vrot.slane %v316, 2
      %v666 = vsel %vm598, %v664, %v665
      %v667 = vrot.slane %v406, 2
      %v668 = vsel %vm598, %v665, %v667
      %v669 = vrot.slane %v390, 2
      %v670 = vrot.slane %v319, 2
      %v671 = vsel %vm598, %v669, %v670
      %v672 = vrot.slane %v407, 2
      %v673 = vsel %vm598, %v670, %v672
      %v674 = vrot.slane %v391, 2
      %v675 = vrot.slane %v322, 2
      %v676 = vsel %vm598, %v674, %v675
      %v677 = vrot.slane %v408, 2
      %v678 = vsel %vm598, %v675, %v677
      %v679 = vrot.slane %v392, 2
      %v680 = vrot.slane %v325, 2
      %v681 = vsel %vm598, %v679, %v680
      %v682 = vrot.slane %v409, 2
      %v683 = vsel %vm598, %v680, %v682
      %v718 = vmax.f32 %v564, %v601
      %v719 = vmax.f32 %v565, %v603
      %v720 = vmax.f32 %v566, %v606
      %v721 = vmax.f32 %v567, %v608
      %v722 = vmax.f32 %v568, %v611
      %v723 = vmax.f32 %v569, %v613
      %v724 = vmax.f32 %v570, %v616
      %v725 = vmax.f32 %v571, %v618
      %v726 = vmax.f32 %v572, %v621
      %v727 = vmax.f32 %v573, %v623
      %v728 = vmax.f32 %v574, %v626
      %v729 = vmax.f32 %v575, %v628
      %v730 = vmax.f32 %v576, %v631
      %v731 = vmax.f32 %v577, %v633
      %v732 = vmax.f32 %v578, %v636
      %v733 = vmax.f32 %v579, %v638
      %v734 = vmax.f32 %v580, %v641
      %v735 = vmax.f32 %v581, %v643
      %v736 = vmax.f32 %v582, %v646
      %v737 = vmax.f32 %v583, %v648
      %v738 = vmax.f32 %v584, %v651
      %v739 = vmax.f32 %v585, %v653
      %v740 = vmax.f32 %v586, %v656
      %v741 = vmax.f32 %v587, %v658
      %v742 = vmax.f32 %v588, %v661
      %v743 = vmax.f32 %v589, %v663
      %v744 = vmax.f32 %v590, %v666
      %v745 = vmax.f32 %v591, %v668
      %v746 = vmax.f32 %v592, %v671
      %v747 = vmax.f32 %v593, %v673
      %v748 = vmax.f32 %v594, %v676
      %v749 = vmax.f32 %v595, %v678
      %v750 = vmax.f32 %v596, %v681
      %v751 = vmax.f32 %v597, %v683
      %v752 = vmax.f32 %v718, %v720
      %v753 = vmax.f32 %v719, %v721
      %v754 = vmax.f32 %v720, %v722
      %v755 = vmax.f32 %v721, %v723
      %v756 = vmax.f32 %v722, %v724
      %v757 = vmax.f32 %v723, %v725
      %v758 = vmax.f32 %v724, %v726
      %v759 = vmax.f32 %v725, %v727
      %v760 = vmax.f32 %v726, %v728
      %v761 = vmax.f32 %v727, %v729
      %v762 = vmax.f32 %v728, %v730
      %v763 = vmax.f32 %v729, %v731
      %v764 = vmax.f32 %v730, %v732
      %v765 = vmax.f32 %v731, %v733
      %v766 = vmax.f32 %v732, %v734
      %v767 = vmax.f32 %v733, %v735
      %v768 = vmax.f32 %v734, %v736
      %v769 = vmax.f32 %v735, %v737
      %v770 = vmax.f32 %v736, %v738
      %v771 = vmax.f32 %v737, %v739
      %v772 = vmax.f32 %v738, %v740
      %v773 = vmax.f32 %v739, %v741
      %v774 = vmax.f32 %v740, %v742
      %v775 = vmax.f32 %v741, %v743
      %v776 = vmax.f32 %v742, %v744
      %v777 = vmax.f32 %v743, %v745
      %v778 = vmax.f32 %v744, %v746
      %v779 = vmax.f32 %v745, %v747
      %v780 = vmax.f32 %v746, %v748
      %v781 = vmax.f32 %v747, %v749
      %v782 = vmax.f32 %v748, %v750
      %v783 = vmax.f32 %v749, %v751
      %v784 = vmax.f32 %v752, %v722
      %v785 = vmax.f32 %v753, %v723
      %v786 = vmax.f32 %v754, %v724
      %v787 = vmax.f32 %v755, %v725
      %v788 = vmax.f32 %v756, %v726
      %v789 = vmax.f32 %v757, %v727
      %v790 = vmax.f32 %v758, %v728
      %v791 = vmax.f32 %v759, %v729
      %v792 = vmax.f32 %v760, %v730
      %v793 = vmax.f32 %v761, %v731
      %v794 = vmax.f32 %v762, %v732
      %v795 = vmax.f32 %v763, %v733
      %v796 = vmax.f32 %v764, %v734
      %v797 = vmax.f32 %v765, %v735
      %v798 = vmax.f32 %v766, %v736
      %v799 = vmax.f32 %v767, %v737
      %v800 = vmax.f32 %v768, %v738
      %v801 = vmax.f32 %v769, %v739
      %v802 = vmax.f32 %v770, %v740
      %v803 = vmax.f32 %v771, %v741
      %v804 = vmax.f32 %v772, %v742
      %v805 = vmax.f32 %v773, %v743
      %v806 = vmax.f32 %v774, %v744
      %v807 = vmax.f32 %v775, %v745
      %v808 = vmax.f32 %v776, %v746
      %v809 = vmax.f32 %v777, %v747
      %v810 = vmax.f32 %v778, %v748
      %v811 = vmax.f32 %v779, %v749
      %v812 = vmax.f32 %v780, %v750
      %v813 = vmax.f32 %v781, %v751
      %v814 = vmax.f32 %v782, %v718
      %v815 = vmax.f32 %v783, %v719
      %v816 = vpack.c.bf16 %v785, %v784
      %v817 = vpack.c.bf16 %v787, %v786
      %v818 = vpack.c.bf16 %v789, %v788
      %v819 = vpack.c.bf16 %v791, %v790
      %v820 = vpack.c.bf16 %v793, %v792
      %v821 = vpack.c.bf16 %v795, %v794
      %v822 = vpack.c.bf16 %v797, %v796
      %v823 = vpack.c.bf16 %v799, %v798
      %v824 = vpack.c.bf16 %v801, %v800
      %v825 = vpack.c.bf16 %v803, %v802
      %v826 = vpack.c.bf16 %v805, %v804
      %v827 = vpack.c.bf16 %v807, %v806
      %v828 = vpack.c.bf16 %v809, %v808
      %v829 = vpack.c.bf16 %v811, %v810
      %v830 = vpack.c.bf16 %v813, %v812
      %v831 = vpack.c.bf16 %v815, %v814
      %v832 = vld [vmem:[%s1] sm:$0x3]
      %v833 = vld [vmem:[%s2] sm:$0x1]
      %v835 = vlaneseq
      %v836 = vshrl.u32 %v835, 7
      %v837 = vsub.s32 0, %v836
      %v838 = vrot.slane %v833, %v837
      %vm840 = vcmask 31744
      %v842 = vsel %vm840, %v816, 0
      %v845 = vsel %vm840, %v817, 0
      %v848 = vsel %vm840, %v818, 0
      %v851 = vsel %vm840, %v819, 0
      %v854 = vsel %vm840, %v820, 0
      %v857 = vsel %vm840, %v821, 0
      %v860 = vsel %vm840, %v822, 0
      %v863 = vsel %vm840, %v823, 0
      %v866 = vsel %vm840, %v824, 0
      %v869 = vsel %vm840, %v825, 0
      %v872 = vsel %vm840, %v826, 0
      %v875 = vsel %vm840, %v827, 0
      %v878 = vsel %vm840, %v828, 0
      %v881 = vsel %vm840, %v829, 0
      %v884 = vsel %vm840, %v830, 0
      %v887 = vsel %vm840, %v831, 0
      %vm889 = vcmask 1041408
      %v891 = vsel %vm889, %v832, 0
      %893 = vmatprep.subr.bf16.mxu0 0
      %894 = vmatpush1.bf16.msra.mxu0 %v891
      %895 = vmatprep.subr.bf16.mxu0 0
      %896 = vmatpush1.bf16.msra.mxu0 0
      %897 = vmatprep.subr.bf16.mxu0 0
      %898 = vmatpush1.bf16.msra.mxu0 0
      %899 = vmatprep.subr.bf16.mxu0 0
      %900 = vmatpush1.bf16.msra.mxu0 0
      %901 = vmatprep.subr.bf16.mxu0 0
      %902 = vmatpush1.bf16.msra.mxu0 0
      %903 = vmatprep.subr.bf16.mxu0 0
      %904 = vmatpush1.bf16.msra.mxu0 0
      %905 = vmatprep.subr.bf16.mxu0 0
      %906 = vmatpush1.bf16.msra.mxu0 0
      %907 = vmatprep.subr.bf16.mxu0 0
      %908 = vmatpush1.bf16.msra.mxu0 0
      %909 = vmatprep.subr.bf16.mxu0 0
      %910 = vmatpush1.bf16.msra.mxu0 0
      %911 = vmatprep.subr.bf16.mxu0 0
      %912 = vmatpush1.bf16.msra.mxu0 0
      %913 = vmatprep.subr.bf16.mxu0 0
      %914 = vmatpush1.bf16.msra.mxu0 0
      %915 = vmatprep.subr.bf16.mxu0 0
      %916 = vmatpush1.bf16.msra.mxu0 0
      %917 = vmatprep.subr.bf16.mxu0 0
      %918 = vmatpush1.bf16.msra.mxu0 0
      %919 = vmatprep.subr.bf16.mxu0 0
      %920 = vmatpush1.bf16.msra.mxu0 0
      %921 = vmatprep.subr.bf16.mxu0 0
      %922 = vmatpush1.bf16.msra.mxu0 0
      %923 = vmatprep.subr.bf16.mxu0 0
      %924 = vmatpush1.bf16.msra.mxu0 0
      %925 = vmatprep.mubr.bf16.mxu0 0
      %926 = vmatmul.mubr.bf16.gmra.mrb[0].mxu0 %v842
      %v927 = vpop.f32.mrb[0].mxu0
      %v928 = vadd.f32 %v838, %v927
      %v929 = vpop.f32.mrb[0].mxu0
      %v930 = vpop.f32.mrb[0].mxu0
      %v931 = vadd.f32 %v838, %v930
      %v932 = vpop.f32.mrb[0].mxu0
      %933 = vmatprep.mubr.bf16.mxu0 0
      %934 = vmatmul.mubr.bf16.gmra.mrb[0].mxu0 %v845
      %v935 = vpop.f32.mrb[0].mxu0
      %v936 = vadd.f32 %v838, %v935
      %v937 = vpop.f32.mrb[0].mxu0
      %v938 = vpop.f32.mrb[0].mxu0
      %v939 = vadd.f32 %v838, %v938
      %v940 = vpop.f32.mrb[0].mxu0
      %941 = vmatprep.mubr.bf16.mxu0 0
      %942 = vmatmul.mubr.bf16.gmra.mrb[0].mxu0 %v848
      %v943 = vpop.f32.mrb[0].mxu0
      %v944 = vadd.f32 %v838, %v943
      %v945 = vpop.f32.mrb[0].mxu0
      %v946 = vpop.f32.mrb[0].mxu0
      %v947 = vadd.f32 %v838, %v946
      %v948 = vpop.f32.mrb[0].mxu0
      %949 = vmatprep.mubr.bf16.mxu0 0
      %950 = vmatmul.mubr.bf16.gmra.mrb[0].mxu0 %v851
      %v951 = vpop.f32.mrb[0].mxu0
      %v952 = vadd.f32 %v838, %v951
      %v953 = vpop.f32.mrb[0].mxu0
      %v954 = vpop.f32.mrb[0].mxu0
      %v955 = vadd.f32 %v838, %v954
      %v956 = vpop.f32.mrb[0].mxu0
      %957 = vmatprep.mubr.bf16.mxu0 0
      %958 = vmatmul.mubr.bf16.gmra.mrb[0].mxu0 %v854
      %v959 = vpop.f32.mrb[0].mxu0
      %v960 = vadd.f32 %v838, %v959
      %v961 = vpop.f32.mrb[0].mxu0
      %v962 = vpop.f32.mrb[0].mxu0
      %v963 = vadd.f32 %v838, %v962
      %v964 = vpop.f32.mrb[0].mxu0
      %965 = vmatprep.mubr.bf16.mxu0 0
      %966 = vmatmul.mubr.bf16.gmra.mrb[0].mxu0 %v857
      %v967 = vpop.f32.mrb[0].mxu0
      %v968 = vadd.f32 %v838, %v967
      %v969 = vpop.f32.mrb[0].mxu0
      %v970 = vpop.f32.mrb[0].mxu0
      %v971 = vadd.f32 %v838, %v970
      %v972 = vpop.f32.mrb[0].mxu0
      %973 = vmatprep.mubr.bf16.mxu0 0
      %974 = vmatmul.mubr.bf16.gmra.mrb[0].mxu0 %v860
      %v975 = vpop.f32.mrb[0].mxu0
      %v976 = vadd.f32 %v838, %v975
      %v977 = vpop.f32.mrb[0].mxu0
      %v978 = vpop.f32.mrb[0].mxu0
      %v979 = vadd.f32 %v838, %v978
      %v980 = vpop.f32.mrb[0].mxu0
      %981 = vmatprep.mubr.bf16.mxu0 0
      %982 = vmatmul.mubr.bf16.gmra.mrb[0].mxu0 %v863
      %v983 = vpop.f32.mrb[0].mxu0
      %v984 = vadd.f32 %v838, %v983
      %v985 = vpop.f32.mrb[0].mxu0
      %v986 = vpop.f32.mrb[0].mxu0
      %v987 = vadd.f32 %v838, %v986
      %v988 = vpop.f32.mrb[0].mxu0
      %989 = vmatprep.mubr.bf16.mxu0 0
      %990 = vmatmul.mubr.bf16.gmra.mrb[0].mxu0 %v866
      %v991 = vpop.f32.mrb[0].mxu0
      %v992 = vadd.f32 %v838, %v991
      %v993 = vpop.f32.mrb[0].mxu0
      %v994 = vpop.f32.mrb[0].mxu0
      %v995 = vadd.f32 %v838, %v994
      %v996 = vpop.f32.mrb[0].mxu0
      %997 = vmatprep.mubr.bf16.mxu0 0
      %998 = vmatmul.mubr.bf16.gmra.mrb[0].mxu0 %v869
      %v999 = vpop.f32.mrb[0].mxu0
      %v1000 = vadd.f32 %v838, %v999
      %v1001 = vpop.f32.mrb[0].mxu0
      %v1002 = vpop.f32.mrb[0].mxu0
      %v1003 = vadd.f32 %v838, %v1002
      %v1004 = vpop.f32.mrb[0].mxu0
      %1005 = vmatprep.mubr.bf16.mxu0 0
      %1006 = vmatmul.mubr.bf16.gmra.mrb[0].mxu0 %v872
      %v1007 = vpop.f32.mrb[0].mxu0
      %v1008 = vadd.f32 %v838, %v1007
      %v1009 = vpop.f32.mrb[0].mxu0
      %v1010 = vpop.f32.mrb[0].mxu0
      %v1011 = vadd.f32 %v838, %v1010
      %v1012 = vpop.f32.mrb[0].mxu0
      %1013 = vmatprep.mubr.bf16.mxu0 0
      %1014 = vmatmul.mubr.bf16.gmra.mrb[0].mxu0 %v875
      %v1015 = vpop.f32.mrb[0].mxu0
      %v1016 = vadd.f32 %v838, %v1015
      %v1017 = vpop.f32.mrb[0].mxu0
      %v1018 = vpop.f32.mrb[0].mxu0
      %v1019 = vadd.f32 %v838, %v1018
      %v1020 = vpop.f32.mrb[0].mxu0
      %1021 = vmatprep.mubr.bf16.mxu0 0
      %1022 = vmatmul.mubr.bf16.gmra.mrb[0].mxu0 %v878
      %v1023 = vpop.f32.mrb[0].mxu0
      %v1024 = vadd.f32 %v838, %v1023
      %v1025 = vpop.f32.mrb[0].mxu0
      %v1026 = vpop.f32.mrb[0].mxu0
      %v1027 = vadd.f32 %v838, %v1026
      %v1028 = vpop.f32.mrb[0].mxu0
      %1029 = vmatprep.mubr.bf16.mxu0 0
      %1030 = vmatmul.mubr.bf16.gmra.mrb[0].mxu0 %v881
      %v1031 = vpop.f32.mrb[0].mxu0
      %v1032 = vadd.f32 %v838, %v1031
      %v1033 = vpop.f32.mrb[0].mxu0
      %v1034 = vpop.f32.mrb[0].mxu0
      %v1035 = vadd.f32 %v838, %v1034
      %v1036 = vpop.f32.mrb[0].mxu0
      %1037 = vmatprep.mubr.bf16.mxu0 0
      %1038 = vmatmul.mubr.bf16.gmra.mrb[0].mxu0 %v884
      %v1039 = vpop.f32.mrb[0].mxu0
      %v1040 = vadd.f32 %v838, %v1039
      %v1041 = vpop.f32.mrb[0].mxu0
      %v1042 = vpop.f32.mrb[0].mxu0
      %v1043 = vadd.f32 %v838, %v1042
      %v1044 = vpop.f32.mrb[0].mxu0
      %1045 = vmatprep.mubr.bf16.mxu0 0
      %1046 = vmatmul.mubr.bf16.gmra.mrb[0].mxu0 %v887
      %v1047 = vpop.f32.mrb[0].mxu0
      %v1048 = vadd.f32 %v838, %v1047
      %v1049 = vpop.f32.mrb[0].mxu0
      %v1050 = vpop.f32.mrb[0].mxu0
      %v1051 = vadd.f32 %v838, %v1050
      %v1052 = vpop.f32.mrb[0].mxu0
      %1053 = vdwg.mxu0
      %vm1054 = vcmask 64512
      %1055 = vst.msk [vmem:[%s204] sm:$0xff] %vm1054, %v928
      %1056 = vst.msk [vmem:[%s204 + $0x8] sm:$0xff] %vm1054, %v931
      %1057 = vst.msk [vmem:[%s204 + $0x10] sm:$0xff] %vm1054, %v936
      %1058 = vst.msk [vmem:[%s204 + $0x18] sm:$0xff] %vm1054, %v939
      %1059 = vst.msk [vmem:[%s204 + $0x20] sm:$0xff] %vm1054, %v944
      %1060 = vst.msk [vmem:[%s204 + $0x28] sm:$0xff] %vm1054, %v947
      %1061 = vst.msk [vmem:[%s204 + $0x30] sm:$0xff] %vm1054, %v952
      %1062 = vst.msk [vmem:[%s204 + $0x38] sm:$0xff] %vm1054, %v955
      %1063 = vst.msk [vmem:[%s204 + $0x40] sm:$0xff] %vm1054, %v960
      %1064 = vst.msk [vmem:[%s204 + $0x48] sm:$0xff] %vm1054, %v963
      %1065 = vst.msk [vmem:[%s204 + $0x50] sm:$0xff] %vm1054, %v968
      %1066 = vst.msk [vmem:[%s204 + $0x58] sm:$0xff] %vm1054, %v971
      %1067 = vst.msk [vmem:[%s204 + $0x60] sm:$0xff] %vm1054, %v976
      %1068 = vst.msk [vmem:[%s204 + $0x68] sm:$0xff] %vm1054, %v979
      %1069 = vst.msk [vmem:[%s204 + $0x70] sm:$0xff] %vm1054, %v984
      %1070 = vst.msk [vmem:[%s204 + $0x78] sm:$0xff] %vm1054, %v987
      %1071 = vst.msk [vmem:[%s204 + $0x80] sm:$0xff] %vm1054, %v992
      %1072 = vst.msk [vmem:[%s204 + $0x88] sm:$0xff] %vm1054, %v995
      %1073 = vst.msk [vmem:[%s204 + $0x90] sm:$0xff] %vm1054, %v1000
      %1074 = vst.msk [vmem:[%s204 + $0x98] sm:$0xff] %vm1054, %v1003
      %1075 = vst.msk [vmem:[%s204 + $0xa0] sm:$0xff] %vm1054, %v1008
      %1076 = vst.msk [vmem:[%s204 + $0xa8] sm:$0xff] %vm1054, %v1011
      %1077 = vst.msk [vmem:[%s204 + $0xb0] sm:$0xff] %vm1054, %v1016
      %1078 = vst.msk [vmem:[%s204 + $0xb8] sm:$0xff] %vm1054, %v1019
      %1079 = vst.msk [vmem:[%s204 + $0xc0] sm:$0xff] %vm1054, %v1024
      %1080 = vst.msk [vmem:[%s204 + $0xc8] sm:$0xff] %vm1054, %v1027
      %1081 = vst.msk [vmem:[%s204 + $0xd0] sm:$0xff] %vm1054, %v1032
      %1082 = vst.msk [vmem:[%s204 + $0xd8] sm:$0xff] %vm1054, %v1035
      %1083 = vst.msk [vmem:[%s204 + $0xe0] sm:$0xff] %vm1054, %v1040
      %1084 = vst.msk [vmem:[%s204 + $0xe8] sm:$0xff] %vm1054, %v1043
      %1085 = vst.msk [vmem:[%s204 + $0xf0] sm:$0xff] %vm1054, %v1048
      %1086 = vst.msk [vmem:[%s204 + $0xf8] sm:$0xff] %vm1054, %v1051
      %v1087 = vsel %vm1054, %v928, 0.0
      %v1088 = vsel %vm1054, %v931, 0.0
      %v1089 = vadd.f32 %v1087, %v1088
      %v1090 = vsel %vm1054, %v936, 0.0
      %v1091 = vadd.f32 %v1089, %v1090
      %v1092 = vsel %vm1054, %v939, 0.0
      %v1093 = vadd.f32 %v1091, %v1092
      %v1094 = vsel %vm1054, %v944, 0.0
      %v1095 = vadd.f32 %v1093, %v1094
      %v1096 = vsel %vm1054, %v947, 0.0
      %v1097 = vadd.f32 %v1095, %v1096
      %v1098 = vsel %vm1054, %v952, 0.0
      %v1099 = vadd.f32 %v1097, %v1098
      %v1100 = vsel %vm1054, %v955, 0.0
      %v1101 = vadd.f32 %v1099, %v1100
      %v1102 = vsel %vm1054, %v960, 0.0
      %v1103 = vadd.f32 %v1101, %v1102
      %v1104 = vsel %vm1054, %v963, 0.0
      %v1105 = vadd.f32 %v1103, %v1104
      %v1106 = vsel %vm1054, %v968, 0.0
      %v1107 = vadd.f32 %v1105, %v1106
      %v1108 = vsel %vm1054, %v971, 0.0
      %v1109 = vadd.f32 %v1107, %v1108
      %v1110 = vsel %vm1054, %v976, 0.0
      %v1111 = vadd.f32 %v1109, %v1110
      %v1112 = vsel %vm1054, %v979, 0.0
      %v1113 = vadd.f32 %v1111, %v1112
      %v1114 = vsel %vm1054, %v984, 0.0
      %v1115 = vadd.f32 %v1113, %v1114
      %v1116 = vsel %vm1054, %v987, 0.0
      %v1117 = vadd.f32 %v1115, %v1116
      %v1118 = vsel %vm1054, %v992, 0.0
      %v1119 = vadd.f32 %v1117, %v1118
      %v1120 = vsel %vm1054, %v995, 0.0
      %v1121 = vadd.f32 %v1119, %v1120
      %v1122 = vsel %vm1054, %v1000, 0.0
      %v1123 = vadd.f32 %v1121, %v1122
      %v1124 = vsel %vm1054, %v1003, 0.0
      %v1125 = vadd.f32 %v1123, %v1124
      %v1126 = vsel %vm1054, %v1008, 0.0
      %v1127 = vadd.f32 %v1125, %v1126
      %v1128 = vsel %vm1054, %v1011, 0.0
      %v1129 = vadd.f32 %v1127, %v1128
      %v1130 = vsel %vm1054, %v1016, 0.0
      %v1131 = vadd.f32 %v1129, %v1130
      %v1132 = vsel %vm1054, %v1019, 0.0
      %v1133 = vadd.f32 %v1131, %v1132
      %v1134 = vsel %vm1054, %v1024, 0.0
      %v1135 = vadd.f32 %v1133, %v1134
      %v1136 = vsel %vm1054, %v1027, 0.0
      %v1137 = vadd.f32 %v1135, %v1136
      %v1138 = vsel %vm1054, %v1032, 0.0
      %v1139 = vadd.f32 %v1137, %v1138
      %v1140 = vsel %vm1054, %v1035, 0.0
      %v1141 = vadd.f32 %v1139, %v1140
      %v1142 = vsel %vm1054, %v1040, 0.0
      %v1143 = vadd.f32 %v1141, %v1142
      %v1144 = vsel %vm1054, %v1043, 0.0
      %v1145 = vadd.f32 %v1143, %v1144
      %v1146 = vsel %vm1054, %v1048, 0.0
      %v1147 = vadd.f32 %v1145, %v1146
      %v1148 = vsel %vm1054, %v1051, 0.0
      %v1149 = vadd.f32 %v1147, %v1148
      %v1150 = vrot.slane %v1149, 4
      %v1151 = vadd.f32 %v1149, %v1150
      %v1152 = vrot.slane %v1151, 2
      %v1153 = vadd.f32 %v1151, %v1152
      %v1154 = vrot.slane %v1153, 1
      %v1155 = vadd.f32 %v1153, %v1154
      %v1156 = vmul.f32 %v928, %v928
      %v1157 = vmul.f32 %v931, %v931
      %v1158 = vmul.f32 %v936, %v936
      %v1159 = vmul.f32 %v939, %v939
      %v1160 = vmul.f32 %v944, %v944
      %v1161 = vmul.f32 %v947, %v947
      %v1162 = vmul.f32 %v952, %v952
      %v1163 = vmul.f32 %v955, %v955
      %v1164 = vmul.f32 %v960, %v960
      %v1165 = vmul.f32 %v963, %v963
      %v1166 = vmul.f32 %v968, %v968
      %v1167 = vmul.f32 %v971, %v971
      %v1168 = vmul.f32 %v976, %v976
      %v1169 = vmul.f32 %v979, %v979
      %v1170 = vmul.f32 %v984, %v984
      %v1171 = vmul.f32 %v987, %v987
      %v1172 = vmul.f32 %v992, %v992
      %v1173 = vmul.f32 %v995, %v995
      %v1174 = vmul.f32 %v1000, %v1000
      %v1175 = vmul.f32 %v1003, %v1003
      %v1176 = vmul.f32 %v1008, %v1008
      %v1177 = vmul.f32 %v1011, %v1011
      %v1178 = vmul.f32 %v1016, %v1016
      %v1179 = vmul.f32 %v1019, %v1019
      %v1180 = vmul.f32 %v1024, %v1024
      %v1181 = vmul.f32 %v1027, %v1027
      %v1182 = vmul.f32 %v1032, %v1032
      %v1183 = vmul.f32 %v1035, %v1035
      %v1184 = vmul.f32 %v1040, %v1040
      %v1185 = vmul.f32 %v1043, %v1043
      %v1186 = vmul.f32 %v1048, %v1048
      %v1187 = vmul.f32 %v1051, %v1051
      %v1188 = vsel %vm1054, %v1156, 0.0
      %v1189 = vsel %vm1054, %v1157, 0.0
      %v1190 = vadd.f32 %v1188, %v1189
      %v1191 = vsel %vm1054, %v1158, 0.0
      %v1192 = vadd.f32 %v1190, %v1191
      %v1193 = vsel %vm1054, %v1159, 0.0
      %v1194 = vadd.f32 %v1192, %v1193
      %v1195 = vsel %vm1054, %v1160, 0.0
      %v1196 = vadd.f32 %v1194, %v1195
      %v1197 = vsel %vm1054, %v1161, 0.0
      %v1198 = vadd.f32 %v1196, %v1197
      %v1199 = vsel %vm1054, %v1162, 0.0
      %v1200 = vadd.f32 %v1198, %v1199
      %v1201 = vsel %vm1054, %v1163, 0.0
      %v1202 = vadd.f32 %v1200, %v1201
      %v1203 = vsel %vm1054, %v1164, 0.0
      %v1204 = vadd.f32 %v1202, %v1203
      %v1205 = vsel %vm1054, %v1165, 0.0
      %v1206 = vadd.f32 %v1204, %v1205
      %v1207 = vsel %vm1054, %v1166, 0.0
      %v1208 = vadd.f32 %v1206, %v1207
      %v1209 = vsel %vm1054, %v1167, 0.0
      %v1210 = vadd.f32 %v1208, %v1209
      %v1211 = vsel %vm1054, %v1168, 0.0
      %v1212 = vadd.f32 %v1210, %v1211
      %v1213 = vsel %vm1054, %v1169, 0.0
      %v1214 = vadd.f32 %v1212, %v1213
      %v1215 = vsel %vm1054, %v1170, 0.0
      %v1216 = vadd.f32 %v1214, %v1215
      %v1217 = vsel %vm1054, %v1171, 0.0
      %v1218 = vadd.f32 %v1216, %v1217
      %v1219 = vsel %vm1054, %v1172, 0.0
      %v1220 = vadd.f32 %v1218, %v1219
      %v1221 = vsel %vm1054, %v1173, 0.0
      %v1222 = vadd.f32 %v1220, %v1221
      %v1223 = vsel %vm1054, %v1174, 0.0
      %v1224 = vadd.f32 %v1222, %v1223
      %v1225 = vsel %vm1054, %v1175, 0.0
      %v1226 = vadd.f32 %v1224, %v1225
      %v1227 = vsel %vm1054, %v1176, 0.0
      %v1228 = vadd.f32 %v1226, %v1227
      %v1229 = vsel %vm1054, %v1177, 0.0
      %v1230 = vadd.f32 %v1228, %v1229
      %v1231 = vsel %vm1054, %v1178, 0.0
      %v1232 = vadd.f32 %v1230, %v1231
      %v1233 = vsel %vm1054, %v1179, 0.0
      %v1234 = vadd.f32 %v1232, %v1233
      %v1235 = vsel %vm1054, %v1180, 0.0
      %v1236 = vadd.f32 %v1234, %v1235
      %v1237 = vsel %vm1054, %v1181, 0.0
      %v1238 = vadd.f32 %v1236, %v1237
      %v1239 = vsel %vm1054, %v1182, 0.0
      %v1240 = vadd.f32 %v1238, %v1239
      %v1241 = vsel %vm1054, %v1183, 0.0
      %v1242 = vadd.f32 %v1240, %v1241
      %v1243 = vsel %vm1054, %v1184, 0.0
      %v1244 = vadd.f32 %v1242, %v1243
      %v1245 = vsel %vm1054, %v1185, 0.0
      %v1246 = vadd.f32 %v1244, %v1245
      %v1247 = vsel %vm1054, %v1186, 0.0
      %v1248 = vadd.f32 %v1246, %v1247
      %v1249 = vsel %vm1054, %v1187, 0.0
      %v1250 = vadd.f32 %v1248, %v1249
      %v1251 = vrot.slane %v1250, 4
      %v1252 = vadd.f32 %v1250, %v1251
      %v1253 = vrot.slane %v1252, 2
      %v1254 = vadd.f32 %v1252, %v1253
      %v1255 = vrot.slane %v1254, 1
      %v1256 = vadd.f32 %v1254, %v1255
      %v1257 = vsel %vm275, %v1155, %v1256
      %vm1258 = vcmask 58368
      %1259 = vst.msk [vmem:[%s208] sm:$0x3] %vm1258, %v1257
      %p1260 = scmp.lt.s32.totalorder %s16, 1
      %s1261 = scalar_select %p1260, %s16, 1
      %s1262 = smul.addr %s1261, 32
      %s1263 = smul.addr %s1262, 8
      %s1264 = scalar_lea.vmem %s3, %s1263
      %p1265 = scmp.lt.s32.totalorder %s16, 1
      %s1266 = scalar_select %p1265, %s16, 1
      %s1267 = smul.addr %s1266, 2
      %s1268 = scalar_lea.vmem %s4, %s1267
      // Predicated region
      $region33: #{inception_forward.10} parent=31 // pred_check
        %p1269 = pneg %p102
      $region34: #{inception_forward.10} parent=31 // pred_check_branch
        %1271 = sbr.rel (%p1269) target = $region36
      $region35: #{inception_forward.10} parent=31 // pred_region
        _
      $region36: #{inception_forward.10} parent=31 // pred_fallthru
        _
      // Predicated region
      $region37: #{inception_forward.10} parent=31 // pred_check
        %p1272 = pneg %p128
      $region38: #{inception_forward.10} parent=31 // pred_check_branch
        %1274 = sbr.rel (%p1272) target = $region40
      $region39: #{inception_forward.10} parent=31 // pred_region
        _
      $region40: #{inception_forward.10} parent=31 // pred_fallthru
        _
    $region32: #{inception_forward.10} parent=5 // pred_fallthru
      _
    %p1275 = scmp.le.s32.totalorder 2, %s11
    // Predicated region
    $region41: #{inception_forward.10} parent=5 // pred_check
      %p1276 = pneg %p1275
    $region42: #{inception_forward.10} parent=5 // pred_check_branch
      %1278 = sbr.rel (%p1276) target = $region44
    $region43: #{inception_forward.10} parent=5 // pred_region
      %s1279 = ssub.s32 %s11, 2
      // Predicated region
      $region45: #{inception_forward.10} parent=43 // pred_check
        %p1280 = pneg %p108
      $region46: #{inception_forward.10} parent=43 // pred_check_branch
        %1282 = sbr.rel (%p1280) target = $region48
      $region47: #{inception_forward.10} parent=43 // pred_region
        %p1283 = scmp.lt.s32.totalorder %s17, 1
        %s1284 = scalar_select %p1283, %s17, 1
        %s1285 = smul.addr %s1284, 32
        %s1286 = smul.addr %s1285, 8
        %s1287 = scalar_lea.vmem %s3, %s1286
      $region48: #{inception_forward.10} parent=43 // pred_fallthru
        _
      // Predicated region
      $region49: #{inception_forward.10} parent=43 // pred_check
        %p1288 = pneg %p134
      $region50: #{inception_forward.10} parent=43 // pred_check_branch
        %1290 = sbr.rel (%p1288) target = $region52
      $region51: #{inception_forward.10} parent=43 // pred_region
        %p1291 = scmp.lt.s32.totalorder %s17, 1
        %s1292 = scalar_select %p1291, %s17, 1
        %s1293 = smul.addr %s1292, 2
        %s1294 = scalar_lea.vmem %s4, %s1293
      $region52: #{inception_forward.10} parent=43 // pred_fallthru
        _
    $region44: #{inception_forward.10} parent=5 // pred_fallthru
      _
  $region6: #{inception_forward.10} parent=0 // loop_footer
    %s15 = sadd.s32 1, %s11
  $region7: #{inception_forward.10} parent=0 // loop_footer_branch
    %10 = sbr.rel target = $region3
  $region8: #{inception_forward.10} parent=0 // loop_exit
    _

// kernel: inception_forward.8
$region0: #{inception_forward.8}
  #allocation0 [shape = 'u32[]', space=smem, size = 0x4, offset = 0x4, fixed_abs, tag = 'smem constant byte address 0x4 - core index']
  #allocation1 [shape = 'u32[144,128]{1,0:T(1,128)}', space=vmem, size = 0x12000, scoped, tag = 'internal scratch']
  %s0 = inlined_call_operand.vmem [shape: f32[2,16,16,4], index: 0, kind: input, shape index: {}]
  %s1 = inlined_call_operand.vmem [shape: f32[1,4], index: 1, kind: input, shape index: {}]
  %s2 = inlined_call_operand.vmem [shape: f32[1,4], index: 2, kind: input, shape index: {}]
  %s3 = inlined_call_operand.vmem [shape: bf16[36,8], index: 3, kind: input, shape index: {}]
  %s4 = inlined_call_operand.vmem [shape: f32[1,8], index: 4, kind: input, shape index: {}]
  %s5 = inlined_call_operand.vmem [shape: f32[2,256,8], index: 5, kind: output, shape index: {0}]
  %s6 = inlined_call_operand.vmem [shape: f32[2,2,8], index: 6, kind: output, shape index: {1}]
  %7 = xla_tuple %s5, %s6
  %s8 = sld [smem:[#allocation0]]
  $region61: #{inception_forward.8} parent=0
    _
  %s10 = ssub.s32 1, %s8
  %s11 = scalar_select 0, %s10, %s8
  loop: start=0, step=1, limit=4
  $region2: #{inception_forward.8} parent=0 // loop_pre_header
    _
  $region3: #{inception_forward.8} parent=0 // loop_header
    %s13 = sphi 0, %s17
    %p14 = scmp.ge.s32.totalorder %s13, 4
    %s23 = sphi 0, %s25
    %s26 = sphi 0, %s23
    %s27 = sphi 0, %s26
    %s43 = sphi 0, %s27
    %s47 = sphi 0, %s47
    %s49 = sphi 0, %s47
    %s50 = sphi 0, %s49
    %s64 = sphi 0, %s50
    %s68 = sphi 0, %s68
    %s70 = sphi 0, %s68
    %s71 = sphi 0, %s70
    %s85 = sphi 0, %s71
    %s89 = sphi 0, %s89
    %s91 = sphi 0, %s89
    %s92 = sphi 0, %s91
    %s106 = sphi 0, %s92
    %s110 = sphi 0, %s110
    %s112 = sphi 0, %s110
    %s113 = sphi 0, %s112
    %s127 = sphi 0, %s113
    %s133 = sphi 0, %s135
    %s136 = sphi 0, %s133
    %s137 = sphi 0, %s136
    %s153 = sphi 0, %s137
    %s159 = sphi 0, %s161
    %s162 = sphi 0, %s159
    %s163 = sphi 0, %s162
    %s179 = sphi 0, %s163
  $region4: #{inception_forward.8} parent=0 // loop_header_branch
    %16 = sbr.rel (%p14) target = $region8
  $region5: #{inception_forward.8} parent=0 // loop_body
    %s18 = ssub.s32 %s13, 1
    %s19 = ssub.s32 %s13, 2
    %s20 = sadd.s32 %s13, 1
    %s21 = ssub.s32 %s13, %s20
    %p22 = scmp.eq.s32.totalorder %s21, 0
    %s24 = sadd.s32 %s23, 1
    %s25 = scalar_select %p22, %s23, %s24
    %p28 = pneg %p22
    %p29 = scmp.eq.s32.totalorder %s13, 1
    %p30 = por %p28, %p29
    %p31 = scmp.ne.s32.totalorder %s23, %s26
    %p32 = scmp.eq.s32.totalorder %s13, 0
    %p33 = por %p31, %p32
    %p34 = scmp.ne.s32.totalorder %s23, %s26
    %p35 = scmp.eq.s32.totalorder %s18, 1
    %p36 = por %p34, %p35
    %p37 = scmp.ne.s32.totalorder %s26, %s27
    %p38 = scmp.eq.s32.totalorder %s18, 0
    %p39 = por %p37, %p38
    %p40 = scmp.ne.s32.totalorder %s26, %s27
    %p41 = scmp.eq.s32.totalorder %s19, 1
    %p42 = por %p40, %p41
    %p44 = scmp.ne.s32.totalorder %s27, %s43
    %p45 = scmp.eq.s32.totalorder %s19, 0
    %p46 = por %p44, %p45
    %s48 = sadd.s32 %s47, 1
    %p51 = scmp.eq.s32.totalorder %s13, 1
    %p52 = scmp.ne.s32.totalorder %s47, %s49
    %p53 = scmp.eq.s32.totalorder %s13, 0
    %p54 = por %p52, %p53
    %p55 = scmp.ne.s32.totalorder %s47, %s49
    %p56 = scmp.eq.s32.totalorder %s18, 1
    %p57 = por %p55, %p56
    %p58 = scmp.ne.s32.totalorder %s49, %s50
    %p59 = scmp.eq.s32.totalorder %s18, 0
    %p60 = por %p58, %p59
    %p61 = scmp.ne.s32.totalorder %s49, %s50
    %p62 = scmp.eq.s32.totalorder %s19, 1
    %p63 = por %p61, %p62
    %p65 = scmp.ne.s32.totalorder %s50, %s64
    %p66 = scmp.eq.s32.totalorder %s19, 0
    %p67 = por %p65, %p66
    %s69 = sadd.s32 %s68, 1
    %p72 = scmp.eq.s32.totalorder %s13, 1
    %p73 = scmp.ne.s32.totalorder %s68, %s70
    %p74 = scmp.eq.s32.totalorder %s13, 0
    %p75 = por %p73, %p74
    %p76 = scmp.ne.s32.totalorder %s68, %s70
    %p77 = scmp.eq.s32.totalorder %s18, 1
    %p78 = por %p76, %p77
    %p79 = scmp.ne.s32.totalorder %s70, %s71
    %p80 = scmp.eq.s32.totalorder %s18, 0
    %p81 = por %p79, %p80
    %p82 = scmp.ne.s32.totalorder %s70, %s71
    %p83 = scmp.eq.s32.totalorder %s19, 1
    %p84 = por %p82, %p83
    %p86 = scmp.ne.s32.totalorder %s71, %s85
    %p87 = scmp.eq.s32.totalorder %s19, 0
    %p88 = por %p86, %p87
    %s90 = sadd.s32 %s89, 1
    %p93 = scmp.eq.s32.totalorder %s13, 1
    %p94 = scmp.ne.s32.totalorder %s89, %s91
    %p95 = scmp.eq.s32.totalorder %s13, 0
    %p96 = por %p94, %p95
    %p97 = scmp.ne.s32.totalorder %s89, %s91
    %p98 = scmp.eq.s32.totalorder %s18, 1
    %p99 = por %p97, %p98
    %p100 = scmp.ne.s32.totalorder %s91, %s92
    %p101 = scmp.eq.s32.totalorder %s18, 0
    %p102 = por %p100, %p101
    %p103 = scmp.ne.s32.totalorder %s91, %s92
    %p104 = scmp.eq.s32.totalorder %s19, 1
    %p105 = por %p103, %p104
    %p107 = scmp.ne.s32.totalorder %s92, %s106
    %p108 = scmp.eq.s32.totalorder %s19, 0
    %p109 = por %p107, %p108
    %s111 = sadd.s32 %s110, 1
    %p114 = scmp.eq.s32.totalorder %s13, 1
    %p115 = scmp.ne.s32.totalorder %s110, %s112
    %p116 = scmp.eq.s32.totalorder %s13, 0
    %p117 = por %p115, %p116
    %p118 = scmp.ne.s32.totalorder %s110, %s112
    %p119 = scmp.eq.s32.totalorder %s18, 1
    %p120 = por %p118, %p119
    %p121 = scmp.ne.s32.totalorder %s112, %s113
    %p122 = scmp.eq.s32.totalorder %s18, 0
    %p123 = por %p121, %p122
    %p124 = scmp.ne.s32.totalorder %s112, %s113
    %p125 = scmp.eq.s32.totalorder %s19, 1
    %p126 = por %p124, %p125
    %p128 = scmp.ne.s32.totalorder %s113, %s127
    %p129 = scmp.eq.s32.totalorder %s19, 0
    %p130 = por %p128, %p129
    %s131 = ssub.s32 %s13, %s20
    %p132 = scmp.eq.s32.totalorder %s131, 0
    %s134 = sadd.s32 %s133, 1
    %s135 = scalar_select %p132, %s133, %s134
    %p138 = pneg %p132
    %p139 = scmp.eq.s32.totalorder %s13, 1
    %p140 = por %p138, %p139
    %p141 = scmp.ne.s32.totalorder %s133, %s136
    %p142 = scmp.eq.s32.totalorder %s13, 0
    %p143 = por %p141, %p142
    %p144 = scmp.ne.s32.totalorder %s133, %s136
    %p145 = scmp.eq.s32.totalorder %s18, 1
    %p146 = por %p144, %p145
    %p147 = scmp.ne.s32.totalorder %s136, %s137
    %p148 = scmp.eq.s32.totalorder %s18, 0
    %p149 = por %p147, %p148
    %p150 = scmp.ne.s32.totalorder %s136, %s137
    %p151 = scmp.eq.s32.totalorder %s19, 1
    %p152 = por %p150, %p151
    %p154 = scmp.ne.s32.totalorder %s137, %s153
    %p155 = scmp.eq.s32.totalorder %s19, 0
    %p156 = por %p154, %p155
    %s157 = ssub.s32 %s13, %s20
    %p158 = scmp.eq.s32.totalorder %s157, 0
    %s160 = sadd.s32 %s159, 1
    %s161 = scalar_select %p158, %s159, %s160
    %p164 = pneg %p158
    %p165 = scmp.eq.s32.totalorder %s13, 1
    %p166 = por %p164, %p165
    %p167 = scmp.ne.s32.totalorder %s159, %s162
    %p168 = scmp.eq.s32.totalorder %s13, 0
    %p169 = por %p167, %p168
    %p170 = scmp.ne.s32.totalorder %s159, %s162
    %p171 = scmp.eq.s32.totalorder %s18, 1
    %p172 = por %p170, %p171
    %p173 = scmp.ne.s32.totalorder %s162, %s163
    %p174 = scmp.eq.s32.totalorder %s18, 0
    %p175 = por %p173, %p174
    %p176 = scmp.ne.s32.totalorder %s162, %s163
    %p177 = scmp.eq.s32.totalorder %s19, 1
    %p178 = por %p176, %p177
    %p180 = scmp.ne.s32.totalorder %s163, %s179
    %p181 = scmp.eq.s32.totalorder %s19, 0
    %p182 = por %p180, %p181
    %p183 = scmp.le.s32.totalorder 1, %s13
    %p184 = scmp.lt.s32.totalorder %s13, 3
    %p185 = pnand %p183, %p184
    %p186 = pneg %p185
    // Predicated region
    $region9: #{inception_forward.8} parent=5 // pred_check
      _
    $region10: #{inception_forward.8} parent=5 // pred_check_branch
      %188 = sbr.rel (%p185) target = $region12
    $region11: #{inception_forward.8} parent=5 // pred_region
      %s189 = ssub.s32 %s13, 1
      // Predicated region
      $region13: #{inception_forward.8} parent=11 // pred_check
        %p190 = pneg %p60
      $region14: #{inception_forward.8} parent=11 // pred_check_branch
        %192 = sbr.rel (%p190) target = $region16
      $region15: #{inception_forward.8} parent=11 // pred_region
        _
      $region16: #{inception_forward.8} parent=11 // pred_fallthru
        _
      // Predicated region
      $region17: #{inception_forward.8} parent=11 // pred_check
        %p193 = pneg %p81
      $region18: #{inception_forward.8} parent=11 // pred_check_branch
        %195 = sbr.rel (%p193) target = $region20
      $region19: #{inception_forward.8} parent=11 // pred_region
        _
      $region20: #{inception_forward.8} parent=11 // pred_fallthru
        _
      // Predicated region
      $region21: #{inception_forward.8} parent=11 // pred_check
        %p196 = pneg %p102
      $region22: #{inception_forward.8} parent=11 // pred_check_branch
        %198 = sbr.rel (%p196) target = $region24
      $region23: #{inception_forward.8} parent=11 // pred_region
        _
      $region24: #{inception_forward.8} parent=11 // pred_fallthru
        _
      // Predicated region
      $region25: #{inception_forward.8} parent=11 // pred_check
        %p199 = pneg %p123
      $region26: #{inception_forward.8} parent=11 // pred_check_branch
        %201 = sbr.rel (%p199) target = $region28
      $region27: #{inception_forward.8} parent=11 // pred_region
        _
      $region28: #{inception_forward.8} parent=11 // pred_fallthru
        _
    $region12: #{inception_forward.8} parent=5 // pred_fallthru
      _
    %p202 = scmp.lt.s32.totalorder %s13, 2
    // Predicated region
    $region29: #{inception_forward.8} parent=5 // pred_check
      %p203 = pneg %p202
    $region30: #{inception_forward.8} parent=5 // pred_check_branch
      %205 = sbr.rel (%p203) target = $region32
    $region31: #{inception_forward.8} parent=5 // pred_region
      // Predicated region
      $region33: #{inception_forward.8} parent=31 // pred_check
        %p206 = pneg %p33
      $region34: #{inception_forward.8} parent=31 // pred_check_branch
        %208 = sbr.rel (%p206) target = $region36
      $region35: #{inception_forward.8} parent=31 // pred_region
        %p209 = scmp.lt.s32.totalorder %s13, 1
        %s210 = scalar_select %p209, %s13, 1
        %s211 = smul.addr %s210, 32
        %s212 = smul.addr %s211, 8
        %s213 = scalar_lea.vmem %s0, %s212
      $region36: #{inception_forward.8} parent=31 // pred_fallthru
        _
    $region32: #{inception_forward.8} parent=5 // pred_fallthru
      _
    %p214 = scmp.le.s32.totalorder 1, %s13
    %p215 = scmp.lt.s32.totalorder %s13, 3
    %p216 = pnand %p214, %p215
    %p217 = pneg %p216
    // Predicated region
    $region37: #{inception_forward.8} parent=5 // pred_check
      _
    $region38: #{inception_forward.8} parent=5 // pred_check_branch
      %219 = sbr.rel (%p216) target = $region40
    $region39: #{inception_forward.8} parent=5 // pred_region
      %s220 = ssub.s32 %s13, 1
      %p221 = scmp.lt.s32.totalorder %s18, 1
      %s222 = scalar_select %p221, %s18, 1
      %s223 = smul.addr %s222, 32
      %s224 = smul.addr %s223, 8
      %s225 = scalar_lea.vmem %s0, %s224
      %p226 = pneg %p39
      %p227 = pneg %p36
      %p228 = pneg %p60
      %p229 = pneg %p57
      %p230 = pneg %p81
      %p231 = pneg %p78
      %p232 = pneg %p102
      %p233 = pneg %p99
      %p234 = pneg %p123
      %p235 = pneg %p120
      %p236 = pneg %p149
      %p237 = pneg %p146
      %p238 = scmp.lt.s32.totalorder %s18, 1
      %s239 = scalar_select %p238, %s18, 1
      %s240 = smul.addr %s239, 32
      %s241 = smul.addr %s240, 8
      %s242 = scalar_lea.vmem %s5, %s241
      %p243 = pneg %p175
      %p244 = pneg %p172
      %p245 = scmp.lt.s32.totalorder %s18, 1
      %s246 = scalar_select %p245, %s18, 1
      %s247 = smul.addr %s246, 2
      %s248 = scalar_lea.vmem %s6, %s247
      %p249 = scmp.lt.s32.totalorder %s18, 1
      %s250 = scalar_select %p249, %s18, 1
      %s251 = smul.addr %s250, 32
      %s252 = smul.addr %s251, 8
      %s253 = scalar_lea.vmem %s0, %s252
      %p254 = scmp.lt.s32.totalorder %s18, 1
      %s255 = scalar_select %p254, %s18, 1
      %s256 = smul.addr %s255, 32
      %s257 = smul.addr %s256, 8
      %s258 = scalar_lea.vmem %s5, %s257
      %p259 = scmp.lt.s32.totalorder %s18, 1
      %s260 = scalar_select %p259, %s18, 1
      %s261 = smul.addr %s260, 2
      %s262 = scalar_lea.vmem %s6, %s261
      %v264 = vld [vmem:[%s1] sm:$0x1]
      %v265 = vld [vmem:[%s2] sm:$0x1]
      %v266 = vld [vmem:[%s253] sm:$0xff]
      %v267 = vld [vmem:[%s253 + $0x8] sm:$0xff]
      %v268 = vld [vmem:[%s253 + $0x10] sm:$0xff]
      %v269 = vld [vmem:[%s253 + $0x18] sm:$0xff]
      %v270 = vld [vmem:[%s253 + $0x20] sm:$0xff]
      %v271 = vld [vmem:[%s253 + $0x28] sm:$0xff]
      %v272 = vld [vmem:[%s253 + $0x30] sm:$0xff]
      %v273 = vld [vmem:[%s253 + $0x38] sm:$0xff]
      %v274 = vld [vmem:[%s253 + $0x40] sm:$0xff]
      %v275 = vld [vmem:[%s253 + $0x48] sm:$0xff]
      %v276 = vld [vmem:[%s253 + $0x50] sm:$0xff]
      %v277 = vld [vmem:[%s253 + $0x58] sm:$0xff]
      %v278 = vld [vmem:[%s253 + $0x60] sm:$0xff]
      %v279 = vld [vmem:[%s253 + $0x68] sm:$0xff]
      %v280 = vld [vmem:[%s253 + $0x70] sm:$0xff]
      %v281 = vld [vmem:[%s253 + $0x78] sm:$0xff]
      %v282 = vld [vmem:[%s253 + $0x80] sm:$0xff]
      %v283 = vld [vmem:[%s253 + $0x88] sm:$0xff]
      %v284 = vld [vmem:[%s253 + $0x90] sm:$0xff]
      %v285 = vld [vmem:[%s253 + $0x98] sm:$0xff]
      %v286 = vld [vmem:[%s253 + $0xa0] sm:$0xff]
      %v287 = vld [vmem:[%s253 + $0xa8] sm:$0xff]
      %v288 = vld [vmem:[%s253 + $0xb0] sm:$0xff]
      %v289 = vld [vmem:[%s253 + $0xb8] sm:$0xff]
      %v290 = vld [vmem:[%s253 + $0xc0] sm:$0xff]
      %v291 = vld [vmem:[%s253 + $0xc8] sm:$0xff]
      %v292 = vld [vmem:[%s253 + $0xd0] sm:$0xff]
      %v293 = vld [vmem:[%s253 + $0xd8] sm:$0xff]
      %v294 = vld [vmem:[%s253 + $0xe0] sm:$0xff]
      %v295 = vld [vmem:[%s253 + $0xe8] sm:$0xff]
      %v296 = vld [vmem:[%s253 + $0xf0] sm:$0xff]
      %v297 = vld [vmem:[%s253 + $0xf8] sm:$0xff]
      %v299 = vlaneseq
      %v300 = vshrl.u32 %v299, 7
      %v301 = vsub.s32 0, %v300
      %v302 = vrot.slane %v264, %v301
      %v304 = vmul.f32 %v266, %v302
      %v305 = vmul.f32 %v267, %v302
      %v306 = vmul.f32 %v268, %v302
      %v307 = vmul.f32 %v269, %v302
      %v308 = vmul.f32 %v270, %v302
      %v309 = vmul.f32 %v271, %v302
      %v310 = vmul.f32 %v272, %v302
      %v311 = vmul.f32 %v273, %v302
      %v312 = vmul.f32 %v274, %v302
      %v313 = vmul.f32 %v275, %v302
      %v314 = vmul.f32 %v276, %v302
      %v315 = vmul.f32 %v277, %v302
      %v316 = vmul.f32 %v278, %v302
      %v317 = vmul.f32 %v279, %v302
      %v318 = vmul.f32 %v280, %v302
      %v319 = vmul.f32 %v281, %v302
      %v320 = vmul.f32 %v282, %v302
      %v321 = vmul.f32 %v283, %v302
      %v322 = vmul.f32 %v284, %v302
      %v323 = vmul.f32 %v285, %v302
      %v324 = vmul.f32 %v286, %v302
      %v325 = vmul.f32 %v287, %v302
      %v326 = vmul.f32 %v288, %v302
      %v327 = vmul.f32 %v289, %v302
      %v328 = vmul.f32 %v290, %v302
      %v329 = vmul.f32 %v291, %v302
      %v330 = vmul.f32 %v292, %v302
      %v331 = vmul.f32 %v293, %v302
      %v332 = vmul.f32 %v294, %v302
      %v333 = vmul.f32 %v295, %v302
      %v334 = vmul.f32 %v296, %v302
      %v335 = vmul.f32 %v297, %v302
      %v337 = vlaneseq
      %v338 = vshrl.u32 %v337, 7
      %v339 = vsub.s32 0, %v338
      %v340 = vrot.slane %v265, %v339
      %v342 = vadd.f32 %v304, %v340
      %v343 = vadd.f32 %v305, %v340
      %v344 = vadd.f32 %v306, %v340
      %v345 = vadd.f32 %v307, %v340
      %v346 = vadd.f32 %v308, %v340
      %v347 = vadd.f32 %v309, %v340
      %v348 = vadd.f32 %v310, %v340
      %v349 = vadd.f32 %v311, %v340
      %v350 = vadd.f32 %v312, %v340
      %v351 = vadd.f32 %v313, %v340
      %v352 = vadd.f32 %v314, %v340
      %v353 = vadd.f32 %v315, %v340
      %v354 = vadd.f32 %v316, %v340
      %v355 = vadd.f32 %v317, %v340
      %v356 = vadd.f32 %v318, %v340
      %v357 = vadd.f32 %v319, %v340
      %v358 = vadd.f32 %v320, %v340
      %v359 = vadd.f32 %v321, %v340
      %v360 = vadd.f32 %v322, %v340
      %v361 = vadd.f32 %v323, %v340
      %v362 = vadd.f32 %v324, %v340
      %v363 = vadd.f32 %v325, %v340
      %v364 = vadd.f32 %v326, %v340
      %v365 = vadd.f32 %v327, %v340
      %v366 = vadd.f32 %v328, %v340
      %v367 = vadd.f32 %v329, %v340
      %v368 = vadd.f32 %v330, %v340
      %v369 = vadd.f32 %v331, %v340
      %v370 = vadd.f32 %v332, %v340
      %v371 = vadd.f32 %v333, %v340
      %v372 = vadd.f32 %v334, %v340
      %v373 = vadd.f32 %v335, %v340
      %v374 = vmax.f32 %v342, 0.0
      %v375 = vmax.f32 %v343, 0.0
      %v376 = vmax.f32 %v344, 0.0
      %v377 = vmax.f32 %v345, 0.0
      %v378 = vmax.f32 %v346, 0.0
      %v379 = vmax.f32 %v347, 0.0
      %v380 = vmax.f32 %v348, 0.0
      %v381 = vmax.f32 %v349, 0.0
      %v382 = vmax.f32 %v350, 0.0
      %v383 = vmax.f32 %v351, 0.0
      %v384 = vmax.f32 %v352, 0.0
      %v385 = vmax.f32 %v353, 0.0
      %v386 = vmax.f32 %v354, 0.0
      %v387 = vmax.f32 %v355, 0.0
      %v388 = vmax.f32 %v356, 0.0
      %v389 = vmax.f32 %v357, 0.0
      %v390 = vmax.f32 %v358, 0.0
      %v391 = vmax.f32 %v359, 0.0
      %v392 = vmax.f32 %v360, 0.0
      %v393 = vmax.f32 %v361, 0.0
      %v394 = vmax.f32 %v362, 0.0
      %v395 = vmax.f32 %v363, 0.0
      %v396 = vmax.f32 %v364, 0.0
      %v397 = vmax.f32 %v365, 0.0
      %v398 = vmax.f32 %v366, 0.0
      %v399 = vmax.f32 %v367, 0.0
      %v400 = vmax.f32 %v368, 0.0
      %v401 = vmax.f32 %v369, 0.0
      %v402 = vmax.f32 %v370, 0.0
      %v403 = vmax.f32 %v371, 0.0
      %v404 = vmax.f32 %v372, 0.0
      %v405 = vmax.f32 %v373, 0.0
      %v406 = vpack.c.bf16 %v375, %v374
      %v407 = vpack.c.bf16 %v377, %v376
      %v408 = vpack.c.bf16 %v379, %v378
      %v409 = vpack.c.bf16 %v381, %v380
      %v410 = vpack.c.bf16 %v383, %v382
      %v411 = vpack.c.bf16 %v385, %v384
      %v412 = vpack.c.bf16 %v387, %v386
      %v413 = vpack.c.bf16 %v389, %v388
      %v414 = vpack.c.bf16 %v391, %v390
      %v415 = vpack.c.bf16 %v393, %v392
      %v416 = vpack.c.bf16 %v395, %v394
      %v417 = vpack.c.bf16 %v397, %v396
      %v418 = vpack.c.bf16 %v399, %v398
      %v419 = vpack.c.bf16 %v401, %v400
      %v420 = vpack.c.bf16 %v403, %v402
      %v421 = vpack.c.bf16 %v405, %v404
      %v423 = vshrl.u32 0, 16
      %v425 = vrot.slane %v423, 7
      %v426 = vshll.u32 0, 16
      %v428 = vor.u32 %v425, %v426
      %v430 = vshrl.u32 %v406, 16
      %v432 = vrot.slane %v430, 7
      %v433 = vshll.u32 %v406, 16
      %v435 = vor.u32 %v432, %v433
      %v437 = vshrl.u32 %v407, 16
      %v439 = vrot.slane %v437, 7
      %v440 = vshll.u32 %v407, 16
      %v442 = vor.u32 %v439, %v440
      %v444 = vshrl.u32 %v408, 16
      %v446 = vrot.slane %v444, 7
      %v447 = vshll.u32 %v408, 16
      %v449 = vor.u32 %v446, %v447
      %v451 = vshrl.u32 %v409, 16
      %v453 = vrot.slane %v451, 7
      %v454 = vshll.u32 %v409, 16
      %v456 = vor.u32 %v453, %v454
      %v458 = vshrl.u32 %v410, 16
      %v460 = vrot.slane %v458, 7
      %v461 = vshll.u32 %v410, 16
      %v463 = vor.u32 %v460, %v461
      %v465 = vshrl.u32 %v411, 16
      %v467 = vrot.slane %v465, 7
      %v468 = vshll.u32 %v411, 16
      %v470 = vor.u32 %v467, %v468
      %v472 = vshrl.u32 %v412, 16
      %v474 = vrot.slane %v472, 7
      %v475 = vshll.u32 %v412, 16
      %v477 = vor.u32 %v474, %v475
      %v479 = vshrl.u32 %v413, 16
      %v481 = vrot.slane %v479, 7
      %v482 = vshll.u32 %v413, 16
      %v484 = vor.u32 %v481, %v482
      %v486 = vshrl.u32 %v414, 16
      %v488 = vrot.slane %v486, 7
      %v489 = vshll.u32 %v414, 16
      %v491 = vor.u32 %v488, %v489
      %v493 = vshrl.u32 %v415, 16
      %v495 = vrot.slane %v493, 7
      %v496 = vshll.u32 %v415, 16
      %v498 = vor.u32 %v495, %v496
      %v500 = vshrl.u32 %v416, 16
      %v502 = vrot.slane %v500, 7
      %v503 = vshll.u32 %v416, 16
      %v505 = vor.u32 %v502, %v503
      %v507 = vshrl.u32 %v417, 16
      %v509 = vrot.slane %v507, 7
      %v510 = vshll.u32 %v417, 16
      %v512 = vor.u32 %v509, %v510
      %v514 = vshrl.u32 %v418, 16
      %v516 = vrot.slane %v514, 7
      %v517 = vshll.u32 %v418, 16
      %v519 = vor.u32 %v516, %v517
      %v521 = vshrl.u32 %v419, 16
      %v523 = vrot.slane %v521, 7
      %v524 = vshll.u32 %v419, 16
      %v526 = vor.u32 %v523, %v524
      %v528 = vshrl.u32 %v420, 16
      %v530 = vrot.slane %v528, 7
      %v531 = vshll.u32 %v420, 16
      %v533 = vor.u32 %v530, %v531
      %v535 = vshrl.u32 %v421, 16
      %v537 = vrot.slane %v535, 7
      %v538 = vshll.u32 %v421, 16
      %v540 = vor.u32 %v537, %v538
      %vm575 = vcmask 1040384
      %vm576 = vsmask.f32 256
      %vm577 = vmand %vm575, %vm576
      %v578 = vsel %vm577, 0, %v428
      %v579 = vsel %vm577, 0, %v435
      %v580 = vsel %vm577, 0, %v442
      %v581 = vsel %vm577, 0, %v449
      %v582 = vsel %vm577, 0, %v456
      %v583 = vsel %vm577, 0, %v463
      %v584 = vsel %vm577, 0, %v470
      %v585 = vsel %vm577, 0, %v477
      %v586 = vsel %vm577, 0, %v484
      %v587 = vsel %vm577, 0, %v491
      %v588 = vsel %vm577, 0, %v498
      %v589 = vsel %vm577, 0, %v505
      %v590 = vsel %vm577, 0, %v512
      %v591 = vsel %vm577, 0, %v519
      %v592 = vsel %vm577, 0, %v526
      %v593 = vsel %vm577, 0, %v533
      %v594 = vsel %vm577, 0, %v540
      %v595 = vsel %vm577, %v425, 0
      %v596 = vsel %vm577, %v432, 0
      %v597 = vsel %vm577, %v439, 0
      %v598 = vsel %vm577, %v446, 0
      %v599 = vsel %vm577, %v453, 0
      %v600 = vsel %vm577, %v460, 0
      %v601 = vsel %vm577, %v467, 0
      %v602 = vsel %vm577, %v474, 0
      %v603 = vsel %vm577, %v481, 0
      %v604 = vsel %vm577, %v488, 0
      %v605 = vsel %vm577, %v495, 0
      %v606 = vsel %vm577, %v502, 0
      %v607 = vsel %vm577, %v509, 0
      %v608 = vsel %vm577, %v516, 0
      %v609 = vsel %vm577, %v523, 0
      %v610 = vsel %vm577, %v530, 0
      %v611 = vsel %vm577, %v537, 0
      %vm612 = vsmask.f32 7424
      %v614 = vshrl.u32 %v578, 16
      %v616 = vshll.u32 %v578, 16
      %v618 = vrot.slane %v616, 1
      %v619 = vor.u32 %v614, %v618
      %v621 = vshll.u32 %v595, 16
      %v623 = vrot.slane %v621, 1
      %v624 = vsel %vm612, %v619, %v623
      %v626 = vshrl.u32 %v579, 16
      %v628 = vshll.u32 %v579, 16
      %v630 = vrot.slane %v628, 1
      %v631 = vor.u32 %v626, %v630
      %v633 = vshll.u32 %v596, 16
      %v635 = vrot.slane %v633, 1
      %v636 = vsel %vm612, %v631, %v635
      %v638 = vshrl.u32 %v580, 16
      %v640 = vshll.u32 %v580, 16
      %v642 = vrot.slane %v640, 1
      %v643 = vor.u32 %v638, %v642
      %v645 = vshll.u32 %v597, 16
      %v647 = vrot.slane %v645, 1
      %v648 = vsel %vm612, %v643, %v647
      %v650 = vshrl.u32 %v581, 16
      %v652 = vshll.u32 %v581, 16
      %v654 = vrot.slane %v652, 1
      %v655 = vor.u32 %v650, %v654
      %v657 = vshll.u32 %v598, 16
      %v659 = vrot.slane %v657, 1
      %v660 = vsel %vm612, %v655, %v659
      %v662 = vshrl.u32 %v582, 16
      %v664 = vshll.u32 %v582, 16
      %v666 = vrot.slane %v664, 1
      %v667 = vor.u32 %v662, %v666
      %v669 = vshll.u32 %v599, 16
      %v671 = vrot.slane %v669, 1
      %v672 = vsel %vm612, %v667, %v671
      %v674 = vshrl.u32 %v583, 16
      %v676 = vshll.u32 %v583, 16
      %v678 = vrot.slane %v676, 1
      %v679 = vor.u32 %v674, %v678
      %v681 = vshll.u32 %v600, 16
      %v683 = vrot.slane %v681, 1
      %v684 = vsel %vm612, %v679, %v683
      %v686 = vshrl.u32 %v584, 16
      %v688 = vshll.u32 %v584, 16
      %v690 = vrot.slane %v688, 1
      %v691 = vor.u32 %v686, %v690
      %v693 = vshll.u32 %v601, 16
      %v695 = vrot.slane %v693, 1
      %v696 = vsel %vm612, %v691, %v695
      %v698 = vshrl.u32 %v585, 16
      %v700 = vshll.u32 %v585, 16
      %v702 = vrot.slane %v700, 1
      %v703 = vor.u32 %v698, %v702
      %v705 = vshll.u32 %v602, 16
      %v707 = vrot.slane %v705, 1
      %v708 = vsel %vm612, %v703, %v707
      %v710 = vshrl.u32 %v586, 16
      %v712 = vshll.u32 %v586, 16
      %v714 = vrot.slane %v712, 1
      %v715 = vor.u32 %v710, %v714
      %v717 = vshll.u32 %v603, 16
      %v719 = vrot.slane %v717, 1
      %v720 = vsel %vm612, %v715, %v719
      %v722 = vshrl.u32 %v587, 16
      %v724 = vshll.u32 %v587, 16
      %v726 = vrot.slane %v724, 1
      %v727 = vor.u32 %v722, %v726
      %v729 = vshll.u32 %v604, 16
      %v731 = vrot.slane %v729, 1
      %v732 = vsel %vm612, %v727, %v731
      %v734 = vshrl.u32 %v588, 16
      %v736 = vshll.u32 %v588, 16
      %v738 = vrot.slane %v736, 1
      %v739 = vor.u32 %v734, %v738
      %v741 = vshll.u32 %v605, 16
      %v743 = vrot.slane %v741, 1
      %v744 = vsel %vm612, %v739, %v743
      %v746 = vshrl.u32 %v589, 16
      %v748 = vshll.u32 %v589, 16
      %v750 = vrot.slane %v748, 1
      %v751 = vor.u32 %v746, %v750
      %v753 = vshll.u32 %v606, 16
      %v755 = vrot.slane %v753, 1
      %v756 = vsel %vm612, %v751, %v755
      %v758 = vshrl.u32 %v590, 16
      %v760 = vshll.u32 %v590, 16
      %v762 = vrot.slane %v760, 1
      %v763 = vor.u32 %v758, %v762
      %v765 = vshll.u32 %v607, 16
      %v767 = vrot.slane %v765, 1
      %v768 = vsel %vm612, %v763, %v767
      %v770 = vshrl.u32 %v591, 16
      %v772 = vshll.u32 %v591, 16
      %v774 = vrot.slane %v772, 1
      %v775 = vor.u32 %v770, %v774
      %v777 = vshll.u32 %v608, 16
      %v779 = vrot.slane %v777, 1
      %v780 = vsel %vm612, %v775, %v779
      %v782 = vshrl.u32 %v592, 16
      %v784 = vshll.u32 %v592, 16
      %v786 = vrot.slane %v784, 1
      %v787 = vor.u32 %v782, %v786
      %v789 = vshll.u32 %v609, 16
      %v791 = vrot.slane %v789, 1
      %v792 = vsel %vm612, %v787, %v791
      %v794 = vshrl.u32 %v593, 16
      %v796 = vshll.u32 %v593, 16
      %v798 = vrot.slane %v796, 1
      %v799 = vor.u32 %v794, %v798
      %v801 = vshll.u32 %v610, 16
      %v803 = vrot.slane %v801, 1
      %v804 = vsel %vm612, %v799, %v803
      %vm837 = vcmask 1046528
      %v838 = vrot.slane %v578, 1
      %v839 = vrot.slane %v595, 1
      %v840 = vsel %vm837, %v838, %v839
      %v841 = vrot.slane %v579, 1
      %v842 = vrot.slane %v596, 1
      %v843 = vsel %vm837, %v841, %v842
      %v844 = vrot.slane %v580, 1
      %v845 = vrot.slane %v597, 1
      %v846 = vsel %vm837, %v844, %v845
      %v847 = vrot.slane %v581, 1
      %v848 = vrot.slane %v598, 1
      %v849 = vsel %vm837, %v847, %v848
      %v850 = vrot.slane %v582, 1
      %v851 = vrot.slane %v599, 1
      %v852 = vsel %vm837, %v850, %v851
      %v853 = vrot.slane %v583, 1
      %v854 = vrot.slane %v600, 1
      %v855 = vsel %vm837, %v853, %v854
      %v856 = vrot.slane %v584, 1
      %v857 = vrot.slane %v601, 1
      %v858 = vsel %vm837, %v856, %v857
      %v859 = vrot.slane %v585, 1
      %v860 = vrot.slane %v602, 1
      %v861 = vsel %vm837, %v859, %v860
      %v862 = vrot.slane %v586, 1
      %v863 = vrot.slane %v603, 1
      %v864 = vsel %vm837, %v862, %v863
      %v865 = vrot.slane %v587, 1
      %v866 = vrot.slane %v604, 1
      %v867 = vsel %vm837, %v865, %v866
      %v868 = vrot.slane %v588, 1
      %v869 = vrot.slane %v605, 1
      %v870 = vsel %vm837, %v868, %v869
      %v871 = vrot.slane %v589, 1
      %v872 = vrot.slane %v606, 1
      %v873 = vsel %vm837, %v871, %v872
      %v874 = vrot.slane %v590, 1
      %v875 = vrot.slane %v607, 1
      %v876 = vsel %vm837, %v874, %v875
      %v877 = vrot.slane %v591, 1
      %v878 = vrot.slane %v608, 1
      %v879 = vsel %vm837, %v877, %v878
      %v880 = vrot.slane %v592, 1
      %v881 = vrot.slane %v609, 1
      %v882 = vsel %vm837, %v880, %v881
      %v883 = vrot.slane %v593, 1
      %v884 = vrot.slane %v610, 1
      %v885 = vsel %vm837, %v883, %v884
      %v887 = vshrl.u32 %v594, 16
      %v889 = vshll.u32 %v594, 16
      %v891 = vrot.slane %v889, 1
      %v892 = vor.u32 %v887, %v891
      %v894 = vshll.u32 %v611, 16
      %v896 = vrot.slane %v894, 1
      %v897 = vsel %vm612, %v892, %v896
      %v900 = vrot.slane %v594, 1
      %v901 = vrot.slane %v611, 1
      %v902 = vsel %vm837, %v900, %v901
      %903 = vrot.lane.b32.xlu0 %v624, 4
      %v904 = vpop.permute.xlu0 %903
      %905 = vrot.lane.b32.xlu0 %v636, 4
      %v906 = vpop.permute.xlu0 %905
      %907 = vrot.lane.b32.xlu0 %v648, 4
      %v908 = vpop.permute.xlu0 %907
      %909 = vrot.lane.b32.xlu0 %v660, 4
      %v910 = vpop.permute.xlu0 %909
      %911 = vrot.lane.b32.xlu0 %v672, 4
      %v912 = vpop.permute.xlu0 %911
      %913 = vrot.lane.b32.xlu0 %v684, 4
      %v914 = vpop.permute.xlu0 %913
      %915 = vrot.lane.b32.xlu0 %v696, 4
      %v916 = vpop.permute.xlu0 %915
      %917 = vrot.lane.b32.xlu0 %v708, 4
      %v918 = vpop.permute.xlu0 %917
      %919 = vrot.lane.b32.xlu0 %v720, 4
      %v920 = vpop.permute.xlu0 %919
      %921 = vrot.lane.b32.xlu0 %v732, 4
      %v922 = vpop.permute.xlu0 %921
      %923 = vrot.lane.b32.xlu0 %v744, 4
      %v924 = vpop.permute.xlu0 %923
      %925 = vrot.lane.b32.xlu0 %v756, 4
      %v926 = vpop.permute.xlu0 %925
      %927 = vrot.lane.b32.xlu0 %v768, 4
      %v928 = vpop.permute.xlu0 %927
      %929 = vrot.lane.b32.xlu0 %v780, 4
      %v930 = vpop.permute.xlu0 %929
      %931 = vrot.lane.b32.xlu0 %v792, 4
      %v932 = vpop.permute.xlu0 %931
      %933 = vrot.lane.b32.xlu0 %v804, 4
      %v934 = vpop.permute.xlu0 %933
      %935 = vrot.lane.b32.xlu0 %v840, 8
      %v936 = vpop.permute.xlu0 %935
      %937 = vrot.lane.b32.xlu0 %v843, 8
      %v938 = vpop.permute.xlu0 %937
      %939 = vrot.lane.b32.xlu0 %v846, 8
      %v940 = vpop.permute.xlu0 %939
      %941 = vrot.lane.b32.xlu0 %v849, 8
      %v942 = vpop.permute.xlu0 %941
      %943 = vrot.lane.b32.xlu0 %v852, 8
      %v944 = vpop.permute.xlu0 %943
      %945 = vrot.lane.b32.xlu0 %v855, 8
      %v946 = vpop.permute.xlu0 %945
      %947 = vrot.lane.b32.xlu0 %v858, 8
      %v948 = vpop.permute.xlu0 %947
      %949 = vrot.lane.b32.xlu0 %v861, 8
      %v950 = vpop.permute.xlu0 %949
      %951 = vrot.lane.b32.xlu0 %v864, 8
      %v952 = vpop.permute.xlu0 %951
      %953 = vrot.lane.b32.xlu0 %v867, 8
      %v954 = vpop.permute.xlu0 %953
      %955 = vrot.lane.b32.xlu0 %v870, 8
      %v956 = vpop.permute.xlu0 %955
      %957 = vrot.lane.b32.xlu0 %v873, 8
      %v958 = vpop.permute.xlu0 %957
      %959 = vrot.lane.b32.xlu0 %v876, 8
      %v960 = vpop.permute.xlu0 %959
      %961 = vrot.lane.b32.xlu0 %v879, 8
      %v962 = vpop.permute.xlu0 %961
      %963 = vrot.lane.b32.xlu0 %v882, 8
      %v964 = vpop.permute.xlu0 %963
      %965 = vrot.lane.b32.xlu0 %v885, 8
      %v966 = vpop.permute.xlu0 %965
      %967 = vrot.lane.b32.xlu0 %v579, 12
      %v968 = vpop.permute.xlu0 %967
      %969 = vrot.lane.b32.xlu0 %v580, 12
      %v970 = vpop.permute.xlu0 %969
      %971 = vrot.lane.b32.xlu0 %v581, 12
      %v972 = vpop.permute.xlu0 %971
      %973 = vrot.lane.b32.xlu0 %v582, 12
      %v974 = vpop.permute.xlu0 %973
      %975 = vrot.lane.b32.xlu0 %v583, 12
      %v976 = vpop.permute.xlu0 %975
      %977 = vrot.lane.b32.xlu0 %v584, 12
      %v978 = vpop.permute.xlu0 %977
      %979 = vrot.lane.b32.xlu0 %v585, 12
      %v980 = vpop.permute.xlu0 %979
      %981 = vrot.lane.b32.xlu0 %v586, 12
      %v982 = vpop.permute.xlu0 %981
      %983 = vrot.lane.b32.xlu0 %v587, 12
      %v984 = vpop.permute.xlu0 %983
      %985 = vrot.lane.b32.xlu0 %v588, 12
      %v986 = vpop.permute.xlu0 %985
      %987 = vrot.lane.b32.xlu0 %v589, 12
      %v988 = vpop.permute.xlu0 %987
      %989 = vrot.lane.b32.xlu0 %v590, 12
      %v990 = vpop.permute.xlu0 %989
      %991 = vrot.lane.b32.xlu0 %v591, 12
      %v992 = vpop.permute.xlu0 %991
      %993 = vrot.lane.b32.xlu0 %v592, 12
      %v994 = vpop.permute.xlu0 %993
      %995 = vrot.lane.b32.xlu0 %v593, 12
      %v996 = vpop.permute.xlu0 %995
      %997 = vrot.lane.b32.xlu0 %v594, 12
      %v998 = vpop.permute.xlu0 %997
      %999 = vrot.lane.b32.xlu0 %v636, 16
      %v1000 = vpop.permute.xlu0 %999
      %1001 = vrot.lane.b32.xlu0 %v648, 16
      %v1002 = vpop.permute.xlu0 %1001
      %1003 = vrot.lane.b32.xlu0 %v660, 16
      %v1004 = vpop.permute.xlu0 %1003
      %1005 = vrot.lane.b32.xlu0 %v672, 16
      %v1006 = vpop.permute.xlu0 %1005
      %1007 = vrot.lane.b32.xlu0 %v684, 16
      %v1008 = vpop.permute.xlu0 %1007
      %1009 = vrot.lane.b32.xlu0 %v696, 16
      %v1010 = vpop.permute.xlu0 %1009
      %1011 = vrot.lane.b32.xlu0 %v708, 16
      %v1012 = vpop.permute.xlu0 %1011
      %1013 = vrot.lane.b32.xlu0 %v720, 16
      %v1014 = vpop.permute.xlu0 %1013
      %1015 = vrot.lane.b32.xlu0 %v732, 16
      %v1016 = vpop.permute.xlu0 %1015
      %1017 = vrot.lane.b32.xlu0 %v744, 16
      %v1018 = vpop.permute.xlu0 %1017
      %1019 = vrot.lane.b32.xlu0 %v756, 16
      %v1020 = vpop.permute.xlu0 %1019
      %1021 = vrot.lane.b32.xlu0 %v768, 16
      %v1022 = vpop.permute.xlu0 %1021
      %1023 = vrot.lane.b32.xlu0 %v780, 16
      %v1024 = vpop.permute.xlu0 %1023
      %1025 = vrot.lane.b32.xlu0 %v792, 16
      %v1026 = vpop.permute.xlu0 %1025
      %1027 = vrot.lane.b32.xlu0 %v804, 16
      %v1028 = vpop.permute.xlu0 %1027
      %1029 = vrot.lane.b32.xlu0 %v897, 16
      %v1030 = vpop.permute.xlu0 %1029
      %1031 = vrot.lane.b32.xlu0 %v843, 20
      %v1032 = vpop.permute.xlu0 %1031
      %1033 = vrot.lane.b32.xlu0 %v846, 20
      %v1034 = vpop.permute.xlu0 %1033
      %1035 = vrot.lane.b32.xlu0 %v849, 20
      %v1036 = vpop.permute.xlu0 %1035
      %1037 = vrot.lane.b32.xlu0 %v852, 20
      %v1038 = vpop.permute.xlu0 %1037
      %1039 = vrot.lane.b32.xlu0 %v855, 20
      %v1040 = vpop.permute.xlu0 %1039
      %1041 = vrot.lane.b32.xlu0 %v858, 20
      %v1042 = vpop.permute.xlu0 %1041
      %1043 = vrot.lane.b32.xlu0 %v861, 20
      %v1044 = vpop.permute.xlu0 %1043
      %1045 = vrot.lane.b32.xlu0 %v864, 20
      %v1046 = vpop.permute.xlu0 %1045
      %1047 = vrot.lane.b32.xlu0 %v867, 20
      %v1048 = vpop.permute.xlu0 %1047
      %1049 = vrot.lane.b32.xlu0 %v870, 20
      %v1050 = vpop.permute.xlu0 %1049
      %1051 = vrot.lane.b32.xlu0 %v873, 20
      %v1052 = vpop.permute.xlu0 %1051
      %1053 = vrot.lane.b32.xlu0 %v876, 20
      %v1054 = vpop.permute.xlu0 %1053
      %1055 = vrot.lane.b32.xlu0 %v879, 20
      %v1056 = vpop.permute.xlu0 %1055
      %1057 = vrot.lane.b32.xlu0 %v882, 20
      %v1058 = vpop.permute.xlu0 %1057
      %1059 = vrot.lane.b32.xlu0 %v885, 20
      %v1060 = vpop.permute.xlu0 %1059
      %1061 = vrot.lane.b32.xlu0 %v902, 20
      %v1062 = vpop.permute.xlu0 %1061
      %1063 = vrot.lane.b32.xlu0 %v580, 24
      %v1064 = vpop.permute.xlu0 %1063
      %1065 = vrot.lane.b32.xlu0 %v581, 24
      %v1066 = vpop.permute.xlu0 %1065
      %1067 = vrot.lane.b32.xlu0 %v582, 24
      %v1068 = vpop.permute.xlu0 %1067
      %1069 = vrot.lane.b32.xlu0 %v583, 24
      %v1070 = vpop.permute.xlu0 %1069
      %1071 = vrot.lane.b32.xlu0 %v584, 24
      %v1072 = vpop.permute.xlu0 %1071
      %1073 = vrot.lane.b32.xlu0 %v585, 24
      %v1074 = vpop.permute.xlu0 %1073
      %1075 = vrot.lane.b32.xlu0 %v586, 24
      %v1076 = vpop.permute.xlu0 %1075
      %1077 = vrot.lane.b32.xlu0 %v587, 24
      %v1078 = vpop.permute.xlu0 %1077
      %1079 = vrot.lane.b32.xlu0 %v588, 24
      %v1080 = vpop.permute.xlu0 %1079
      %1081 = vrot.lane.b32.xlu0 %v589, 24
      %v1082 = vpop.permute.xlu0 %1081
      %1083 = vrot.lane.b32.xlu0 %v590, 24
      %v1084 = vpop.permute.xlu0 %1083
      %1085 = vrot.lane.b32.xlu0 %v591, 24
      %v1086 = vpop.permute.xlu0 %1085
      %1087 = vrot.lane.b32.xlu0 %v592, 24
      %v1088 = vpop.permute.xlu0 %1087
      %1089 = vrot.lane.b32.xlu0 %v593, 24
      %v1090 = vpop.permute.xlu0 %1089
      %1091 = vrot.lane.b32.xlu0 %v594, 24
      %v1092 = vpop.permute.xlu0 %1091
      %1093 = vrot.lane.b32.xlu0 %v578, 24
      %v1094 = vpop.permute.xlu0 %1093
      %1095 = vrot.lane.b32.xlu0 %v648, 28
      %v1096 = vpop.permute.xlu0 %1095
      %1097 = vrot.lane.b32.xlu0 %v660, 28
      %v1098 = vpop.permute.xlu0 %1097
      %1099 = vrot.lane.b32.xlu0 %v672, 28
      %v1100 = vpop.permute.xlu0 %1099
      %1101 = vrot.lane.b32.xlu0 %v684, 28
      %v1102 = vpop.permute.xlu0 %1101
      %1103 = vrot.lane.b32.xlu0 %v696, 28
      %v1104 = vpop.permute.xlu0 %1103
      %1105 = vrot.lane.b32.xlu0 %v708, 28
      %v1106 = vpop.permute.xlu0 %1105
      %1107 = vrot.lane.b32.xlu0 %v720, 28
      %v1108 = vpop.permute.xlu0 %1107
      %1109 = vrot.lane.b32.xlu0 %v732, 28
      %v1110 = vpop.permute.xlu0 %1109
      %1111 = vrot.lane.b32.xlu0 %v744, 28
      %v1112 = vpop.permute.xlu0 %1111
      %1113 = vrot.lane.b32.xlu0 %v756, 28
      %v1114 = vpop.permute.xlu0 %1113
      %1115 = vrot.lane.b32.xlu0 %v768, 28
      %v1116 = vpop.permute.xlu0 %1115
      %1117 = vrot.lane.b32.xlu0 %v780, 28
      %v1118 = vpop.permute.xlu0 %1117
      %1119 = vrot.lane.b32.xlu0 %v792, 28
      %v1120 = vpop.permute.xlu0 %1119
      %1121 = vrot.lane.b32.xlu0 %v804, 28
      %v1122 = vpop.permute.xlu0 %1121
      %1123 = vrot.lane.b32.xlu0 %v897, 28
      %v1124 = vpop.permute.xlu0 %1123
      %1125 = vrot.lane.b32.xlu0 %v624, 28
      %v1126 = vpop.permute.xlu0 %1125
      %1127 = vrot.lane.b32.xlu0 %v846, 32
      %v1128 = vpop.permute.xlu0 %1127
      %1129 = vrot.lane.b32.xlu0 %v849, 32
      %v1130 = vpop.permute.xlu0 %1129
      %1131 = vrot.lane.b32.xlu0 %v852, 32
      %v1132 = vpop.permute.xlu0 %1131
      %1133 = vrot.lane.b32.xlu0 %v855, 32
      %v1134 = vpop.permute.xlu0 %1133
      %1135 = vrot.lane.b32.xlu0 %v858, 32
      %v1136 = vpop.permute.xlu0 %1135
      %1137 = vrot.lane.b32.xlu0 %v861, 32
      %v1138 = vpop.permute.xlu0 %1137
      %1139 = vrot.lane.b32.xlu0 %v864, 32
      %v1140 = vpop.permute.xlu0 %1139
      %1141 = vrot.lane.b32.xlu0 %v867, 32
      %v1142 = vpop.permute.xlu0 %1141
      %1143 = vrot.lane.b32.xlu0 %v870, 32
      %v1144 = vpop.permute.xlu0 %1143
      %1145 = vrot.lane.b32.xlu0 %v873, 32
      %v1146 = vpop.permute.xlu0 %1145
      %1147 = vrot.lane.b32.xlu0 %v876, 32
      %v1148 = vpop.permute.xlu0 %1147
      %1149 = vrot.lane.b32.xlu0 %v879, 32
      %v1150 = vpop.permute.xlu0 %1149
      %1151 = vrot.lane.b32.xlu0 %v882, 32
      %v1152 = vpop.permute.xlu0 %1151
      %1153 = vrot.lane.b32.xlu0 %v885, 32
      %v1154 = vpop.permute.xlu0 %1153
      %1155 = vrot.lane.b32.xlu0 %v902, 32
      %v1156 = vpop.permute.xlu0 %1155
      %1157 = vrot.lane.b32.xlu0 %v840, 32
      %v1158 = vpop.permute.xlu0 %1157
      %vm1159 = vcmask 31744
      %v1161 = vsel %vm1159, %v578, %v904
      %v1163 = vsel %vm1159, %v579, %v906
      %v1165 = vsel %vm1159, %v580, %v908
      %v1167 = vsel %vm1159, %v581, %v910
      %v1169 = vsel %vm1159, %v582, %v912
      %v1171 = vsel %vm1159, %v583, %v914
      %v1173 = vsel %vm1159, %v584, %v916
      %v1175 = vsel %vm1159, %v585, %v918
      %v1177 = vsel %vm1159, %v586, %v920
      %v1179 = vsel %vm1159, %v587, %v922
      %v1181 = vsel %vm1159, %v588, %v924
      %v1183 = vsel %vm1159, %v589, %v926
      %v1185 = vsel %vm1159, %v590, %v928
      %v1187 = vsel %vm1159, %v591, %v930
      %v1189 = vsel %vm1159, %v592, %v932
      %v1191 = vsel %vm1159, %v593, %v934
      %vm1192 = vcmask 64512
      %v1194 = vsel %vm1192, %v1161, %v936
      %v1196 = vsel %vm1192, %v1163, %v938
      %v1198 = vsel %vm1192, %v1165, %v940
      %v1200 = vsel %vm1192, %v1167, %v942
      %v1202 = vsel %vm1192, %v1169, %v944
      %v1204 = vsel %vm1192, %v1171, %v946
      %v1206 = vsel %vm1192, %v1173, %v948
      %v1208 = vsel %vm1192, %v1175, %v950
      %v1210 = vsel %vm1192, %v1177, %v952
      %v1212 = vsel %vm1192, %v1179, %v954
      %v1214 = vsel %vm1192, %v1181, %v956
      %v1216 = vsel %vm1192, %v1183, %v958
      %v1218 = vsel %vm1192, %v1185, %v960
      %v1220 = vsel %vm1192, %v1187, %v962
      %v1222 = vsel %vm1192, %v1189, %v964
      %v1224 = vsel %vm1192, %v1191, %v966
      %vm1225 = vcmask 97280
      %v1227 = vsel %vm1225, %v1194, %v968
      %v1229 = vsel %vm1225, %v1196, %v970
      %v1231 = vsel %vm1225, %v1198, %v972
      %v1233 = vsel %vm1225, %v1200, %v974
      %v1235 = vsel %vm1225, %v1202, %v976
      %v1237 = vsel %vm1225, %v1204, %v978
      %v1239 = vsel %vm1225, %v1206, %v980
      %v1241 = vsel %vm1225, %v1208, %v982
      %v1243 = vsel %vm1225, %v1210, %v984
      %v1245 = vsel %vm1225, %v1212, %v986
      %v1247 = vsel %vm1225, %v1214, %v988
      %v1249 = vsel %vm1225, %v1216, %v990
      %v1251 = vsel %vm1225, %v1218, %v992
      %v1253 = vsel %vm1225, %v1220, %v994
      %v1255 = vsel %vm1225, %v1222, %v996
      %v1257 = vsel %vm1225, %v1224, %v998
      %vm1258 = vcmask 130048
      %v1260 = vsel %vm1258, %v1227, %v1000
      %v1262 = vsel %vm1258, %v1229, %v1002
      %v1264 = vsel %vm1258, %v1231, %v1004
      %v1266 = vsel %vm1258, %v1233, %v1006
      %v1268 = vsel %vm1258, %v1235, %v1008
      %v1270 = vsel %vm1258, %v1237, %v1010
      %v1272 = vsel %vm1258, %v1239, %v1012
      %v1274 = vsel %vm1258, %v1241, %v1014
      %v1276 = vsel %vm1258, %v1243, %v1016
      %v1278 = vsel %vm1258, %v1245, %v1018
      %v1280 = vsel %vm1258, %v1247, %v1020
      %v1282 = vsel %vm1258, %v1249, %v1022
      %v1284 = vsel %vm1258, %v1251, %v1024
      %v1286 = vsel %vm1258, %v1253, %v1026
      %v1288 = vsel %vm1258, %v1255, %v1028
      %v1290 = vsel %vm1258, %v1257, %v1030
      %vm1291 = vcmask 162816
      %v1293 = vsel %vm1291, %v1260, %v1032
      %v1295 = vsel %vm1291, %v1262, %v1034
      %v1297 = vsel %vm1291, %v1264, %v1036
      %v1299 = vsel %vm1291, %v1266, %v1038
      %v1301 = vsel %vm1291, %v1268, %v1040
      %v1303 = vsel %vm1291, %v1270, %v1042
      %v1305 = vsel %vm1291, %v1272, %v1044
      %v1307 = vsel %vm1291, %v1274, %v1046
      %v1309 = vsel %vm1291, %v1276, %v1048
      %v1311 = vsel %vm1291, %v1278, %v1050
      %v1313 = vsel %vm1291, %v1280, %v1052
      %v1315 = vsel %vm1291, %v1282, %v1054
      %v1317 = vsel %vm1291, %v1284, %v1056
      %v1319 = vsel %vm1291, %v1286, %v1058
      %v1321 = vsel %vm1291, %v1288, %v1060
      %v1323 = vsel %vm1291, %v1290, %v1062
      %vm1324 = vcmask 195584
      %v1326 = vsel %vm1324, %v1293, %v1064
      %v1328 = vsel %vm1324, %v1295, %v1066
      %v1330 = vsel %vm1324, %v1297, %v1068
      %v1332 = vsel %vm1324, %v1299, %v1070
      %v1334 = vsel %vm1324, %v1301, %v1072
      %v1336 = vsel %vm1324, %v1303, %v1074
      %v1338 = vsel %vm1324, %v1305, %v1076
      %v1340 = vsel %vm1324, %v1307, %v1078
      %v1342 = vsel %vm1324, %v1309, %v1080
      %v1344 = vsel %vm1324, %v1311, %v1082
      %v1346 = vsel %vm1324, %v1313, %v1084
      %v1348 = vsel %vm1324, %v1315, %v1086
      %v1350 = vsel %vm1324, %v1317, %v1088
      %v1352 = vsel %vm1324, %v1319, %v1090
      %v1354 = vsel %vm1324, %v1321, %v1092
      %v1356 = vsel %vm1324, %v1323, %v1094
      %vm1357 = vcmask 228352
      %v1359 = vsel %vm1357, %v1326, %v1096
      %v1361 = vsel %vm1357, %v1328, %v1098
      %v1363 = vsel %vm1357, %v1330, %v1100
      %v1365 = vsel %vm1357, %v1332, %v1102
      %v1367 = vsel %vm1357, %v1334, %v1104
      %v1369 = vsel %vm1357, %v1336, %v1106
      %v1371 = vsel %vm1357, %v1338, %v1108
      %v1373 = vsel %vm1357, %v1340, %v1110
      %v1375 = vsel %vm1357, %v1342, %v1112
      %v1377 = vsel %vm1357, %v1344, %v1114
      %v1379 = vsel %vm1357, %v1346, %v1116
      %v1381 = vsel %vm1357, %v1348, %v1118
      %v1383 = vsel %vm1357, %v1350, %v1120
      %v1385 = vsel %vm1357, %v1352, %v1122
      %v1387 = vsel %vm1357, %v1354, %v1124
      %v1389 = vsel %vm1357, %v1356, %v1126
      %vm1390 = vcmask 261120
      %v1392 = vsel %vm1390, %v1359, %v1128
      %v1394 = vsel %vm1390, %v1361, %v1130
      %v1396 = vsel %vm1390, %v1363, %v1132
      %v1398 = vsel %vm1390, %v1365, %v1134
      %v1400 = vsel %vm1390, %v1367, %v1136
      %v1402 = vsel %vm1390, %v1369, %v1138
      %v1404 = vsel %vm1390, %v1371, %v1140
      %v1406 = vsel %vm1390, %v1373, %v1142
      %v1408 = vsel %vm1390, %v1375, %v1144
      %v1410 = vsel %vm1390, %v1377, %v1146
      %v1412 = vsel %vm1390, %v1379, %v1148
      %v1414 = vsel %vm1390, %v1381, %v1150
      %v1416 = vsel %vm1390, %v1383, %v1152
      %v1418 = vsel %vm1390, %v1385, %v1154
      %v1420 = vsel %vm1390, %v1387, %v1156
      %v1422 = vsel %vm1390, %v1389, %v1158
      %v1423 = vld [vmem:[%s3] sm:$0xf]
      %v1424 = vld [vmem:[%s3 + $0x4] sm:$0xf]
      %v1425 = vld [vmem:[%s3 + $0x8] sm:$0xf]
      %v1426 = vld [vmem:[%s3 + $0xc] sm:$0xf]
      %v1427 = vld [vmem:[%s3 + $0x10] sm:$0x3]
      %v1428 = vld [vmem:[%s4] sm:$0x1]
      %v1430 = vlaneseq
      %v1431 = vshrl.u32 %v1430, 7
      %v1432 = vsub.s32 0, %v1431
      %v1433 = vrot.slane %v1428, %v1432
      %v1440 = vunpack.c.l.b16 %v1423
      %v1441 = vunpack.c.l.b16 %v1424
      %v1442 = vunpack.c.l.b16 %v1425
      %v1443 = vunpack.c.l.b16 %v1426
      %v1444 = vunpack.c.l.b16 %v1427
      %v1445 = vpack.c.b16 %v1441, %v1440
      %v1446 = vpack.c.b16 %v1443, %v1442
      %v1447 = vpack.c.b16 %v1444, %v1444
      %vm1450 = vcmask 293888
      %v1451 = vsel %vm1450, %v1392, 0
      %v1453 = vsel %vm1450, %v1394, 0
      %v1455 = vsel %vm1450, %v1396, 0
      %v1457 = vsel %vm1450, %v1398, 0
      %v1459 = vsel %vm1450, %v1400, 0
      %v1461 = vsel %vm1450, %v1402, 0
      %v1463 = vsel %vm1450, %v1404, 0
      %v1465 = vsel %vm1450, %v1406, 0
      %v1467 = vsel %vm1450, %v1408, 0
      %v1469 = vsel %vm1450, %v1410, 0
      %v1471 = vsel %vm1450, %v1412, 0
      %v1473 = vsel %vm1450, %v1414, 0
      %v1475 = vsel %vm1450, %v1416, 0
      %v1477 = vsel %vm1450, %v1418, 0
      %v1479 = vsel %vm1450, %v1420, 0
      %v1481 = vsel %vm1450, %v1422, 0
      %vm1483 = vcmask 1041408
      %v1485 = vsel %vm1483, %v1447, 0
      %1487 = vmatprep.subr.bf16.mxu0 0
      %1488 = vmatpush1.bf16.msra.mxu0 %v1445
      %1489 = vmatprep.subr.bf16.mxu0 0
      %1490 = vmatpush1.bf16.msra.mxu0 %v1446
      %1491 = vmatprep.subr.bf16.mxu0 0
      %1492 = vmatpush1.bf16.msra.mxu0 %v1485
      %1493 = vmatprep.subr.bf16.mxu0 0
      %1494 = vmatpush1.bf16.msra.mxu0 0
      %1495 = vmatprep.subr.bf16.mxu0 0
      %1496 = vmatpush1.bf16.msra.mxu0 0
      %1497 = vmatprep.subr.bf16.mxu0 0
      %1498 = vmatpush1.bf16.msra.mxu0 0
      %1499 = vmatprep.subr.bf16.mxu0 0
      %1500 = vmatpush1.bf16.msra.mxu0 0
      %1501 = vmatprep.subr.bf16.mxu0 0
      %1502 = vmatpush1.bf16.msra.mxu0 0
      %1503 = vmatprep.subr.bf16.mxu0 0
      %1504 = vmatpush1.bf16.msra.mxu0 0
      %1505 = vmatprep.subr.bf16.mxu0 0
      %1506 = vmatpush1.bf16.msra.mxu0 0
      %1507 = vmatprep.subr.bf16.mxu0 0
      %1508 = vmatpush1.bf16.msra.mxu0 0
      %1509 = vmatprep.subr.bf16.mxu0 0
      %1510 = vmatpush1.bf16.msra.mxu0 0
      %1511 = vmatprep.subr.bf16.mxu0 0
      %1512 = vmatpush1.bf16.msra.mxu0 0
      %1513 = vmatprep.subr.bf16.mxu0 0
      %1514 = vmatpush1.bf16.msra.mxu0 0
      %1515 = vmatprep.subr.bf16.mxu0 0
      %1516 = vmatpush1.bf16.msra.mxu0 0
      %1517 = vmatprep.subr.bf16.mxu0 0
      %1518 = vmatpush1.bf16.msra.mxu0 0
      %1519 = vmatprep.mubr.bf16.mxu0 0
      %1520 = vmatmul.mubr.bf16.gmra.mrb[0].mxu0 %v1451
      %v1521 = vpop.f32.mrb[0].mxu0
      %v1522 = vadd.f32 %v1433, %v1521
      %v1523 = vpop.f32.mrb[0].mxu0
      %v1524 = vpop.f32.mrb[0].mxu0
      %v1525 = vadd.f32 %v1433, %v1524
      %v1526 = vpop.f32.mrb[0].mxu0
      %1527 = vmatprep.mubr.bf16.mxu0 0
      %1528 = vmatmul.mubr.bf16.gmra.mrb[0].mxu0 %v1453
      %v1529 = vpop.f32.mrb[0].mxu0
      %v1530 = vadd.f32 %v1433, %v1529
      %v1531 = vpop.f32.mrb[0].mxu0
      %v1532 = vpop.f32.mrb[0].mxu0
      %v1533 = vadd.f32 %v1433, %v1532
      %v1534 = vpop.f32.mrb[0].mxu0
      %1535 = vmatprep.mubr.bf16.mxu0 0
      %1536 = vmatmul.mubr.bf16.gmra.mrb[0].mxu0 %v1455
      %v1537 = vpop.f32.mrb[0].mxu0
      %v1538 = vadd.f32 %v1433, %v1537
      %v1539 = vpop.f32.mrb[0].mxu0
      %v1540 = vpop.f32.mrb[0].mxu0
      %v1541 = vadd.f32 %v1433, %v1540
      %v1542 = vpop.f32.mrb[0].mxu0
      %1543 = vmatprep.mubr.bf16.mxu0 0
      %1544 = vmatmul.mubr.bf16.gmra.mrb[0].mxu0 %v1457
      %v1545 = vpop.f32.mrb[0].mxu0
      %v1546 = vadd.f32 %v1433, %v1545
      %v1547 = vpop.f32.mrb[0].mxu0
      %v1548 = vpop.f32.mrb[0].mxu0
      %v1549 = vadd.f32 %v1433, %v1548
      %v1550 = vpop.f32.mrb[0].mxu0
      %1551 = vmatprep.mubr.bf16.mxu0 0
      %1552 = vmatmul.mubr.bf16.gmra.mrb[0].mxu0 %v1459
      %v1553 = vpop.f32.mrb[0].mxu0
      %v1554 = vadd.f32 %v1433, %v1553
      %v1555 = vpop.f32.mrb[0].mxu0
      %v1556 = vpop.f32.mrb[0].mxu0
      %v1557 = vadd.f32 %v1433, %v1556
      %v1558 = vpop.f32.mrb[0].mxu0
      %1559 = vmatprep.mubr.bf16.mxu0 0
      %1560 = vmatmul.mubr.bf16.gmra.mrb[0].mxu0 %v1461
      %v1561 = vpop.f32.mrb[0].mxu0
      %v1562 = vadd.f32 %v1433, %v1561
      %v1563 = vpop.f32.mrb[0].mxu0
      %v1564 = vpop.f32.mrb[0].mxu0
      %v1565 = vadd.f32 %v1433, %v1564
      %v1566 = vpop.f32.mrb[0].mxu0
      %1567 = vmatprep.mubr.bf16.mxu0 0
      %1568 = vmatmul.mubr.bf16.gmra.mrb[0].mxu0 %v1463
      %v1569 = vpop.f32.mrb[0].mxu0
      %v1570 = vadd.f32 %v1433, %v1569
      %v1571 = vpop.f32.mrb[0].mxu0
      %v1572 = vpop.f32.mrb[0].mxu0
      %v1573 = vadd.f32 %v1433, %v1572
      %v1574 = vpop.f32.mrb[0].mxu0
      %1575 = vmatprep.mubr.bf16.mxu0 0
      %1576 = vmatmul.mubr.bf16.gmra.mrb[0].mxu0 %v1465
      %v1577 = vpop.f32.mrb[0].mxu0
      %v1578 = vadd.f32 %v1433, %v1577
      %v1579 = vpop.f32.mrb[0].mxu0
      %v1580 = vpop.f32.mrb[0].mxu0
      %v1581 = vadd.f32 %v1433, %v1580
      %v1582 = vpop.f32.mrb[0].mxu0
      %1583 = vmatprep.mubr.bf16.mxu0 0
      %1584 = vmatmul.mubr.bf16.gmra.mrb[0].mxu0 %v1467
      %v1585 = vpop.f32.mrb[0].mxu0
      %v1586 = vadd.f32 %v1433, %v1585
      %v1587 = vpop.f32.mrb[0].mxu0
      %v1588 = vpop.f32.mrb[0].mxu0
      %v1589 = vadd.f32 %v1433, %v1588
      %v1590 = vpop.f32.mrb[0].mxu0
      %1591 = vmatprep.mubr.bf16.mxu0 0
      %1592 = vmatmul.mubr.bf16.gmra.mrb[0].mxu0 %v1469
      %v1593 = vpop.f32.mrb[0].mxu0
      %v1594 = vadd.f32 %v1433, %v1593
      %v1595 = vpop.f32.mrb[0].mxu0
      %v1596 = vpop.f32.mrb[0].mxu0
      %v1597 = vadd.f32 %v1433, %v1596
      %v1598 = vpop.f32.mrb[0].mxu0
      %1599 = vmatprep.mubr.bf16.mxu0 0
      %1600 = vmatmul.mubr.bf16.gmra.mrb[0].mxu0 %v1471
      %v1601 = vpop.f32.mrb[0].mxu0
      %v1602 = vadd.f32 %v1433, %v1601
      %v1603 = vpop.f32.mrb[0].mxu0
      %v1604 = vpop.f32.mrb[0].mxu0
      %v1605 = vadd.f32 %v1433, %v1604
      %v1606 = vpop.f32.mrb[0].mxu0
      %1607 = vmatprep.mubr.bf16.mxu0 0
      %1608 = vmatmul.mubr.bf16.gmra.mrb[0].mxu0 %v1473
      %v1609 = vpop.f32.mrb[0].mxu0
      %v1610 = vadd.f32 %v1433, %v1609
      %v1611 = vpop.f32.mrb[0].mxu0
      %v1612 = vpop.f32.mrb[0].mxu0
      %v1613 = vadd.f32 %v1433, %v1612
      %v1614 = vpop.f32.mrb[0].mxu0
      %1615 = vmatprep.mubr.bf16.mxu0 0
      %1616 = vmatmul.mubr.bf16.gmra.mrb[0].mxu0 %v1475
      %v1617 = vpop.f32.mrb[0].mxu0
      %v1618 = vadd.f32 %v1433, %v1617
      %v1619 = vpop.f32.mrb[0].mxu0
      %v1620 = vpop.f32.mrb[0].mxu0
      %v1621 = vadd.f32 %v1433, %v1620
      %v1622 = vpop.f32.mrb[0].mxu0
      %1623 = vmatprep.mubr.bf16.mxu0 0
      %1624 = vmatmul.mubr.bf16.gmra.mrb[0].mxu0 %v1477
      %v1625 = vpop.f32.mrb[0].mxu0
      %v1626 = vadd.f32 %v1433, %v1625
      %v1627 = vpop.f32.mrb[0].mxu0
      %v1628 = vpop.f32.mrb[0].mxu0
      %v1629 = vadd.f32 %v1433, %v1628
      %v1630 = vpop.f32.mrb[0].mxu0
      %1631 = vmatprep.mubr.bf16.mxu0 0
      %1632 = vmatmul.mubr.bf16.gmra.mrb[0].mxu0 %v1479
      %v1633 = vpop.f32.mrb[0].mxu0
      %v1634 = vadd.f32 %v1433, %v1633
      %v1635 = vpop.f32.mrb[0].mxu0
      %v1636 = vpop.f32.mrb[0].mxu0
      %v1637 = vadd.f32 %v1433, %v1636
      %v1638 = vpop.f32.mrb[0].mxu0
      %1639 = vmatprep.mubr.bf16.mxu0 0
      %1640 = vmatmul.mubr.bf16.gmra.mrb[0].mxu0 %v1481
      %v1641 = vpop.f32.mrb[0].mxu0
      %v1642 = vadd.f32 %v1433, %v1641
      %v1643 = vpop.f32.mrb[0].mxu0
      %v1644 = vpop.f32.mrb[0].mxu0
      %v1645 = vadd.f32 %v1433, %v1644
      %v1646 = vpop.f32.mrb[0].mxu0
      %1647 = vdwg.mxu0
      %1648 = vst.msk [vmem:[%s258] sm:$0xff] %vm1192, %v1522
      %1649 = vst.msk [vmem:[%s258 + $0x8] sm:$0xff] %vm1192, %v1525
      %1650 = vst.msk [vmem:[%s258 + $0x10] sm:$0xff] %vm1192, %v1530
      %1651 = vst.msk [vmem:[%s258 + $0x18] sm:$0xff] %vm1192, %v1533
      %1652 = vst.msk [vmem:[%s258 + $0x20] sm:$0xff] %vm1192, %v1538
      %1653 = vst.msk [vmem:[%s258 + $0x28] sm:$0xff] %vm1192, %v1541
      %1654 = vst.msk [vmem:[%s258 + $0x30] sm:$0xff] %vm1192, %v1546
      %1655 = vst.msk [vmem:[%s258 + $0x38] sm:$0xff] %vm1192, %v1549
      %1656 = vst.msk [vmem:[%s258 + $0x40] sm:$0xff] %vm1192, %v1554
      %1657 = vst.msk [vmem:[%s258 + $0x48] sm:$0xff] %vm1192, %v1557
      %1658 = vst.msk [vmem:[%s258 + $0x50] sm:$0xff] %vm1192, %v1562
      %1659 = vst.msk [vmem:[%s258 + $0x58] sm:$0xff] %vm1192, %v1565
      %1660 = vst.msk [vmem:[%s258 + $0x60] sm:$0xff] %vm1192, %v1570
      %1661 = vst.msk [vmem:[%s258 + $0x68] sm:$0xff] %vm1192, %v1573
      %1662 = vst.msk [vmem:[%s258 + $0x70] sm:$0xff] %vm1192, %v1578
      %1663 = vst.msk [vmem:[%s258 + $0x78] sm:$0xff] %vm1192, %v1581
      %1664 = vst.msk [vmem:[%s258 + $0x80] sm:$0xff] %vm1192, %v1586
      %1665 = vst.msk [vmem:[%s258 + $0x88] sm:$0xff] %vm1192, %v1589
      %1666 = vst.msk [vmem:[%s258 + $0x90] sm:$0xff] %vm1192, %v1594
      %1667 = vst.msk [vmem:[%s258 + $0x98] sm:$0xff] %vm1192, %v1597
      %1668 = vst.msk [vmem:[%s258 + $0xa0] sm:$0xff] %vm1192, %v1602
      %1669 = vst.msk [vmem:[%s258 + $0xa8] sm:$0xff] %vm1192, %v1605
      %1670 = vst.msk [vmem:[%s258 + $0xb0] sm:$0xff] %vm1192, %v1610
      %1671 = vst.msk [vmem:[%s258 + $0xb8] sm:$0xff] %vm1192, %v1613
      %1672 = vst.msk [vmem:[%s258 + $0xc0] sm:$0xff] %vm1192, %v1618
      %1673 = vst.msk [vmem:[%s258 + $0xc8] sm:$0xff] %vm1192, %v1621
      %1674 = vst.msk [vmem:[%s258 + $0xd0] sm:$0xff] %vm1192, %v1626
      %1675 = vst.msk [vmem:[%s258 + $0xd8] sm:$0xff] %vm1192, %v1629
      %1676 = vst.msk [vmem:[%s258 + $0xe0] sm:$0xff] %vm1192, %v1634
      %1677 = vst.msk [vmem:[%s258 + $0xe8] sm:$0xff] %vm1192, %v1637
      %1678 = vst.msk [vmem:[%s258 + $0xf0] sm:$0xff] %vm1192, %v1642
      %1679 = vst.msk [vmem:[%s258 + $0xf8] sm:$0xff] %vm1192, %v1645
      %v1680 = vsel %vm1192, %v1522, 0.0
      %v1681 = vsel %vm1192, %v1525, 0.0
      %v1682 = vadd.f32 %v1680, %v1681
      %v1683 = vsel %vm1192, %v1530, 0.0
      %v1684 = vadd.f32 %v1682, %v1683
      %v1685 = vsel %vm1192, %v1533, 0.0
      %v1686 = vadd.f32 %v1684, %v1685
      %v1687 = vsel %vm1192, %v1538, 0.0
      %v1688 = vadd.f32 %v1686, %v1687
      %v1689 = vsel %vm1192, %v1541, 0.0
      %v1690 = vadd.f32 %v1688, %v1689
      %v1691 = vsel %vm1192, %v1546, 0.0
      %v1692 = vadd.f32 %v1690, %v1691
      %v1693 = vsel %vm1192, %v1549, 0.0
      %v1694 = vadd.f32 %v1692, %v1693
      %v1695 = vsel %vm1192, %v1554, 0.0
      %v1696 = vadd.f32 %v1694, %v1695
      %v1697 = vsel %vm1192, %v1557, 0.0
      %v1698 = vadd.f32 %v1696, %v1697
      %v1699 = vsel %vm1192, %v1562, 0.0
      %v1700 = vadd.f32 %v1698, %v1699
      %v1701 = vsel %vm1192, %v1565, 0.0
      %v1702 = vadd.f32 %v1700, %v1701
      %v1703 = vsel %vm1192, %v1570, 0.0
      %v1704 = vadd.f32 %v1702, %v1703
      %v1705 = vsel %vm1192, %v1573, 0.0
      %v1706 = vadd.f32 %v1704, %v1705
      %v1707 = vsel %vm1192, %v1578, 0.0
      %v1708 = vadd.f32 %v1706, %v1707
      %v1709 = vsel %vm1192, %v1581, 0.0
      %v1710 = vadd.f32 %v1708, %v1709
      %v1711 = vsel %vm1192, %v1586, 0.0
      %v1712 = vadd.f32 %v1710, %v1711
      %v1713 = vsel %vm1192, %v1589, 0.0
      %v1714 = vadd.f32 %v1712, %v1713
      %v1715 = vsel %vm1192, %v1594, 0.0
      %v1716 = vadd.f32 %v1714, %v1715
      %v1717 = vsel %vm1192, %v1597, 0.0
      %v1718 = vadd.f32 %v1716, %v1717
      %v1719 = vsel %vm1192, %v1602, 0.0
      %v1720 = vadd.f32 %v1718, %v1719
      %v1721 = vsel %vm1192, %v1605, 0.0
      %v1722 = vadd.f32 %v1720, %v1721
      %v1723 = vsel %vm1192, %v1610, 0.0
      %v1724 = vadd.f32 %v1722, %v1723
      %v1725 = vsel %vm1192, %v1613, 0.0
      %v1726 = vadd.f32 %v1724, %v1725
      %v1727 = vsel %vm1192, %v1618, 0.0
      %v1728 = vadd.f32 %v1726, %v1727
      %v1729 = vsel %vm1192, %v1621, 0.0
      %v1730 = vadd.f32 %v1728, %v1729
      %v1731 = vsel %vm1192, %v1626, 0.0
      %v1732 = vadd.f32 %v1730, %v1731
      %v1733 = vsel %vm1192, %v1629, 0.0
      %v1734 = vadd.f32 %v1732, %v1733
      %v1735 = vsel %vm1192, %v1634, 0.0
      %v1736 = vadd.f32 %v1734, %v1735
      %v1737 = vsel %vm1192, %v1637, 0.0
      %v1738 = vadd.f32 %v1736, %v1737
      %v1739 = vsel %vm1192, %v1642, 0.0
      %v1740 = vadd.f32 %v1738, %v1739
      %v1741 = vsel %vm1192, %v1645, 0.0
      %v1742 = vadd.f32 %v1740, %v1741
      %v1743 = vrot.slane %v1742, 4
      %v1744 = vadd.f32 %v1742, %v1743
      %v1745 = vrot.slane %v1744, 2
      %v1746 = vadd.f32 %v1744, %v1745
      %v1747 = vrot.slane %v1746, 1
      %v1748 = vadd.f32 %v1746, %v1747
      %v1749 = vmul.f32 %v1522, %v1522
      %v1750 = vmul.f32 %v1525, %v1525
      %v1751 = vmul.f32 %v1530, %v1530
      %v1752 = vmul.f32 %v1533, %v1533
      %v1753 = vmul.f32 %v1538, %v1538
      %v1754 = vmul.f32 %v1541, %v1541
      %v1755 = vmul.f32 %v1546, %v1546
      %v1756 = vmul.f32 %v1549, %v1549
      %v1757 = vmul.f32 %v1554, %v1554
      %v1758 = vmul.f32 %v1557, %v1557
      %v1759 = vmul.f32 %v1562, %v1562
      %v1760 = vmul.f32 %v1565, %v1565
      %v1761 = vmul.f32 %v1570, %v1570
      %v1762 = vmul.f32 %v1573, %v1573
      %v1763 = vmul.f32 %v1578, %v1578
      %v1764 = vmul.f32 %v1581, %v1581
      %v1765 = vmul.f32 %v1586, %v1586
      %v1766 = vmul.f32 %v1589, %v1589
      %v1767 = vmul.f32 %v1594, %v1594
      %v1768 = vmul.f32 %v1597, %v1597
      %v1769 = vmul.f32 %v1602, %v1602
      %v1770 = vmul.f32 %v1605, %v1605
      %v1771 = vmul.f32 %v1610, %v1610
      %v1772 = vmul.f32 %v1613, %v1613
      %v1773 = vmul.f32 %v1618, %v1618
      %v1774 = vmul.f32 %v1621, %v1621
      %v1775 = vmul.f32 %v1626, %v1626
      %v1776 = vmul.f32 %v1629, %v1629
      %v1777 = vmul.f32 %v1634, %v1634
      %v1778 = vmul.f32 %v1637, %v1637
      %v1779 = vmul.f32 %v1642, %v1642
      %v1780 = vmul.f32 %v1645, %v1645
      %v1781 = vsel %vm1192, %v1749, 0.0
      %v1782 = vsel %vm1192, %v1750, 0.0
      %v1783 = vadd.f32 %v1781, %v1782
      %v1784 = vsel %vm1192, %v1751, 0.0
      %v1785 = vadd.f32 %v1783, %v1784
      %v1786 = vsel %vm1192, %v1752, 0.0
      %v1787 = vadd.f32 %v1785, %v1786
      %v1788 = vsel %vm1192, %v1753, 0.0
      %v1789 = vadd.f32 %v1787, %v1788
      %v1790 = vsel %vm1192, %v1754, 0.0
      %v1791 = vadd.f32 %v1789, %v1790
      %v1792 = vsel %vm1192, %v1755, 0.0
      %v1793 = vadd.f32 %v1791, %v1792
      %v1794 = vsel %vm1192, %v1756, 0.0
      %v1795 = vadd.f32 %v1793, %v1794
      %v1796 = vsel %vm1192, %v1757, 0.0
      %v1797 = vadd.f32 %v1795, %v1796
      %v1798 = vsel %vm1192, %v1758, 0.0
      %v1799 = vadd.f32 %v1797, %v1798
      %v1800 = vsel %vm1192, %v1759, 0.0
      %v1801 = vadd.f32 %v1799, %v1800
      %v1802 = vsel %vm1192, %v1760, 0.0
      %v1803 = vadd.f32 %v1801, %v1802
      %v1804 = vsel %vm1192, %v1761, 0.0
      %v1805 = vadd.f32 %v1803, %v1804
      %v1806 = vsel %vm1192, %v1762, 0.0
      %v1807 = vadd.f32 %v1805, %v1806
      %v1808 = vsel %vm1192, %v1763, 0.0
      %v1809 = vadd.f32 %v1807, %v1808
      %v1810 = vsel %vm1192, %v1764, 0.0
      %v1811 = vadd.f32 %v1809, %v1810
      %v1812 = vsel %vm1192, %v1765, 0.0
      %v1813 = vadd.f32 %v1811, %v1812
      %v1814 = vsel %vm1192, %v1766, 0.0
      %v1815 = vadd.f32 %v1813, %v1814
      %v1816 = vsel %vm1192, %v1767, 0.0
      %v1817 = vadd.f32 %v1815, %v1816
      %v1818 = vsel %vm1192, %v1768, 0.0
      %v1819 = vadd.f32 %v1817, %v1818
      %v1820 = vsel %vm1192, %v1769, 0.0
      %v1821 = vadd.f32 %v1819, %v1820
      %v1822 = vsel %vm1192, %v1770, 0.0
      %v1823 = vadd.f32 %v1821, %v1822
      %v1824 = vsel %vm1192, %v1771, 0.0
      %v1825 = vadd.f32 %v1823, %v1824
      %v1826 = vsel %vm1192, %v1772, 0.0
      %v1827 = vadd.f32 %v1825, %v1826
      %v1828 = vsel %vm1192, %v1773, 0.0
      %v1829 = vadd.f32 %v1827, %v1828
      %v1830 = vsel %vm1192, %v1774, 0.0
      %v1831 = vadd.f32 %v1829, %v1830
      %v1832 = vsel %vm1192, %v1775, 0.0
      %v1833 = vadd.f32 %v1831, %v1832
      %v1834 = vsel %vm1192, %v1776, 0.0
      %v1835 = vadd.f32 %v1833, %v1834
      %v1836 = vsel %vm1192, %v1777, 0.0
      %v1837 = vadd.f32 %v1835, %v1836
      %v1838 = vsel %vm1192, %v1778, 0.0
      %v1839 = vadd.f32 %v1837, %v1838
      %v1840 = vsel %vm1192, %v1779, 0.0
      %v1841 = vadd.f32 %v1839, %v1840
      %v1842 = vsel %vm1192, %v1780, 0.0
      %v1843 = vadd.f32 %v1841, %v1842
      %v1844 = vrot.slane %v1843, 4
      %v1845 = vadd.f32 %v1843, %v1844
      %v1846 = vrot.slane %v1845, 2
      %v1847 = vadd.f32 %v1845, %v1846
      %v1848 = vrot.slane %v1847, 1
      %v1849 = vadd.f32 %v1847, %v1848
      %vm1850 = vcmask 1040384
      %v1851 = vsel %vm1850, %v1748, %v1849
      %vm1852 = vcmask 58368
      %1853 = vst.msk [vmem:[%s262] sm:$0x3] %vm1852, %v1851
      %p1854 = scmp.lt.s32.totalorder %s18, 1
      %s1855 = scalar_select %p1854, %s18, 1
      %s1856 = smul.addr %s1855, 32
      %s1857 = smul.addr %s1856, 8
      %s1858 = scalar_lea.vmem %s5, %s1857
      %p1859 = scmp.lt.s32.totalorder %s18, 1
      %s1860 = scalar_select %p1859, %s18, 1
      %s1861 = smul.addr %s1860, 2
      %s1862 = scalar_lea.vmem %s6, %s1861
      // Predicated region
      $region41: #{inception_forward.8} parent=39 // pred_check
        %p1863 = pneg %p146
      $region42: #{inception_forward.8} parent=39 // pred_check_branch
        %1865 = sbr.rel (%p1863) target = $region44
      $region43: #{inception_forward.8} parent=39 // pred_region
        _
      $region44: #{inception_forward.8} parent=39 // pred_fallthru
        _
      // Predicated region
      $region45: #{inception_forward.8} parent=39 // pred_check
        %p1866 = pneg %p172
      $region46: #{inception_forward.8} parent=39 // pred_check_branch
        %1868 = sbr.rel (%p1866) target = $region48
      $region47: #{inception_forward.8} parent=39 // pred_region
        _
      $region48: #{inception_forward.8} parent=39 // pred_fallthru
        _
    $region40: #{inception_forward.8} parent=5 // pred_fallthru
      _
    %p1869 = scmp.le.s32.totalorder 2, %s13
    // Predicated region
    $region49: #{inception_forward.8} parent=5 // pred_check
      %p1870 = pneg %p1869
    $region50: #{inception_forward.8} parent=5 // pred_check_branch
      %1872 = sbr.rel (%p1870) target = $region52
    $region51: #{inception_forward.8} parent=5 // pred_region
      %s1873 = ssub.s32 %s13, 2
      // Predicated region
      $region53: #{inception_forward.8} parent=51 // pred_check
        %p1874 = pneg %p152
      $region54: #{inception_forward.8} parent=51 // pred_check_branch
        %1876 = sbr.rel (%p1874) target = $region56
      $region55: #{inception_forward.8} parent=51 // pred_region
        %p1877 = scmp.lt.s32.totalorder %s19, 1
        %s1878 = scalar_select %p1877, %s19, 1
        %s1879 = smul.addr %s1878, 32
        %s1880 = smul.addr %s1879, 8
        %s1881 = scalar_lea.vmem %s5, %s1880
      $region56: #{inception_forward.8} parent=51 // pred_fallthru
        _
      // Predicated region
      $region57: #{inception_forward.8} parent=51 // pred_check
        %p1882 = pneg %p178
      $region58: #{inception_forward.8} parent=51 // pred_check_branch
        %1884 = sbr.rel (%p1882) target = $region60
      $region59: #{inception_forward.8} parent=51 // pred_region
        %p1885 = scmp.lt.s32.totalorder %s19, 1
        %s1886 = scalar_select %p1885, %s19, 1
        %s1887 = smul.addr %s1886, 2
        %s1888 = scalar_lea.vmem %s6, %s1887
      $region60: #{inception_forward.8} parent=51 // pred_fallthru
        _
    $region52: #{inception_forward.8} parent=5 // pred_fallthru
      _
  $region6: #{inception_forward.8} parent=0 // loop_footer
    %s17 = sadd.s32 1, %s13
  $region7: #{inception_forward.8} parent=0 // loop_footer_branch
    %12 = sbr.rel target = $region3
  $region8: #{inception_forward.8} parent=0 // loop_exit
    _

// kernel: inception_forward.9
$region0: #{inception_forward.9}
  #allocation0 [shape = 'u32[]', space=smem, size = 0x4, offset = 0x4, fixed_abs, tag = 'smem constant byte address 0x4 - core index']
  #allocation1 [shape = 'u32[144,128]{1,0:T(1,128)}', space=vmem, size = 0x12000, scoped, tag = 'internal scratch']
  %s0 = inlined_call_operand.vmem [shape: f32[2,16,16,8], index: 0, kind: input, shape index: {}]
  %s1 = inlined_call_operand.vmem [shape: f32[1,8], index: 1, kind: input, shape index: {}]
  %s2 = inlined_call_operand.vmem [shape: f32[1,8], index: 2, kind: input, shape index: {}]
  %s3 = inlined_call_operand.vmem [shape: bf16[72,8], index: 3, kind: input, shape index: {}]
  %s4 = inlined_call_operand.vmem [shape: f32[1,8], index: 4, kind: input, shape index: {}]
  %s5 = inlined_call_operand.vmem [shape: f32[2,256,8], index: 5, kind: output, shape index: {0}]
  %s6 = inlined_call_operand.vmem [shape: f32[2,2,8], index: 6, kind: output, shape index: {1}]
  %7 = xla_tuple %s5, %s6
  %s8 = sld [smem:[#allocation0]]
  $region61: #{inception_forward.9} parent=0
    _
  %s10 = ssub.s32 1, %s8
  %s11 = scalar_select 0, %s10, %s8
  loop: start=0, step=1, limit=4
  $region2: #{inception_forward.9} parent=0 // loop_pre_header
    _
  $region3: #{inception_forward.9} parent=0 // loop_header
    %s13 = sphi 0, %s17
    %p14 = scmp.ge.s32.totalorder %s13, 4
    %s23 = sphi 0, %s25
    %s26 = sphi 0, %s23
    %s27 = sphi 0, %s26
    %s43 = sphi 0, %s27
    %s47 = sphi 0, %s47
    %s49 = sphi 0, %s47
    %s50 = sphi 0, %s49
    %s64 = sphi 0, %s50
    %s68 = sphi 0, %s68
    %s70 = sphi 0, %s68
    %s71 = sphi 0, %s70
    %s85 = sphi 0, %s71
    %s89 = sphi 0, %s89
    %s91 = sphi 0, %s89
    %s92 = sphi 0, %s91
    %s106 = sphi 0, %s92
    %s110 = sphi 0, %s110
    %s112 = sphi 0, %s110
    %s113 = sphi 0, %s112
    %s127 = sphi 0, %s113
    %s133 = sphi 0, %s135
    %s136 = sphi 0, %s133
    %s137 = sphi 0, %s136
    %s153 = sphi 0, %s137
    %s159 = sphi 0, %s161
    %s162 = sphi 0, %s159
    %s163 = sphi 0, %s162
    %s179 = sphi 0, %s163
  $region4: #{inception_forward.9} parent=0 // loop_header_branch
    %16 = sbr.rel (%p14) target = $region8
  $region5: #{inception_forward.9} parent=0 // loop_body
    %s18 = ssub.s32 %s13, 1
    %s19 = ssub.s32 %s13, 2
    %s20 = sadd.s32 %s13, 1
    %s21 = ssub.s32 %s13, %s20
    %p22 = scmp.eq.s32.totalorder %s21, 0
    %s24 = sadd.s32 %s23, 1
    %s25 = scalar_select %p22, %s23, %s24
    %p28 = pneg %p22
    %p29 = scmp.eq.s32.totalorder %s13, 1
    %p30 = por %p28, %p29
    %p31 = scmp.ne.s32.totalorder %s23, %s26
    %p32 = scmp.eq.s32.totalorder %s13, 0
    %p33 = por %p31, %p32
    %p34 = scmp.ne.s32.totalorder %s23, %s26
    %p35 = scmp.eq.s32.totalorder %s18, 1
    %p36 = por %p34, %p35
    %p37 = scmp.ne.s32.totalorder %s26, %s27
    %p38 = scmp.eq.s32.totalorder %s18, 0
    %p39 = por %p37, %p38
    %p40 = scmp.ne.s32.totalorder %s26, %s27
    %p41 = scmp.eq.s32.totalorder %s19, 1
    %p42 = por %p40, %p41
    %p44 = scmp.ne.s32.totalorder %s27, %s43
    %p45 = scmp.eq.s32.totalorder %s19, 0
    %p46 = por %p44, %p45
    %s48 = sadd.s32 %s47, 1
    %p51 = scmp.eq.s32.totalorder %s13, 1
    %p52 = scmp.ne.s32.totalorder %s47, %s49
    %p53 = scmp.eq.s32.totalorder %s13, 0
    %p54 = por %p52, %p53
    %p55 = scmp.ne.s32.totalorder %s47, %s49
    %p56 = scmp.eq.s32.totalorder %s18, 1
    %p57 = por %p55, %p56
    %p58 = scmp.ne.s32.totalorder %s49, %s50
    %p59 = scmp.eq.s32.totalorder %s18, 0
    %p60 = por %p58, %p59
    %p61 = scmp.ne.s32.totalorder %s49, %s50
    %p62 = scmp.eq.s32.totalorder %s19, 1
    %p63 = por %p61, %p62
    %p65 = scmp.ne.s32.totalorder %s50, %s64
    %p66 = scmp.eq.s32.totalorder %s19, 0
    %p67 = por %p65, %p66
    %s69 = sadd.s32 %s68, 1
    %p72 = scmp.eq.s32.totalorder %s13, 1
    %p73 = scmp.ne.s32.totalorder %s68, %s70
    %p74 = scmp.eq.s32.totalorder %s13, 0
    %p75 = por %p73, %p74
    %p76 = scmp.ne.s32.totalorder %s68, %s70
    %p77 = scmp.eq.s32.totalorder %s18, 1
    %p78 = por %p76, %p77
    %p79 = scmp.ne.s32.totalorder %s70, %s71
    %p80 = scmp.eq.s32.totalorder %s18, 0
    %p81 = por %p79, %p80
    %p82 = scmp.ne.s32.totalorder %s70, %s71
    %p83 = scmp.eq.s32.totalorder %s19, 1
    %p84 = por %p82, %p83
    %p86 = scmp.ne.s32.totalorder %s71, %s85
    %p87 = scmp.eq.s32.totalorder %s19, 0
    %p88 = por %p86, %p87
    %s90 = sadd.s32 %s89, 1
    %p93 = scmp.eq.s32.totalorder %s13, 1
    %p94 = scmp.ne.s32.totalorder %s89, %s91
    %p95 = scmp.eq.s32.totalorder %s13, 0
    %p96 = por %p94, %p95
    %p97 = scmp.ne.s32.totalorder %s89, %s91
    %p98 = scmp.eq.s32.totalorder %s18, 1
    %p99 = por %p97, %p98
    %p100 = scmp.ne.s32.totalorder %s91, %s92
    %p101 = scmp.eq.s32.totalorder %s18, 0
    %p102 = por %p100, %p101
    %p103 = scmp.ne.s32.totalorder %s91, %s92
    %p104 = scmp.eq.s32.totalorder %s19, 1
    %p105 = por %p103, %p104
    %p107 = scmp.ne.s32.totalorder %s92, %s106
    %p108 = scmp.eq.s32.totalorder %s19, 0
    %p109 = por %p107, %p108
    %s111 = sadd.s32 %s110, 1
    %p114 = scmp.eq.s32.totalorder %s13, 1
    %p115 = scmp.ne.s32.totalorder %s110, %s112
    %p116 = scmp.eq.s32.totalorder %s13, 0
    %p117 = por %p115, %p116
    %p118 = scmp.ne.s32.totalorder %s110, %s112
    %p119 = scmp.eq.s32.totalorder %s18, 1
    %p120 = por %p118, %p119
    %p121 = scmp.ne.s32.totalorder %s112, %s113
    %p122 = scmp.eq.s32.totalorder %s18, 0
    %p123 = por %p121, %p122
    %p124 = scmp.ne.s32.totalorder %s112, %s113
    %p125 = scmp.eq.s32.totalorder %s19, 1
    %p126 = por %p124, %p125
    %p128 = scmp.ne.s32.totalorder %s113, %s127
    %p129 = scmp.eq.s32.totalorder %s19, 0
    %p130 = por %p128, %p129
    %s131 = ssub.s32 %s13, %s20
    %p132 = scmp.eq.s32.totalorder %s131, 0
    %s134 = sadd.s32 %s133, 1
    %s135 = scalar_select %p132, %s133, %s134
    %p138 = pneg %p132
    %p139 = scmp.eq.s32.totalorder %s13, 1
    %p140 = por %p138, %p139
    %p141 = scmp.ne.s32.totalorder %s133, %s136
    %p142 = scmp.eq.s32.totalorder %s13, 0
    %p143 = por %p141, %p142
    %p144 = scmp.ne.s32.totalorder %s133, %s136
    %p145 = scmp.eq.s32.totalorder %s18, 1
    %p146 = por %p144, %p145
    %p147 = scmp.ne.s32.totalorder %s136, %s137
    %p148 = scmp.eq.s32.totalorder %s18, 0
    %p149 = por %p147, %p148
    %p150 = scmp.ne.s32.totalorder %s136, %s137
    %p151 = scmp.eq.s32.totalorder %s19, 1
    %p152 = por %p150, %p151
    %p154 = scmp.ne.s32.totalorder %s137, %s153
    %p155 = scmp.eq.s32.totalorder %s19, 0
    %p156 = por %p154, %p155
    %s157 = ssub.s32 %s13, %s20
    %p158 = scmp.eq.s32.totalorder %s157, 0
    %s160 = sadd.s32 %s159, 1
    %s161 = scalar_select %p158, %s159, %s160
    %p164 = pneg %p158
    %p165 = scmp.eq.s32.totalorder %s13, 1
    %p166 = por %p164, %p165
    %p167 = scmp.ne.s32.totalorder %s159, %s162
    %p168 = scmp.eq.s32.totalorder %s13, 0
    %p169 = por %p167, %p168
    %p170 = scmp.ne.s32.totalorder %s159, %s162
    %p171 = scmp.eq.s32.totalorder %s18, 1
    %p172 = por %p170, %p171
    %p173 = scmp.ne.s32.totalorder %s162, %s163
    %p174 = scmp.eq.s32.totalorder %s18, 0
    %p175 = por %p173, %p174
    %p176 = scmp.ne.s32.totalorder %s162, %s163
    %p177 = scmp.eq.s32.totalorder %s19, 1
    %p178 = por %p176, %p177
    %p180 = scmp.ne.s32.totalorder %s163, %s179
    %p181 = scmp.eq.s32.totalorder %s19, 0
    %p182 = por %p180, %p181
    %p183 = scmp.le.s32.totalorder 1, %s13
    %p184 = scmp.lt.s32.totalorder %s13, 3
    %p185 = pnand %p183, %p184
    %p186 = pneg %p185
    // Predicated region
    $region9: #{inception_forward.9} parent=5 // pred_check
      _
    $region10: #{inception_forward.9} parent=5 // pred_check_branch
      %188 = sbr.rel (%p185) target = $region12
    $region11: #{inception_forward.9} parent=5 // pred_region
      %s189 = ssub.s32 %s13, 1
      // Predicated region
      $region13: #{inception_forward.9} parent=11 // pred_check
        %p190 = pneg %p60
      $region14: #{inception_forward.9} parent=11 // pred_check_branch
        %192 = sbr.rel (%p190) target = $region16
      $region15: #{inception_forward.9} parent=11 // pred_region
        _
      $region16: #{inception_forward.9} parent=11 // pred_fallthru
        _
      // Predicated region
      $region17: #{inception_forward.9} parent=11 // pred_check
        %p193 = pneg %p81
      $region18: #{inception_forward.9} parent=11 // pred_check_branch
        %195 = sbr.rel (%p193) target = $region20
      $region19: #{inception_forward.9} parent=11 // pred_region
        _
      $region20: #{inception_forward.9} parent=11 // pred_fallthru
        _
      // Predicated region
      $region21: #{inception_forward.9} parent=11 // pred_check
        %p196 = pneg %p102
      $region22: #{inception_forward.9} parent=11 // pred_check_branch
        %198 = sbr.rel (%p196) target = $region24
      $region23: #{inception_forward.9} parent=11 // pred_region
        _
      $region24: #{inception_forward.9} parent=11 // pred_fallthru
        _
      // Predicated region
      $region25: #{inception_forward.9} parent=11 // pred_check
        %p199 = pneg %p123
      $region26: #{inception_forward.9} parent=11 // pred_check_branch
        %201 = sbr.rel (%p199) target = $region28
      $region27: #{inception_forward.9} parent=11 // pred_region
        _
      $region28: #{inception_forward.9} parent=11 // pred_fallthru
        _
    $region12: #{inception_forward.9} parent=5 // pred_fallthru
      _
    %p202 = scmp.lt.s32.totalorder %s13, 2
    // Predicated region
    $region29: #{inception_forward.9} parent=5 // pred_check
      %p203 = pneg %p202
    $region30: #{inception_forward.9} parent=5 // pred_check_branch
      %205 = sbr.rel (%p203) target = $region32
    $region31: #{inception_forward.9} parent=5 // pred_region
      // Predicated region
      $region33: #{inception_forward.9} parent=31 // pred_check
        %p206 = pneg %p33
      $region34: #{inception_forward.9} parent=31 // pred_check_branch
        %208 = sbr.rel (%p206) target = $region36
      $region35: #{inception_forward.9} parent=31 // pred_region
        %p209 = scmp.lt.s32.totalorder %s13, 1
        %s210 = scalar_select %p209, %s13, 1
        %s211 = smul.addr %s210, 32
        %s212 = smul.addr %s211, 8
        %s213 = scalar_lea.vmem %s0, %s212
      $region36: #{inception_forward.9} parent=31 // pred_fallthru
        _
    $region32: #{inception_forward.9} parent=5 // pred_fallthru
      _
    %p214 = scmp.le.s32.totalorder 1, %s13
    %p215 = scmp.lt.s32.totalorder %s13, 3
    %p216 = pnand %p214, %p215
    %p217 = pneg %p216
    // Predicated region
    $region37: #{inception_forward.9} parent=5 // pred_check
      _
    $region38: #{inception_forward.9} parent=5 // pred_check_branch
      %219 = sbr.rel (%p216) target = $region40
    $region39: #{inception_forward.9} parent=5 // pred_region
      %s220 = ssub.s32 %s13, 1
      %p221 = scmp.lt.s32.totalorder %s18, 1
      %s222 = scalar_select %p221, %s18, 1
      %s223 = smul.addr %s222, 32
      %s224 = smul.addr %s223, 8
      %s225 = scalar_lea.vmem %s0, %s224
      %p226 = pneg %p39
      %p227 = pneg %p36
      %p228 = pneg %p60
      %p229 = pneg %p57
      %p230 = pneg %p81
      %p231 = pneg %p78
      %p232 = pneg %p102
      %p233 = pneg %p99
      %p234 = pneg %p123
      %p235 = pneg %p120
      %p236 = pneg %p149
      %p237 = pneg %p146
      %p238 = scmp.lt.s32.totalorder %s18, 1
      %s239 = scalar_select %p238, %s18, 1
      %s240 = smul.addr %s239, 32
      %s241 = smul.addr %s240, 8
      %s242 = scalar_lea.vmem %s5, %s241
      %p243 = pneg %p175
      %p244 = pneg %p172
      %p245 = scmp.lt.s32.totalorder %s18, 1
      %s246 = scalar_select %p245, %s18, 1
      %s247 = smul.addr %s246, 2
      %s248 = scalar_lea.vmem %s6, %s247
      %p249 = scmp.lt.s32.totalorder %s18, 1
      %s250 = scalar_select %p249, %s18, 1
      %s251 = smul.addr %s250, 32
      %s252 = smul.addr %s251, 8
      %s253 = scalar_lea.vmem %s0, %s252
      %p254 = scmp.lt.s32.totalorder %s18, 1
      %s255 = scalar_select %p254, %s18, 1
      %s256 = smul.addr %s255, 32
      %s257 = smul.addr %s256, 8
      %s258 = scalar_lea.vmem %s5, %s257
      %p259 = scmp.lt.s32.totalorder %s18, 1
      %s260 = scalar_select %p259, %s18, 1
      %s261 = smul.addr %s260, 2
      %s262 = scalar_lea.vmem %s6, %s261
      %v264 = vld [vmem:[%s1] sm:$0x1]
      %v265 = vld [vmem:[%s2] sm:$0x1]
      %v266 = vld [vmem:[%s253] sm:$0xff]
      %v267 = vld [vmem:[%s253 + $0x8] sm:$0xff]
      %v268 = vld [vmem:[%s253 + $0x10] sm:$0xff]
      %v269 = vld [vmem:[%s253 + $0x18] sm:$0xff]
      %v270 = vld [vmem:[%s253 + $0x20] sm:$0xff]
      %v271 = vld [vmem:[%s253 + $0x28] sm:$0xff]
      %v272 = vld [vmem:[%s253 + $0x30] sm:$0xff]
      %v273 = vld [vmem:[%s253 + $0x38] sm:$0xff]
      %v274 = vld [vmem:[%s253 + $0x40] sm:$0xff]
      %v275 = vld [vmem:[%s253 + $0x48] sm:$0xff]
      %v276 = vld [vmem:[%s253 + $0x50] sm:$0xff]
      %v277 = vld [vmem:[%s253 + $0x58] sm:$0xff]
      %v278 = vld [vmem:[%s253 + $0x60] sm:$0xff]
      %v279 = vld [vmem:[%s253 + $0x68] sm:$0xff]
      %v280 = vld [vmem:[%s253 + $0x70] sm:$0xff]
      %v281 = vld [vmem:[%s253 + $0x78] sm:$0xff]
      %v282 = vld [vmem:[%s253 + $0x80] sm:$0xff]
      %v283 = vld [vmem:[%s253 + $0x88] sm:$0xff]
      %v284 = vld [vmem:[%s253 + $0x90] sm:$0xff]
      %v285 = vld [vmem:[%s253 + $0x98] sm:$0xff]
      %v286 = vld [vmem:[%s253 + $0xa0] sm:$0xff]
      %v287 = vld [vmem:[%s253 + $0xa8] sm:$0xff]
      %v288 = vld [vmem:[%s253 + $0xb0] sm:$0xff]
      %v289 = vld [vmem:[%s253 + $0xb8] sm:$0xff]
      %v290 = vld [vmem:[%s253 + $0xc0] sm:$0xff]
      %v291 = vld [vmem:[%s253 + $0xc8] sm:$0xff]
      %v292 = vld [vmem:[%s253 + $0xd0] sm:$0xff]
      %v293 = vld [vmem:[%s253 + $0xd8] sm:$0xff]
      %v294 = vld [vmem:[%s253 + $0xe0] sm:$0xff]
      %v295 = vld [vmem:[%s253 + $0xe8] sm:$0xff]
      %v296 = vld [vmem:[%s253 + $0xf0] sm:$0xff]
      %v297 = vld [vmem:[%s253 + $0xf8] sm:$0xff]
      %v299 = vlaneseq
      %v300 = vshrl.u32 %v299, 7
      %v301 = vsub.s32 0, %v300
      %v302 = vrot.slane %v264, %v301
      %v304 = vmul.f32 %v266, %v302
      %v305 = vmul.f32 %v267, %v302
      %v306 = vmul.f32 %v268, %v302
      %v307 = vmul.f32 %v269, %v302
      %v308 = vmul.f32 %v270, %v302
      %v309 = vmul.f32 %v271, %v302
      %v310 = vmul.f32 %v272, %v302
      %v311 = vmul.f32 %v273, %v302
      %v312 = vmul.f32 %v274, %v302
      %v313 = vmul.f32 %v275, %v302
      %v314 = vmul.f32 %v276, %v302
      %v315 = vmul.f32 %v277, %v302
      %v316 = vmul.f32 %v278, %v302
      %v317 = vmul.f32 %v279, %v302
      %v318 = vmul.f32 %v280, %v302
      %v319 = vmul.f32 %v281, %v302
      %v320 = vmul.f32 %v282, %v302
      %v321 = vmul.f32 %v283, %v302
      %v322 = vmul.f32 %v284, %v302
      %v323 = vmul.f32 %v285, %v302
      %v324 = vmul.f32 %v286, %v302
      %v325 = vmul.f32 %v287, %v302
      %v326 = vmul.f32 %v288, %v302
      %v327 = vmul.f32 %v289, %v302
      %v328 = vmul.f32 %v290, %v302
      %v329 = vmul.f32 %v291, %v302
      %v330 = vmul.f32 %v292, %v302
      %v331 = vmul.f32 %v293, %v302
      %v332 = vmul.f32 %v294, %v302
      %v333 = vmul.f32 %v295, %v302
      %v334 = vmul.f32 %v296, %v302
      %v335 = vmul.f32 %v297, %v302
      %v337 = vlaneseq
      %v338 = vshrl.u32 %v337, 7
      %v339 = vsub.s32 0, %v338
      %v340 = vrot.slane %v265, %v339
      %v342 = vadd.f32 %v304, %v340
      %v343 = vadd.f32 %v305, %v340
      %v344 = vadd.f32 %v306, %v340
      %v345 = vadd.f32 %v307, %v340
      %v346 = vadd.f32 %v308, %v340
      %v347 = vadd.f32 %v309, %v340
      %v348 = vadd.f32 %v310, %v340
      %v349 = vadd.f32 %v311, %v340
      %v350 = vadd.f32 %v312, %v340
      %v351 = vadd.f32 %v313, %v340
      %v352 = vadd.f32 %v314, %v340
      %v353 = vadd.f32 %v315, %v340
      %v354 = vadd.f32 %v316, %v340
      %v355 = vadd.f32 %v317, %v340
      %v356 = vadd.f32 %v318, %v340
      %v357 = vadd.f32 %v319, %v340
      %v358 = vadd.f32 %v320, %v340
      %v359 = vadd.f32 %v321, %v340
      %v360 = vadd.f32 %v322, %v340
      %v361 = vadd.f32 %v323, %v340
      %v362 = vadd.f32 %v324, %v340
      %v363 = vadd.f32 %v325, %v340
      %v364 = vadd.f32 %v326, %v340
      %v365 = vadd.f32 %v327, %v340
      %v366 = vadd.f32 %v328, %v340
      %v367 = vadd.f32 %v329, %v340
      %v368 = vadd.f32 %v330, %v340
      %v369 = vadd.f32 %v331, %v340
      %v370 = vadd.f32 %v332, %v340
      %v371 = vadd.f32 %v333, %v340
      %v372 = vadd.f32 %v334, %v340
      %v373 = vadd.f32 %v335, %v340
      %v374 = vmax.f32 %v342, 0.0
      %v375 = vmax.f32 %v343, 0.0
      %v376 = vmax.f32 %v344, 0.0
      %v377 = vmax.f32 %v345, 0.0
      %v378 = vmax.f32 %v346, 0.0
      %v379 = vmax.f32 %v347, 0.0
      %v380 = vmax.f32 %v348, 0.0
      %v381 = vmax.f32 %v349, 0.0
      %v382 = vmax.f32 %v350, 0.0
      %v383 = vmax.f32 %v351, 0.0
      %v384 = vmax.f32 %v352, 0.0
      %v385 = vmax.f32 %v353, 0.0
      %v386 = vmax.f32 %v354, 0.0
      %v387 = vmax.f32 %v355, 0.0
      %v388 = vmax.f32 %v356, 0.0
      %v389 = vmax.f32 %v357, 0.0
      %v390 = vmax.f32 %v358, 0.0
      %v391 = vmax.f32 %v359, 0.0
      %v392 = vmax.f32 %v360, 0.0
      %v393 = vmax.f32 %v361, 0.0
      %v394 = vmax.f32 %v362, 0.0
      %v395 = vmax.f32 %v363, 0.0
      %v396 = vmax.f32 %v364, 0.0
      %v397 = vmax.f32 %v365, 0.0
      %v398 = vmax.f32 %v366, 0.0
      %v399 = vmax.f32 %v367, 0.0
      %v400 = vmax.f32 %v368, 0.0
      %v401 = vmax.f32 %v369, 0.0
      %v402 = vmax.f32 %v370, 0.0
      %v403 = vmax.f32 %v371, 0.0
      %v404 = vmax.f32 %v372, 0.0
      %v405 = vmax.f32 %v373, 0.0
      %v406 = vpack.c.bf16 %v375, %v374
      %v407 = vpack.c.bf16 %v377, %v376
      %v408 = vpack.c.bf16 %v379, %v378
      %v409 = vpack.c.bf16 %v381, %v380
      %v410 = vpack.c.bf16 %v383, %v382
      %v411 = vpack.c.bf16 %v385, %v384
      %v412 = vpack.c.bf16 %v387, %v386
      %v413 = vpack.c.bf16 %v389, %v388
      %v414 = vpack.c.bf16 %v391, %v390
      %v415 = vpack.c.bf16 %v393, %v392
      %v416 = vpack.c.bf16 %v395, %v394
      %v417 = vpack.c.bf16 %v397, %v396
      %v418 = vpack.c.bf16 %v399, %v398
      %v419 = vpack.c.bf16 %v401, %v400
      %v420 = vpack.c.bf16 %v403, %v402
      %v421 = vpack.c.bf16 %v405, %v404
      %v423 = vshrl.u32 0, 16
      %v425 = vrot.slane %v423, 7
      %v426 = vshll.u32 0, 16
      %v428 = vor.u32 %v425, %v426
      %v430 = vshrl.u32 %v406, 16
      %v432 = vrot.slane %v430, 7
      %v433 = vshll.u32 %v406, 16
      %v435 = vor.u32 %v432, %v433
      %v437 = vshrl.u32 %v407, 16
      %v439 = vrot.slane %v437, 7
      %v440 = vshll.u32 %v407, 16
      %v442 = vor.u32 %v439, %v440
      %v444 = vshrl.u32 %v408, 16
      %v446 = vrot.slane %v444, 7
      %v447 = vshll.u32 %v408, 16
      %v449 = vor.u32 %v446, %v447
      %v451 = vshrl.u32 %v409, 16
      %v453 = vrot.slane %v451, 7
      %v454 = vshll.u32 %v409, 16
      %v456 = vor.u32 %v453, %v454
      %v458 = vshrl.u32 %v410, 16
      %v460 = vrot.slane %v458, 7
      %v461 = vshll.u32 %v410, 16
      %v463 = vor.u32 %v460, %v461
      %v465 = vshrl.u32 %v411, 16
      %v467 = vrot.slane %v465, 7
      %v468 = vshll.u32 %v411, 16
      %v470 = vor.u32 %v467, %v468
      %v472 = vshrl.u32 %v412, 16
      %v474 = vrot.slane %v472, 7
      %v475 = vshll.u32 %v412, 16
      %v477 = vor.u32 %v474, %v475
      %v479 = vshrl.u32 %v413, 16
      %v481 = vrot.slane %v479, 7
      %v482 = vshll.u32 %v413, 16
      %v484 = vor.u32 %v481, %v482
      %v486 = vshrl.u32 %v414, 16
      %v488 = vrot.slane %v486, 7
      %v489 = vshll.u32 %v414, 16
      %v491 = vor.u32 %v488, %v489
      %v493 = vshrl.u32 %v415, 16
      %v495 = vrot.slane %v493, 7
      %v496 = vshll.u32 %v415, 16
      %v498 = vor.u32 %v495, %v496
      %v500 = vshrl.u32 %v416, 16
      %v502 = vrot.slane %v500, 7
      %v503 = vshll.u32 %v416, 16
      %v505 = vor.u32 %v502, %v503
      %v507 = vshrl.u32 %v417, 16
      %v509 = vrot.slane %v507, 7
      %v510 = vshll.u32 %v417, 16
      %v512 = vor.u32 %v509, %v510
      %v514 = vshrl.u32 %v418, 16
      %v516 = vrot.slane %v514, 7
      %v517 = vshll.u32 %v418, 16
      %v519 = vor.u32 %v516, %v517
      %v521 = vshrl.u32 %v419, 16
      %v523 = vrot.slane %v521, 7
      %v524 = vshll.u32 %v419, 16
      %v526 = vor.u32 %v523, %v524
      %v528 = vshrl.u32 %v420, 16
      %v530 = vrot.slane %v528, 7
      %v531 = vshll.u32 %v420, 16
      %v533 = vor.u32 %v530, %v531
      %v535 = vshrl.u32 %v421, 16
      %v537 = vrot.slane %v535, 7
      %v538 = vshll.u32 %v421, 16
      %v540 = vor.u32 %v537, %v538
      %vm575 = vcmask 1040384
      %vm576 = vsmask.f32 256
      %vm577 = vmand %vm575, %vm576
      %v578 = vsel %vm577, 0, %v428
      %v579 = vsel %vm577, 0, %v435
      %v580 = vsel %vm577, 0, %v442
      %v581 = vsel %vm577, 0, %v449
      %v582 = vsel %vm577, 0, %v456
      %v583 = vsel %vm577, 0, %v463
      %v584 = vsel %vm577, 0, %v470
      %v585 = vsel %vm577, 0, %v477
      %v586 = vsel %vm577, 0, %v484
      %v587 = vsel %vm577, 0, %v491
      %v588 = vsel %vm577, 0, %v498
      %v589 = vsel %vm577, 0, %v505
      %v590 = vsel %vm577, 0, %v512
      %v591 = vsel %vm577, 0, %v519
      %v592 = vsel %vm577, 0, %v526
      %v593 = vsel %vm577, 0, %v533
      %v594 = vsel %vm577, 0, %v540
      %v595 = vsel %vm577, %v425, 0
      %v596 = vsel %vm577, %v432, 0
      %v597 = vsel %vm577, %v439, 0
      %v598 = vsel %vm577, %v446, 0
      %v599 = vsel %vm577, %v453, 0
      %v600 = vsel %vm577, %v460, 0
      %v601 = vsel %vm577, %v467, 0
      %v602 = vsel %vm577, %v474, 0
      %v603 = vsel %vm577, %v481, 0
      %v604 = vsel %vm577, %v488, 0
      %v605 = vsel %vm577, %v495, 0
      %v606 = vsel %vm577, %v502, 0
      %v607 = vsel %vm577, %v509, 0
      %v608 = vsel %vm577, %v516, 0
      %v609 = vsel %vm577, %v523, 0
      %v610 = vsel %vm577, %v530, 0
      %v611 = vsel %vm577, %v537, 0
      %vm612 = vsmask.f32 7424
      %v614 = vshrl.u32 %v578, 16
      %v616 = vshll.u32 %v578, 16
      %v618 = vrot.slane %v616, 1
      %v619 = vor.u32 %v614, %v618
      %v621 = vshll.u32 %v595, 16
      %v623 = vrot.slane %v621, 1
      %v624 = vsel %vm612, %v619, %v623
      %v626 = vshrl.u32 %v579, 16
      %v628 = vshll.u32 %v579, 16
      %v630 = vrot.slane %v628, 1
      %v631 = vor.u32 %v626, %v630
      %v633 = vshll.u32 %v596, 16
      %v635 = vrot.slane %v633, 1
      %v636 = vsel %vm612, %v631, %v635
      %v638 = vshrl.u32 %v580, 16
      %v640 = vshll.u32 %v580, 16
      %v642 = vrot.slane %v640, 1
      %v643 = vor.u32 %v638, %v642
      %v645 = vshll.u32 %v597, 16
      %v647 = vrot.slane %v645, 1
      %v648 = vsel %vm612, %v643, %v647
      %v650 = vshrl.u32 %v581, 16
      %v652 = vshll.u32 %v581, 16
      %v654 = vrot.slane %v652, 1
      %v655 = vor.u32 %v650, %v654
      %v657 = vshll.u32 %v598, 16
      %v659 = vrot.slane %v657, 1
      %v660 = vsel %vm612, %v655, %v659
      %v662 = vshrl.u32 %v582, 16
      %v664 = vshll.u32 %v582, 16
      %v666 = vrot.slane %v664, 1
      %v667 = vor.u32 %v662, %v666
      %v669 = vshll.u32 %v599, 16
      %v671 = vrot.slane %v669, 1
      %v672 = vsel %vm612, %v667, %v671
      %v674 = vshrl.u32 %v583, 16
      %v676 = vshll.u32 %v583, 16
      %v678 = vrot.slane %v676, 1
      %v679 = vor.u32 %v674, %v678
      %v681 = vshll.u32 %v600, 16
      %v683 = vrot.slane %v681, 1
      %v684 = vsel %vm612, %v679, %v683
      %v686 = vshrl.u32 %v584, 16
      %v688 = vshll.u32 %v584, 16
      %v690 = vrot.slane %v688, 1
      %v691 = vor.u32 %v686, %v690
      %v693 = vshll.u32 %v601, 16
      %v695 = vrot.slane %v693, 1
      %v696 = vsel %vm612, %v691, %v695
      %v698 = vshrl.u32 %v585, 16
      %v700 = vshll.u32 %v585, 16
      %v702 = vrot.slane %v700, 1
      %v703 = vor.u32 %v698, %v702
      %v705 = vshll.u32 %v602, 16
      %v707 = vrot.slane %v705, 1
      %v708 = vsel %vm612, %v703, %v707
      %v710 = vshrl.u32 %v586, 16
      %v712 = vshll.u32 %v586, 16
      %v714 = vrot.slane %v712, 1
      %v715 = vor.u32 %v710, %v714
      %v717 = vshll.u32 %v603, 16
      %v719 = vrot.slane %v717, 1
      %v720 = vsel %vm612, %v715, %v719
      %v722 = vshrl.u32 %v587, 16
      %v724 = vshll.u32 %v587, 16
      %v726 = vrot.slane %v724, 1
      %v727 = vor.u32 %v722, %v726
      %v729 = vshll.u32 %v604, 16
      %v731 = vrot.slane %v729, 1
      %v732 = vsel %vm612, %v727, %v731
      %v734 = vshrl.u32 %v588, 16
      %v736 = vshll.u32 %v588, 16
      %v738 = vrot.slane %v736, 1
      %v739 = vor.u32 %v734, %v738
      %v741 = vshll.u32 %v605, 16
      %v743 = vrot.slane %v741, 1
      %v744 = vsel %vm612, %v739, %v743
      %v746 = vshrl.u32 %v589, 16
      %v748 = vshll.u32 %v589, 16
      %v750 = vrot.slane %v748, 1
      %v751 = vor.u32 %v746, %v750
      %v753 = vshll.u32 %v606, 16
      %v755 = vrot.slane %v753, 1
      %v756 = vsel %vm612, %v751, %v755
      %v758 = vshrl.u32 %v590, 16
      %v760 = vshll.u32 %v590, 16
      %v762 = vrot.slane %v760, 1
      %v763 = vor.u32 %v758, %v762
      %v765 = vshll.u32 %v607, 16
      %v767 = vrot.slane %v765, 1
      %v768 = vsel %vm612, %v763, %v767
      %v770 = vshrl.u32 %v591, 16
      %v772 = vshll.u32 %v591, 16
      %v774 = vrot.slane %v772, 1
      %v775 = vor.u32 %v770, %v774
      %v777 = vshll.u32 %v608, 16
      %v779 = vrot.slane %v777, 1
      %v780 = vsel %vm612, %v775, %v779
      %v782 = vshrl.u32 %v592, 16
      %v784 = vshll.u32 %v592, 16
      %v786 = vrot.slane %v784, 1
      %v787 = vor.u32 %v782, %v786
      %v789 = vshll.u32 %v609, 16
      %v791 = vrot.slane %v789, 1
      %v792 = vsel %vm612, %v787, %v791
      %v794 = vshrl.u32 %v593, 16
      %v796 = vshll.u32 %v593, 16
      %v798 = vrot.slane %v796, 1
      %v799 = vor.u32 %v794, %v798
      %v801 = vshll.u32 %v610, 16
      %v803 = vrot.slane %v801, 1
      %v804 = vsel %vm612, %v799, %v803
      %vm837 = vcmask 1046528
      %v838 = vrot.slane %v578, 1
      %v839 = vrot.slane %v595, 1
      %v840 = vsel %vm837, %v838, %v839
      %v841 = vrot.slane %v579, 1
      %v842 = vrot.slane %v596, 1
      %v843 = vsel %vm837, %v841, %v842
      %v844 = vrot.slane %v580, 1
      %v845 = vrot.slane %v597, 1
      %v846 = vsel %vm837, %v844, %v845
      %v847 = vrot.slane %v581, 1
      %v848 = vrot.slane %v598, 1
      %v849 = vsel %vm837, %v847, %v848
      %v850 = vrot.slane %v582, 1
      %v851 = vrot.slane %v599, 1
      %v852 = vsel %vm837, %v850, %v851
      %v853 = vrot.slane %v583, 1
      %v854 = vrot.slane %v600, 1
      %v855 = vsel %vm837, %v853, %v854
      %v856 = vrot.slane %v584, 1
      %v857 = vrot.slane %v601, 1
      %v858 = vsel %vm837, %v856, %v857
      %v859 = vrot.slane %v585, 1
      %v860 = vrot.slane %v602, 1
      %v861 = vsel %vm837, %v859, %v860
      %v862 = vrot.slane %v586, 1
      %v863 = vrot.slane %v603, 1
      %v864 = vsel %vm837, %v862, %v863
      %v865 = vrot.slane %v587, 1
      %v866 = vrot.slane %v604, 1
      %v867 = vsel %vm837, %v865, %v866
      %v868 = vrot.slane %v588, 1
      %v869 = vrot.slane %v605, 1
      %v870 = vsel %vm837, %v868, %v869
      %v871 = vrot.slane %v589, 1
      %v872 = vrot.slane %v606, 1
      %v873 = vsel %vm837, %v871, %v872
      %v874 = vrot.slane %v590, 1
      %v875 = vrot.slane %v607, 1
      %v876 = vsel %vm837, %v874, %v875
      %v877 = vrot.slane %v591, 1
      %v878 = vrot.slane %v608, 1
      %v879 = vsel %vm837, %v877, %v878
      %v880 = vrot.slane %v592, 1
      %v881 = vrot.slane %v609, 1
      %v882 = vsel %vm837, %v880, %v881
      %v883 = vrot.slane %v593, 1
      %v884 = vrot.slane %v610, 1
      %v885 = vsel %vm837, %v883, %v884
      %v887 = vshrl.u32 %v594, 16
      %v889 = vshll.u32 %v594, 16
      %v891 = vrot.slane %v889, 1
      %v892 = vor.u32 %v887, %v891
      %v894 = vshll.u32 %v611, 16
      %v896 = vrot.slane %v894, 1
      %v897 = vsel %vm612, %v892, %v896
      %v900 = vrot.slane %v594, 1
      %v901 = vrot.slane %v611, 1
      %v902 = vsel %vm837, %v900, %v901
      %903 = vrot.lane.b32.xlu0 %v624, 8
      %v904 = vpop.permute.xlu0 %903
      %905 = vrot.lane.b32.xlu0 %v636, 8
      %v906 = vpop.permute.xlu0 %905
      %907 = vrot.lane.b32.xlu0 %v648, 8
      %v908 = vpop.permute.xlu0 %907
      %909 = vrot.lane.b32.xlu0 %v660, 8
      %v910 = vpop.permute.xlu0 %909
      %911 = vrot.lane.b32.xlu0 %v672, 8
      %v912 = vpop.permute.xlu0 %911
      %913 = vrot.lane.b32.xlu0 %v684, 8
      %v914 = vpop.permute.xlu0 %913
      %915 = vrot.lane.b32.xlu0 %v696, 8
      %v916 = vpop.permute.xlu0 %915
      %917 = vrot.lane.b32.xlu0 %v708, 8
      %v918 = vpop.permute.xlu0 %917
      %919 = vrot.lane.b32.xlu0 %v720, 8
      %v920 = vpop.permute.xlu0 %919
      %921 = vrot.lane.b32.xlu0 %v732, 8
      %v922 = vpop.permute.xlu0 %921
      %923 = vrot.lane.b32.xlu0 %v744, 8
      %v924 = vpop.permute.xlu0 %923
      %925 = vrot.lane.b32.xlu0 %v756, 8
      %v926 = vpop.permute.xlu0 %925
      %927 = vrot.lane.b32.xlu0 %v768, 8
      %v928 = vpop.permute.xlu0 %927
      %929 = vrot.lane.b32.xlu0 %v780, 8
      %v930 = vpop.permute.xlu0 %929
      %931 = vrot.lane.b32.xlu0 %v792, 8
      %v932 = vpop.permute.xlu0 %931
      %933 = vrot.lane.b32.xlu0 %v804, 8
      %v934 = vpop.permute.xlu0 %933
      %935 = vrot.lane.b32.xlu0 %v840, 16
      %v936 = vpop.permute.xlu0 %935
      %937 = vrot.lane.b32.xlu0 %v843, 16
      %v938 = vpop.permute.xlu0 %937
      %939 = vrot.lane.b32.xlu0 %v846, 16
      %v940 = vpop.permute.xlu0 %939
      %941 = vrot.lane.b32.xlu0 %v849, 16
      %v942 = vpop.permute.xlu0 %941
      %943 = vrot.lane.b32.xlu0 %v852, 16
      %v944 = vpop.permute.xlu0 %943
      %945 = vrot.lane.b32.xlu0 %v855, 16
      %v946 = vpop.permute.xlu0 %945
      %947 = vrot.lane.b32.xlu0 %v858, 16
      %v948 = vpop.permute.xlu0 %947
      %949 = vrot.lane.b32.xlu0 %v861, 16
      %v950 = vpop.permute.xlu0 %949
      %951 = vrot.lane.b32.xlu0 %v864, 16
      %v952 = vpop.permute.xlu0 %951
      %953 = vrot.lane.b32.xlu0 %v867, 16
      %v954 = vpop.permute.xlu0 %953
      %955 = vrot.lane.b32.xlu0 %v870, 16
      %v956 = vpop.permute.xlu0 %955
      %957 = vrot.lane.b32.xlu0 %v873, 16
      %v958 = vpop.permute.xlu0 %957
      %959 = vrot.lane.b32.xlu0 %v876, 16
      %v960 = vpop.permute.xlu0 %959
      %961 = vrot.lane.b32.xlu0 %v879, 16
      %v962 = vpop.permute.xlu0 %961
      %963 = vrot.lane.b32.xlu0 %v882, 16
      %v964 = vpop.permute.xlu0 %963
      %965 = vrot.lane.b32.xlu0 %v885, 16
      %v966 = vpop.permute.xlu0 %965
      %967 = vrot.lane.b32.xlu0 %v579, 24
      %v968 = vpop.permute.xlu0 %967
      %969 = vrot.lane.b32.xlu0 %v580, 24
      %v970 = vpop.permute.xlu0 %969
      %971 = vrot.lane.b32.xlu0 %v581, 24
      %v972 = vpop.permute.xlu0 %971
      %973 = vrot.lane.b32.xlu0 %v582, 24
      %v974 = vpop.permute.xlu0 %973
      %975 = vrot.lane.b32.xlu0 %v583, 24
      %v976 = vpop.permute.xlu0 %975
      %977 = vrot.lane.b32.xlu0 %v584, 24
      %v978 = vpop.permute.xlu0 %977
      %979 = vrot.lane.b32.xlu0 %v585, 24
      %v980 = vpop.permute.xlu0 %979
      %981 = vrot.lane.b32.xlu0 %v586, 24
      %v982 = vpop.permute.xlu0 %981
      %983 = vrot.lane.b32.xlu0 %v587, 24
      %v984 = vpop.permute.xlu0 %983
      %985 = vrot.lane.b32.xlu0 %v588, 24
      %v986 = vpop.permute.xlu0 %985
      %987 = vrot.lane.b32.xlu0 %v589, 24
      %v988 = vpop.permute.xlu0 %987
      %989 = vrot.lane.b32.xlu0 %v590, 24
      %v990 = vpop.permute.xlu0 %989
      %991 = vrot.lane.b32.xlu0 %v591, 24
      %v992 = vpop.permute.xlu0 %991
      %993 = vrot.lane.b32.xlu0 %v592, 24
      %v994 = vpop.permute.xlu0 %993
      %995 = vrot.lane.b32.xlu0 %v593, 24
      %v996 = vpop.permute.xlu0 %995
      %997 = vrot.lane.b32.xlu0 %v594, 24
      %v998 = vpop.permute.xlu0 %997
      %999 = vrot.lane.b32.xlu0 %v636, 32
      %v1000 = vpop.permute.xlu0 %999
      %1001 = vrot.lane.b32.xlu0 %v648, 32
      %v1002 = vpop.permute.xlu0 %1001
      %1003 = vrot.lane.b32.xlu0 %v660, 32
      %v1004 = vpop.permute.xlu0 %1003
      %1005 = vrot.lane.b32.xlu0 %v672, 32
      %v1006 = vpop.permute.xlu0 %1005
      %1007 = vrot.lane.b32.xlu0 %v684, 32
      %v1008 = vpop.permute.xlu0 %1007
      %1009 = vrot.lane.b32.xlu0 %v696, 32
      %v1010 = vpop.permute.xlu0 %1009
      %1011 = vrot.lane.b32.xlu0 %v708, 32
      %v1012 = vpop.permute.xlu0 %1011
      %1013 = vrot.lane.b32.xlu0 %v720, 32
      %v1014 = vpop.permute.xlu0 %1013
      %1015 = vrot.lane.b32.xlu0 %v732, 32
      %v1016 = vpop.permute.xlu0 %1015
      %1017 = vrot.lane.b32.xlu0 %v744, 32
      %v1018 = vpop.permute.xlu0 %1017
      %1019 = vrot.lane.b32.xlu0 %v756, 32
      %v1020 = vpop.permute.xlu0 %1019
      %1021 = vrot.lane.b32.xlu0 %v768, 32
      %v1022 = vpop.permute.xlu0 %1021
      %1023 = vrot.lane.b32.xlu0 %v780, 32
      %v1024 = vpop.permute.xlu0 %1023
      %1025 = vrot.lane.b32.xlu0 %v792, 32
      %v1026 = vpop.permute.xlu0 %1025
      %1027 = vrot.lane.b32.xlu0 %v804, 32
      %v1028 = vpop.permute.xlu0 %1027
      %1029 = vrot.lane.b32.xlu0 %v897, 32
      %v1030 = vpop.permute.xlu0 %1029
      %1031 = vrot.lane.b32.xlu0 %v843, 40
      %v1032 = vpop.permute.xlu0 %1031
      %1033 = vrot.lane.b32.xlu0 %v846, 40
      %v1034 = vpop.permute.xlu0 %1033
      %1035 = vrot.lane.b32.xlu0 %v849, 40
      %v1036 = vpop.permute.xlu0 %1035
      %1037 = vrot.lane.b32.xlu0 %v852, 40
      %v1038 = vpop.permute.xlu0 %1037
      %1039 = vrot.lane.b32.xlu0 %v855, 40
      %v1040 = vpop.permute.xlu0 %1039
      %1041 = vrot.lane.b32.xlu0 %v858, 40
      %v1042 = vpop.permute.xlu0 %1041
      %1043 = vrot.lane.b32.xlu0 %v861, 40
      %v1044 = vpop.permute.xlu0 %1043
      %1045 = vrot.lane.b32.xlu0 %v864, 40
      %v1046 = vpop.permute.xlu0 %1045
      %1047 = vrot.lane.b32.xlu0 %v867, 40
      %v1048 = vpop.permute.xlu0 %1047
      %1049 = vrot.lane.b32.xlu0 %v870, 40
      %v1050 = vpop.permute.xlu0 %1049
      %1051 = vrot.lane.b32.xlu0 %v873, 40
      %v1052 = vpop.permute.xlu0 %1051
      %1053 = vrot.lane.b32.xlu0 %v876, 40
      %v1054 = vpop.permute.xlu0 %1053
      %1055 = vrot.lane.b32.xlu0 %v879, 40
      %v1056 = vpop.permute.xlu0 %1055
      %1057 = vrot.lane.b32.xlu0 %v882, 40
      %v1058 = vpop.permute.xlu0 %1057
      %1059 = vrot.lane.b32.xlu0 %v885, 40
      %v1060 = vpop.permute.xlu0 %1059
      %1061 = vrot.lane.b32.xlu0 %v902, 40
      %v1062 = vpop.permute.xlu0 %1061
      %1063 = vrot.lane.b32.xlu0 %v580, 48
      %v1064 = vpop.permute.xlu0 %1063
      %1065 = vrot.lane.b32.xlu0 %v581, 48
      %v1066 = vpop.permute.xlu0 %1065
      %1067 = vrot.lane.b32.xlu0 %v582, 48
      %v1068 = vpop.permute.xlu0 %1067
      %1069 = vrot.lane.b32.xlu0 %v583, 48
      %v1070 = vpop.permute.xlu0 %1069
      %1071 = vrot.lane.b32.xlu0 %v584, 48
      %v1072 = vpop.permute.xlu0 %1071
      %1073 = vrot.lane.b32.xlu0 %v585, 48
      %v1074 = vpop.permute.xlu0 %1073
      %1075 = vrot.lane.b32.xlu0 %v586, 48
      %v1076 = vpop.permute.xlu0 %1075
      %1077 = vrot.lane.b32.xlu0 %v587, 48
      %v1078 = vpop.permute.xlu0 %1077
      %1079 = vrot.lane.b32.xlu0 %v588, 48
      %v1080 = vpop.permute.xlu0 %1079
      %1081 = vrot.lane.b32.xlu0 %v589, 48
      %v1082 = vpop.permute.xlu0 %1081
      %1083 = vrot.lane.b32.xlu0 %v590, 48
      %v1084 = vpop.permute.xlu0 %1083
      %1085 = vrot.lane.b32.xlu0 %v591, 48
      %v1086 = vpop.permute.xlu0 %1085
      %1087 = vrot.lane.b32.xlu0 %v592, 48
      %v1088 = vpop.permute.xlu0 %1087
      %1089 = vrot.lane.b32.xlu0 %v593, 48
      %v1090 = vpop.permute.xlu0 %1089
      %1091 = vrot.lane.b32.xlu0 %v594, 48
      %v1092 = vpop.permute.xlu0 %1091
      %1093 = vrot.lane.b32.xlu0 %v578, 48
      %v1094 = vpop.permute.xlu0 %1093
      %1095 = vrot.lane.b32.xlu0 %v648, 56
      %v1096 = vpop.permute.xlu0 %1095
      %1097 = vrot.lane.b32.xlu0 %v660, 56
      %v1098 = vpop.permute.xlu0 %1097
      %1099 = vrot.lane.b32.xlu0 %v672, 56
      %v1100 = vpop.permute.xlu0 %1099
      %1101 = vrot.lane.b32.xlu0 %v684, 56
      %v1102 = vpop.permute.xlu0 %1101
      %1103 = vrot.lane.b32.xlu0 %v696, 56
      %v1104 = vpop.permute.xlu0 %1103
      %1105 = vrot.lane.b32.xlu0 %v708, 56
      %v1106 = vpop.permute.xlu0 %1105
      %1107 = vrot.lane.b32.xlu0 %v720, 56
      %v1108 = vpop.permute.xlu0 %1107
      %1109 = vrot.lane.b32.xlu0 %v732, 56
      %v1110 = vpop.permute.xlu0 %1109
      %1111 = vrot.lane.b32.xlu0 %v744, 56
      %v1112 = vpop.permute.xlu0 %1111
      %1113 = vrot.lane.b32.xlu0 %v756, 56
      %v1114 = vpop.permute.xlu0 %1113
      %1115 = vrot.lane.b32.xlu0 %v768, 56
      %v1116 = vpop.permute.xlu0 %1115
      %1117 = vrot.lane.b32.xlu0 %v780, 56
      %v1118 = vpop.permute.xlu0 %1117
      %1119 = vrot.lane.b32.xlu0 %v792, 56
      %v1120 = vpop.permute.xlu0 %1119
      %1121 = vrot.lane.b32.xlu0 %v804, 56
      %v1122 = vpop.permute.xlu0 %1121
      %1123 = vrot.lane.b32.xlu0 %v897, 56
      %v1124 = vpop.permute.xlu0 %1123
      %1125 = vrot.lane.b32.xlu0 %v624, 56
      %v1126 = vpop.permute.xlu0 %1125
      %1127 = vrot.lane.b32.xlu0 %v846, 64
      %v1128 = vpop.permute.xlu0 %1127
      %1129 = vrot.lane.b32.xlu0 %v849, 64
      %v1130 = vpop.permute.xlu0 %1129
      %1131 = vrot.lane.b32.xlu0 %v852, 64
      %v1132 = vpop.permute.xlu0 %1131
      %1133 = vrot.lane.b32.xlu0 %v855, 64
      %v1134 = vpop.permute.xlu0 %1133
      %1135 = vrot.lane.b32.xlu0 %v858, 64
      %v1136 = vpop.permute.xlu0 %1135
      %1137 = vrot.lane.b32.xlu0 %v861, 64
      %v1138 = vpop.permute.xlu0 %1137
      %1139 = vrot.lane.b32.xlu0 %v864, 64
      %v1140 = vpop.permute.xlu0 %1139
      %1141 = vrot.lane.b32.xlu0 %v867, 64
      %v1142 = vpop.permute.xlu0 %1141
      %1143 = vrot.lane.b32.xlu0 %v870, 64
      %v1144 = vpop.permute.xlu0 %1143
      %1145 = vrot.lane.b32.xlu0 %v873, 64
      %v1146 = vpop.permute.xlu0 %1145
      %1147 = vrot.lane.b32.xlu0 %v876, 64
      %v1148 = vpop.permute.xlu0 %1147
      %1149 = vrot.lane.b32.xlu0 %v879, 64
      %v1150 = vpop.permute.xlu0 %1149
      %1151 = vrot.lane.b32.xlu0 %v882, 64
      %v1152 = vpop.permute.xlu0 %1151
      %1153 = vrot.lane.b32.xlu0 %v885, 64
      %v1154 = vpop.permute.xlu0 %1153
      %1155 = vrot.lane.b32.xlu0 %v902, 64
      %v1156 = vpop.permute.xlu0 %1155
      %1157 = vrot.lane.b32.xlu0 %v840, 64
      %v1158 = vpop.permute.xlu0 %1157
      %vm1159 = vcmask 64512
      %v1161 = vsel %vm1159, %v578, %v904
      %v1163 = vsel %vm1159, %v579, %v906
      %v1165 = vsel %vm1159, %v580, %v908
      %v1167 = vsel %vm1159, %v581, %v910
      %v1169 = vsel %vm1159, %v582, %v912
      %v1171 = vsel %vm1159, %v583, %v914
      %v1173 = vsel %vm1159, %v584, %v916
      %v1175 = vsel %vm1159, %v585, %v918
      %v1177 = vsel %vm1159, %v586, %v920
      %v1179 = vsel %vm1159, %v587, %v922
      %v1181 = vsel %vm1159, %v588, %v924
      %v1183 = vsel %vm1159, %v589, %v926
      %v1185 = vsel %vm1159, %v590, %v928
      %v1187 = vsel %vm1159, %v591, %v930
      %v1189 = vsel %vm1159, %v592, %v932
      %v1191 = vsel %vm1159, %v593, %v934
      %vm1192 = vcmask 130048
      %v1194 = vsel %vm1192, %v1161, %v936
      %v1196 = vsel %vm1192, %v1163, %v938
      %v1198 = vsel %vm1192, %v1165, %v940
      %v1200 = vsel %vm1192, %v1167, %v942
      %v1202 = vsel %vm1192, %v1169, %v944
      %v1204 = vsel %vm1192, %v1171, %v946
      %v1206 = vsel %vm1192, %v1173, %v948
      %v1208 = vsel %vm1192, %v1175, %v950
      %v1210 = vsel %vm1192, %v1177, %v952
      %v1212 = vsel %vm1192, %v1179, %v954
      %v1214 = vsel %vm1192, %v1181, %v956
      %v1216 = vsel %vm1192, %v1183, %v958
      %v1218 = vsel %vm1192, %v1185, %v960
      %v1220 = vsel %vm1192, %v1187, %v962
      %v1222 = vsel %vm1192, %v1189, %v964
      %v1224 = vsel %vm1192, %v1191, %v966
      %vm1225 = vcmask 195584
      %v1227 = vsel %vm1225, %v1194, %v968
      %v1229 = vsel %vm1225, %v1196, %v970
      %v1231 = vsel %vm1225, %v1198, %v972
      %v1233 = vsel %vm1225, %v1200, %v974
      %v1235 = vsel %vm1225, %v1202, %v976
      %v1237 = vsel %vm1225, %v1204, %v978
      %v1239 = vsel %vm1225, %v1206, %v980
      %v1241 = vsel %vm1225, %v1208, %v982
      %v1243 = vsel %vm1225, %v1210, %v984
      %v1245 = vsel %vm1225, %v1212, %v986
      %v1247 = vsel %vm1225, %v1214, %v988
      %v1249 = vsel %vm1225, %v1216, %v990
      %v1251 = vsel %vm1225, %v1218, %v992
      %v1253 = vsel %vm1225, %v1220, %v994
      %v1255 = vsel %vm1225, %v1222, %v996
      %v1257 = vsel %vm1225, %v1224, %v998
      %vm1258 = vcmask 261120
      %v1260 = vsel %vm1258, %v1227, %v1000
      %v1262 = vsel %vm1258, %v1229, %v1002
      %v1264 = vsel %vm1258, %v1231, %v1004
      %v1266 = vsel %vm1258, %v1233, %v1006
      %v1268 = vsel %vm1258, %v1235, %v1008
      %v1270 = vsel %vm1258, %v1237, %v1010
      %v1272 = vsel %vm1258, %v1239, %v1012
      %v1274 = vsel %vm1258, %v1241, %v1014
      %v1276 = vsel %vm1258, %v1243, %v1016
      %v1278 = vsel %vm1258, %v1245, %v1018
      %v1280 = vsel %vm1258, %v1247, %v1020
      %v1282 = vsel %vm1258, %v1249, %v1022
      %v1284 = vsel %vm1258, %v1251, %v1024
      %v1286 = vsel %vm1258, %v1253, %v1026
      %v1288 = vsel %vm1258, %v1255, %v1028
      %v1290 = vsel %vm1258, %v1257, %v1030
      %vm1291 = vcmask 326656
      %v1293 = vsel %vm1291, %v1260, %v1032
      %v1295 = vsel %vm1291, %v1262, %v1034
      %v1297 = vsel %vm1291, %v1264, %v1036
      %v1299 = vsel %vm1291, %v1266, %v1038
      %v1301 = vsel %vm1291, %v1268, %v1040
      %v1303 = vsel %vm1291, %v1270, %v1042
      %v1305 = vsel %vm1291, %v1272, %v1044
      %v1307 = vsel %vm1291, %v1274, %v1046
      %v1309 = vsel %vm1291, %v1276, %v1048
      %v1311 = vsel %vm1291, %v1278, %v1050
      %v1313 = vsel %vm1291, %v1280, %v1052
      %v1315 = vsel %vm1291, %v1282, %v1054
      %v1317 = vsel %vm1291, %v1284, %v1056
      %v1319 = vsel %vm1291, %v1286, %v1058
      %v1321 = vsel %vm1291, %v1288, %v1060
      %v1323 = vsel %vm1291, %v1290, %v1062
      %vm1324 = vcmask 392192
      %v1326 = vsel %vm1324, %v1293, %v1064
      %v1328 = vsel %vm1324, %v1295, %v1066
      %v1330 = vsel %vm1324, %v1297, %v1068
      %v1332 = vsel %vm1324, %v1299, %v1070
      %v1334 = vsel %vm1324, %v1301, %v1072
      %v1336 = vsel %vm1324, %v1303, %v1074
      %v1338 = vsel %vm1324, %v1305, %v1076
      %v1340 = vsel %vm1324, %v1307, %v1078
      %v1342 = vsel %vm1324, %v1309, %v1080
      %v1344 = vsel %vm1324, %v1311, %v1082
      %v1346 = vsel %vm1324, %v1313, %v1084
      %v1348 = vsel %vm1324, %v1315, %v1086
      %v1350 = vsel %vm1324, %v1317, %v1088
      %v1352 = vsel %vm1324, %v1319, %v1090
      %v1354 = vsel %vm1324, %v1321, %v1092
      %v1356 = vsel %vm1324, %v1323, %v1094
      %vm1357 = vcmask 457728
      %v1359 = vsel %vm1357, %v1326, %v1096
      %v1361 = vsel %vm1357, %v1328, %v1098
      %v1363 = vsel %vm1357, %v1330, %v1100
      %v1365 = vsel %vm1357, %v1332, %v1102
      %v1367 = vsel %vm1357, %v1334, %v1104
      %v1369 = vsel %vm1357, %v1336, %v1106
      %v1371 = vsel %vm1357, %v1338, %v1108
      %v1373 = vsel %vm1357, %v1340, %v1110
      %v1375 = vsel %vm1357, %v1342, %v1112
      %v1377 = vsel %vm1357, %v1344, %v1114
      %v1379 = vsel %vm1357, %v1346, %v1116
      %v1381 = vsel %vm1357, %v1348, %v1118
      %v1383 = vsel %vm1357, %v1350, %v1120
      %v1385 = vsel %vm1357, %v1352, %v1122
      %v1387 = vsel %vm1357, %v1354, %v1124
      %v1389 = vsel %vm1357, %v1356, %v1126
      %vm1390 = vcmask 523264
      %v1392 = vsel %vm1390, %v1359, %v1128
      %v1394 = vsel %vm1390, %v1361, %v1130
      %v1396 = vsel %vm1390, %v1363, %v1132
      %v1398 = vsel %vm1390, %v1365, %v1134
      %v1400 = vsel %vm1390, %v1367, %v1136
      %v1402 = vsel %vm1390, %v1369, %v1138
      %v1404 = vsel %vm1390, %v1371, %v1140
      %v1406 = vsel %vm1390, %v1373, %v1142
      %v1408 = vsel %vm1390, %v1375, %v1144
      %v1410 = vsel %vm1390, %v1377, %v1146
      %v1412 = vsel %vm1390, %v1379, %v1148
      %v1414 = vsel %vm1390, %v1381, %v1150
      %v1416 = vsel %vm1390, %v1383, %v1152
      %v1418 = vsel %vm1390, %v1385, %v1154
      %v1420 = vsel %vm1390, %v1387, %v1156
      %v1422 = vsel %vm1390, %v1389, %v1158
      %v1423 = vld [vmem:[%s3] sm:$0xf]
      %v1424 = vld [vmem:[%s3 + $0x4] sm:$0xf]
      %v1425 = vld [vmem:[%s3 + $0x8] sm:$0xf]
      %v1426 = vld [vmem:[%s3 + $0xc] sm:$0xf]
      %v1427 = vld [vmem:[%s3 + $0x10] sm:$0xf]
      %v1428 = vld [vmem:[%s3 + $0x14] sm:$0xf]
      %v1429 = vld [vmem:[%s3 + $0x18] sm:$0xf]
      %v1430 = vld [vmem:[%s3 + $0x1c] sm:$0xf]
      %v1431 = vld [vmem:[%s3 + $0x20] sm:$0xf]
      %v1432 = vld [vmem:[%s4] sm:$0x1]
      %v1434 = vlaneseq
      %v1435 = vshrl.u32 %v1434, 7
      %v1436 = vsub.s32 0, %v1435
      %v1437 = vrot.slane %v1432, %v1436
      %v1448 = vunpack.c.l.b16 %v1423
      %v1449 = vunpack.c.l.b16 %v1424
      %v1450 = vunpack.c.l.b16 %v1425
      %v1451 = vunpack.c.l.b16 %v1426
      %v1452 = vunpack.c.l.b16 %v1427
      %v1453 = vunpack.c.l.b16 %v1428
      %v1454 = vunpack.c.l.b16 %v1429
      %v1455 = vunpack.c.l.b16 %v1430
      %v1456 = vunpack.c.l.b16 %v1431
      %v1457 = vpack.c.b16 %v1449, %v1448
      %v1458 = vpack.c.b16 %v1451, %v1450
      %v1459 = vpack.c.b16 %v1453, %v1452
      %v1460 = vpack.c.b16 %v1455, %v1454
      %v1461 = vpack.c.b16 %v1456, %v1456
      %vm1466 = vcmask 588800
      %v1467 = vsel %vm1466, %v1392, 0
      %v1469 = vsel %vm1466, %v1394, 0
      %v1471 = vsel %vm1466, %v1396, 0
      %v1473 = vsel %vm1466, %v1398, 0
      %v1475 = vsel %vm1466, %v1400, 0
      %v1477 = vsel %vm1466, %v1402, 0
      %v1479 = vsel %vm1466, %v1404, 0
      %v1481 = vsel %vm1466, %v1406, 0
      %v1483 = vsel %vm1466, %v1408, 0
      %v1485 = vsel %vm1466, %v1410, 0
      %v1487 = vsel %vm1466, %v1412, 0
      %v1489 = vsel %vm1466, %v1414, 0
      %v1491 = vsel %vm1466, %v1416, 0
      %v1493 = vsel %vm1466, %v1418, 0
      %v1495 = vsel %vm1466, %v1420, 0
      %v1497 = vsel %vm1466, %v1422, 0
      %vm1499 = vcmask 1043456
      %v1501 = vsel %vm1499, %v1461, 0
      %1503 = vmatprep.subr.bf16.mxu0 0
      %1504 = vmatpush1.bf16.msra.mxu0 %v1457
      %1505 = vmatprep.subr.bf16.mxu0 0
      %1506 = vmatpush1.bf16.msra.mxu0 %v1458
      %1507 = vmatprep.subr.bf16.mxu0 0
      %1508 = vmatpush1.bf16.msra.mxu0 %v1459
      %1509 = vmatprep.subr.bf16.mxu0 0
      %1510 = vmatpush1.bf16.msra.mxu0 %v1460
      %1511 = vmatprep.subr.bf16.mxu0 0
      %1512 = vmatpush1.bf16.msra.mxu0 %v1501
      %1513 = vmatprep.subr.bf16.mxu0 0
      %1514 = vmatpush1.bf16.msra.mxu0 0
      %1515 = vmatprep.subr.bf16.mxu0 0
      %1516 = vmatpush1.bf16.msra.mxu0 0
      %1517 = vmatprep.subr.bf16.mxu0 0
      %1518 = vmatpush1.bf16.msra.mxu0 0
      %1519 = vmatprep.subr.bf16.mxu0 0
      %1520 = vmatpush1.bf16.msra.mxu0 0
      %1521 = vmatprep.subr.bf16.mxu0 0
      %1522 = vmatpush1.bf16.msra.mxu0 0
      %1523 = vmatprep.subr.bf16.mxu0 0
      %1524 = vmatpush1.bf16.msra.mxu0 0
      %1525 = vmatprep.subr.bf16.mxu0 0
      %1526 = vmatpush1.bf16.msra.mxu0 0
      %1527 = vmatprep.subr.bf16.mxu0 0
      %1528 = vmatpush1.bf16.msra.mxu0 0
      %1529 = vmatprep.subr.bf16.mxu0 0
      %1530 = vmatpush1.bf16.msra.mxu0 0
      %1531 = vmatprep.subr.bf16.mxu0 0
      %1532 = vmatpush1.bf16.msra.mxu0 0
      %1533 = vmatprep.subr.bf16.mxu0 0
      %1534 = vmatpush1.bf16.msra.mxu0 0
      %1535 = vmatprep.mubr.bf16.mxu0 0
      %1536 = vmatmul.mubr.bf16.gmra.mrb[0].mxu0 %v1467
      %v1537 = vpop.f32.mrb[0].mxu0
      %v1538 = vadd.f32 %v1437, %v1537
      %v1539 = vpop.f32.mrb[0].mxu0
      %v1540 = vpop.f32.mrb[0].mxu0
      %v1541 = vadd.f32 %v1437, %v1540
      %v1542 = vpop.f32.mrb[0].mxu0
      %1543 = vmatprep.mubr.bf16.mxu0 0
      %1544 = vmatmul.mubr.bf16.gmra.mrb[0].mxu0 %v1469
      %v1545 = vpop.f32.mrb[0].mxu0
      %v1546 = vadd.f32 %v1437, %v1545
      %v1547 = vpop.f32.mrb[0].mxu0
      %v1548 = vpop.f32.mrb[0].mxu0
      %v1549 = vadd.f32 %v1437, %v1548
      %v1550 = vpop.f32.mrb[0].mxu0
      %1551 = vmatprep.mubr.bf16.mxu0 0
      %1552 = vmatmul.mubr.bf16.gmra.mrb[0].mxu0 %v1471
      %v1553 = vpop.f32.mrb[0].mxu0
      %v1554 = vadd.f32 %v1437, %v1553
      %v1555 = vpop.f32.mrb[0].mxu0
      %v1556 = vpop.f32.mrb[0].mxu0
      %v1557 = vadd.f32 %v1437, %v1556
      %v1558 = vpop.f32.mrb[0].mxu0
      %1559 = vmatprep.mubr.bf16.mxu0 0
      %1560 = vmatmul.mubr.bf16.gmra.mrb[0].mxu0 %v1473
      %v1561 = vpop.f32.mrb[0].mxu0
      %v1562 = vadd.f32 %v1437, %v1561
      %v1563 = vpop.f32.mrb[0].mxu0
      %v1564 = vpop.f32.mrb[0].mxu0
      %v1565 = vadd.f32 %v1437, %v1564
      %v1566 = vpop.f32.mrb[0].mxu0
      %1567 = vmatprep.mubr.bf16.mxu0 0
      %1568 = vmatmul.mubr.bf16.gmra.mrb[0].mxu0 %v1475
      %v1569 = vpop.f32.mrb[0].mxu0
      %v1570 = vadd.f32 %v1437, %v1569
      %v1571 = vpop.f32.mrb[0].mxu0
      %v1572 = vpop.f32.mrb[0].mxu0
      %v1573 = vadd.f32 %v1437, %v1572
      %v1574 = vpop.f32.mrb[0].mxu0
      %1575 = vmatprep.mubr.bf16.mxu0 0
      %1576 = vmatmul.mubr.bf16.gmra.mrb[0].mxu0 %v1477
      %v1577 = vpop.f32.mrb[0].mxu0
      %v1578 = vadd.f32 %v1437, %v1577
      %v1579 = vpop.f32.mrb[0].mxu0
      %v1580 = vpop.f32.mrb[0].mxu0
      %v1581 = vadd.f32 %v1437, %v1580
      %v1582 = vpop.f32.mrb[0].mxu0
      %1583 = vmatprep.mubr.bf16.mxu0 0
      %1584 = vmatmul.mubr.bf16.gmra.mrb[0].mxu0 %v1479
      %v1585 = vpop.f32.mrb[0].mxu0
      %v1586 = vadd.f32 %v1437, %v1585
      %v1587 = vpop.f32.mrb[0].mxu0
      %v1588 = vpop.f32.mrb[0].mxu0
      %v1589 = vadd.f32 %v1437, %v1588
      %v1590 = vpop.f32.mrb[0].mxu0
      %1591 = vmatprep.mubr.bf16.mxu0 0
      %1592 = vmatmul.mubr.bf16.gmra.mrb[0].mxu0 %v1481
      %v1593 = vpop.f32.mrb[0].mxu0
      %v1594 = vadd.f32 %v1437, %v1593
      %v1595 = vpop.f32.mrb[0].mxu0
      %v1596 = vpop.f32.mrb[0].mxu0
      %v1597 = vadd.f32 %v1437, %v1596
      %v1598 = vpop.f32.mrb[0].mxu0
      %1599 = vmatprep.mubr.bf16.mxu0 0
      %1600 = vmatmul.mubr.bf16.gmra.mrb[0].mxu0 %v1483
      %v1601 = vpop.f32.mrb[0].mxu0
      %v1602 = vadd.f32 %v1437, %v1601
      %v1603 = vpop.f32.mrb[0].mxu0
      %v1604 = vpop.f32.mrb[0].mxu0
      %v1605 = vadd.f32 %v1437, %v1604
      %v1606 = vpop.f32.mrb[0].mxu0
      %1607 = vmatprep.mubr.bf16.mxu0 0
      %1608 = vmatmul.mubr.bf16.gmra.mrb[0].mxu0 %v1485
      %v1609 = vpop.f32.mrb[0].mxu0
      %v1610 = vadd.f32 %v1437, %v1609
      %v1611 = vpop.f32.mrb[0].mxu0
      %v1612 = vpop.f32.mrb[0].mxu0
      %v1613 = vadd.f32 %v1437, %v1612
      %v1614 = vpop.f32.mrb[0].mxu0
      %1615 = vmatprep.mubr.bf16.mxu0 0
      %1616 = vmatmul.mubr.bf16.gmra.mrb[0].mxu0 %v1487
      %v1617 = vpop.f32.mrb[0].mxu0
      %v1618 = vadd.f32 %v1437, %v1617
      %v1619 = vpop.f32.mrb[0].mxu0
      %v1620 = vpop.f32.mrb[0].mxu0
      %v1621 = vadd.f32 %v1437, %v1620
      %v1622 = vpop.f32.mrb[0].mxu0
      %1623 = vmatprep.mubr.bf16.mxu0 0
      %1624 = vmatmul.mubr.bf16.gmra.mrb[0].mxu0 %v1489
      %v1625 = vpop.f32.mrb[0].mxu0
      %v1626 = vadd.f32 %v1437, %v1625
      %v1627 = vpop.f32.mrb[0].mxu0
      %v1628 = vpop.f32.mrb[0].mxu0
      %v1629 = vadd.f32 %v1437, %v1628
      %v1630 = vpop.f32.mrb[0].mxu0
      %1631 = vmatprep.mubr.bf16.mxu0 0
      %1632 = vmatmul.mubr.bf16.gmra.mrb[0].mxu0 %v1491
      %v1633 = vpop.f32.mrb[0].mxu0
      %v1634 = vadd.f32 %v1437, %v1633
      %v1635 = vpop.f32.mrb[0].mxu0
      %v1636 = vpop.f32.mrb[0].mxu0
      %v1637 = vadd.f32 %v1437, %v1636
      %v1638 = vpop.f32.mrb[0].mxu0
      %1639 = vmatprep.mubr.bf16.mxu0 0
      %1640 = vmatmul.mubr.bf16.gmra.mrb[0].mxu0 %v1493
      %v1641 = vpop.f32.mrb[0].mxu0
      %v1642 = vadd.f32 %v1437, %v1641
      %v1643 = vpop.f32.mrb[0].mxu0
      %v1644 = vpop.f32.mrb[0].mxu0
      %v1645 = vadd.f32 %v1437, %v1644
      %v1646 = vpop.f32.mrb[0].mxu0
      %1647 = vmatprep.mubr.bf16.mxu0 0
      %1648 = vmatmul.mubr.bf16.gmra.mrb[0].mxu0 %v1495
      %v1649 = vpop.f32.mrb[0].mxu0
      %v1650 = vadd.f32 %v1437, %v1649
      %v1651 = vpop.f32.mrb[0].mxu0
      %v1652 = vpop.f32.mrb[0].mxu0
      %v1653 = vadd.f32 %v1437, %v1652
      %v1654 = vpop.f32.mrb[0].mxu0
      %1655 = vmatprep.mubr.bf16.mxu0 0
      %1656 = vmatmul.mubr.bf16.gmra.mrb[0].mxu0 %v1497
      %v1657 = vpop.f32.mrb[0].mxu0
      %v1658 = vadd.f32 %v1437, %v1657
      %v1659 = vpop.f32.mrb[0].mxu0
      %v1660 = vpop.f32.mrb[0].mxu0
      %v1661 = vadd.f32 %v1437, %v1660
      %v1662 = vpop.f32.mrb[0].mxu0
      %1663 = vdwg.mxu0
      %1664 = vst.msk [vmem:[%s258] sm:$0xff] %vm1159, %v1538
      %1665 = vst.msk [vmem:[%s258 + $0x8] sm:$0xff] %vm1159, %v1541
      %1666 = vst.msk [vmem:[%s258 + $0x10] sm:$0xff] %vm1159, %v1546
      %1667 = vst.msk [vmem:[%s258 + $0x18] sm:$0xff] %vm1159, %v1549
      %1668 = vst.msk [vmem:[%s258 + $0x20] sm:$0xff] %vm1159, %v1554
      %1669 = vst.msk [vmem:[%s258 + $0x28] sm:$0xff] %vm1159, %v1557
      %1670 = vst.msk [vmem:[%s258 + $0x30] sm:$0xff] %vm1159, %v1562
      %1671 = vst.msk [vmem:[%s258 + $0x38] sm:$0xff] %vm1159, %v1565
      %1672 = vst.msk [vmem:[%s258 + $0x40] sm:$0xff] %vm1159, %v1570
      %1673 = vst.msk [vmem:[%s258 + $0x48] sm:$0xff] %vm1159, %v1573
      %1674 = vst.msk [vmem:[%s258 + $0x50] sm:$0xff] %vm1159, %v1578
      %1675 = vst.msk [vmem:[%s258 + $0x58] sm:$0xff] %vm1159, %v1581
      %1676 = vst.msk [vmem:[%s258 + $0x60] sm:$0xff] %vm1159, %v1586
      %1677 = vst.msk [vmem:[%s258 + $0x68] sm:$0xff] %vm1159, %v1589
      %1678 = vst.msk [vmem:[%s258 + $0x70] sm:$0xff] %vm1159, %v1594
      %1679 = vst.msk [vmem:[%s258 + $0x78] sm:$0xff] %vm1159, %v1597
      %1680 = vst.msk [vmem:[%s258 + $0x80] sm:$0xff] %vm1159, %v1602
      %1681 = vst.msk [vmem:[%s258 + $0x88] sm:$0xff] %vm1159, %v1605
      %1682 = vst.msk [vmem:[%s258 + $0x90] sm:$0xff] %vm1159, %v1610
      %1683 = vst.msk [vmem:[%s258 + $0x98] sm:$0xff] %vm1159, %v1613
      %1684 = vst.msk [vmem:[%s258 + $0xa0] sm:$0xff] %vm1159, %v1618
      %1685 = vst.msk [vmem:[%s258 + $0xa8] sm:$0xff] %vm1159, %v1621
      %1686 = vst.msk [vmem:[%s258 + $0xb0] sm:$0xff] %vm1159, %v1626
      %1687 = vst.msk [vmem:[%s258 + $0xb8] sm:$0xff] %vm1159, %v1629
      %1688 = vst.msk [vmem:[%s258 + $0xc0] sm:$0xff] %vm1159, %v1634
      %1689 = vst.msk [vmem:[%s258 + $0xc8] sm:$0xff] %vm1159, %v1637
      %1690 = vst.msk [vmem:[%s258 + $0xd0] sm:$0xff] %vm1159, %v1642
      %1691 = vst.msk [vmem:[%s258 + $0xd8] sm:$0xff] %vm1159, %v1645
      %1692 = vst.msk [vmem:[%s258 + $0xe0] sm:$0xff] %vm1159, %v1650
      %1693 = vst.msk [vmem:[%s258 + $0xe8] sm:$0xff] %vm1159, %v1653
      %1694 = vst.msk [vmem:[%s258 + $0xf0] sm:$0xff] %vm1159, %v1658
      %1695 = vst.msk [vmem:[%s258 + $0xf8] sm:$0xff] %vm1159, %v1661
      %v1696 = vsel %vm1159, %v1538, 0.0
      %v1697 = vsel %vm1159, %v1541, 0.0
      %v1698 = vadd.f32 %v1696, %v1697
      %v1699 = vsel %vm1159, %v1546, 0.0
      %v1700 = vadd.f32 %v1698, %v1699
      %v1701 = vsel %vm1159, %v1549, 0.0
      %v1702 = vadd.f32 %v1700, %v1701
      %v1703 = vsel %vm1159, %v1554, 0.0
      %v1704 = vadd.f32 %v1702, %v1703
      %v1705 = vsel %vm1159, %v1557, 0.0
      %v1706 = vadd.f32 %v1704, %v1705
      %v1707 = vsel %vm1159, %v1562, 0.0
      %v1708 = vadd.f32 %v1706, %v1707
      %v1709 = vsel %vm1159, %v1565, 0.0
      %v1710 = vadd.f32 %v1708, %v1709
      %v1711 = vsel %vm1159, %v1570, 0.0
      %v1712 = vadd.f32 %v1710, %v1711
      %v1713 = vsel %vm1159, %v1573, 0.0
      %v1714 = vadd.f32 %v1712, %v1713
      %v1715 = vsel %vm1159, %v1578, 0.0
      %v1716 = vadd.f32 %v1714, %v1715
      %v1717 = vsel %vm1159, %v1581, 0.0
      %v1718 = vadd.f32 %v1716, %v1717
      %v1719 = vsel %vm1159, %v1586, 0.0
      %v1720 = vadd.f32 %v1718, %v1719
      %v1721 = vsel %vm1159, %v1589, 0.0
      %v1722 = vadd.f32 %v1720, %v1721
      %v1723 = vsel %vm1159, %v1594, 0.0
      %v1724 = vadd.f32 %v1722, %v1723
      %v1725 = vsel %vm1159, %v1597, 0.0
      %v1726 = vadd.f32 %v1724, %v1725
      %v1727 = vsel %vm1159, %v1602, 0.0
      %v1728 = vadd.f32 %v1726, %v1727
      %v1729 = vsel %vm1159, %v1605, 0.0
      %v1730 = vadd.f32 %v1728, %v1729
      %v1731 = vsel %vm1159, %v1610, 0.0
      %v1732 = vadd.f32 %v1730, %v1731
      %v1733 = vsel %vm1159, %v1613, 0.0
      %v1734 = vadd.f32 %v1732, %v1733
      %v1735 = vsel %vm1159, %v1618, 0.0
      %v1736 = vadd.f32 %v1734, %v1735
      %v1737 = vsel %vm1159, %v1621, 0.0
      %v1738 = vadd.f32 %v1736, %v1737
      %v1739 = vsel %vm1159, %v1626, 0.0
      %v1740 = vadd.f32 %v1738, %v1739
      %v1741 = vsel %vm1159, %v1629, 0.0
      %v1742 = vadd.f32 %v1740, %v1741
      %v1743 = vsel %vm1159, %v1634, 0.0
      %v1744 = vadd.f32 %v1742, %v1743
      %v1745 = vsel %vm1159, %v1637, 0.0
      %v1746 = vadd.f32 %v1744, %v1745
      %v1747 = vsel %vm1159, %v1642, 0.0
      %v1748 = vadd.f32 %v1746, %v1747
      %v1749 = vsel %vm1159, %v1645, 0.0
      %v1750 = vadd.f32 %v1748, %v1749
      %v1751 = vsel %vm1159, %v1650, 0.0
      %v1752 = vadd.f32 %v1750, %v1751
      %v1753 = vsel %vm1159, %v1653, 0.0
      %v1754 = vadd.f32 %v1752, %v1753
      %v1755 = vsel %vm1159, %v1658, 0.0
      %v1756 = vadd.f32 %v1754, %v1755
      %v1757 = vsel %vm1159, %v1661, 0.0
      %v1758 = vadd.f32 %v1756, %v1757
      %v1759 = vrot.slane %v1758, 4
      %v1760 = vadd.f32 %v1758, %v1759
      %v1761 = vrot.slane %v1760, 2
      %v1762 = vadd.f32 %v1760, %v1761
      %v1763 = vrot.slane %v1762, 1
      %v1764 = vadd.f32 %v1762, %v1763
      %v1765 = vmul.f32 %v1538, %v1538
      %v1766 = vmul.f32 %v1541, %v1541
      %v1767 = vmul.f32 %v1546, %v1546
      %v1768 = vmul.f32 %v1549, %v1549
      %v1769 = vmul.f32 %v1554, %v1554
      %v1770 = vmul.f32 %v1557, %v1557
      %v1771 = vmul.f32 %v1562, %v1562
      %v1772 = vmul.f32 %v1565, %v1565
      %v1773 = vmul.f32 %v1570, %v1570
      %v1774 = vmul.f32 %v1573, %v1573
      %v1775 = vmul.f32 %v1578, %v1578
      %v1776 = vmul.f32 %v1581, %v1581
      %v1777 = vmul.f32 %v1586, %v1586
      %v1778 = vmul.f32 %v1589, %v1589
      %v1779 = vmul.f32 %v1594, %v1594
      %v1780 = vmul.f32 %v1597, %v1597
      %v1781 = vmul.f32 %v1602, %v1602
      %v1782 = vmul.f32 %v1605, %v1605
      %v1783 = vmul.f32 %v1610, %v1610
      %v1784 = vmul.f32 %v1613, %v1613
      %v1785 = vmul.f32 %v1618, %v1618
      %v1786 = vmul.f32 %v1621, %v1621
      %v1787 = vmul.f32 %v1626, %v1626
      %v1788 = vmul.f32 %v1629, %v1629
      %v1789 = vmul.f32 %v1634, %v1634
      %v1790 = vmul.f32 %v1637, %v1637
      %v1791 = vmul.f32 %v1642, %v1642
      %v1792 = vmul.f32 %v1645, %v1645
      %v1793 = vmul.f32 %v1650, %v1650
      %v1794 = vmul.f32 %v1653, %v1653
      %v1795 = vmul.f32 %v1658, %v1658
      %v1796 = vmul.f32 %v1661, %v1661
      %v1797 = vsel %vm1159, %v1765, 0.0
      %v1798 = vsel %vm1159, %v1766, 0.0
      %v1799 = vadd.f32 %v1797, %v1798
      %v1800 = vsel %vm1159, %v1767, 0.0
      %v1801 = vadd.f32 %v1799, %v1800
      %v1802 = vsel %vm1159, %v1768, 0.0
      %v1803 = vadd.f32 %v1801, %v1802
      %v1804 = vsel %vm1159, %v1769, 0.0
      %v1805 = vadd.f32 %v1803, %v1804
      %v1806 = vsel %vm1159, %v1770, 0.0
      %v1807 = vadd.f32 %v1805, %v1806
      %v1808 = vsel %vm1159, %v1771, 0.0
      %v1809 = vadd.f32 %v1807, %v1808
      %v1810 = vsel %vm1159, %v1772, 0.0
      %v1811 = vadd.f32 %v1809, %v1810
      %v1812 = vsel %vm1159, %v1773, 0.0
      %v1813 = vadd.f32 %v1811, %v1812
      %v1814 = vsel %vm1159, %v1774, 0.0
      %v1815 = vadd.f32 %v1813, %v1814
      %v1816 = vsel %vm1159, %v1775, 0.0
      %v1817 = vadd.f32 %v1815, %v1816
      %v1818 = vsel %vm1159, %v1776, 0.0
      %v1819 = vadd.f32 %v1817, %v1818
      %v1820 = vsel %vm1159, %v1777, 0.0
      %v1821 = vadd.f32 %v1819, %v1820
      %v1822 = vsel %vm1159, %v1778, 0.0
      %v1823 = vadd.f32 %v1821, %v1822
      %v1824 = vsel %vm1159, %v1779, 0.0
      %v1825 = vadd.f32 %v1823, %v1824
      %v1826 = vsel %vm1159, %v1780, 0.0
      %v1827 = vadd.f32 %v1825, %v1826
      %v1828 = vsel %vm1159, %v1781, 0.0
      %v1829 = vadd.f32 %v1827, %v1828
      %v1830 = vsel %vm1159, %v1782, 0.0
      %v1831 = vadd.f32 %v1829, %v1830
      %v1832 = vsel %vm1159, %v1783, 0.0
      %v1833 = vadd.f32 %v1831, %v1832
      %v1834 = vsel %vm1159, %v1784, 0.0
      %v1835 = vadd.f32 %v1833, %v1834
      %v1836 = vsel %vm1159, %v1785, 0.0
      %v1837 = vadd.f32 %v1835, %v1836
      %v1838 = vsel %vm1159, %v1786, 0.0
      %v1839 = vadd.f32 %v1837, %v1838
      %v1840 = vsel %vm1159, %v1787, 0.0
      %v1841 = vadd.f32 %v1839, %v1840
      %v1842 = vsel %vm1159, %v1788, 0.0
      %v1843 = vadd.f32 %v1841, %v1842
      %v1844 = vsel %vm1159, %v1789, 0.0
      %v1845 = vadd.f32 %v1843, %v1844
      %v1846 = vsel %vm1159, %v1790, 0.0
      %v1847 = vadd.f32 %v1845, %v1846
      %v1848 = vsel %vm1159, %v1791, 0.0
      %v1849 = vadd.f32 %v1847, %v1848
      %v1850 = vsel %vm1159, %v1792, 0.0
      %v1851 = vadd.f32 %v1849, %v1850
      %v1852 = vsel %vm1159, %v1793, 0.0
      %v1853 = vadd.f32 %v1851, %v1852
      %v1854 = vsel %vm1159, %v1794, 0.0
      %v1855 = vadd.f32 %v1853, %v1854
      %v1856 = vsel %vm1159, %v1795, 0.0
      %v1857 = vadd.f32 %v1855, %v1856
      %v1858 = vsel %vm1159, %v1796, 0.0
      %v1859 = vadd.f32 %v1857, %v1858
      %v1860 = vrot.slane %v1859, 4
      %v1861 = vadd.f32 %v1859, %v1860
      %v1862 = vrot.slane %v1861, 2
      %v1863 = vadd.f32 %v1861, %v1862
      %v1864 = vrot.slane %v1863, 1
      %v1865 = vadd.f32 %v1863, %v1864
      %vm1866 = vcmask 1040384
      %v1867 = vsel %vm1866, %v1764, %v1865
      %vm1868 = vcmask 58368
      %1869 = vst.msk [vmem:[%s262] sm:$0x3] %vm1868, %v1867
      %p1870 = scmp.lt.s32.totalorder %s18, 1
      %s1871 = scalar_select %p1870, %s18, 1
      %s1872 = smul.addr %s1871, 32
      %s1873 = smul.addr %s1872, 8
      %s1874 = scalar_lea.vmem %s5, %s1873
      %p1875 = scmp.lt.s32.totalorder %s18, 1
      %s1876 = scalar_select %p1875, %s18, 1
      %s1877 = smul.addr %s1876, 2
      %s1878 = scalar_lea.vmem %s6, %s1877
      // Predicated region
      $region41: #{inception_forward.9} parent=39 // pred_check
        %p1879 = pneg %p146
      $region42: #{inception_forward.9} parent=39 // pred_check_branch
        %1881 = sbr.rel (%p1879) target = $region44
      $region43: #{inception_forward.9} parent=39 // pred_region
        _
      $region44: #{inception_forward.9} parent=39 // pred_fallthru
        _
      // Predicated region
      $region45: #{inception_forward.9} parent=39 // pred_check
        %p1882 = pneg %p172
      $region46: #{inception_forward.9} parent=39 // pred_check_branch
        %1884 = sbr.rel (%p1882) target = $region48
      $region47: #{inception_forward.9} parent=39 // pred_region
        _
      $region48: #{inception_forward.9} parent=39 // pred_fallthru
        _
    $region40: #{inception_forward.9} parent=5 // pred_fallthru
      _
    %p1885 = scmp.le.s32.totalorder 2, %s13
    // Predicated region
    $region49: #{inception_forward.9} parent=5 // pred_check
      %p1886 = pneg %p1885
    $region50: #{inception_forward.9} parent=5 // pred_check_branch
      %1888 = sbr.rel (%p1886) target = $region52
    $region51: #{inception_forward.9} parent=5 // pred_region
      %s1889 = ssub.s32 %s13, 2
      // Predicated region
      $region53: #{inception_forward.9} parent=51 // pred_check
        %p1890 = pneg %p152
      $region54: #{inception_forward.9} parent=51 // pred_check_branch
        %1892 = sbr.rel (%p1890) target = $region56
      $region55: #{inception_forward.9} parent=51 // pred_region
        %p1893 = scmp.lt.s32.totalorder %s19, 1
        %s1894 = scalar_select %p1893, %s19, 1
        %s1895 = smul.addr %s1894, 32
        %s1896 = smul.addr %s1895, 8
        %s1897 = scalar_lea.vmem %s5, %s1896
      $region56: #{inception_forward.9} parent=51 // pred_fallthru
        _
      // Predicated region
      $region57: #{inception_forward.9} parent=51 // pred_check
        %p1898 = pneg %p178
      $region58: #{inception_forward.9} parent=51 // pred_check_branch
        %1900 = sbr.rel (%p1898) target = $region60
      $region59: #{inception_forward.9} parent=51 // pred_region
        %p1901 = scmp.lt.s32.totalorder %s19, 1
        %s1902 = scalar_select %p1901, %s19, 1
        %s1903 = smul.addr %s1902, 2
        %s1904 = scalar_lea.vmem %s6, %s1903
      $region60: #{inception_forward.9} parent=51 // pred_fallthru
        _
    $region52: #{inception_forward.9} parent=5 // pred_fallthru
      _
  $region6: #{inception_forward.9} parent=0 // loop_footer
    %s17 = sadd.s32 1, %s13
  $region7: #{inception_forward.9} parent=0 // loop_footer_branch
    %12 = sbr.rel target = $region3
  $region8: #{inception_forward.9} parent=0 // loop_exit
    _

// kernel: inception_forward.11
$region0: #{inception_forward.11}
  #allocation0 [shape = 'u32[]', space=smem, size = 0x4, offset = 0x4, fixed_abs, tag = 'smem constant byte address 0x4 - core index']
  #allocation1 [shape = 'u32[144,128]{1,0:T(1,128)}', space=vmem, size = 0x12000, scoped, tag = 'internal scratch']
  %s0 = inlined_call_operand.vmem [shape: f32[512,8], index: 0, kind: input, shape index: {}]
  %s1 = inlined_call_operand.vmem [shape: f32[512,8], index: 1, kind: input, shape index: {}]
  %s2 = inlined_call_operand.vmem [shape: f32[512,8], index: 2, kind: input, shape index: {}]
  %s3 = inlined_call_operand.vmem [shape: f32[512,8], index: 3, kind: input, shape index: {}]
  %s4 = inlined_call_operand.vmem [shape: f32[1,8], index: 4, kind: input, shape index: {}]
  %s5 = inlined_call_operand.vmem [shape: f32[1,8], index: 5, kind: input, shape index: {}]
  %s6 = inlined_call_operand.vmem [shape: f32[1,8], index: 6, kind: input, shape index: {}]
  %s7 = inlined_call_operand.vmem [shape: f32[1,8], index: 7, kind: input, shape index: {}]
  %s8 = inlined_call_operand.vmem [shape: f32[1,8], index: 8, kind: input, shape index: {}]
  %s9 = inlined_call_operand.vmem [shape: f32[1,8], index: 9, kind: input, shape index: {}]
  %s10 = inlined_call_operand.vmem [shape: f32[1,8], index: 10, kind: input, shape index: {}]
  %s11 = inlined_call_operand.vmem [shape: f32[1,8], index: 11, kind: input, shape index: {}]
  %s12 = inlined_call_operand.hbm [shape: f32[512,32], index: 12, kind: output, shape index: {}]
  %s13 = sld [smem:[#allocation0]]
  $region58: #{inception_forward.11} parent=0
    _
  %s15 = ssub.s32 1, %s13
  %s16 = scalar_select 0, %s15, %s13
  $region1: #{inception_forward.11} parent=0
    #allocation2 [shape = 'u8[262144]{0}', space=vmem, size = 0x40000, scoped, tag = 'output window, operand 0, single buffered']
    #allocation3 [shape = 's32[1]{0}', space=sflag, size = 0x4, scoped, tag = 'scoped memory for inception_forward.11']
    %17 = vsyncpa [#allocation3], 0
    // Predicated region
    $region2: #{inception_forward.11} parent=1 // pred_check
      _
    $region3: #{inception_forward.11} parent=1 // pred_check_branch
      %19 = sbr.rel (0) target = $region5
    $region4: #{inception_forward.11} parent=1 // pred_region
      _
    $region5: #{inception_forward.11} parent=1 // pred_fallthru
      _
    // Predicated region
    $region6: #{inception_forward.11} parent=1 // pred_check
      _
    $region7: #{inception_forward.11} parent=1 // pred_check_branch
      %21 = sbr.rel (0) target = $region9
    $region8: #{inception_forward.11} parent=1 // pred_region
      _
    $region9: #{inception_forward.11} parent=1 // pred_fallthru
      _
    // Predicated region
    $region10: #{inception_forward.11} parent=1 // pred_check
      _
    $region11: #{inception_forward.11} parent=1 // pred_check_branch
      %23 = sbr.rel (0) target = $region13
    $region12: #{inception_forward.11} parent=1 // pred_region
      _
    $region13: #{inception_forward.11} parent=1 // pred_fallthru
      _
    // Predicated region
    $region14: #{inception_forward.11} parent=1 // pred_check
      _
    $region15: #{inception_forward.11} parent=1 // pred_check_branch
      %25 = sbr.rel (0) target = $region17
    $region16: #{inception_forward.11} parent=1 // pred_region
      _
    $region17: #{inception_forward.11} parent=1 // pred_fallthru
      _
    // Predicated region
    $region18: #{inception_forward.11} parent=1 // pred_check
      _
    $region19: #{inception_forward.11} parent=1 // pred_check_branch
      %27 = sbr.rel (0) target = $region21
    $region20: #{inception_forward.11} parent=1 // pred_region
      _
    $region21: #{inception_forward.11} parent=1 // pred_fallthru
      _
    // Predicated region
    $region22: #{inception_forward.11} parent=1 // pred_check
      _
    $region23: #{inception_forward.11} parent=1 // pred_check_branch
      %29 = sbr.rel (0) target = $region25
    $region24: #{inception_forward.11} parent=1 // pred_region
      _
    $region25: #{inception_forward.11} parent=1 // pred_fallthru
      _
    // Predicated region
    $region26: #{inception_forward.11} parent=1 // pred_check
      _
    $region27: #{inception_forward.11} parent=1 // pred_check_branch
      %31 = sbr.rel (0) target = $region29
    $region28: #{inception_forward.11} parent=1 // pred_region
      _
    $region29: #{inception_forward.11} parent=1 // pred_fallthru
      _
    // Predicated region
    $region30: #{inception_forward.11} parent=1 // pred_check
      _
    $region31: #{inception_forward.11} parent=1 // pred_check_branch
      %33 = sbr.rel (0) target = $region33
    $region32: #{inception_forward.11} parent=1 // pred_region
      _
    $region33: #{inception_forward.11} parent=1 // pred_fallthru
      _
    // Predicated region
    $region34: #{inception_forward.11} parent=1 // pred_check
      _
    $region35: #{inception_forward.11} parent=1 // pred_check_branch
      %35 = sbr.rel (0) target = $region37
    $region36: #{inception_forward.11} parent=1 // pred_region
      _
    $region37: #{inception_forward.11} parent=1 // pred_fallthru
      _
    // Predicated region
    $region38: #{inception_forward.11} parent=1 // pred_check
      _
    $region39: #{inception_forward.11} parent=1 // pred_check_branch
      %37 = sbr.rel (0) target = $region41
    $region40: #{inception_forward.11} parent=1 // pred_region
      _
    $region41: #{inception_forward.11} parent=1 // pred_fallthru
      _
    // Predicated region
    $region42: #{inception_forward.11} parent=1 // pred_check
      _
    $region43: #{inception_forward.11} parent=1 // pred_check_branch
      %39 = sbr.rel (0) target = $region45
    $region44: #{inception_forward.11} parent=1 // pred_region
      _
    $region45: #{inception_forward.11} parent=1 // pred_fallthru
      _
    // Predicated region
    $region46: #{inception_forward.11} parent=1 // pred_check
      _
    $region47: #{inception_forward.11} parent=1 // pred_check_branch
      %41 = sbr.rel (0) target = $region49
    $region48: #{inception_forward.11} parent=1 // pred_region
      _
    $region49: #{inception_forward.11} parent=1 // pred_fallthru
      _
    %v42 = vld [vmem:[%s0] sm:$0xff]
    %v43 = vld [vmem:[%s0 + $0x8] sm:$0xff]
    %v44 = vld [vmem:[%s0 + $0x10] sm:$0xff]
    %v45 = vld [vmem:[%s0 + $0x18] sm:$0xff]
    %v46 = vld [vmem:[%s0 + $0x20] sm:$0xff]
    %v47 = vld [vmem:[%s0 + $0x28] sm:$0xff]
    %v48 = vld [vmem:[%s0 + $0x30] sm:$0xff]
    %v49 = vld [vmem:[%s0 + $0x38] sm:$0xff]
    %v50 = vld [vmem:[%s0 + $0x40] sm:$0xff]
    %v51 = vld [vmem:[%s0 + $0x48] sm:$0xff]
    %v52 = vld [vmem:[%s0 + $0x50] sm:$0xff]
    %v53 = vld [vmem:[%s0 + $0x58] sm:$0xff]
    %v54 = vld [vmem:[%s0 + $0x60] sm:$0xff]
    %v55 = vld [vmem:[%s0 + $0x68] sm:$0xff]
    %v56 = vld [vmem:[%s0 + $0x70] sm:$0xff]
    %v57 = vld [vmem:[%s0 + $0x78] sm:$0xff]
    %v58 = vld [vmem:[%s0 + $0x80] sm:$0xff]
    %v59 = vld [vmem:[%s0 + $0x88] sm:$0xff]
    %v60 = vld [vmem:[%s0 + $0x90] sm:$0xff]
    %v61 = vld [vmem:[%s0 + $0x98] sm:$0xff]
    %v62 = vld [vmem:[%s0 + $0xa0] sm:$0xff]
    %v63 = vld [vmem:[%s0 + $0xa8] sm:$0xff]
    %v64 = vld [vmem:[%s0 + $0xb0] sm:$0xff]
    %v65 = vld [vmem:[%s0 + $0xb8] sm:$0xff]
    %v66 = vld [vmem:[%s0 + $0xc0] sm:$0xff]
    %v67 = vld [vmem:[%s0 + $0xc8] sm:$0xff]
    %v68 = vld [vmem:[%s0 + $0xd0] sm:$0xff]
    %v69 = vld [vmem:[%s0 + $0xd8] sm:$0xff]
    %v70 = vld [vmem:[%s0 + $0xe0] sm:$0xff]
    %v71 = vld [vmem:[%s0 + $0xe8] sm:$0xff]
    %v72 = vld [vmem:[%s0 + $0xf0] sm:$0xff]
    %v73 = vld [vmem:[%s0 + $0xf8] sm:$0xff]
    %v74 = vld [vmem:[%s0 + $0x100] sm:$0xff]
    %v75 = vld [vmem:[%s0 + $0x108] sm:$0xff]
    %v76 = vld [vmem:[%s0 + $0x110] sm:$0xff]
    %v77 = vld [vmem:[%s0 + $0x118] sm:$0xff]
    %v78 = vld [vmem:[%s0 + $0x120] sm:$0xff]
    %v79 = vld [vmem:[%s0 + $0x128] sm:$0xff]
    %v80 = vld [vmem:[%s0 + $0x130] sm:$0xff]
    %v81 = vld [vmem:[%s0 + $0x138] sm:$0xff]
    %v82 = vld [vmem:[%s0 + $0x140] sm:$0xff]
    %v83 = vld [vmem:[%s0 + $0x148] sm:$0xff]
    %v84 = vld [vmem:[%s0 + $0x150] sm:$0xff]
    %v85 = vld [vmem:[%s0 + $0x158] sm:$0xff]
    %v86 = vld [vmem:[%s0 + $0x160] sm:$0xff]
    %v87 = vld [vmem:[%s0 + $0x168] sm:$0xff]
    %v88 = vld [vmem:[%s0 + $0x170] sm:$0xff]
    %v89 = vld [vmem:[%s0 + $0x178] sm:$0xff]
    %v90 = vld [vmem:[%s0 + $0x180] sm:$0xff]
    %v91 = vld [vmem:[%s0 + $0x188] sm:$0xff]
    %v92 = vld [vmem:[%s0 + $0x190] sm:$0xff]
    %v93 = vld [vmem:[%s0 + $0x198] sm:$0xff]
    %v94 = vld [vmem:[%s0 + $0x1a0] sm:$0xff]
    %v95 = vld [vmem:[%s0 + $0x1a8] sm:$0xff]
    %v96 = vld [vmem:[%s0 + $0x1b0] sm:$0xff]
    %v97 = vld [vmem:[%s0 + $0x1b8] sm:$0xff]
    %v98 = vld [vmem:[%s0 + $0x1c0] sm:$0xff]
    %v99 = vld [vmem:[%s0 + $0x1c8] sm:$0xff]
    %v100 = vld [vmem:[%s0 + $0x1d0] sm:$0xff]
    %v101 = vld [vmem:[%s0 + $0x1d8] sm:$0xff]
    %v102 = vld [vmem:[%s0 + $0x1e0] sm:$0xff]
    %v103 = vld [vmem:[%s0 + $0x1e8] sm:$0xff]
    %v104 = vld [vmem:[%s0 + $0x1f0] sm:$0xff]
    %v105 = vld [vmem:[%s0 + $0x1f8] sm:$0xff]
    %v106 = vld [vmem:[%s4] sm:$0x1]
    %v108 = vlaneseq
    %v109 = vshrl.u32 %v108, 7
    %v110 = vsub.s32 0, %v109
    %v111 = vrot.slane %v106, %v110
    %v113 = vmul.f32 %v42, %v111
    %v114 = vmul.f32 %v43, %v111
    %v115 = vmul.f32 %v44, %v111
    %v116 = vmul.f32 %v45, %v111
    %v117 = vmul.f32 %v46, %v111
    %v118 = vmul.f32 %v47, %v111
    %v119 = vmul.f32 %v48, %v111
    %v120 = vmul.f32 %v49, %v111
    %v121 = vmul.f32 %v50, %v111
    %v122 = vmul.f32 %v51, %v111
    %v123 = vmul.f32 %v52, %v111
    %v124 = vmul.f32 %v53, %v111
    %v125 = vmul.f32 %v54, %v111
    %v126 = vmul.f32 %v55, %v111
    %v127 = vmul.f32 %v56, %v111
    %v128 = vmul.f32 %v57, %v111
    %v129 = vmul.f32 %v58, %v111
    %v130 = vmul.f32 %v59, %v111
    %v131 = vmul.f32 %v60, %v111
    %v132 = vmul.f32 %v61, %v111
    %v133 = vmul.f32 %v62, %v111
    %v134 = vmul.f32 %v63, %v111
    %v135 = vmul.f32 %v64, %v111
    %v136 = vmul.f32 %v65, %v111
    %v137 = vmul.f32 %v66, %v111
    %v138 = vmul.f32 %v67, %v111
    %v139 = vmul.f32 %v68, %v111
    %v140 = vmul.f32 %v69, %v111
    %v141 = vmul.f32 %v70, %v111
    %v142 = vmul.f32 %v71, %v111
    %v143 = vmul.f32 %v72, %v111
    %v144 = vmul.f32 %v73, %v111
    %v145 = vmul.f32 %v74, %v111
    %v146 = vmul.f32 %v75, %v111
    %v147 = vmul.f32 %v76, %v111
    %v148 = vmul.f32 %v77, %v111
    %v149 = vmul.f32 %v78, %v111
    %v150 = vmul.f32 %v79, %v111
    %v151 = vmul.f32 %v80, %v111
    %v152 = vmul.f32 %v81, %v111
    %v153 = vmul.f32 %v82, %v111
    %v154 = vmul.f32 %v83, %v111
    %v155 = vmul.f32 %v84, %v111
    %v156 = vmul.f32 %v85, %v111
    %v157 = vmul.f32 %v86, %v111
    %v158 = vmul.f32 %v87, %v111
    %v159 = vmul.f32 %v88, %v111
    %v160 = vmul.f32 %v89, %v111
    %v161 = vmul.f32 %v90, %v111
    %v162 = vmul.f32 %v91, %v111
    %v163 = vmul.f32 %v92, %v111
    %v164 = vmul.f32 %v93, %v111
    %v165 = vmul.f32 %v94, %v111
    %v166 = vmul.f32 %v95, %v111
    %v167 = vmul.f32 %v96, %v111
    %v168 = vmul.f32 %v97, %v111
    %v169 = vmul.f32 %v98, %v111
    %v170 = vmul.f32 %v99, %v111
    %v171 = vmul.f32 %v100, %v111
    %v172 = vmul.f32 %v101, %v111
    %v173 = vmul.f32 %v102, %v111
    %v174 = vmul.f32 %v103, %v111
    %v175 = vmul.f32 %v104, %v111
    %v176 = vmul.f32 %v105, %v111
    %v177 = vld [vmem:[%s8] sm:$0x1]
    %v179 = vlaneseq
    %v180 = vshrl.u32 %v179, 7
    %v181 = vsub.s32 0, %v180
    %v182 = vrot.slane %v177, %v181
    %v184 = vadd.f32 %v113, %v182
    %v185 = vadd.f32 %v114, %v182
    %v186 = vadd.f32 %v115, %v182
    %v187 = vadd.f32 %v116, %v182
    %v188 = vadd.f32 %v117, %v182
    %v189 = vadd.f32 %v118, %v182
    %v190 = vadd.f32 %v119, %v182
    %v191 = vadd.f32 %v120, %v182
    %v192 = vadd.f32 %v121, %v182
    %v193 = vadd.f32 %v122, %v182
    %v194 = vadd.f32 %v123, %v182
    %v195 = vadd.f32 %v124, %v182
    %v196 = vadd.f32 %v125, %v182
    %v197 = vadd.f32 %v126, %v182
    %v198 = vadd.f32 %v127, %v182
    %v199 = vadd.f32 %v128, %v182
    %v200 = vadd.f32 %v129, %v182
    %v201 = vadd.f32 %v130, %v182
    %v202 = vadd.f32 %v131, %v182
    %v203 = vadd.f32 %v132, %v182
    %v204 = vadd.f32 %v133, %v182
    %v205 = vadd.f32 %v134, %v182
    %v206 = vadd.f32 %v135, %v182
    %v207 = vadd.f32 %v136, %v182
    %v208 = vadd.f32 %v137, %v182
    %v209 = vadd.f32 %v138, %v182
    %v210 = vadd.f32 %v139, %v182
    %v211 = vadd.f32 %v140, %v182
    %v212 = vadd.f32 %v141, %v182
    %v213 = vadd.f32 %v142, %v182
    %v214 = vadd.f32 %v143, %v182
    %v215 = vadd.f32 %v144, %v182
    %v216 = vadd.f32 %v145, %v182
    %v217 = vadd.f32 %v146, %v182
    %v218 = vadd.f32 %v147, %v182
    %v219 = vadd.f32 %v148, %v182
    %v220 = vadd.f32 %v149, %v182
    %v221 = vadd.f32 %v150, %v182
    %v222 = vadd.f32 %v151, %v182
    %v223 = vadd.f32 %v152, %v182
    %v224 = vadd.f32 %v153, %v182
    %v225 = vadd.f32 %v154, %v182
    %v226 = vadd.f32 %v155, %v182
    %v227 = vadd.f32 %v156, %v182
    %v228 = vadd.f32 %v157, %v182
    %v229 = vadd.f32 %v158, %v182
    %v230 = vadd.f32 %v159, %v182
    %v231 = vadd.f32 %v160, %v182
    %v232 = vadd.f32 %v161, %v182
    %v233 = vadd.f32 %v162, %v182
    %v234 = vadd.f32 %v163, %v182
    %v235 = vadd.f32 %v164, %v182
    %v236 = vadd.f32 %v165, %v182
    %v237 = vadd.f32 %v166, %v182
    %v238 = vadd.f32 %v167, %v182
    %v239 = vadd.f32 %v168, %v182
    %v240 = vadd.f32 %v169, %v182
    %v241 = vadd.f32 %v170, %v182
    %v242 = vadd.f32 %v171, %v182
    %v243 = vadd.f32 %v172, %v182
    %v244 = vadd.f32 %v173, %v182
    %v245 = vadd.f32 %v174, %v182
    %v246 = vadd.f32 %v175, %v182
    %v247 = vadd.f32 %v176, %v182
    %v248 = vmax.f32 %v184, 0.0
    %v249 = vmax.f32 %v185, 0.0
    %v250 = vmax.f32 %v186, 0.0
    %v251 = vmax.f32 %v187, 0.0
    %v252 = vmax.f32 %v188, 0.0
    %v253 = vmax.f32 %v189, 0.0
    %v254 = vmax.f32 %v190, 0.0
    %v255 = vmax.f32 %v191, 0.0
    %v256 = vmax.f32 %v192, 0.0
    %v257 = vmax.f32 %v193, 0.0
    %v258 = vmax.f32 %v194, 0.0
    %v259 = vmax.f32 %v195, 0.0
    %v260 = vmax.f32 %v196, 0.0
    %v261 = vmax.f32 %v197, 0.0
    %v262 = vmax.f32 %v198, 0.0
    %v263 = vmax.f32 %v199, 0.0
    %v264 = vmax.f32 %v200, 0.0
    %v265 = vmax.f32 %v201, 0.0
    %v266 = vmax.f32 %v202, 0.0
    %v267 = vmax.f32 %v203, 0.0
    %v268 = vmax.f32 %v204, 0.0
    %v269 = vmax.f32 %v205, 0.0
    %v270 = vmax.f32 %v206, 0.0
    %v271 = vmax.f32 %v207, 0.0
    %v272 = vmax.f32 %v208, 0.0
    %v273 = vmax.f32 %v209, 0.0
    %v274 = vmax.f32 %v210, 0.0
    %v275 = vmax.f32 %v211, 0.0
    %v276 = vmax.f32 %v212, 0.0
    %v277 = vmax.f32 %v213, 0.0
    %v278 = vmax.f32 %v214, 0.0
    %v279 = vmax.f32 %v215, 0.0
    %v280 = vmax.f32 %v216, 0.0
    %v281 = vmax.f32 %v217, 0.0
    %v282 = vmax.f32 %v218, 0.0
    %v283 = vmax.f32 %v219, 0.0
    %v284 = vmax.f32 %v220, 0.0
    %v285 = vmax.f32 %v221, 0.0
    %v286 = vmax.f32 %v222, 0.0
    %v287 = vmax.f32 %v223, 0.0
    %v288 = vmax.f32 %v224, 0.0
    %v289 = vmax.f32 %v225, 0.0
    %v290 = vmax.f32 %v226, 0.0
    %v291 = vmax.f32 %v227, 0.0
    %v292 = vmax.f32 %v228, 0.0
    %v293 = vmax.f32 %v229, 0.0
    %v294 = vmax.f32 %v230, 0.0
    %v295 = vmax.f32 %v231, 0.0
    %v296 = vmax.f32 %v232, 0.0
    %v297 = vmax.f32 %v233, 0.0
    %v298 = vmax.f32 %v234, 0.0
    %v299 = vmax.f32 %v235, 0.0
    %v300 = vmax.f32 %v236, 0.0
    %v301 = vmax.f32 %v237, 0.0
    %v302 = vmax.f32 %v238, 0.0
    %v303 = vmax.f32 %v239, 0.0
    %v304 = vmax.f32 %v240, 0.0
    %v305 = vmax.f32 %v241, 0.0
    %v306 = vmax.f32 %v242, 0.0
    %v307 = vmax.f32 %v243, 0.0
    %v308 = vmax.f32 %v244, 0.0
    %v309 = vmax.f32 %v245, 0.0
    %v310 = vmax.f32 %v246, 0.0
    %v311 = vmax.f32 %v247, 0.0
    %vm312 = vcmask 64512
    %313 = vst.msk [vmem:[#allocation2] sm:$0xff] %vm312, %v248
    %314 = vst.msk [vmem:[#allocation2 + $0x8] sm:$0xff] %vm312, %v249
    %315 = vst.msk [vmem:[#allocation2 + $0x10] sm:$0xff] %vm312, %v250
    %316 = vst.msk [vmem:[#allocation2 + $0x18] sm:$0xff] %vm312, %v251
    %317 = vst.msk [vmem:[#allocation2 + $0x20] sm:$0xff] %vm312, %v252
    %318 = vst.msk [vmem:[#allocation2 + $0x28] sm:$0xff] %vm312, %v253
    %319 = vst.msk [vmem:[#allocation2 + $0x30] sm:$0xff] %vm312, %v254
    %320 = vst.msk [vmem:[#allocation2 + $0x38] sm:$0xff] %vm312, %v255
    %321 = vst.msk [vmem:[#allocation2 + $0x40] sm:$0xff] %vm312, %v256
    %322 = vst.msk [vmem:[#allocation2 + $0x48] sm:$0xff] %vm312, %v257
    %323 = vst.msk [vmem:[#allocation2 + $0x50] sm:$0xff] %vm312, %v258
    %324 = vst.msk [vmem:[#allocation2 + $0x58] sm:$0xff] %vm312, %v259
    %325 = vst.msk [vmem:[#allocation2 + $0x60] sm:$0xff] %vm312, %v260
    %326 = vst.msk [vmem:[#allocation2 + $0x68] sm:$0xff] %vm312, %v261
    %327 = vst.msk [vmem:[#allocation2 + $0x70] sm:$0xff] %vm312, %v262
    %328 = vst.msk [vmem:[#allocation2 + $0x78] sm:$0xff] %vm312, %v263
    %329 = vst.msk [vmem:[#allocation2 + $0x80] sm:$0xff] %vm312, %v264
    %330 = vst.msk [vmem:[#allocation2 + $0x88] sm:$0xff] %vm312, %v265
    %331 = vst.msk [vmem:[#allocation2 + $0x90] sm:$0xff] %vm312, %v266
    %332 = vst.msk [vmem:[#allocation2 + $0x98] sm:$0xff] %vm312, %v267
    %333 = vst.msk [vmem:[#allocation2 + $0xa0] sm:$0xff] %vm312, %v268
    %334 = vst.msk [vmem:[#allocation2 + $0xa8] sm:$0xff] %vm312, %v269
    %335 = vst.msk [vmem:[#allocation2 + $0xb0] sm:$0xff] %vm312, %v270
    %336 = vst.msk [vmem:[#allocation2 + $0xb8] sm:$0xff] %vm312, %v271
    %337 = vst.msk [vmem:[#allocation2 + $0xc0] sm:$0xff] %vm312, %v272
    %338 = vst.msk [vmem:[#allocation2 + $0xc8] sm:$0xff] %vm312, %v273
    %339 = vst.msk [vmem:[#allocation2 + $0xd0] sm:$0xff] %vm312, %v274
    %340 = vst.msk [vmem:[#allocation2 + $0xd8] sm:$0xff] %vm312, %v275
    %341 = vst.msk [vmem:[#allocation2 + $0xe0] sm:$0xff] %vm312, %v276
    %342 = vst.msk [vmem:[#allocation2 + $0xe8] sm:$0xff] %vm312, %v277
    %343 = vst.msk [vmem:[#allocation2 + $0xf0] sm:$0xff] %vm312, %v278
    %344 = vst.msk [vmem:[#allocation2 + $0xf8] sm:$0xff] %vm312, %v279
    %345 = vst.msk [vmem:[#allocation2 + $0x100] sm:$0xff] %vm312, %v280
    %346 = vst.msk [vmem:[#allocation2 + $0x108] sm:$0xff] %vm312, %v281
    %347 = vst.msk [vmem:[#allocation2 + $0x110] sm:$0xff] %vm312, %v282
    %348 = vst.msk [vmem:[#allocation2 + $0x118] sm:$0xff] %vm312, %v283
    %349 = vst.msk [vmem:[#allocation2 + $0x120] sm:$0xff] %vm312, %v284
    %350 = vst.msk [vmem:[#allocation2 + $0x128] sm:$0xff] %vm312, %v285
    %351 = vst.msk [vmem:[#allocation2 + $0x130] sm:$0xff] %vm312, %v286
    %352 = vst.msk [vmem:[#allocation2 + $0x138] sm:$0xff] %vm312, %v287
    %353 = vst.msk [vmem:[#allocation2 + $0x140] sm:$0xff] %vm312, %v288
    %354 = vst.msk [vmem:[#allocation2 + $0x148] sm:$0xff] %vm312, %v289
    %355 = vst.msk [vmem:[#allocation2 + $0x150] sm:$0xff] %vm312, %v290
    %356 = vst.msk [vmem:[#allocation2 + $0x158] sm:$0xff] %vm312, %v291
    %357 = vst.msk [vmem:[#allocation2 + $0x160] sm:$0xff] %vm312, %v292
    %358 = vst.msk [vmem:[#allocation2 + $0x168] sm:$0xff] %vm312, %v293
    %359 = vst.msk [vmem:[#allocation2 + $0x170] sm:$0xff] %vm312, %v294
    %360 = vst.msk [vmem:[#allocation2 + $0x178] sm:$0xff] %vm312, %v295
    %361 = vst.msk [vmem:[#allocation2 + $0x180] sm:$0xff] %vm312, %v296
    %362 = vst.msk [vmem:[#allocation2 + $0x188] sm:$0xff] %vm312, %v297
    %363 = vst.msk [vmem:[#allocation2 + $0x190] sm:$0xff] %vm312, %v298
    %364 = vst.msk [vmem:[#allocation2 + $0x198] sm:$0xff] %vm312, %v299
    %365 = vst.msk [vmem:[#allocation2 + $0x1a0] sm:$0xff] %vm312, %v300
    %366 = vst.msk [vmem:[#allocation2 + $0x1a8] sm:$0xff] %vm312, %v301
    %367 = vst.msk [vmem:[#allocation2 + $0x1b0] sm:$0xff] %vm312, %v302
    %368 = vst.msk [vmem:[#allocation2 + $0x1b8] sm:$0xff] %vm312, %v303
    %369 = vst.msk [vmem:[#allocation2 + $0x1c0] sm:$0xff] %vm312, %v304
    %370 = vst.msk [vmem:[#allocation2 + $0x1c8] sm:$0xff] %vm312, %v305
    %371 = vst.msk [vmem:[#allocation2 + $0x1d0] sm:$0xff] %vm312, %v306
    %372 = vst.msk [vmem:[#allocation2 + $0x1d8] sm:$0xff] %vm312, %v307
    %373 = vst.msk [vmem:[#allocation2 + $0x1e0] sm:$0xff] %vm312, %v308
    %374 = vst.msk [vmem:[#allocation2 + $0x1e8] sm:$0xff] %vm312, %v309
    %375 = vst.msk [vmem:[#allocation2 + $0x1f0] sm:$0xff] %vm312, %v310
    %376 = vst.msk [vmem:[#allocation2 + $0x1f8] sm:$0xff] %vm312, %v311
    %v377 = vld [vmem:[%s1] sm:$0xff]
    %v378 = vld [vmem:[%s1 + $0x8] sm:$0xff]
    %v379 = vld [vmem:[%s1 + $0x10] sm:$0xff]
    %v380 = vld [vmem:[%s1 + $0x18] sm:$0xff]
    %v381 = vld [vmem:[%s1 + $0x20] sm:$0xff]
    %v382 = vld [vmem:[%s1 + $0x28] sm:$0xff]
    %v383 = vld [vmem:[%s1 + $0x30] sm:$0xff]
    %v384 = vld [vmem:[%s1 + $0x38] sm:$0xff]
    %v385 = vld [vmem:[%s1 + $0x40] sm:$0xff]
    %v386 = vld [vmem:[%s1 + $0x48] sm:$0xff]
    %v387 = vld [vmem:[%s1 + $0x50] sm:$0xff]
    %v388 = vld [vmem:[%s1 + $0x58] sm:$0xff]
    %v389 = vld [vmem:[%s1 + $0x60] sm:$0xff]
    %v390 = vld [vmem:[%s1 + $0x68] sm:$0xff]
    %v391 = vld [vmem:[%s1 + $0x70] sm:$0xff]
    %v392 = vld [vmem:[%s1 + $0x78] sm:$0xff]
    %v393 = vld [vmem:[%s1 + $0x80] sm:$0xff]
    %v394 = vld [vmem:[%s1 + $0x88] sm:$0xff]
    %v395 = vld [vmem:[%s1 + $0x90] sm:$0xff]
    %v396 = vld [vmem:[%s1 + $0x98] sm:$0xff]
    %v397 = vld [vmem:[%s1 + $0xa0] sm:$0xff]
    %v398 = vld [vmem:[%s1 + $0xa8] sm:$0xff]
    %v399 = vld [vmem:[%s1 + $0xb0] sm:$0xff]
    %v400 = vld [vmem:[%s1 + $0xb8] sm:$0xff]
    %v401 = vld [vmem:[%s1 + $0xc0] sm:$0xff]
    %v402 = vld [vmem:[%s1 + $0xc8] sm:$0xff]
    %v403 = vld [vmem:[%s1 + $0xd0] sm:$0xff]
    %v404 = vld [vmem:[%s1 + $0xd8] sm:$0xff]
    %v405 = vld [vmem:[%s1 + $0xe0] sm:$0xff]
    %v406 = vld [vmem:[%s1 + $0xe8] sm:$0xff]
    %v407 = vld [vmem:[%s1 + $0xf0] sm:$0xff]
    %v408 = vld [vmem:[%s1 + $0xf8] sm:$0xff]
    %v409 = vld [vmem:[%s1 + $0x100] sm:$0xff]
    %v410 = vld [vmem:[%s1 + $0x108] sm:$0xff]
    %v411 = vld [vmem:[%s1 + $0x110] sm:$0xff]
    %v412 = vld [vmem:[%s1 + $0x118] sm:$0xff]
    %v413 = vld [vmem:[%s1 + $0x120] sm:$0xff]
    %v414 = vld [vmem:[%s1 + $0x128] sm:$0xff]
    %v415 = vld [vmem:[%s1 + $0x130] sm:$0xff]
    %v416 = vld [vmem:[%s1 + $0x138] sm:$0xff]
    %v417 = vld [vmem:[%s1 + $0x140] sm:$0xff]
    %v418 = vld [vmem:[%s1 + $0x148] sm:$0xff]
    %v419 = vld [vmem:[%s1 + $0x150] sm:$0xff]
    %v420 = vld [vmem:[%s1 + $0x158] sm:$0xff]
    %v421 = vld [vmem:[%s1 + $0x160] sm:$0xff]
    %v422 = vld [vmem:[%s1 + $0x168] sm:$0xff]
    %v423 = vld [vmem:[%s1 + $0x170] sm:$0xff]
    %v424 = vld [vmem:[%s1 + $0x178] sm:$0xff]
    %v425 = vld [vmem:[%s1 + $0x180] sm:$0xff]
    %v426 = vld [vmem:[%s1 + $0x188] sm:$0xff]
    %v427 = vld [vmem:[%s1 + $0x190] sm:$0xff]
    %v428 = vld [vmem:[%s1 + $0x198] sm:$0xff]
    %v429 = vld [vmem:[%s1 + $0x1a0] sm:$0xff]
    %v430 = vld [vmem:[%s1 + $0x1a8] sm:$0xff]
    %v431 = vld [vmem:[%s1 + $0x1b0] sm:$0xff]
    %v432 = vld [vmem:[%s1 + $0x1b8] sm:$0xff]
    %v433 = vld [vmem:[%s1 + $0x1c0] sm:$0xff]
    %v434 = vld [vmem:[%s1 + $0x1c8] sm:$0xff]
    %v435 = vld [vmem:[%s1 + $0x1d0] sm:$0xff]
    %v436 = vld [vmem:[%s1 + $0x1d8] sm:$0xff]
    %v437 = vld [vmem:[%s1 + $0x1e0] sm:$0xff]
    %v438 = vld [vmem:[%s1 + $0x1e8] sm:$0xff]
    %v439 = vld [vmem:[%s1 + $0x1f0] sm:$0xff]
    %v440 = vld [vmem:[%s1 + $0x1f8] sm:$0xff]
    %v441 = vld [vmem:[%s5] sm:$0x1]
    %v443 = vlaneseq
    %v444 = vshrl.u32 %v443, 7
    %v445 = vsub.s32 0, %v444
    %v446 = vrot.slane %v441, %v445
    %v448 = vmul.f32 %v377, %v446
    %v449 = vmul.f32 %v378, %v446
    %v450 = vmul.f32 %v379, %v446
    %v451 = vmul.f32 %v380, %v446
    %v452 = vmul.f32 %v381, %v446
    %v453 = vmul.f32 %v382, %v446
    %v454 = vmul.f32 %v383, %v446
    %v455 = vmul.f32 %v384, %v446
    %v456 = vmul.f32 %v385, %v446
    %v457 = vmul.f32 %v386, %v446
    %v458 = vmul.f32 %v387, %v446
    %v459 = vmul.f32 %v388, %v446
    %v460 = vmul.f32 %v389, %v446
    %v461 = vmul.f32 %v390, %v446
    %v462 = vmul.f32 %v391, %v446
    %v463 = vmul.f32 %v392, %v446
    %v464 = vmul.f32 %v393, %v446
    %v465 = vmul.f32 %v394, %v446
    %v466 = vmul.f32 %v395, %v446
    %v467 = vmul.f32 %v396, %v446
    %v468 = vmul.f32 %v397, %v446
    %v469 = vmul.f32 %v398, %v446
    %v470 = vmul.f32 %v399, %v446
    %v471 = vmul.f32 %v400, %v446
    %v472 = vmul.f32 %v401, %v446
    %v473 = vmul.f32 %v402, %v446
    %v474 = vmul.f32 %v403, %v446
    %v475 = vmul.f32 %v404, %v446
    %v476 = vmul.f32 %v405, %v446
    %v477 = vmul.f32 %v406, %v446
    %v478 = vmul.f32 %v407, %v446
    %v479 = vmul.f32 %v408, %v446
    %v480 = vmul.f32 %v409, %v446
    %v481 = vmul.f32 %v410, %v446
    %v482 = vmul.f32 %v411, %v446
    %v483 = vmul.f32 %v412, %v446
    %v484 = vmul.f32 %v413, %v446
    %v485 = vmul.f32 %v414, %v446
    %v486 = vmul.f32 %v415, %v446
    %v487 = vmul.f32 %v416, %v446
    %v488 = vmul.f32 %v417, %v446
    %v489 = vmul.f32 %v418, %v446
    %v490 = vmul.f32 %v419, %v446
    %v491 = vmul.f32 %v420, %v446
    %v492 = vmul.f32 %v421, %v446
    %v493 = vmul.f32 %v422, %v446
    %v494 = vmul.f32 %v423, %v446
    %v495 = vmul.f32 %v424, %v446
    %v496 = vmul.f32 %v425, %v446
    %v497 = vmul.f32 %v426, %v446
    %v498 = vmul.f32 %v427, %v446
    %v499 = vmul.f32 %v428, %v446
    %v500 = vmul.f32 %v429, %v446
    %v501 = vmul.f32 %v430, %v446
    %v502 = vmul.f32 %v431, %v446
    %v503 = vmul.f32 %v432, %v446
    %v504 = vmul.f32 %v433, %v446
    %v505 = vmul.f32 %v434, %v446
    %v506 = vmul.f32 %v435, %v446
    %v507 = vmul.f32 %v436, %v446
    %v508 = vmul.f32 %v437, %v446
    %v509 = vmul.f32 %v438, %v446
    %v510 = vmul.f32 %v439, %v446
    %v511 = vmul.f32 %v440, %v446
    %v512 = vld [vmem:[%s9] sm:$0x1]
    %v514 = vlaneseq
    %v515 = vshrl.u32 %v514, 7
    %v516 = vsub.s32 0, %v515
    %v517 = vrot.slane %v512, %v516
    %v519 = vadd.f32 %v448, %v517
    %v520 = vadd.f32 %v449, %v517
    %v521 = vadd.f32 %v450, %v517
    %v522 = vadd.f32 %v451, %v517
    %v523 = vadd.f32 %v452, %v517
    %v524 = vadd.f32 %v453, %v517
    %v525 = vadd.f32 %v454, %v517
    %v526 = vadd.f32 %v455, %v517
    %v527 = vadd.f32 %v456, %v517
    %v528 = vadd.f32 %v457, %v517
    %v529 = vadd.f32 %v458, %v517
    %v530 = vadd.f32 %v459, %v517
    %v531 = vadd.f32 %v460, %v517
    %v532 = vadd.f32 %v461, %v517
    %v533 = vadd.f32 %v462, %v517
    %v534 = vadd.f32 %v463, %v517
    %v535 = vadd.f32 %v464, %v517
    %v536 = vadd.f32 %v465, %v517
    %v537 = vadd.f32 %v466, %v517
    %v538 = vadd.f32 %v467, %v517
    %v539 = vadd.f32 %v468, %v517
    %v540 = vadd.f32 %v469, %v517
    %v541 = vadd.f32 %v470, %v517
    %v542 = vadd.f32 %v471, %v517
    %v543 = vadd.f32 %v472, %v517
    %v544 = vadd.f32 %v473, %v517
    %v545 = vadd.f32 %v474, %v517
    %v546 = vadd.f32 %v475, %v517
    %v547 = vadd.f32 %v476, %v517
    %v548 = vadd.f32 %v477, %v517
    %v549 = vadd.f32 %v478, %v517
    %v550 = vadd.f32 %v479, %v517
    %v551 = vadd.f32 %v480, %v517
    %v552 = vadd.f32 %v481, %v517
    %v553 = vadd.f32 %v482, %v517
    %v554 = vadd.f32 %v483, %v517
    %v555 = vadd.f32 %v484, %v517
    %v556 = vadd.f32 %v485, %v517
    %v557 = vadd.f32 %v486, %v517
    %v558 = vadd.f32 %v487, %v517
    %v559 = vadd.f32 %v488, %v517
    %v560 = vadd.f32 %v489, %v517
    %v561 = vadd.f32 %v490, %v517
    %v562 = vadd.f32 %v491, %v517
    %v563 = vadd.f32 %v492, %v517
    %v564 = vadd.f32 %v493, %v517
    %v565 = vadd.f32 %v494, %v517
    %v566 = vadd.f32 %v495, %v517
    %v567 = vadd.f32 %v496, %v517
    %v568 = vadd.f32 %v497, %v517
    %v569 = vadd.f32 %v498, %v517
    %v570 = vadd.f32 %v499, %v517
    %v571 = vadd.f32 %v500, %v517
    %v572 = vadd.f32 %v501, %v517
    %v573 = vadd.f32 %v502, %v517
    %v574 = vadd.f32 %v503, %v517
    %v575 = vadd.f32 %v504, %v517
    %v576 = vadd.f32 %v505, %v517
    %v577 = vadd.f32 %v506, %v517
    %v578 = vadd.f32 %v507, %v517
    %v579 = vadd.f32 %v508, %v517
    %v580 = vadd.f32 %v509, %v517
    %v581 = vadd.f32 %v510, %v517
    %v582 = vadd.f32 %v511, %v517
    %v583 = vmax.f32 %v519, 0.0
    %v584 = vmax.f32 %v520, 0.0
    %v585 = vmax.f32 %v521, 0.0
    %v586 = vmax.f32 %v522, 0.0
    %v587 = vmax.f32 %v523, 0.0
    %v588 = vmax.f32 %v524, 0.0
    %v589 = vmax.f32 %v525, 0.0
    %v590 = vmax.f32 %v526, 0.0
    %v591 = vmax.f32 %v527, 0.0
    %v592 = vmax.f32 %v528, 0.0
    %v593 = vmax.f32 %v529, 0.0
    %v594 = vmax.f32 %v530, 0.0
    %v595 = vmax.f32 %v531, 0.0
    %v596 = vmax.f32 %v532, 0.0
    %v597 = vmax.f32 %v533, 0.0
    %v598 = vmax.f32 %v534, 0.0
    %v599 = vmax.f32 %v535, 0.0
    %v600 = vmax.f32 %v536, 0.0
    %v601 = vmax.f32 %v537, 0.0
    %v602 = vmax.f32 %v538, 0.0
    %v603 = vmax.f32 %v539, 0.0
    %v604 = vmax.f32 %v540, 0.0
    %v605 = vmax.f32 %v541, 0.0
    %v606 = vmax.f32 %v542, 0.0
    %v607 = vmax.f32 %v543, 0.0
    %v608 = vmax.f32 %v544, 0.0
    %v609 = vmax.f32 %v545, 0.0
    %v610 = vmax.f32 %v546, 0.0
    %v611 = vmax.f32 %v547, 0.0
    %v612 = vmax.f32 %v548, 0.0
    %v613 = vmax.f32 %v549, 0.0
    %v614 = vmax.f32 %v550, 0.0
    %v615 = vmax.f32 %v551, 0.0
    %v616 = vmax.f32 %v552, 0.0
    %v617 = vmax.f32 %v553, 0.0
    %v618 = vmax.f32 %v554, 0.0
    %v619 = vmax.f32 %v555, 0.0
    %v620 = vmax.f32 %v556, 0.0
    %v621 = vmax.f32 %v557, 0.0
    %v622 = vmax.f32 %v558, 0.0
    %v623 = vmax.f32 %v559, 0.0
    %v624 = vmax.f32 %v560, 0.0
    %v625 = vmax.f32 %v561, 0.0
    %v626 = vmax.f32 %v562, 0.0
    %v627 = vmax.f32 %v563, 0.0
    %v628 = vmax.f32 %v564, 0.0
    %v629 = vmax.f32 %v565, 0.0
    %v630 = vmax.f32 %v566, 0.0
    %v631 = vmax.f32 %v567, 0.0
    %v632 = vmax.f32 %v568, 0.0
    %v633 = vmax.f32 %v569, 0.0
    %v634 = vmax.f32 %v570, 0.0
    %v635 = vmax.f32 %v571, 0.0
    %v636 = vmax.f32 %v572, 0.0
    %v637 = vmax.f32 %v573, 0.0
    %v638 = vmax.f32 %v574, 0.0
    %v639 = vmax.f32 %v575, 0.0
    %v640 = vmax.f32 %v576, 0.0
    %v641 = vmax.f32 %v577, 0.0
    %v642 = vmax.f32 %v578, 0.0
    %v643 = vmax.f32 %v579, 0.0
    %v644 = vmax.f32 %v580, 0.0
    %v645 = vmax.f32 %v581, 0.0
    %v646 = vmax.f32 %v582, 0.0
    %711 = vrot.lane.b32.xlu0 %v583, 8
    %v712 = vpop.permute.xlu0 %711
    %713 = vrot.lane.b32.xlu0 %v584, 8
    %v714 = vpop.permute.xlu0 %713
    %715 = vrot.lane.b32.xlu0 %v585, 8
    %v716 = vpop.permute.xlu0 %715
    %717 = vrot.lane.b32.xlu0 %v586, 8
    %v718 = vpop.permute.xlu0 %717
    %719 = vrot.lane.b32.xlu0 %v587, 8
    %v720 = vpop.permute.xlu0 %719
    %721 = vrot.lane.b32.xlu0 %v588, 8
    %v722 = vpop.permute.xlu0 %721
    %723 = vrot.lane.b32.xlu0 %v589, 8
    %v724 = vpop.permute.xlu0 %723
    %725 = vrot.lane.b32.xlu0 %v590, 8
    %v726 = vpop.permute.xlu0 %725
    %727 = vrot.lane.b32.xlu0 %v591, 8
    %v728 = vpop.permute.xlu0 %727
    %729 = vrot.lane.b32.xlu0 %v592, 8
    %v730 = vpop.permute.xlu0 %729
    %731 = vrot.lane.b32.xlu0 %v593, 8
    %v732 = vpop.permute.xlu0 %731
    %733 = vrot.lane.b32.xlu0 %v594, 8
    %v734 = vpop.permute.xlu0 %733
    %735 = vrot.lane.b32.xlu0 %v595, 8
    %v736 = vpop.permute.xlu0 %735
    %737 = vrot.lane.b32.xlu0 %v596, 8
    %v738 = vpop.permute.xlu0 %737
    %739 = vrot.lane.b32.xlu0 %v597, 8
    %v740 = vpop.permute.xlu0 %739
    %741 = vrot.lane.b32.xlu0 %v598, 8
    %v742 = vpop.permute.xlu0 %741
    %743 = vrot.lane.b32.xlu0 %v599, 8
    %v744 = vpop.permute.xlu0 %743
    %745 = vrot.lane.b32.xlu0 %v600, 8
    %v746 = vpop.permute.xlu0 %745
    %747 = vrot.lane.b32.xlu0 %v601, 8
    %v748 = vpop.permute.xlu0 %747
    %749 = vrot.lane.b32.xlu0 %v602, 8
    %v750 = vpop.permute.xlu0 %749
    %751 = vrot.lane.b32.xlu0 %v603, 8
    %v752 = vpop.permute.xlu0 %751
    %753 = vrot.lane.b32.xlu0 %v604, 8
    %v754 = vpop.permute.xlu0 %753
    %755 = vrot.lane.b32.xlu0 %v605, 8
    %v756 = vpop.permute.xlu0 %755
    %757 = vrot.lane.b32.xlu0 %v606, 8
    %v758 = vpop.permute.xlu0 %757
    %759 = vrot.lane.b32.xlu0 %v607, 8
    %v760 = vpop.permute.xlu0 %759
    %761 = vrot.lane.b32.xlu0 %v608, 8
    %v762 = vpop.permute.xlu0 %761
    %763 = vrot.lane.b32.xlu0 %v609, 8
    %v764 = vpop.permute.xlu0 %763
    %765 = vrot.lane.b32.xlu0 %v610, 8
    %v766 = vpop.permute.xlu0 %765
    %767 = vrot.lane.b32.xlu0 %v611, 8
    %v768 = vpop.permute.xlu0 %767
    %769 = vrot.lane.b32.xlu0 %v612, 8
    %v770 = vpop.permute.xlu0 %769
    %771 = vrot.lane.b32.xlu0 %v613, 8
    %v772 = vpop.permute.xlu0 %771
    %773 = vrot.lane.b32.xlu0 %v614, 8
    %v774 = vpop.permute.xlu0 %773
    %775 = vrot.lane.b32.xlu0 %v615, 8
    %v776 = vpop.permute.xlu0 %775
    %777 = vrot.lane.b32.xlu0 %v616, 8
    %v778 = vpop.permute.xlu0 %777
    %779 = vrot.lane.b32.xlu0 %v617, 8
    %v780 = vpop.permute.xlu0 %779
    %781 = vrot.lane.b32.xlu0 %v618, 8
    %v782 = vpop.permute.xlu0 %781
    %783 = vrot.lane.b32.xlu0 %v619, 8
    %v784 = vpop.permute.xlu0 %783
    %785 = vrot.lane.b32.xlu0 %v620, 8
    %v786 = vpop.permute.xlu0 %785
    %787 = vrot.lane.b32.xlu0 %v621, 8
    %v788 = vpop.permute.xlu0 %787
    %789 = vrot.lane.b32.xlu0 %v622, 8
    %v790 = vpop.permute.xlu0 %789
    %791 = vrot.lane.b32.xlu0 %v623, 8
    %v792 = vpop.permute.xlu0 %791
    %793 = vrot.lane.b32.xlu0 %v624, 8
    %v794 = vpop.permute.xlu0 %793
    %795 = vrot.lane.b32.xlu0 %v625, 8
    %v796 = vpop.permute.xlu0 %795
    %797 = vrot.lane.b32.xlu0 %v626, 8
    %v798 = vpop.permute.xlu0 %797
    %799 = vrot.lane.b32.xlu0 %v627, 8
    %v800 = vpop.permute.xlu0 %799
    %801 = vrot.lane.b32.xlu0 %v628, 8
    %v802 = vpop.permute.xlu0 %801
    %803 = vrot.lane.b32.xlu0 %v629, 8
    %v804 = vpop.permute.xlu0 %803
    %805 = vrot.lane.b32.xlu0 %v630, 8
    %v806 = vpop.permute.xlu0 %805
    %807 = vrot.lane.b32.xlu0 %v631, 8
    %v808 = vpop.permute.xlu0 %807
    %809 = vrot.lane.b32.xlu0 %v632, 8
    %v810 = vpop.permute.xlu0 %809
    %811 = vrot.lane.b32.xlu0 %v633, 8
    %v812 = vpop.permute.xlu0 %811
    %813 = vrot.lane.b32.xlu0 %v634, 8
    %v814 = vpop.permute.xlu0 %813
    %815 = vrot.lane.b32.xlu0 %v635, 8
    %v816 = vpop.permute.xlu0 %815
    %817 = vrot.lane.b32.xlu0 %v636, 8
    %v818 = vpop.permute.xlu0 %817
    %819 = vrot.lane.b32.xlu0 %v637, 8
    %v820 = vpop.permute.xlu0 %819
    %821 = vrot.lane.b32.xlu0 %v638, 8
    %v822 = vpop.permute.xlu0 %821
    %823 = vrot.lane.b32.xlu0 %v639, 8
    %v824 = vpop.permute.xlu0 %823
    %825 = vrot.lane.b32.xlu0 %v640, 8
    %v826 = vpop.permute.xlu0 %825
    %827 = vrot.lane.b32.xlu0 %v641, 8
    %v828 = vpop.permute.xlu0 %827
    %829 = vrot.lane.b32.xlu0 %v642, 8
    %v830 = vpop.permute.xlu0 %829
    %831 = vrot.lane.b32.xlu0 %v643, 8
    %v832 = vpop.permute.xlu0 %831
    %833 = vrot.lane.b32.xlu0 %v644, 8
    %v834 = vpop.permute.xlu0 %833
    %835 = vrot.lane.b32.xlu0 %v645, 8
    %v836 = vpop.permute.xlu0 %835
    %837 = vrot.lane.b32.xlu0 %v646, 8
    %v838 = vpop.permute.xlu0 %837
    %vm903 = vcmask 130112
    %904 = vst.msk [vmem:[#allocation2] sm:$0xff] %vm903, %v712
    %905 = vst.msk [vmem:[#allocation2 + $0x8] sm:$0xff] %vm903, %v714
    %906 = vst.msk [vmem:[#allocation2 + $0x10] sm:$0xff] %vm903, %v716
    %907 = vst.msk [vmem:[#allocation2 + $0x18] sm:$0xff] %vm903, %v718
    %908 = vst.msk [vmem:[#allocation2 + $0x20] sm:$0xff] %vm903, %v720
    %909 = vst.msk [vmem:[#allocation2 + $0x28] sm:$0xff] %vm903, %v722
    %910 = vst.msk [vmem:[#allocation2 + $0x30] sm:$0xff] %vm903, %v724
    %911 = vst.msk [vmem:[#allocation2 + $0x38] sm:$0xff] %vm903, %v726
    %912 = vst.msk [vmem:[#allocation2 + $0x40] sm:$0xff] %vm903, %v728
    %913 = vst.msk [vmem:[#allocation2 + $0x48] sm:$0xff] %vm903, %v730
    %914 = vst.msk [vmem:[#allocation2 + $0x50] sm:$0xff] %vm903, %v732
    %915 = vst.msk [vmem:[#allocation2 + $0x58] sm:$0xff] %vm903, %v734
    %916 = vst.msk [vmem:[#allocation2 + $0x60] sm:$0xff] %vm903, %v736
    %917 = vst.msk [vmem:[#allocation2 + $0x68] sm:$0xff] %vm903, %v738
    %918 = vst.msk [vmem:[#allocation2 + $0x70] sm:$0xff] %vm903, %v740
    %919 = vst.msk [vmem:[#allocation2 + $0x78] sm:$0xff] %vm903, %v742
    %920 = vst.msk [vmem:[#allocation2 + $0x80] sm:$0xff] %vm903, %v744
    %921 = vst.msk [vmem:[#allocation2 + $0x88] sm:$0xff] %vm903, %v746
    %922 = vst.msk [vmem:[#allocation2 + $0x90] sm:$0xff] %vm903, %v748
    %923 = vst.msk [vmem:[#allocation2 + $0x98] sm:$0xff] %vm903, %v750
    %924 = vst.msk [vmem:[#allocation2 + $0xa0] sm:$0xff] %vm903, %v752
    %925 = vst.msk [vmem:[#allocation2 + $0xa8] sm:$0xff] %vm903, %v754
    %926 = vst.msk [vmem:[#allocation2 + $0xb0] sm:$0xff] %vm903, %v756
    %927 = vst.msk [vmem:[#allocation2 + $0xb8] sm:$0xff] %vm903, %v758
    %928 = vst.msk [vmem:[#allocation2 + $0xc0] sm:$0xff] %vm903, %v760
    %929 = vst.msk [vmem:[#allocation2 + $0xc8] sm:$0xff] %vm903, %v762
    %930 = vst.msk [vmem:[#allocation2 + $0xd0] sm:$0xff] %vm903, %v764
    %931 = vst.msk [vmem:[#allocation2 + $0xd8] sm:$0xff] %vm903, %v766
    %932 = vst.msk [vmem:[#allocation2 + $0xe0] sm:$0xff] %vm903, %v768
    %933 = vst.msk [vmem:[#allocation2 + $0xe8] sm:$0xff] %vm903, %v770
    %934 = vst.msk [vmem:[#allocation2 + $0xf0] sm:$0xff] %vm903, %v772
    %935 = vst.msk [vmem:[#allocation2 + $0xf8] sm:$0xff] %vm903, %v774
    %936 = vst.msk [vmem:[#allocation2 + $0x100] sm:$0xff] %vm903, %v776
    %937 = vst.msk [vmem:[#allocation2 + $0x108] sm:$0xff] %vm903, %v778
    %938 = vst.msk [vmem:[#allocation2 + $0x110] sm:$0xff] %vm903, %v780
    %939 = vst.msk [vmem:[#allocation2 + $0x118] sm:$0xff] %vm903, %v782
    %940 = vst.msk [vmem:[#allocation2 + $0x120] sm:$0xff] %vm903, %v784
    %941 = vst.msk [vmem:[#allocation2 + $0x128] sm:$0xff] %vm903, %v786
    %942 = vst.msk [vmem:[#allocation2 + $0x130] sm:$0xff] %vm903, %v788
    %943 = vst.msk [vmem:[#allocation2 + $0x138] sm:$0xff] %vm903, %v790
    %944 = vst.msk [vmem:[#allocation2 + $0x140] sm:$0xff] %vm903, %v792
    %945 = vst.msk [vmem:[#allocation2 + $0x148] sm:$0xff] %vm903, %v794
    %946 = vst.msk [vmem:[#allocation2 + $0x150] sm:$0xff] %vm903, %v796
    %947 = vst.msk [vmem:[#allocation2 + $0x158] sm:$0xff] %vm903, %v798
    %948 = vst.msk [vmem:[#allocation2 + $0x160] sm:$0xff] %vm903, %v800
    %949 = vst.msk [vmem:[#allocation2 + $0x168] sm:$0xff] %vm903, %v802
    %950 = vst.msk [vmem:[#allocation2 + $0x170] sm:$0xff] %vm903, %v804
    %951 = vst.msk [vmem:[#allocation2 + $0x178] sm:$0xff] %vm903, %v806
    %952 = vst.msk [vmem:[#allocation2 + $0x180] sm:$0xff] %vm903, %v808
    %953 = vst.msk [vmem:[#allocation2 + $0x188] sm:$0xff] %vm903, %v810
    %954 = vst.msk [vmem:[#allocation2 + $0x190] sm:$0xff] %vm903, %v812
    %955 = vst.msk [vmem:[#allocation2 + $0x198] sm:$0xff] %vm903, %v814
    %956 = vst.msk [vmem:[#allocation2 + $0x1a0] sm:$0xff] %vm903, %v816
    %957 = vst.msk [vmem:[#allocation2 + $0x1a8] sm:$0xff] %vm903, %v818
    %958 = vst.msk [vmem:[#allocation2 + $0x1b0] sm:$0xff] %vm903, %v820
    %959 = vst.msk [vmem:[#allocation2 + $0x1b8] sm:$0xff] %vm903, %v822
    %960 = vst.msk [vmem:[#allocation2 + $0x1c0] sm:$0xff] %vm903, %v824
    %961 = vst.msk [vmem:[#allocation2 + $0x1c8] sm:$0xff] %vm903, %v826
    %962 = vst.msk [vmem:[#allocation2 + $0x1d0] sm:$0xff] %vm903, %v828
    %963 = vst.msk [vmem:[#allocation2 + $0x1d8] sm:$0xff] %vm903, %v830
    %964 = vst.msk [vmem:[#allocation2 + $0x1e0] sm:$0xff] %vm903, %v832
    %965 = vst.msk [vmem:[#allocation2 + $0x1e8] sm:$0xff] %vm903, %v834
    %966 = vst.msk [vmem:[#allocation2 + $0x1f0] sm:$0xff] %vm903, %v836
    %967 = vst.msk [vmem:[#allocation2 + $0x1f8] sm:$0xff] %vm903, %v838
    %v968 = vld [vmem:[%s2] sm:$0xff]
    %v969 = vld [vmem:[%s2 + $0x8] sm:$0xff]
    %v970 = vld [vmem:[%s2 + $0x10] sm:$0xff]
    %v971 = vld [vmem:[%s2 + $0x18] sm:$0xff]
    %v972 = vld [vmem:[%s2 + $0x20] sm:$0xff]
    %v973 = vld [vmem:[%s2 + $0x28] sm:$0xff]
    %v974 = vld [vmem:[%s2 + $0x30] sm:$0xff]
    %v975 = vld [vmem:[%s2 + $0x38] sm:$0xff]
    %v976 = vld [vmem:[%s2 + $0x40] sm:$0xff]
    %v977 = vld [vmem:[%s2 + $0x48] sm:$0xff]
    %v978 = vld [vmem:[%s2 + $0x50] sm:$0xff]
    %v979 = vld [vmem:[%s2 + $0x58] sm:$0xff]
    %v980 = vld [vmem:[%s2 + $0x60] sm:$0xff]
    %v981 = vld [vmem:[%s2 + $0x68] sm:$0xff]
    %v982 = vld [vmem:[%s2 + $0x70] sm:$0xff]
    %v983 = vld [vmem:[%s2 + $0x78] sm:$0xff]
    %v984 = vld [vmem:[%s2 + $0x80] sm:$0xff]
    %v985 = vld [vmem:[%s2 + $0x88] sm:$0xff]
    %v986 = vld [vmem:[%s2 + $0x90] sm:$0xff]
    %v987 = vld [vmem:[%s2 + $0x98] sm:$0xff]
    %v988 = vld [vmem:[%s2 + $0xa0] sm:$0xff]
    %v989 = vld [vmem:[%s2 + $0xa8] sm:$0xff]
    %v990 = vld [vmem:[%s2 + $0xb0] sm:$0xff]
    %v991 = vld [vmem:[%s2 + $0xb8] sm:$0xff]
    %v992 = vld [vmem:[%s2 + $0xc0] sm:$0xff]
    %v993 = vld [vmem:[%s2 + $0xc8] sm:$0xff]
    %v994 = vld [vmem:[%s2 + $0xd0] sm:$0xff]
    %v995 = vld [vmem:[%s2 + $0xd8] sm:$0xff]
    %v996 = vld [vmem:[%s2 + $0xe0] sm:$0xff]
    %v997 = vld [vmem:[%s2 + $0xe8] sm:$0xff]
    %v998 = vld [vmem:[%s2 + $0xf0] sm:$0xff]
    %v999 = vld [vmem:[%s2 + $0xf8] sm:$0xff]
    %v1000 = vld [vmem:[%s2 + $0x100] sm:$0xff]
    %v1001 = vld [vmem:[%s2 + $0x108] sm:$0xff]
    %v1002 = vld [vmem:[%s2 + $0x110] sm:$0xff]
    %v1003 = vld [vmem:[%s2 + $0x118] sm:$0xff]
    %v1004 = vld [vmem:[%s2 + $0x120] sm:$0xff]
    %v1005 = vld [vmem:[%s2 + $0x128] sm:$0xff]
    %v1006 = vld [vmem:[%s2 + $0x130] sm:$0xff]
    %v1007 = vld [vmem:[%s2 + $0x138] sm:$0xff]
    %v1008 = vld [vmem:[%s2 + $0x140] sm:$0xff]
    %v1009 = vld [vmem:[%s2 + $0x148] sm:$0xff]
    %v1010 = vld [vmem:[%s2 + $0x150] sm:$0xff]
    %v1011 = vld [vmem:[%s2 + $0x158] sm:$0xff]
    %v1012 = vld [vmem:[%s2 + $0x160] sm:$0xff]
    %v1013 = vld [vmem:[%s2 + $0x168] sm:$0xff]
    %v1014 = vld [vmem:[%s2 + $0x170] sm:$0xff]
    %v1015 = vld [vmem:[%s2 + $0x178] sm:$0xff]
    %v1016 = vld [vmem:[%s2 + $0x180] sm:$0xff]
    %v1017 = vld [vmem:[%s2 + $0x188] sm:$0xff]
    %v1018 = vld [vmem:[%s2 + $0x190] sm:$0xff]
    %v1019 = vld [vmem:[%s2 + $0x198] sm:$0xff]
    %v1020 = vld [vmem:[%s2 + $0x1a0] sm:$0xff]
    %v1021 = vld [vmem:[%s2 + $0x1a8] sm:$0xff]
    %v1022 = vld [vmem:[%s2 + $0x1b0] sm:$0xff]
    %v1023 = vld [vmem:[%s2 + $0x1b8] sm:$0xff]
    %v1024 = vld [vmem:[%s2 + $0x1c0] sm:$0xff]
    %v1025 = vld [vmem:[%s2 + $0x1c8] sm:$0xff]
    %v1026 = vld [vmem:[%s2 + $0x1d0] sm:$0xff]
    %v1027 = vld [vmem:[%s2 + $0x1d8] sm:$0xff]
    %v1028 = vld [vmem:[%s2 + $0x1e0] sm:$0xff]
    %v1029 = vld [vmem:[%s2 + $0x1e8] sm:$0xff]
    %v1030 = vld [vmem:[%s2 + $0x1f0] sm:$0xff]
    %v1031 = vld [vmem:[%s2 + $0x1f8] sm:$0xff]
    %v1032 = vld [vmem:[%s6] sm:$0x1]
    %v1034 = vlaneseq
    %v1035 = vshrl.u32 %v1034, 7
    %v1036 = vsub.s32 0, %v1035
    %v1037 = vrot.slane %v1032, %v1036
    %v1039 = vmul.f32 %v968, %v1037
    %v1040 = vmul.f32 %v969, %v1037
    %v1041 = vmul.f32 %v970, %v1037
    %v1042 = vmul.f32 %v971, %v1037
    %v1043 = vmul.f32 %v972, %v1037
    %v1044 = vmul.f32 %v973, %v1037
    %v1045 = vmul.f32 %v974, %v1037
    %v1046 = vmul.f32 %v975, %v1037
    %v1047 = vmul.f32 %v976, %v1037
    %v1048 = vmul.f32 %v977, %v1037
    %v1049 = vmul.f32 %v978, %v1037
    %v1050 = vmul.f32 %v979, %v1037
    %v1051 = vmul.f32 %v980, %v1037
    %v1052 = vmul.f32 %v981, %v1037
    %v1053 = vmul.f32 %v982, %v1037
    %v1054 = vmul.f32 %v983, %v1037
    %v1055 = vmul.f32 %v984, %v1037
    %v1056 = vmul.f32 %v985, %v1037
    %v1057 = vmul.f32 %v986, %v1037
    %v1058 = vmul.f32 %v987, %v1037
    %v1059 = vmul.f32 %v988, %v1037
    %v1060 = vmul.f32 %v989, %v1037
    %v1061 = vmul.f32 %v990, %v1037
    %v1062 = vmul.f32 %v991, %v1037
    %v1063 = vmul.f32 %v992, %v1037
    %v1064 = vmul.f32 %v993, %v1037
    %v1065 = vmul.f32 %v994, %v1037
    %v1066 = vmul.f32 %v995, %v1037
    %v1067 = vmul.f32 %v996, %v1037
    %v1068 = vmul.f32 %v997, %v1037
    %v1069 = vmul.f32 %v998, %v1037
    %v1070 = vmul.f32 %v999, %v1037
    %v1071 = vmul.f32 %v1000, %v1037
    %v1072 = vmul.f32 %v1001, %v1037
    %v1073 = vmul.f32 %v1002, %v1037
    %v1074 = vmul.f32 %v1003, %v1037
    %v1075 = vmul.f32 %v1004, %v1037
    %v1076 = vmul.f32 %v1005, %v1037
    %v1077 = vmul.f32 %v1006, %v1037
    %v1078 = vmul.f32 %v1007, %v1037
    %v1079 = vmul.f32 %v1008, %v1037
    %v1080 = vmul.f32 %v1009, %v1037
    %v1081 = vmul.f32 %v1010, %v1037
    %v1082 = vmul.f32 %v1011, %v1037
    %v1083 = vmul.f32 %v1012, %v1037
    %v1084 = vmul.f32 %v1013, %v1037
    %v1085 = vmul.f32 %v1014, %v1037
    %v1086 = vmul.f32 %v1015, %v1037
    %v1087 = vmul.f32 %v1016, %v1037
    %v1088 = vmul.f32 %v1017, %v1037
    %v1089 = vmul.f32 %v1018, %v1037
    %v1090 = vmul.f32 %v1019, %v1037
    %v1091 = vmul.f32 %v1020, %v1037
    %v1092 = vmul.f32 %v1021, %v1037
    %v1093 = vmul.f32 %v1022, %v1037
    %v1094 = vmul.f32 %v1023, %v1037
    %v1095 = vmul.f32 %v1024, %v1037
    %v1096 = vmul.f32 %v1025, %v1037
    %v1097 = vmul.f32 %v1026, %v1037
    %v1098 = vmul.f32 %v1027, %v1037
    %v1099 = vmul.f32 %v1028, %v1037
    %v1100 = vmul.f32 %v1029, %v1037
    %v1101 = vmul.f32 %v1030, %v1037
    %v1102 = vmul.f32 %v1031, %v1037
    %v1103 = vld [vmem:[%s10] sm:$0x1]
    %v1105 = vlaneseq
    %v1106 = vshrl.u32 %v1105, 7
    %v1107 = vsub.s32 0, %v1106
    %v1108 = vrot.slane %v1103, %v1107
    %v1110 = vadd.f32 %v1039, %v1108
    %v1111 = vadd.f32 %v1040, %v1108
    %v1112 = vadd.f32 %v1041, %v1108
    %v1113 = vadd.f32 %v1042, %v1108
    %v1114 = vadd.f32 %v1043, %v1108
    %v1115 = vadd.f32 %v1044, %v1108
    %v1116 = vadd.f32 %v1045, %v1108
    %v1117 = vadd.f32 %v1046, %v1108
    %v1118 = vadd.f32 %v1047, %v1108
    %v1119 = vadd.f32 %v1048, %v1108
    %v1120 = vadd.f32 %v1049, %v1108
    %v1121 = vadd.f32 %v1050, %v1108
    %v1122 = vadd.f32 %v1051, %v1108
    %v1123 = vadd.f32 %v1052, %v1108
    %v1124 = vadd.f32 %v1053, %v1108
    %v1125 = vadd.f32 %v1054, %v1108
    %v1126 = vadd.f32 %v1055, %v1108
    %v1127 = vadd.f32 %v1056, %v1108
    %v1128 = vadd.f32 %v1057, %v1108
    %v1129 = vadd.f32 %v1058, %v1108
    %v1130 = vadd.f32 %v1059, %v1108
    %v1131 = vadd.f32 %v1060, %v1108
    %v1132 = vadd.f32 %v1061, %v1108
    %v1133 = vadd.f32 %v1062, %v1108
    %v1134 = vadd.f32 %v1063, %v1108
    %v1135 = vadd.f32 %v1064, %v1108
    %v1136 = vadd.f32 %v1065, %v1108
    %v1137 = vadd.f32 %v1066, %v1108
    %v1138 = vadd.f32 %v1067, %v1108
    %v1139 = vadd.f32 %v1068, %v1108
    %v1140 = vadd.f32 %v1069, %v1108
    %v1141 = vadd.f32 %v1070, %v1108
    %v1142 = vadd.f32 %v1071, %v1108
    %v1143 = vadd.f32 %v1072, %v1108
    %v1144 = vadd.f32 %v1073, %v1108
    %v1145 = vadd.f32 %v1074, %v1108
    %v1146 = vadd.f32 %v1075, %v1108
    %v1147 = vadd.f32 %v1076, %v1108
    %v1148 = vadd.f32 %v1077, %v1108
    %v1149 = vadd.f32 %v1078, %v1108
    %v1150 = vadd.f32 %v1079, %v1108
    %v1151 = vadd.f32 %v1080, %v1108
    %v1152 = vadd.f32 %v1081, %v1108
    %v1153 = vadd.f32 %v1082, %v1108
    %v1154 = vadd.f32 %v1083, %v1108
    %v1155 = vadd.f32 %v1084, %v1108
    %v1156 = vadd.f32 %v1085, %v1108
    %v1157 = vadd.f32 %v1086, %v1108
    %v1158 = vadd.f32 %v1087, %v1108
    %v1159 = vadd.f32 %v1088, %v1108
    %v1160 = vadd.f32 %v1089, %v1108
    %v1161 = vadd.f32 %v1090, %v1108
    %v1162 = vadd.f32 %v1091, %v1108
    %v1163 = vadd.f32 %v1092, %v1108
    %v1164 = vadd.f32 %v1093, %v1108
    %v1165 = vadd.f32 %v1094, %v1108
    %v1166 = vadd.f32 %v1095, %v1108
    %v1167 = vadd.f32 %v1096, %v1108
    %v1168 = vadd.f32 %v1097, %v1108
    %v1169 = vadd.f32 %v1098, %v1108
    %v1170 = vadd.f32 %v1099, %v1108
    %v1171 = vadd.f32 %v1100, %v1108
    %v1172 = vadd.f32 %v1101, %v1108
    %v1173 = vadd.f32 %v1102, %v1108
    %v1174 = vmax.f32 %v1110, 0.0
    %v1175 = vmax.f32 %v1111, 0.0
    %v1176 = vmax.f32 %v1112, 0.0
    %v1177 = vmax.f32 %v1113, 0.0
    %v1178 = vmax.f32 %v1114, 0.0
    %v1179 = vmax.f32 %v1115, 0.0
    %v1180 = vmax.f32 %v1116, 0.0
    %v1181 = vmax.f32 %v1117, 0.0
    %v1182 = vmax.f32 %v1118, 0.0
    %v1183 = vmax.f32 %v1119, 0.0
    %v1184 = vmax.f32 %v1120, 0.0
    %v1185 = vmax.f32 %v1121, 0.0
    %v1186 = vmax.f32 %v1122, 0.0
    %v1187 = vmax.f32 %v1123, 0.0
    %v1188 = vmax.f32 %v1124, 0.0
    %v1189 = vmax.f32 %v1125, 0.0
    %v1190 = vmax.f32 %v1126, 0.0
    %v1191 = vmax.f32 %v1127, 0.0
    %v1192 = vmax.f32 %v1128, 0.0
    %v1193 = vmax.f32 %v1129, 0.0
    %v1194 = vmax.f32 %v1130, 0.0
    %v1195 = vmax.f32 %v1131, 0.0
    %v1196 = vmax.f32 %v1132, 0.0
    %v1197 = vmax.f32 %v1133, 0.0
    %v1198 = vmax.f32 %v1134, 0.0
    %v1199 = vmax.f32 %v1135, 0.0
    %v1200 = vmax.f32 %v1136, 0.0
    %v1201 = vmax.f32 %v1137, 0.0
    %v1202 = vmax.f32 %v1138, 0.0
    %v1203 = vmax.f32 %v1139, 0.0
    %v1204 = vmax.f32 %v1140, 0.0
    %v1205 = vmax.f32 %v1141, 0.0
    %v1206 = vmax.f32 %v1142, 0.0
    %v1207 = vmax.f32 %v1143, 0.0
    %v1208 = vmax.f32 %v1144, 0.0
    %v1209 = vmax.f32 %v1145, 0.0
    %v1210 = vmax.f32 %v1146, 0.0
    %v1211 = vmax.f32 %v1147, 0.0
    %v1212 = vmax.f32 %v1148, 0.0
    %v1213 = vmax.f32 %v1149, 0.0
    %v1214 = vmax.f32 %v1150, 0.0
    %v1215 = vmax.f32 %v1151, 0.0
    %v1216 = vmax.f32 %v1152, 0.0
    %v1217 = vmax.f32 %v1153, 0.0
    %v1218 = vmax.f32 %v1154, 0.0
    %v1219 = vmax.f32 %v1155, 0.0
    %v1220 = vmax.f32 %v1156, 0.0
    %v1221 = vmax.f32 %v1157, 0.0
    %v1222 = vmax.f32 %v1158, 0.0
    %v1223 = vmax.f32 %v1159, 0.0
    %v1224 = vmax.f32 %v1160, 0.0
    %v1225 = vmax.f32 %v1161, 0.0
    %v1226 = vmax.f32 %v1162, 0.0
    %v1227 = vmax.f32 %v1163, 0.0
    %v1228 = vmax.f32 %v1164, 0.0
    %v1229 = vmax.f32 %v1165, 0.0
    %v1230 = vmax.f32 %v1166, 0.0
    %v1231 = vmax.f32 %v1167, 0.0
    %v1232 = vmax.f32 %v1168, 0.0
    %v1233 = vmax.f32 %v1169, 0.0
    %v1234 = vmax.f32 %v1170, 0.0
    %v1235 = vmax.f32 %v1171, 0.0
    %v1236 = vmax.f32 %v1172, 0.0
    %v1237 = vmax.f32 %v1173, 0.0
    %1302 = vrot.lane.b32.xlu0 %v1174, 16
    %v1303 = vpop.permute.xlu0 %1302
    %1304 = vrot.lane.b32.xlu0 %v1175, 16
    %v1305 = vpop.permute.xlu0 %1304
    %1306 = vrot.lane.b32.xlu0 %v1176, 16
    %v1307 = vpop.permute.xlu0 %1306
    %1308 = vrot.lane.b32.xlu0 %v1177, 16
    %v1309 = vpop.permute.xlu0 %1308
    %1310 = vrot.lane.b32.xlu0 %v1178, 16
    %v1311 = vpop.permute.xlu0 %1310
    %1312 = vrot.lane.b32.xlu0 %v1179, 16
    %v1313 = vpop.permute.xlu0 %1312
    %1314 = vrot.lane.b32.xlu0 %v1180, 16
    %v1315 = vpop.permute.xlu0 %1314
    %1316 = vrot.lane.b32.xlu0 %v1181, 16
    %v1317 = vpop.permute.xlu0 %1316
    %1318 = vrot.lane.b32.xlu0 %v1182, 16
    %v1319 = vpop.permute.xlu0 %1318
    %1320 = vrot.lane.b32.xlu0 %v1183, 16
    %v1321 = vpop.permute.xlu0 %1320
    %1322 = vrot.lane.b32.xlu0 %v1184, 16
    %v1323 = vpop.permute.xlu0 %1322
    %1324 = vrot.lane.b32.xlu0 %v1185, 16
    %v1325 = vpop.permute.xlu0 %1324
    %1326 = vrot.lane.b32.xlu0 %v1186, 16
    %v1327 = vpop.permute.xlu0 %1326
    %1328 = vrot.lane.b32.xlu0 %v1187, 16
    %v1329 = vpop.permute.xlu0 %1328
    %1330 = vrot.lane.b32.xlu0 %v1188, 16
    %v1331 = vpop.permute.xlu0 %1330
    %1332 = vrot.lane.b32.xlu0 %v1189, 16
    %v1333 = vpop.permute.xlu0 %1332
    %1334 = vrot.lane.b32.xlu0 %v1190, 16
    %v1335 = vpop.permute.xlu0 %1334
    %1336 = vrot.lane.b32.xlu0 %v1191, 16
    %v1337 = vpop.permute.xlu0 %1336
    %1338 = vrot.lane.b32.xlu0 %v1192, 16
    %v1339 = vpop.permute.xlu0 %1338
    %1340 = vrot.lane.b32.xlu0 %v1193, 16
    %v1341 = vpop.permute.xlu0 %1340
    %1342 = vrot.lane.b32.xlu0 %v1194, 16
    %v1343 = vpop.permute.xlu0 %1342
    %1344 = vrot.lane.b32.xlu0 %v1195, 16
    %v1345 = vpop.permute.xlu0 %1344
    %1346 = vrot.lane.b32.xlu0 %v1196, 16
    %v1347 = vpop.permute.xlu0 %1346
    %1348 = vrot.lane.b32.xlu0 %v1197, 16
    %v1349 = vpop.permute.xlu0 %1348
    %1350 = vrot.lane.b32.xlu0 %v1198, 16
    %v1351 = vpop.permute.xlu0 %1350
    %1352 = vrot.lane.b32.xlu0 %v1199, 16
    %v1353 = vpop.permute.xlu0 %1352
    %1354 = vrot.lane.b32.xlu0 %v1200, 16
    %v1355 = vpop.permute.xlu0 %1354
    %1356 = vrot.lane.b32.xlu0 %v1201, 16
    %v1357 = vpop.permute.xlu0 %1356
    %1358 = vrot.lane.b32.xlu0 %v1202, 16
    %v1359 = vpop.permute.xlu0 %1358
    %1360 = vrot.lane.b32.xlu0 %v1203, 16
    %v1361 = vpop.permute.xlu0 %1360
    %1362 = vrot.lane.b32.xlu0 %v1204, 16
    %v1363 = vpop.permute.xlu0 %1362
    %1364 = vrot.lane.b32.xlu0 %v1205, 16
    %v1365 = vpop.permute.xlu0 %1364
    %1366 = vrot.lane.b32.xlu0 %v1206, 16
    %v1367 = vpop.permute.xlu0 %1366
    %1368 = vrot.lane.b32.xlu0 %v1207, 16
    %v1369 = vpop.permute.xlu0 %1368
    %1370 = vrot.lane.b32.xlu0 %v1208, 16
    %v1371 = vpop.permute.xlu0 %1370
    %1372 = vrot.lane.b32.xlu0 %v1209, 16
    %v1373 = vpop.permute.xlu0 %1372
    %1374 = vrot.lane.b32.xlu0 %v1210, 16
    %v1375 = vpop.permute.xlu0 %1374
    %1376 = vrot.lane.b32.xlu0 %v1211, 16
    %v1377 = vpop.permute.xlu0 %1376
    %1378 = vrot.lane.b32.xlu0 %v1212, 16
    %v1379 = vpop.permute.xlu0 %1378
    %1380 = vrot.lane.b32.xlu0 %v1213, 16
    %v1381 = vpop.permute.xlu0 %1380
    %1382 = vrot.lane.b32.xlu0 %v1214, 16
    %v1383 = vpop.permute.xlu0 %1382
    %1384 = vrot.lane.b32.xlu0 %v1215, 16
    %v1385 = vpop.permute.xlu0 %1384
    %1386 = vrot.lane.b32.xlu0 %v1216, 16
    %v1387 = vpop.permute.xlu0 %1386
    %1388 = vrot.lane.b32.xlu0 %v1217, 16
    %v1389 = vpop.permute.xlu0 %1388
    %1390 = vrot.lane.b32.xlu0 %v1218, 16
    %v1391 = vpop.permute.xlu0 %1390
    %1392 = vrot.lane.b32.xlu0 %v1219, 16
    %v1393 = vpop.permute.xlu0 %1392
    %1394 = vrot.lane.b32.xlu0 %v1220, 16
    %v1395 = vpop.permute.xlu0 %1394
    %1396 = vrot.lane.b32.xlu0 %v1221, 16
    %v1397 = vpop.permute.xlu0 %1396
    %1398 = vrot.lane.b32.xlu0 %v1222, 16
    %v1399 = vpop.permute.xlu0 %1398
    %1400 = vrot.lane.b32.xlu0 %v1223, 16
    %v1401 = vpop.permute.xlu0 %1400
    %1402 = vrot.lane.b32.xlu0 %v1224, 16
    %v1403 = vpop.permute.xlu0 %1402
    %1404 = vrot.lane.b32.xlu0 %v1225, 16
    %v1405 = vpop.permute.xlu0 %1404
    %1406 = vrot.lane.b32.xlu0 %v1226, 16
    %v1407 = vpop.permute.xlu0 %1406
    %1408 = vrot.lane.b32.xlu0 %v1227, 16
    %v1409 = vpop.permute.xlu0 %1408
    %1410 = vrot.lane.b32.xlu0 %v1228, 16
    %v1411 = vpop.permute.xlu0 %1410
    %1412 = vrot.lane.b32.xlu0 %v1229, 16
    %v1413 = vpop.permute.xlu0 %1412
    %1414 = vrot.lane.b32.xlu0 %v1230, 16
    %v1415 = vpop.permute.xlu0 %1414
    %1416 = vrot.lane.b32.xlu0 %v1231, 16
    %v1417 = vpop.permute.xlu0 %1416
    %1418 = vrot.lane.b32.xlu0 %v1232, 16
    %v1419 = vpop.permute.xlu0 %1418
    %1420 = vrot.lane.b32.xlu0 %v1233, 16
    %v1421 = vpop.permute.xlu0 %1420
    %1422 = vrot.lane.b32.xlu0 %v1234, 16
    %v1423 = vpop.permute.xlu0 %1422
    %1424 = vrot.lane.b32.xlu0 %v1235, 16
    %v1425 = vpop.permute.xlu0 %1424
    %1426 = vrot.lane.b32.xlu0 %v1236, 16
    %v1427 = vpop.permute.xlu0 %1426
    %1428 = vrot.lane.b32.xlu0 %v1237, 16
    %v1429 = vpop.permute.xlu0 %1428
    %vm1494 = vcmask 195712
    %1495 = vst.msk [vmem:[#allocation2] sm:$0xff] %vm1494, %v1303
    %1496 = vst.msk [vmem:[#allocation2 + $0x8] sm:$0xff] %vm1494, %v1305
    %1497 = vst.msk [vmem:[#allocation2 + $0x10] sm:$0xff] %vm1494, %v1307
    %1498 = vst.msk [vmem:[#allocation2 + $0x18] sm:$0xff] %vm1494, %v1309
    %1499 = vst.msk [vmem:[#allocation2 + $0x20] sm:$0xff] %vm1494, %v1311
    %1500 = vst.msk [vmem:[#allocation2 + $0x28] sm:$0xff] %vm1494, %v1313
    %1501 = vst.msk [vmem:[#allocation2 + $0x30] sm:$0xff] %vm1494, %v1315
    %1502 = vst.msk [vmem:[#allocation2 + $0x38] sm:$0xff] %vm1494, %v1317
    %1503 = vst.msk [vmem:[#allocation2 + $0x40] sm:$0xff] %vm1494, %v1319
    %1504 = vst.msk [vmem:[#allocation2 + $0x48] sm:$0xff] %vm1494, %v1321
    %1505 = vst.msk [vmem:[#allocation2 + $0x50] sm:$0xff] %vm1494, %v1323
    %1506 = vst.msk [vmem:[#allocation2 + $0x58] sm:$0xff] %vm1494, %v1325
    %1507 = vst.msk [vmem:[#allocation2 + $0x60] sm:$0xff] %vm1494, %v1327
    %1508 = vst.msk [vmem:[#allocation2 + $0x68] sm:$0xff] %vm1494, %v1329
    %1509 = vst.msk [vmem:[#allocation2 + $0x70] sm:$0xff] %vm1494, %v1331
    %1510 = vst.msk [vmem:[#allocation2 + $0x78] sm:$0xff] %vm1494, %v1333
    %1511 = vst.msk [vmem:[#allocation2 + $0x80] sm:$0xff] %vm1494, %v1335
    %1512 = vst.msk [vmem:[#allocation2 + $0x88] sm:$0xff] %vm1494, %v1337
    %1513 = vst.msk [vmem:[#allocation2 + $0x90] sm:$0xff] %vm1494, %v1339
    %1514 = vst.msk [vmem:[#allocation2 + $0x98] sm:$0xff] %vm1494, %v1341
    %1515 = vst.msk [vmem:[#allocation2 + $0xa0] sm:$0xff] %vm1494, %v1343
    %1516 = vst.msk [vmem:[#allocation2 + $0xa8] sm:$0xff] %vm1494, %v1345
    %1517 = vst.msk [vmem:[#allocation2 + $0xb0] sm:$0xff] %vm1494, %v1347
    %1518 = vst.msk [vmem:[#allocation2 + $0xb8] sm:$0xff] %vm1494, %v1349
    %1519 = vst.msk [vmem:[#allocation2 + $0xc0] sm:$0xff] %vm1494, %v1351
    %1520 = vst.msk [vmem:[#allocation2 + $0xc8] sm:$0xff] %vm1494, %v1353
    %1521 = vst.msk [vmem:[#allocation2 + $0xd0] sm:$0xff] %vm1494, %v1355
    %1522 = vst.msk [vmem:[#allocation2 + $0xd8] sm:$0xff] %vm1494, %v1357
    %1523 = vst.msk [vmem:[#allocation2 + $0xe0] sm:$0xff] %vm1494, %v1359
    %1524 = vst.msk [vmem:[#allocation2 + $0xe8] sm:$0xff] %vm1494, %v1361
    %1525 = vst.msk [vmem:[#allocation2 + $0xf0] sm:$0xff] %vm1494, %v1363
    %1526 = vst.msk [vmem:[#allocation2 + $0xf8] sm:$0xff] %vm1494, %v1365
    %1527 = vst.msk [vmem:[#allocation2 + $0x100] sm:$0xff] %vm1494, %v1367
    %1528 = vst.msk [vmem:[#allocation2 + $0x108] sm:$0xff] %vm1494, %v1369
    %1529 = vst.msk [vmem:[#allocation2 + $0x110] sm:$0xff] %vm1494, %v1371
    %1530 = vst.msk [vmem:[#allocation2 + $0x118] sm:$0xff] %vm1494, %v1373
    %1531 = vst.msk [vmem:[#allocation2 + $0x120] sm:$0xff] %vm1494, %v1375
    %1532 = vst.msk [vmem:[#allocation2 + $0x128] sm:$0xff] %vm1494, %v1377
    %1533 = vst.msk [vmem:[#allocation2 + $0x130] sm:$0xff] %vm1494, %v1379
    %1534 = vst.msk [vmem:[#allocation2 + $0x138] sm:$0xff] %vm1494, %v1381
    %1535 = vst.msk [vmem:[#allocation2 + $0x140] sm:$0xff] %vm1494, %v1383
    %1536 = vst.msk [vmem:[#allocation2 + $0x148] sm:$0xff] %vm1494, %v1385
    %1537 = vst.msk [vmem:[#allocation2 + $0x150] sm:$0xff] %vm1494, %v1387
    %1538 = vst.msk [vmem:[#allocation2 + $0x158] sm:$0xff] %vm1494, %v1389
    %1539 = vst.msk [vmem:[#allocation2 + $0x160] sm:$0xff] %vm1494, %v1391
    %1540 = vst.msk [vmem:[#allocation2 + $0x168] sm:$0xff] %vm1494, %v1393
    %1541 = vst.msk [vmem:[#allocation2 + $0x170] sm:$0xff] %vm1494, %v1395
    %1542 = vst.msk [vmem:[#allocation2 + $0x178] sm:$0xff] %vm1494, %v1397
    %1543 = vst.msk [vmem:[#allocation2 + $0x180] sm:$0xff] %vm1494, %v1399
    %1544 = vst.msk [vmem:[#allocation2 + $0x188] sm:$0xff] %vm1494, %v1401
    %1545 = vst.msk [vmem:[#allocation2 + $0x190] sm:$0xff] %vm1494, %v1403
    %1546 = vst.msk [vmem:[#allocation2 + $0x198] sm:$0xff] %vm1494, %v1405
    %1547 = vst.msk [vmem:[#allocation2 + $0x1a0] sm:$0xff] %vm1494, %v1407
    %1548 = vst.msk [vmem:[#allocation2 + $0x1a8] sm:$0xff] %vm1494, %v1409
    %1549 = vst.msk [vmem:[#allocation2 + $0x1b0] sm:$0xff] %vm1494, %v1411
    %1550 = vst.msk [vmem:[#allocation2 + $0x1b8] sm:$0xff] %vm1494, %v1413
    %1551 = vst.msk [vmem:[#allocation2 + $0x1c0] sm:$0xff] %vm1494, %v1415
    %1552 = vst.msk [vmem:[#allocation2 + $0x1c8] sm:$0xff] %vm1494, %v1417
    %1553 = vst.msk [vmem:[#allocation2 + $0x1d0] sm:$0xff] %vm1494, %v1419
    %1554 = vst.msk [vmem:[#allocation2 + $0x1d8] sm:$0xff] %vm1494, %v1421
    %1555 = vst.msk [vmem:[#allocation2 + $0x1e0] sm:$0xff] %vm1494, %v1423
    %1556 = vst.msk [vmem:[#allocation2 + $0x1e8] sm:$0xff] %vm1494, %v1425
    %1557 = vst.msk [vmem:[#allocation2 + $0x1f0] sm:$0xff] %vm1494, %v1427
    %1558 = vst.msk [vmem:[#allocation2 + $0x1f8] sm:$0xff] %vm1494, %v1429
    %v1559 = vld [vmem:[%s3] sm:$0xff]
    %v1560 = vld [vmem:[%s3 + $0x8] sm:$0xff]
    %v1561 = vld [vmem:[%s3 + $0x10] sm:$0xff]
    %v1562 = vld [vmem:[%s3 + $0x18] sm:$0xff]
    %v1563 = vld [vmem:[%s3 + $0x20] sm:$0xff]
    %v1564 = vld [vmem:[%s3 + $0x28] sm:$0xff]
    %v1565 = vld [vmem:[%s3 + $0x30] sm:$0xff]
    %v1566 = vld [vmem:[%s3 + $0x38] sm:$0xff]
    %v1567 = vld [vmem:[%s3 + $0x40] sm:$0xff]
    %v1568 = vld [vmem:[%s3 + $0x48] sm:$0xff]
    %v1569 = vld [vmem:[%s3 + $0x50] sm:$0xff]
    %v1570 = vld [vmem:[%s3 + $0x58] sm:$0xff]
    %v1571 = vld [vmem:[%s3 + $0x60] sm:$0xff]
    %v1572 = vld [vmem:[%s3 + $0x68] sm:$0xff]
    %v1573 = vld [vmem:[%s3 + $0x70] sm:$0xff]
    %v1574 = vld [vmem:[%s3 + $0x78] sm:$0xff]
    %v1575 = vld [vmem:[%s3 + $0x80] sm:$0xff]
    %v1576 = vld [vmem:[%s3 + $0x88] sm:$0xff]
    %v1577 = vld [vmem:[%s3 + $0x90] sm:$0xff]
    %v1578 = vld [vmem:[%s3 + $0x98] sm:$0xff]
    %v1579 = vld [vmem:[%s3 + $0xa0] sm:$0xff]
    %v1580 = vld [vmem:[%s3 + $0xa8] sm:$0xff]
    %v1581 = vld [vmem:[%s3 + $0xb0] sm:$0xff]
    %v1582 = vld [vmem:[%s3 + $0xb8] sm:$0xff]
    %v1583 = vld [vmem:[%s3 + $0xc0] sm:$0xff]
    %v1584 = vld [vmem:[%s3 + $0xc8] sm:$0xff]
    %v1585 = vld [vmem:[%s3 + $0xd0] sm:$0xff]
    %v1586 = vld [vmem:[%s3 + $0xd8] sm:$0xff]
    %v1587 = vld [vmem:[%s3 + $0xe0] sm:$0xff]
    %v1588 = vld [vmem:[%s3 + $0xe8] sm:$0xff]
    %v1589 = vld [vmem:[%s3 + $0xf0] sm:$0xff]
    %v1590 = vld [vmem:[%s3 + $0xf8] sm:$0xff]
    %v1591 = vld [vmem:[%s3 + $0x100] sm:$0xff]
    %v1592 = vld [vmem:[%s3 + $0x108] sm:$0xff]
    %v1593 = vld [vmem:[%s3 + $0x110] sm:$0xff]
    %v1594 = vld [vmem:[%s3 + $0x118] sm:$0xff]
    %v1595 = vld [vmem:[%s3 + $0x120] sm:$0xff]
    %v1596 = vld [vmem:[%s3 + $0x128] sm:$0xff]
    %v1597 = vld [vmem:[%s3 + $0x130] sm:$0xff]
    %v1598 = vld [vmem:[%s3 + $0x138] sm:$0xff]
    %v1599 = vld [vmem:[%s3 + $0x140] sm:$0xff]
    %v1600 = vld [vmem:[%s3 + $0x148] sm:$0xff]
    %v1601 = vld [vmem:[%s3 + $0x150] sm:$0xff]
    %v1602 = vld [vmem:[%s3 + $0x158] sm:$0xff]
    %v1603 = vld [vmem:[%s3 + $0x160] sm:$0xff]
    %v1604 = vld [vmem:[%s3 + $0x168] sm:$0xff]
    %v1605 = vld [vmem:[%s3 + $0x170] sm:$0xff]
    %v1606 = vld [vmem:[%s3 + $0x178] sm:$0xff]
    %v1607 = vld [vmem:[%s3 + $0x180] sm:$0xff]
    %v1608 = vld [vmem:[%s3 + $0x188] sm:$0xff]
    %v1609 = vld [vmem:[%s3 + $0x190] sm:$0xff]
    %v1610 = vld [vmem:[%s3 + $0x198] sm:$0xff]
    %v1611 = vld [vmem:[%s3 + $0x1a0] sm:$0xff]
    %v1612 = vld [vmem:[%s3 + $0x1a8] sm:$0xff]
    %v1613 = vld [vmem:[%s3 + $0x1b0] sm:$0xff]
    %v1614 = vld [vmem:[%s3 + $0x1b8] sm:$0xff]
    %v1615 = vld [vmem:[%s3 + $0x1c0] sm:$0xff]
    %v1616 = vld [vmem:[%s3 + $0x1c8] sm:$0xff]
    %v1617 = vld [vmem:[%s3 + $0x1d0] sm:$0xff]
    %v1618 = vld [vmem:[%s3 + $0x1d8] sm:$0xff]
    %v1619 = vld [vmem:[%s3 + $0x1e0] sm:$0xff]
    %v1620 = vld [vmem:[%s3 + $0x1e8] sm:$0xff]
    %v1621 = vld [vmem:[%s3 + $0x1f0] sm:$0xff]
    %v1622 = vld [vmem:[%s3 + $0x1f8] sm:$0xff]
    %v1623 = vld [vmem:[%s7] sm:$0x1]
    %v1625 = vlaneseq
    %v1626 = vshrl.u32 %v1625, 7
    %v1627 = vsub.s32 0, %v1626
    %v1628 = vrot.slane %v1623, %v1627
    %v1630 = vmul.f32 %v1559, %v1628
    %v1631 = vmul.f32 %v1560, %v1628
    %v1632 = vmul.f32 %v1561, %v1628
    %v1633 = vmul.f32 %v1562, %v1628
    %v1634 = vmul.f32 %v1563, %v1628
    %v1635 = vmul.f32 %v1564, %v1628
    %v1636 = vmul.f32 %v1565, %v1628
    %v1637 = vmul.f32 %v1566, %v1628
    %v1638 = vmul.f32 %v1567, %v1628
    %v1639 = vmul.f32 %v1568, %v1628
    %v1640 = vmul.f32 %v1569, %v1628
    %v1641 = vmul.f32 %v1570, %v1628
    %v1642 = vmul.f32 %v1571, %v1628
    %v1643 = vmul.f32 %v1572, %v1628
    %v1644 = vmul.f32 %v1573, %v1628
    %v1645 = vmul.f32 %v1574, %v1628
    %v1646 = vmul.f32 %v1575, %v1628
    %v1647 = vmul.f32 %v1576, %v1628
    %v1648 = vmul.f32 %v1577, %v1628
    %v1649 = vmul.f32 %v1578, %v1628
    %v1650 = vmul.f32 %v1579, %v1628
    %v1651 = vmul.f32 %v1580, %v1628
    %v1652 = vmul.f32 %v1581, %v1628
    %v1653 = vmul.f32 %v1582, %v1628
    %v1654 = vmul.f32 %v1583, %v1628
    %v1655 = vmul.f32 %v1584, %v1628
    %v1656 = vmul.f32 %v1585, %v1628
    %v1657 = vmul.f32 %v1586, %v1628
    %v1658 = vmul.f32 %v1587, %v1628
    %v1659 = vmul.f32 %v1588, %v1628
    %v1660 = vmul.f32 %v1589, %v1628
    %v1661 = vmul.f32 %v1590, %v1628
    %v1662 = vmul.f32 %v1591, %v1628
    %v1663 = vmul.f32 %v1592, %v1628
    %v1664 = vmul.f32 %v1593, %v1628
    %v1665 = vmul.f32 %v1594, %v1628
    %v1666 = vmul.f32 %v1595, %v1628
    %v1667 = vmul.f32 %v1596, %v1628
    %v1668 = vmul.f32 %v1597, %v1628
    %v1669 = vmul.f32 %v1598, %v1628
    %v1670 = vmul.f32 %v1599, %v1628
    %v1671 = vmul.f32 %v1600, %v1628
    %v1672 = vmul.f32 %v1601, %v1628
    %v1673 = vmul.f32 %v1602, %v1628
    %v1674 = vmul.f32 %v1603, %v1628
    %v1675 = vmul.f32 %v1604, %v1628
    %v1676 = vmul.f32 %v1605, %v1628
    %v1677 = vmul.f32 %v1606, %v1628
    %v1678 = vmul.f32 %v1607, %v1628
    %v1679 = vmul.f32 %v1608, %v1628
    %v1680 = vmul.f32 %v1609, %v1628
    %v1681 = vmul.f32 %v1610, %v1628
    %v1682 = vmul.f32 %v1611, %v1628
    %v1683 = vmul.f32 %v1612, %v1628
    %v1684 = vmul.f32 %v1613, %v1628
    %v1685 = vmul.f32 %v1614, %v1628
    %v1686 = vmul.f32 %v1615, %v1628
    %v1687 = vmul.f32 %v1616, %v1628
    %v1688 = vmul.f32 %v1617, %v1628
    %v1689 = vmul.f32 %v1618, %v1628
    %v1690 = vmul.f32 %v1619, %v1628
    %v1691 = vmul.f32 %v1620, %v1628
    %v1692 = vmul.f32 %v1621, %v1628
    %v1693 = vmul.f32 %v1622, %v1628
    %v1694 = vld [vmem:[%s11] sm:$0x1]
    %v1696 = vlaneseq
    %v1697 = vshrl.u32 %v1696, 7
    %v1698 = vsub.s32 0, %v1697
    %v1699 = vrot.slane %v1694, %v1698
    %v1701 = vadd.f32 %v1630, %v1699
    %v1702 = vadd.f32 %v1631, %v1699
    %v1703 = vadd.f32 %v1632, %v1699
    %v1704 = vadd.f32 %v1633, %v1699
    %v1705 = vadd.f32 %v1634, %v1699
    %v1706 = vadd.f32 %v1635, %v1699
    %v1707 = vadd.f32 %v1636, %v1699
    %v1708 = vadd.f32 %v1637, %v1699
    %v1709 = vadd.f32 %v1638, %v1699
    %v1710 = vadd.f32 %v1639, %v1699
    %v1711 = vadd.f32 %v1640, %v1699
    %v1712 = vadd.f32 %v1641, %v1699
    %v1713 = vadd.f32 %v1642, %v1699
    %v1714 = vadd.f32 %v1643, %v1699
    %v1715 = vadd.f32 %v1644, %v1699
    %v1716 = vadd.f32 %v1645, %v1699
    %v1717 = vadd.f32 %v1646, %v1699
    %v1718 = vadd.f32 %v1647, %v1699
    %v1719 = vadd.f32 %v1648, %v1699
    %v1720 = vadd.f32 %v1649, %v1699
    %v1721 = vadd.f32 %v1650, %v1699
    %v1722 = vadd.f32 %v1651, %v1699
    %v1723 = vadd.f32 %v1652, %v1699
    %v1724 = vadd.f32 %v1653, %v1699
    %v1725 = vadd.f32 %v1654, %v1699
    %v1726 = vadd.f32 %v1655, %v1699
    %v1727 = vadd.f32 %v1656, %v1699
    %v1728 = vadd.f32 %v1657, %v1699
    %v1729 = vadd.f32 %v1658, %v1699
    %v1730 = vadd.f32 %v1659, %v1699
    %v1731 = vadd.f32 %v1660, %v1699
    %v1732 = vadd.f32 %v1661, %v1699
    %v1733 = vadd.f32 %v1662, %v1699
    %v1734 = vadd.f32 %v1663, %v1699
    %v1735 = vadd.f32 %v1664, %v1699
    %v1736 = vadd.f32 %v1665, %v1699
    %v1737 = vadd.f32 %v1666, %v1699
    %v1738 = vadd.f32 %v1667, %v1699
    %v1739 = vadd.f32 %v1668, %v1699
    %v1740 = vadd.f32 %v1669, %v1699
    %v1741 = vadd.f32 %v1670, %v1699
    %v1742 = vadd.f32 %v1671, %v1699
    %v1743 = vadd.f32 %v1672, %v1699
    %v1744 = vadd.f32 %v1673, %v1699
    %v1745 = vadd.f32 %v1674, %v1699
    %v1746 = vadd.f32 %v1675, %v1699
    %v1747 = vadd.f32 %v1676, %v1699
    %v1748 = vadd.f32 %v1677, %v1699
    %v1749 = vadd.f32 %v1678, %v1699
    %v1750 = vadd.f32 %v1679, %v1699
    %v1751 = vadd.f32 %v1680, %v1699
    %v1752 = vadd.f32 %v1681, %v1699
    %v1753 = vadd.f32 %v1682, %v1699
    %v1754 = vadd.f32 %v1683, %v1699
    %v1755 = vadd.f32 %v1684, %v1699
    %v1756 = vadd.f32 %v1685, %v1699
    %v1757 = vadd.f32 %v1686, %v1699
    %v1758 = vadd.f32 %v1687, %v1699
    %v1759 = vadd.f32 %v1688, %v1699
    %v1760 = vadd.f32 %v1689, %v1699
    %v1761 = vadd.f32 %v1690, %v1699
    %v1762 = vadd.f32 %v1691, %v1699
    %v1763 = vadd.f32 %v1692, %v1699
    %v1764 = vadd.f32 %v1693, %v1699
    %v1765 = vmax.f32 %v1701, 0.0
    %v1766 = vmax.f32 %v1702, 0.0
    %v1767 = vmax.f32 %v1703, 0.0
    %v1768 = vmax.f32 %v1704, 0.0
    %v1769 = vmax.f32 %v1705, 0.0
    %v1770 = vmax.f32 %v1706, 0.0
    %v1771 = vmax.f32 %v1707, 0.0
    %v1772 = vmax.f32 %v1708, 0.0
    %v1773 = vmax.f32 %v1709, 0.0
    %v1774 = vmax.f32 %v1710, 0.0
    %v1775 = vmax.f32 %v1711, 0.0
    %v1776 = vmax.f32 %v1712, 0.0
    %v1777 = vmax.f32 %v1713, 0.0
    %v1778 = vmax.f32 %v1714, 0.0
    %v1779 = vmax.f32 %v1715, 0.0
    %v1780 = vmax.f32 %v1716, 0.0
    %v1781 = vmax.f32 %v1717, 0.0
    %v1782 = vmax.f32 %v1718, 0.0
    %v1783 = vmax.f32 %v1719, 0.0
    %v1784 = vmax.f32 %v1720, 0.0
    %v1785 = vmax.f32 %v1721, 0.0
    %v1786 = vmax.f32 %v1722, 0.0
    %v1787 = vmax.f32 %v1723, 0.0
    %v1788 = vmax.f32 %v1724, 0.0
    %v1789 = vmax.f32 %v1725, 0.0
    %v1790 = vmax.f32 %v1726, 0.0
    %v1791 = vmax.f32 %v1727, 0.0
    %v1792 = vmax.f32 %v1728, 0.0
    %v1793 = vmax.f32 %v1729, 0.0
    %v1794 = vmax.f32 %v1730, 0.0
    %v1795 = vmax.f32 %v1731, 0.0
    %v1796 = vmax.f32 %v1732, 0.0
    %v1797 = vmax.f32 %v1733, 0.0
    %v1798 = vmax.f32 %v1734, 0.0
    %v1799 = vmax.f32 %v1735, 0.0
    %v1800 = vmax.f32 %v1736, 0.0
    %v1801 = vmax.f32 %v1737, 0.0
    %v1802 = vmax.f32 %v1738, 0.0
    %v1803 = vmax.f32 %v1739, 0.0
    %v1804 = vmax.f32 %v1740, 0.0
    %v1805 = vmax.f32 %v1741, 0.0
    %v1806 = vmax.f32 %v1742, 0.0
    %v1807 = vmax.f32 %v1743, 0.0
    %v1808 = vmax.f32 %v1744, 0.0
    %v1809 = vmax.f32 %v1745, 0.0
    %v1810 = vmax.f32 %v1746, 0.0
    %v1811 = vmax.f32 %v1747, 0.0
    %v1812 = vmax.f32 %v1748, 0.0
    %v1813 = vmax.f32 %v1749, 0.0
    %v1814 = vmax.f32 %v1750, 0.0
    %v1815 = vmax.f32 %v1751, 0.0
    %v1816 = vmax.f32 %v1752, 0.0
    %v1817 = vmax.f32 %v1753, 0.0
    %v1818 = vmax.f32 %v1754, 0.0
    %v1819 = vmax.f32 %v1755, 0.0
    %v1820 = vmax.f32 %v1756, 0.0
    %v1821 = vmax.f32 %v1757, 0.0
    %v1822 = vmax.f32 %v1758, 0.0
    %v1823 = vmax.f32 %v1759, 0.0
    %v1824 = vmax.f32 %v1760, 0.0
    %v1825 = vmax.f32 %v1761, 0.0
    %v1826 = vmax.f32 %v1762, 0.0
    %v1827 = vmax.f32 %v1763, 0.0
    %v1828 = vmax.f32 %v1764, 0.0
    %1893 = vrot.lane.b32.xlu0 %v1765, 24
    %v1894 = vpop.permute.xlu0 %1893
    %1895 = vrot.lane.b32.xlu0 %v1766, 24
    %v1896 = vpop.permute.xlu0 %1895
    %1897 = vrot.lane.b32.xlu0 %v1767, 24
    %v1898 = vpop.permute.xlu0 %1897
    %1899 = vrot.lane.b32.xlu0 %v1768, 24
    %v1900 = vpop.permute.xlu0 %1899
    %1901 = vrot.lane.b32.xlu0 %v1769, 24
    %v1902 = vpop.permute.xlu0 %1901
    %1903 = vrot.lane.b32.xlu0 %v1770, 24
    %v1904 = vpop.permute.xlu0 %1903
    %1905 = vrot.lane.b32.xlu0 %v1771, 24
    %v1906 = vpop.permute.xlu0 %1905
    %1907 = vrot.lane.b32.xlu0 %v1772, 24
    %v1908 = vpop.permute.xlu0 %1907
    %1909 = vrot.lane.b32.xlu0 %v1773, 24
    %v1910 = vpop.permute.xlu0 %1909
    %1911 = vrot.lane.b32.xlu0 %v1774, 24
    %v1912 = vpop.permute.xlu0 %1911
    %1913 = vrot.lane.b32.xlu0 %v1775, 24
    %v1914 = vpop.permute.xlu0 %1913
    %1915 = vrot.lane.b32.xlu0 %v1776, 24
    %v1916 = vpop.permute.xlu0 %1915
    %1917 = vrot.lane.b32.xlu0 %v1777, 24
    %v1918 = vpop.permute.xlu0 %1917
    %1919 = vrot.lane.b32.xlu0 %v1778, 24
    %v1920 = vpop.permute.xlu0 %1919
    %1921 = vrot.lane.b32.xlu0 %v1779, 24
    %v1922 = vpop.permute.xlu0 %1921
    %1923 = vrot.lane.b32.xlu0 %v1780, 24
    %v1924 = vpop.permute.xlu0 %1923
    %1925 = vrot.lane.b32.xlu0 %v1781, 24
    %v1926 = vpop.permute.xlu0 %1925
    %1927 = vrot.lane.b32.xlu0 %v1782, 24
    %v1928 = vpop.permute.xlu0 %1927
    %1929 = vrot.lane.b32.xlu0 %v1783, 24
    %v1930 = vpop.permute.xlu0 %1929
    %1931 = vrot.lane.b32.xlu0 %v1784, 24
    %v1932 = vpop.permute.xlu0 %1931
    %1933 = vrot.lane.b32.xlu0 %v1785, 24
    %v1934 = vpop.permute.xlu0 %1933
    %1935 = vrot.lane.b32.xlu0 %v1786, 24
    %v1936 = vpop.permute.xlu0 %1935
    %1937 = vrot.lane.b32.xlu0 %v1787, 24
    %v1938 = vpop.permute.xlu0 %1937
    %1939 = vrot.lane.b32.xlu0 %v1788, 24
    %v1940 = vpop.permute.xlu0 %1939
    %1941 = vrot.lane.b32.xlu0 %v1789, 24
    %v1942 = vpop.permute.xlu0 %1941
    %1943 = vrot.lane.b32.xlu0 %v1790, 24
    %v1944 = vpop.permute.xlu0 %1943
    %1945 = vrot.lane.b32.xlu0 %v1791, 24
    %v1946 = vpop.permute.xlu0 %1945
    %1947 = vrot.lane.b32.xlu0 %v1792, 24
    %v1948 = vpop.permute.xlu0 %1947
    %1949 = vrot.lane.b32.xlu0 %v1793, 24
    %v1950 = vpop.permute.xlu0 %1949
    %1951 = vrot.lane.b32.xlu0 %v1794, 24
    %v1952 = vpop.permute.xlu0 %1951
    %1953 = vrot.lane.b32.xlu0 %v1795, 24
    %v1954 = vpop.permute.xlu0 %1953
    %1955 = vrot.lane.b32.xlu0 %v1796, 24
    %v1956 = vpop.permute.xlu0 %1955
    %1957 = vrot.lane.b32.xlu0 %v1797, 24
    %v1958 = vpop.permute.xlu0 %1957
    %1959 = vrot.lane.b32.xlu0 %v1798, 24
    %v1960 = vpop.permute.xlu0 %1959
    %1961 = vrot.lane.b32.xlu0 %v1799, 24
    %v1962 = vpop.permute.xlu0 %1961
    %1963 = vrot.lane.b32.xlu0 %v1800, 24
    %v1964 = vpop.permute.xlu0 %1963
    %1965 = vrot.lane.b32.xlu0 %v1801, 24
    %v1966 = vpop.permute.xlu0 %1965
    %1967 = vrot.lane.b32.xlu0 %v1802, 24
    %v1968 = vpop.permute.xlu0 %1967
    %1969 = vrot.lane.b32.xlu0 %v1803, 24
    %v1970 = vpop.permute.xlu0 %1969
    %1971 = vrot.lane.b32.xlu0 %v1804, 24
    %v1972 = vpop.permute.xlu0 %1971
    %1973 = vrot.lane.b32.xlu0 %v1805, 24
    %v1974 = vpop.permute.xlu0 %1973
    %1975 = vrot.lane.b32.xlu0 %v1806, 24
    %v1976 = vpop.permute.xlu0 %1975
    %1977 = vrot.lane.b32.xlu0 %v1807, 24
    %v1978 = vpop.permute.xlu0 %1977
    %1979 = vrot.lane.b32.xlu0 %v1808, 24
    %v1980 = vpop.permute.xlu0 %1979
    %1981 = vrot.lane.b32.xlu0 %v1809, 24
    %v1982 = vpop.permute.xlu0 %1981
    %1983 = vrot.lane.b32.xlu0 %v1810, 24
    %v1984 = vpop.permute.xlu0 %1983
    %1985 = vrot.lane.b32.xlu0 %v1811, 24
    %v1986 = vpop.permute.xlu0 %1985
    %1987 = vrot.lane.b32.xlu0 %v1812, 24
    %v1988 = vpop.permute.xlu0 %1987
    %1989 = vrot.lane.b32.xlu0 %v1813, 24
    %v1990 = vpop.permute.xlu0 %1989
    %1991 = vrot.lane.b32.xlu0 %v1814, 24
    %v1992 = vpop.permute.xlu0 %1991
    %1993 = vrot.lane.b32.xlu0 %v1815, 24
    %v1994 = vpop.permute.xlu0 %1993
    %1995 = vrot.lane.b32.xlu0 %v1816, 24
    %v1996 = vpop.permute.xlu0 %1995
    %1997 = vrot.lane.b32.xlu0 %v1817, 24
    %v1998 = vpop.permute.xlu0 %1997
    %1999 = vrot.lane.b32.xlu0 %v1818, 24
    %v2000 = vpop.permute.xlu0 %1999
    %2001 = vrot.lane.b32.xlu0 %v1819, 24
    %v2002 = vpop.permute.xlu0 %2001
    %2003 = vrot.lane.b32.xlu0 %v1820, 24
    %v2004 = vpop.permute.xlu0 %2003
    %2005 = vrot.lane.b32.xlu0 %v1821, 24
    %v2006 = vpop.permute.xlu0 %2005
    %2007 = vrot.lane.b32.xlu0 %v1822, 24
    %v2008 = vpop.permute.xlu0 %2007
    %2009 = vrot.lane.b32.xlu0 %v1823, 24
    %v2010 = vpop.permute.xlu0 %2009
    %2011 = vrot.lane.b32.xlu0 %v1824, 24
    %v2012 = vpop.permute.xlu0 %2011
    %2013 = vrot.lane.b32.xlu0 %v1825, 24
    %v2014 = vpop.permute.xlu0 %2013
    %2015 = vrot.lane.b32.xlu0 %v1826, 24
    %v2016 = vpop.permute.xlu0 %2015
    %2017 = vrot.lane.b32.xlu0 %v1827, 24
    %v2018 = vpop.permute.xlu0 %2017
    %2019 = vrot.lane.b32.xlu0 %v1828, 24
    %v2020 = vpop.permute.xlu0 %2019
    %vm2085 = vcmask 261312
    %2086 = vst.msk [vmem:[#allocation2] sm:$0xff] %vm2085, %v1894
    %2087 = vst.msk [vmem:[#allocation2 + $0x8] sm:$0xff] %vm2085, %v1896
    %2088 = vst.msk [vmem:[#allocation2 + $0x10] sm:$0xff] %vm2085, %v1898
    %2089 = vst.msk [vmem:[#allocation2 + $0x18] sm:$0xff] %vm2085, %v1900
    %2090 = vst.msk [vmem:[#allocation2 + $0x20] sm:$0xff] %vm2085, %v1902
    %2091 = vst.msk [vmem:[#allocation2 + $0x28] sm:$0xff] %vm2085, %v1904
    %2092 = vst.msk [vmem:[#allocation2 + $0x30] sm:$0xff] %vm2085, %v1906
    %2093 = vst.msk [vmem:[#allocation2 + $0x38] sm:$0xff] %vm2085, %v1908
    %2094 = vst.msk [vmem:[#allocation2 + $0x40] sm:$0xff] %vm2085, %v1910
    %2095 = vst.msk [vmem:[#allocation2 + $0x48] sm:$0xff] %vm2085, %v1912
    %2096 = vst.msk [vmem:[#allocation2 + $0x50] sm:$0xff] %vm2085, %v1914
    %2097 = vst.msk [vmem:[#allocation2 + $0x58] sm:$0xff] %vm2085, %v1916
    %2098 = vst.msk [vmem:[#allocation2 + $0x60] sm:$0xff] %vm2085, %v1918
    %2099 = vst.msk [vmem:[#allocation2 + $0x68] sm:$0xff] %vm2085, %v1920
    %2100 = vst.msk [vmem:[#allocation2 + $0x70] sm:$0xff] %vm2085, %v1922
    %2101 = vst.msk [vmem:[#allocation2 + $0x78] sm:$0xff] %vm2085, %v1924
    %2102 = vst.msk [vmem:[#allocation2 + $0x80] sm:$0xff] %vm2085, %v1926
    %2103 = vst.msk [vmem:[#allocation2 + $0x88] sm:$0xff] %vm2085, %v1928
    %2104 = vst.msk [vmem:[#allocation2 + $0x90] sm:$0xff] %vm2085, %v1930
    %2105 = vst.msk [vmem:[#allocation2 + $0x98] sm:$0xff] %vm2085, %v1932
    %2106 = vst.msk [vmem:[#allocation2 + $0xa0] sm:$0xff] %vm2085, %v1934
    %2107 = vst.msk [vmem:[#allocation2 + $0xa8] sm:$0xff] %vm2085, %v1936
    %2108 = vst.msk [vmem:[#allocation2 + $0xb0] sm:$0xff] %vm2085, %v1938
    %2109 = vst.msk [vmem:[#allocation2 + $0xb8] sm:$0xff] %vm2085, %v1940
    %2110 = vst.msk [vmem:[#allocation2 + $0xc0] sm:$0xff] %vm2085, %v1942
    %2111 = vst.msk [vmem:[#allocation2 + $0xc8] sm:$0xff] %vm2085, %v1944
    %2112 = vst.msk [vmem:[#allocation2 + $0xd0] sm:$0xff] %vm2085, %v1946
    %2113 = vst.msk [vmem:[#allocation2 + $0xd8] sm:$0xff] %vm2085, %v1948
    %2114 = vst.msk [vmem:[#allocation2 + $0xe0] sm:$0xff] %vm2085, %v1950
    %2115 = vst.msk [vmem:[#allocation2 + $0xe8] sm:$0xff] %vm2085, %v1952
    %2116 = vst.msk [vmem:[#allocation2 + $0xf0] sm:$0xff] %vm2085, %v1954
    %2117 = vst.msk [vmem:[#allocation2 + $0xf8] sm:$0xff] %vm2085, %v1956
    %2118 = vst.msk [vmem:[#allocation2 + $0x100] sm:$0xff] %vm2085, %v1958
    %2119 = vst.msk [vmem:[#allocation2 + $0x108] sm:$0xff] %vm2085, %v1960
    %2120 = vst.msk [vmem:[#allocation2 + $0x110] sm:$0xff] %vm2085, %v1962
    %2121 = vst.msk [vmem:[#allocation2 + $0x118] sm:$0xff] %vm2085, %v1964
    %2122 = vst.msk [vmem:[#allocation2 + $0x120] sm:$0xff] %vm2085, %v1966
    %2123 = vst.msk [vmem:[#allocation2 + $0x128] sm:$0xff] %vm2085, %v1968
    %2124 = vst.msk [vmem:[#allocation2 + $0x130] sm:$0xff] %vm2085, %v1970
    %2125 = vst.msk [vmem:[#allocation2 + $0x138] sm:$0xff] %vm2085, %v1972
    %2126 = vst.msk [vmem:[#allocation2 + $0x140] sm:$0xff] %vm2085, %v1974
    %2127 = vst.msk [vmem:[#allocation2 + $0x148] sm:$0xff] %vm2085, %v1976
    %2128 = vst.msk [vmem:[#allocation2 + $0x150] sm:$0xff] %vm2085, %v1978
    %2129 = vst.msk [vmem:[#allocation2 + $0x158] sm:$0xff] %vm2085, %v1980
    %2130 = vst.msk [vmem:[#allocation2 + $0x160] sm:$0xff] %vm2085, %v1982
    %2131 = vst.msk [vmem:[#allocation2 + $0x168] sm:$0xff] %vm2085, %v1984
    %2132 = vst.msk [vmem:[#allocation2 + $0x170] sm:$0xff] %vm2085, %v1986
    %2133 = vst.msk [vmem:[#allocation2 + $0x178] sm:$0xff] %vm2085, %v1988
    %2134 = vst.msk [vmem:[#allocation2 + $0x180] sm:$0xff] %vm2085, %v1990
    %2135 = vst.msk [vmem:[#allocation2 + $0x188] sm:$0xff] %vm2085, %v1992
    %2136 = vst.msk [vmem:[#allocation2 + $0x190] sm:$0xff] %vm2085, %v1994
    %2137 = vst.msk [vmem:[#allocation2 + $0x198] sm:$0xff] %vm2085, %v1996
    %2138 = vst.msk [vmem:[#allocation2 + $0x1a0] sm:$0xff] %vm2085, %v1998
    %2139 = vst.msk [vmem:[#allocation2 + $0x1a8] sm:$0xff] %vm2085, %v2000
    %2140 = vst.msk [vmem:[#allocation2 + $0x1b0] sm:$0xff] %vm2085, %v2002
    %2141 = vst.msk [vmem:[#allocation2 + $0x1b8] sm:$0xff] %vm2085, %v2004
    %2142 = vst.msk [vmem:[#allocation2 + $0x1c0] sm:$0xff] %vm2085, %v2006
    %2143 = vst.msk [vmem:[#allocation2 + $0x1c8] sm:$0xff] %vm2085, %v2008
    %2144 = vst.msk [vmem:[#allocation2 + $0x1d0] sm:$0xff] %vm2085, %v2010
    %2145 = vst.msk [vmem:[#allocation2 + $0x1d8] sm:$0xff] %vm2085, %v2012
    %2146 = vst.msk [vmem:[#allocation2 + $0x1e0] sm:$0xff] %vm2085, %v2014
    %2147 = vst.msk [vmem:[#allocation2 + $0x1e8] sm:$0xff] %vm2085, %v2016
    %2148 = vst.msk [vmem:[#allocation2 + $0x1f0] sm:$0xff] %vm2085, %v2018
    %2149 = vst.msk [vmem:[#allocation2 + $0x1f8] sm:$0xff] %vm2085, %v2020
    // Predicated region
    $region50: #{inception_forward.11} parent=1 // pred_check
      _
    $region51: #{inception_forward.11} parent=1 // pred_check_branch
      %2151 = sbr.rel (0) target = $region53
    $region52: #{inception_forward.11} parent=1 // pred_region
      %s2153 = ssub.s32 8192, 8192
      %2154 = vsyncadd [#allocation3], %s2153
      %s2155 = sshll.u32 [#allocation2], 4
      %s2156 = int_to_ptr.vmem [resolvable:$true] %s2155
      %2161 = dma.vmem_to_hbm [thread:$0]  %s2156, 8192, %s12, [#allocation3], 128, 128, 8
    $region53: #{inception_forward.11} parent=1 // pred_fallthru
      _
    // Predicated region
    $region54: #{inception_forward.11} parent=1 // pred_check
      _
    $region55: #{inception_forward.11} parent=1 // pred_check_branch
      %2163 = sbr.rel (0) target = $region57
    $region56: #{inception_forward.11} parent=1 // pred_region
      %2164 = dma.done [#allocation3], 8192
    $region57: #{inception_forward.11} parent=1 // pred_fallthru
      _
    %2165 = vsyncpa [#allocation3], 1

// kernel: inception_forward.7
$region0: #{inception_forward.7}
  #allocation0 [shape = 'u32[]', space=smem, size = 0x4, offset = 0x4, fixed_abs, tag = 'smem constant byte address 0x4 - core index']
  #allocation1 [shape = 'u32[144,128]{1,0:T(1,128)}', space=vmem, size = 0x12000, scoped, tag = 'internal scratch']
  %s0 = inlined_call_operand.vmem [shape: f32[2,16,16,6], index: 0, kind: input, shape index: {}]
  %s1 = inlined_call_operand.vmem [shape: f32[1,6], index: 1, kind: input, shape index: {}]
  %s2 = inlined_call_operand.vmem [shape: f32[1,6], index: 2, kind: input, shape index: {}]
  %s3 = inlined_call_operand.vmem [shape: bf16[54,8], index: 3, kind: input, shape index: {}]
  %s4 = inlined_call_operand.vmem [shape: f32[1,8], index: 4, kind: input, shape index: {}]
  %s5 = inlined_call_operand.vmem [shape: f32[2,256,8], index: 5, kind: output, shape index: {0}]
  %s6 = inlined_call_operand.vmem [shape: f32[2,2,8], index: 6, kind: output, shape index: {1}]
  %7 = xla_tuple %s5, %s6
  %s8 = sld [smem:[#allocation0]]
  $region61: #{inception_forward.7} parent=0
    _
  %s10 = ssub.s32 1, %s8
  %s11 = scalar_select 0, %s10, %s8
  loop: start=0, step=1, limit=4
  $region2: #{inception_forward.7} parent=0 // loop_pre_header
    _
  $region3: #{inception_forward.7} parent=0 // loop_header
    %s13 = sphi 0, %s17
    %p14 = scmp.ge.s32.totalorder %s13, 4
    %s23 = sphi 0, %s25
    %s26 = sphi 0, %s23
    %s27 = sphi 0, %s26
    %s43 = sphi 0, %s27
    %s47 = sphi 0, %s47
    %s49 = sphi 0, %s47
    %s50 = sphi 0, %s49
    %s64 = sphi 0, %s50
    %s68 = sphi 0, %s68
    %s70 = sphi 0, %s68
    %s71 = sphi 0, %s70
    %s85 = sphi 0, %s71
    %s89 = sphi 0, %s89
    %s91 = sphi 0, %s89
    %s92 = sphi 0, %s91
    %s106 = sphi 0, %s92
    %s110 = sphi 0, %s110
    %s112 = sphi 0, %s110
    %s113 = sphi 0, %s112
    %s127 = sphi 0, %s113
    %s133 = sphi 0, %s135
    %s136 = sphi 0, %s133
    %s137 = sphi 0, %s136
    %s153 = sphi 0, %s137
    %s159 = sphi 0, %s161
    %s162 = sphi 0, %s159
    %s163 = sphi 0, %s162
    %s179 = sphi 0, %s163
  $region4: #{inception_forward.7} parent=0 // loop_header_branch
    %16 = sbr.rel (%p14) target = $region8
  $region5: #{inception_forward.7} parent=0 // loop_body
    %s18 = ssub.s32 %s13, 1
    %s19 = ssub.s32 %s13, 2
    %s20 = sadd.s32 %s13, 1
    %s21 = ssub.s32 %s13, %s20
    %p22 = scmp.eq.s32.totalorder %s21, 0
    %s24 = sadd.s32 %s23, 1
    %s25 = scalar_select %p22, %s23, %s24
    %p28 = pneg %p22
    %p29 = scmp.eq.s32.totalorder %s13, 1
    %p30 = por %p28, %p29
    %p31 = scmp.ne.s32.totalorder %s23, %s26
    %p32 = scmp.eq.s32.totalorder %s13, 0
    %p33 = por %p31, %p32
    %p34 = scmp.ne.s32.totalorder %s23, %s26
    %p35 = scmp.eq.s32.totalorder %s18, 1
    %p36 = por %p34, %p35
    %p37 = scmp.ne.s32.totalorder %s26, %s27
    %p38 = scmp.eq.s32.totalorder %s18, 0
    %p39 = por %p37, %p38
    %p40 = scmp.ne.s32.totalorder %s26, %s27
    %p41 = scmp.eq.s32.totalorder %s19, 1
    %p42 = por %p40, %p41
    %p44 = scmp.ne.s32.totalorder %s27, %s43
    %p45 = scmp.eq.s32.totalorder %s19, 0
    %p46 = por %p44, %p45
    %s48 = sadd.s32 %s47, 1
    %p51 = scmp.eq.s32.totalorder %s13, 1
    %p52 = scmp.ne.s32.totalorder %s47, %s49
    %p53 = scmp.eq.s32.totalorder %s13, 0
    %p54 = por %p52, %p53
    %p55 = scmp.ne.s32.totalorder %s47, %s49
    %p56 = scmp.eq.s32.totalorder %s18, 1
    %p57 = por %p55, %p56
    %p58 = scmp.ne.s32.totalorder %s49, %s50
    %p59 = scmp.eq.s32.totalorder %s18, 0
    %p60 = por %p58, %p59
    %p61 = scmp.ne.s32.totalorder %s49, %s50
    %p62 = scmp.eq.s32.totalorder %s19, 1
    %p63 = por %p61, %p62
    %p65 = scmp.ne.s32.totalorder %s50, %s64
    %p66 = scmp.eq.s32.totalorder %s19, 0
    %p67 = por %p65, %p66
    %s69 = sadd.s32 %s68, 1
    %p72 = scmp.eq.s32.totalorder %s13, 1
    %p73 = scmp.ne.s32.totalorder %s68, %s70
    %p74 = scmp.eq.s32.totalorder %s13, 0
    %p75 = por %p73, %p74
    %p76 = scmp.ne.s32.totalorder %s68, %s70
    %p77 = scmp.eq.s32.totalorder %s18, 1
    %p78 = por %p76, %p77
    %p79 = scmp.ne.s32.totalorder %s70, %s71
    %p80 = scmp.eq.s32.totalorder %s18, 0
    %p81 = por %p79, %p80
    %p82 = scmp.ne.s32.totalorder %s70, %s71
    %p83 = scmp.eq.s32.totalorder %s19, 1
    %p84 = por %p82, %p83
    %p86 = scmp.ne.s32.totalorder %s71, %s85
    %p87 = scmp.eq.s32.totalorder %s19, 0
    %p88 = por %p86, %p87
    %s90 = sadd.s32 %s89, 1
    %p93 = scmp.eq.s32.totalorder %s13, 1
    %p94 = scmp.ne.s32.totalorder %s89, %s91
    %p95 = scmp.eq.s32.totalorder %s13, 0
    %p96 = por %p94, %p95
    %p97 = scmp.ne.s32.totalorder %s89, %s91
    %p98 = scmp.eq.s32.totalorder %s18, 1
    %p99 = por %p97, %p98
    %p100 = scmp.ne.s32.totalorder %s91, %s92
    %p101 = scmp.eq.s32.totalorder %s18, 0
    %p102 = por %p100, %p101
    %p103 = scmp.ne.s32.totalorder %s91, %s92
    %p104 = scmp.eq.s32.totalorder %s19, 1
    %p105 = por %p103, %p104
    %p107 = scmp.ne.s32.totalorder %s92, %s106
    %p108 = scmp.eq.s32.totalorder %s19, 0
    %p109 = por %p107, %p108
    %s111 = sadd.s32 %s110, 1
    %p114 = scmp.eq.s32.totalorder %s13, 1
    %p115 = scmp.ne.s32.totalorder %s110, %s112
    %p116 = scmp.eq.s32.totalorder %s13, 0
    %p117 = por %p115, %p116
    %p118 = scmp.ne.s32.totalorder %s110, %s112
    %p119 = scmp.eq.s32.totalorder %s18, 1
    %p120 = por %p118, %p119
    %p121 = scmp.ne.s32.totalorder %s112, %s113
    %p122 = scmp.eq.s32.totalorder %s18, 0
    %p123 = por %p121, %p122
    %p124 = scmp.ne.s32.totalorder %s112, %s113
    %p125 = scmp.eq.s32.totalorder %s19, 1
    %p126 = por %p124, %p125
    %p128 = scmp.ne.s32.totalorder %s113, %s127
    %p129 = scmp.eq.s32.totalorder %s19, 0
    %p130 = por %p128, %p129
    %s131 = ssub.s32 %s13, %s20
    %p132 = scmp.eq.s32.totalorder %s131, 0
    %s134 = sadd.s32 %s133, 1
    %s135 = scalar_select %p132, %s133, %s134
    %p138 = pneg %p132
    %p139 = scmp.eq.s32.totalorder %s13, 1
    %p140 = por %p138, %p139
    %p141 = scmp.ne.s32.totalorder %s133, %s136
    %p142 = scmp.eq.s32.totalorder %s13, 0
    %p143 = por %p141, %p142
    %p144 = scmp.ne.s32.totalorder %s133, %s136
    %p145 = scmp.eq.s32.totalorder %s18, 1
    %p146 = por %p144, %p145
    %p147 = scmp.ne.s32.totalorder %s136, %s137
    %p148 = scmp.eq.s32.totalorder %s18, 0
    %p149 = por %p147, %p148
    %p150 = scmp.ne.s32.totalorder %s136, %s137
    %p151 = scmp.eq.s32.totalorder %s19, 1
    %p152 = por %p150, %p151
    %p154 = scmp.ne.s32.totalorder %s137, %s153
    %p155 = scmp.eq.s32.totalorder %s19, 0
    %p156 = por %p154, %p155
    %s157 = ssub.s32 %s13, %s20
    %p158 = scmp.eq.s32.totalorder %s157, 0
    %s160 = sadd.s32 %s159, 1
    %s161 = scalar_select %p158, %s159, %s160
    %p164 = pneg %p158
    %p165 = scmp.eq.s32.totalorder %s13, 1
    %p166 = por %p164, %p165
    %p167 = scmp.ne.s32.totalorder %s159, %s162
    %p168 = scmp.eq.s32.totalorder %s13, 0
    %p169 = por %p167, %p168
    %p170 = scmp.ne.s32.totalorder %s159, %s162
    %p171 = scmp.eq.s32.totalorder %s18, 1
    %p172 = por %p170, %p171
    %p173 = scmp.ne.s32.totalorder %s162, %s163
    %p174 = scmp.eq.s32.totalorder %s18, 0
    %p175 = por %p173, %p174
    %p176 = scmp.ne.s32.totalorder %s162, %s163
    %p177 = scmp.eq.s32.totalorder %s19, 1
    %p178 = por %p176, %p177
    %p180 = scmp.ne.s32.totalorder %s163, %s179
    %p181 = scmp.eq.s32.totalorder %s19, 0
    %p182 = por %p180, %p181
    %p183 = scmp.le.s32.totalorder 1, %s13
    %p184 = scmp.lt.s32.totalorder %s13, 3
    %p185 = pnand %p183, %p184
    %p186 = pneg %p185
    // Predicated region
    $region9: #{inception_forward.7} parent=5 // pred_check
      _
    $region10: #{inception_forward.7} parent=5 // pred_check_branch
      %188 = sbr.rel (%p185) target = $region12
    $region11: #{inception_forward.7} parent=5 // pred_region
      %s189 = ssub.s32 %s13, 1
      // Predicated region
      $region13: #{inception_forward.7} parent=11 // pred_check
        %p190 = pneg %p60
      $region14: #{inception_forward.7} parent=11 // pred_check_branch
        %192 = sbr.rel (%p190) target = $region16
      $region15: #{inception_forward.7} parent=11 // pred_region
        _
      $region16: #{inception_forward.7} parent=11 // pred_fallthru
        _
      // Predicated region
      $region17: #{inception_forward.7} parent=11 // pred_check
        %p193 = pneg %p81
      $region18: #{inception_forward.7} parent=11 // pred_check_branch
        %195 = sbr.rel (%p193) target = $region20
      $region19: #{inception_forward.7} parent=11 // pred_region
        _
      $region20: #{inception_forward.7} parent=11 // pred_fallthru
        _
      // Predicated region
      $region21: #{inception_forward.7} parent=11 // pred_check
        %p196 = pneg %p102
      $region22: #{inception_forward.7} parent=11 // pred_check_branch
        %198 = sbr.rel (%p196) target = $region24
      $region23: #{inception_forward.7} parent=11 // pred_region
        _
      $region24: #{inception_forward.7} parent=11 // pred_fallthru
        _
      // Predicated region
      $region25: #{inception_forward.7} parent=11 // pred_check
        %p199 = pneg %p123
      $region26: #{inception_forward.7} parent=11 // pred_check_branch
        %201 = sbr.rel (%p199) target = $region28
      $region27: #{inception_forward.7} parent=11 // pred_region
        _
      $region28: #{inception_forward.7} parent=11 // pred_fallthru
        _
    $region12: #{inception_forward.7} parent=5 // pred_fallthru
      _
    %p202 = scmp.lt.s32.totalorder %s13, 2
    // Predicated region
    $region29: #{inception_forward.7} parent=5 // pred_check
      %p203 = pneg %p202
    $region30: #{inception_forward.7} parent=5 // pred_check_branch
      %205 = sbr.rel (%p203) target = $region32
    $region31: #{inception_forward.7} parent=5 // pred_region
      // Predicated region
      $region33: #{inception_forward.7} parent=31 // pred_check
        %p206 = pneg %p33
      $region34: #{inception_forward.7} parent=31 // pred_check_branch
        %208 = sbr.rel (%p206) target = $region36
      $region35: #{inception_forward.7} parent=31 // pred_region
        %p209 = scmp.lt.s32.totalorder %s13, 1
        %s210 = scalar_select %p209, %s13, 1
        %s211 = smul.addr %s210, 32
        %s212 = smul.addr %s211, 8
        %s213 = scalar_lea.vmem %s0, %s212
      $region36: #{inception_forward.7} parent=31 // pred_fallthru
        _
    $region32: #{inception_forward.7} parent=5 // pred_fallthru
      _
    %p214 = scmp.le.s32.totalorder 1, %s13
    %p215 = scmp.lt.s32.totalorder %s13, 3
    %p216 = pnand %p214, %p215
    %p217 = pneg %p216
    // Predicated region
    $region37: #{inception_forward.7} parent=5 // pred_check
      _
    $region38: #{inception_forward.7} parent=5 // pred_check_branch
      %219 = sbr.rel (%p216) target = $region40
    $region39: #{inception_forward.7} parent=5 // pred_region
      %s220 = ssub.s32 %s13, 1
      %p221 = scmp.lt.s32.totalorder %s18, 1
      %s222 = scalar_select %p221, %s18, 1
      %s223 = smul.addr %s222, 32
      %s224 = smul.addr %s223, 8
      %s225 = scalar_lea.vmem %s0, %s224
      %p226 = pneg %p39
      %p227 = pneg %p36
      %p228 = pneg %p60
      %p229 = pneg %p57
      %p230 = pneg %p81
      %p231 = pneg %p78
      %p232 = pneg %p102
      %p233 = pneg %p99
      %p234 = pneg %p123
      %p235 = pneg %p120
      %p236 = pneg %p149
      %p237 = pneg %p146
      %p238 = scmp.lt.s32.totalorder %s18, 1
      %s239 = scalar_select %p238, %s18, 1
      %s240 = smul.addr %s239, 32
      %s241 = smul.addr %s240, 8
      %s242 = scalar_lea.vmem %s5, %s241
      %p243 = pneg %p175
      %p244 = pneg %p172
      %p245 = scmp.lt.s32.totalorder %s18, 1
      %s246 = scalar_select %p245, %s18, 1
      %s247 = smul.addr %s246, 2
      %s248 = scalar_lea.vmem %s6, %s247
      %p249 = scmp.lt.s32.totalorder %s18, 1
      %s250 = scalar_select %p249, %s18, 1
      %s251 = smul.addr %s250, 32
      %s252 = smul.addr %s251, 8
      %s253 = scalar_lea.vmem %s0, %s252
      %p254 = scmp.lt.s32.totalorder %s18, 1
      %s255 = scalar_select %p254, %s18, 1
      %s256 = smul.addr %s255, 32
      %s257 = smul.addr %s256, 8
      %s258 = scalar_lea.vmem %s5, %s257
      %p259 = scmp.lt.s32.totalorder %s18, 1
      %s260 = scalar_select %p259, %s18, 1
      %s261 = smul.addr %s260, 2
      %s262 = scalar_lea.vmem %s6, %s261
      %v264 = vld [vmem:[%s1] sm:$0x1]
      %v265 = vld [vmem:[%s2] sm:$0x1]
      %v266 = vld [vmem:[%s253] sm:$0xff]
      %v267 = vld [vmem:[%s253 + $0x8] sm:$0xff]
      %v268 = vld [vmem:[%s253 + $0x10] sm:$0xff]
      %v269 = vld [vmem:[%s253 + $0x18] sm:$0xff]
      %v270 = vld [vmem:[%s253 + $0x20] sm:$0xff]
      %v271 = vld [vmem:[%s253 + $0x28] sm:$0xff]
      %v272 = vld [vmem:[%s253 + $0x30] sm:$0xff]
      %v273 = vld [vmem:[%s253 + $0x38] sm:$0xff]
      %v274 = vld [vmem:[%s253 + $0x40] sm:$0xff]
      %v275 = vld [vmem:[%s253 + $0x48] sm:$0xff]
      %v276 = vld [vmem:[%s253 + $0x50] sm:$0xff]
      %v277 = vld [vmem:[%s253 + $0x58] sm:$0xff]
      %v278 = vld [vmem:[%s253 + $0x60] sm:$0xff]
      %v279 = vld [vmem:[%s253 + $0x68] sm:$0xff]
      %v280 = vld [vmem:[%s253 + $0x70] sm:$0xff]
      %v281 = vld [vmem:[%s253 + $0x78] sm:$0xff]
      %v282 = vld [vmem:[%s253 + $0x80] sm:$0xff]
      %v283 = vld [vmem:[%s253 + $0x88] sm:$0xff]
      %v284 = vld [vmem:[%s253 + $0x90] sm:$0xff]
      %v285 = vld [vmem:[%s253 + $0x98] sm:$0xff]
      %v286 = vld [vmem:[%s253 + $0xa0] sm:$0xff]
      %v287 = vld [vmem:[%s253 + $0xa8] sm:$0xff]
      %v288 = vld [vmem:[%s253 + $0xb0] sm:$0xff]
      %v289 = vld [vmem:[%s253 + $0xb8] sm:$0xff]
      %v290 = vld [vmem:[%s253 + $0xc0] sm:$0xff]
      %v291 = vld [vmem:[%s253 + $0xc8] sm:$0xff]
      %v292 = vld [vmem:[%s253 + $0xd0] sm:$0xff]
      %v293 = vld [vmem:[%s253 + $0xd8] sm:$0xff]
      %v294 = vld [vmem:[%s253 + $0xe0] sm:$0xff]
      %v295 = vld [vmem:[%s253 + $0xe8] sm:$0xff]
      %v296 = vld [vmem:[%s253 + $0xf0] sm:$0xff]
      %v297 = vld [vmem:[%s253 + $0xf8] sm:$0xff]
      %v299 = vlaneseq
      %v300 = vshrl.u32 %v299, 7
      %v301 = vsub.s32 0, %v300
      %v302 = vrot.slane %v264, %v301
      %v304 = vmul.f32 %v266, %v302
      %v305 = vmul.f32 %v267, %v302
      %v306 = vmul.f32 %v268, %v302
      %v307 = vmul.f32 %v269, %v302
      %v308 = vmul.f32 %v270, %v302
      %v309 = vmul.f32 %v271, %v302
      %v310 = vmul.f32 %v272, %v302
      %v311 = vmul.f32 %v273, %v302
      %v312 = vmul.f32 %v274, %v302
      %v313 = vmul.f32 %v275, %v302
      %v314 = vmul.f32 %v276, %v302
      %v315 = vmul.f32 %v277, %v302
      %v316 = vmul.f32 %v278, %v302
      %v317 = vmul.f32 %v279, %v302
      %v318 = vmul.f32 %v280, %v302
      %v319 = vmul.f32 %v281, %v302
      %v320 = vmul.f32 %v282, %v302
      %v321 = vmul.f32 %v283, %v302
      %v322 = vmul.f32 %v284, %v302
      %v323 = vmul.f32 %v285, %v302
      %v324 = vmul.f32 %v286, %v302
      %v325 = vmul.f32 %v287, %v302
      %v326 = vmul.f32 %v288, %v302
      %v327 = vmul.f32 %v289, %v302
      %v328 = vmul.f32 %v290, %v302
      %v329 = vmul.f32 %v291, %v302
      %v330 = vmul.f32 %v292, %v302
      %v331 = vmul.f32 %v293, %v302
      %v332 = vmul.f32 %v294, %v302
      %v333 = vmul.f32 %v295, %v302
      %v334 = vmul.f32 %v296, %v302
      %v335 = vmul.f32 %v297, %v302
      %v337 = vlaneseq
      %v338 = vshrl.u32 %v337, 7
      %v339 = vsub.s32 0, %v338
      %v340 = vrot.slane %v265, %v339
      %v342 = vadd.f32 %v304, %v340
      %v343 = vadd.f32 %v305, %v340
      %v344 = vadd.f32 %v306, %v340
      %v345 = vadd.f32 %v307, %v340
      %v346 = vadd.f32 %v308, %v340
      %v347 = vadd.f32 %v309, %v340
      %v348 = vadd.f32 %v310, %v340
      %v349 = vadd.f32 %v311, %v340
      %v350 = vadd.f32 %v312, %v340
      %v351 = vadd.f32 %v313, %v340
      %v352 = vadd.f32 %v314, %v340
      %v353 = vadd.f32 %v315, %v340
      %v354 = vadd.f32 %v316, %v340
      %v355 = vadd.f32 %v317, %v340
      %v356 = vadd.f32 %v318, %v340
      %v357 = vadd.f32 %v319, %v340
      %v358 = vadd.f32 %v320, %v340
      %v359 = vadd.f32 %v321, %v340
      %v360 = vadd.f32 %v322, %v340
      %v361 = vadd.f32 %v323, %v340
      %v362 = vadd.f32 %v324, %v340
      %v363 = vadd.f32 %v325, %v340
      %v364 = vadd.f32 %v326, %v340
      %v365 = vadd.f32 %v327, %v340
      %v366 = vadd.f32 %v328, %v340
      %v367 = vadd.f32 %v329, %v340
      %v368 = vadd.f32 %v330, %v340
      %v369 = vadd.f32 %v331, %v340
      %v370 = vadd.f32 %v332, %v340
      %v371 = vadd.f32 %v333, %v340
      %v372 = vadd.f32 %v334, %v340
      %v373 = vadd.f32 %v335, %v340
      %v374 = vmax.f32 %v342, 0.0
      %v375 = vmax.f32 %v343, 0.0
      %v376 = vmax.f32 %v344, 0.0
      %v377 = vmax.f32 %v345, 0.0
      %v378 = vmax.f32 %v346, 0.0
      %v379 = vmax.f32 %v347, 0.0
      %v380 = vmax.f32 %v348, 0.0
      %v381 = vmax.f32 %v349, 0.0
      %v382 = vmax.f32 %v350, 0.0
      %v383 = vmax.f32 %v351, 0.0
      %v384 = vmax.f32 %v352, 0.0
      %v385 = vmax.f32 %v353, 0.0
      %v386 = vmax.f32 %v354, 0.0
      %v387 = vmax.f32 %v355, 0.0
      %v388 = vmax.f32 %v356, 0.0
      %v389 = vmax.f32 %v357, 0.0
      %v390 = vmax.f32 %v358, 0.0
      %v391 = vmax.f32 %v359, 0.0
      %v392 = vmax.f32 %v360, 0.0
      %v393 = vmax.f32 %v361, 0.0
      %v394 = vmax.f32 %v362, 0.0
      %v395 = vmax.f32 %v363, 0.0
      %v396 = vmax.f32 %v364, 0.0
      %v397 = vmax.f32 %v365, 0.0
      %v398 = vmax.f32 %v366, 0.0
      %v399 = vmax.f32 %v367, 0.0
      %v400 = vmax.f32 %v368, 0.0
      %v401 = vmax.f32 %v369, 0.0
      %v402 = vmax.f32 %v370, 0.0
      %v403 = vmax.f32 %v371, 0.0
      %v404 = vmax.f32 %v372, 0.0
      %v405 = vmax.f32 %v373, 0.0
      %v406 = vpack.c.bf16 %v375, %v374
      %v407 = vpack.c.bf16 %v377, %v376
      %v408 = vpack.c.bf16 %v379, %v378
      %v409 = vpack.c.bf16 %v381, %v380
      %v410 = vpack.c.bf16 %v383, %v382
      %v411 = vpack.c.bf16 %v385, %v384
      %v412 = vpack.c.bf16 %v387, %v386
      %v413 = vpack.c.bf16 %v389, %v388
      %v414 = vpack.c.bf16 %v391, %v390
      %v415 = vpack.c.bf16 %v393, %v392
      %v416 = vpack.c.bf16 %v395, %v394
      %v417 = vpack.c.bf16 %v397, %v396
      %v418 = vpack.c.bf16 %v399, %v398
      %v419 = vpack.c.bf16 %v401, %v400
      %v420 = vpack.c.bf16 %v403, %v402
      %v421 = vpack.c.bf16 %v405, %v404
      %v423 = vshrl.u32 0, 16
      %v425 = vrot.slane %v423, 7
      %v426 = vshll.u32 0, 16
      %v428 = vor.u32 %v425, %v426
      %v430 = vshrl.u32 %v406, 16
      %v432 = vrot.slane %v430, 7
      %v433 = vshll.u32 %v406, 16
      %v435 = vor.u32 %v432, %v433
      %v437 = vshrl.u32 %v407, 16
      %v439 = vrot.slane %v437, 7
      %v440 = vshll.u32 %v407, 16
      %v442 = vor.u32 %v439, %v440
      %v444 = vshrl.u32 %v408, 16
      %v446 = vrot.slane %v444, 7
      %v447 = vshll.u32 %v408, 16
      %v449 = vor.u32 %v446, %v447
      %v451 = vshrl.u32 %v409, 16
      %v453 = vrot.slane %v451, 7
      %v454 = vshll.u32 %v409, 16
      %v456 = vor.u32 %v453, %v454
      %v458 = vshrl.u32 %v410, 16
      %v460 = vrot.slane %v458, 7
      %v461 = vshll.u32 %v410, 16
      %v463 = vor.u32 %v460, %v461
      %v465 = vshrl.u32 %v411, 16
      %v467 = vrot.slane %v465, 7
      %v468 = vshll.u32 %v411, 16
      %v470 = vor.u32 %v467, %v468
      %v472 = vshrl.u32 %v412, 16
      %v474 = vrot.slane %v472, 7
      %v475 = vshll.u32 %v412, 16
      %v477 = vor.u32 %v474, %v475
      %v479 = vshrl.u32 %v413, 16
      %v481 = vrot.slane %v479, 7
      %v482 = vshll.u32 %v413, 16
      %v484 = vor.u32 %v481, %v482
      %v486 = vshrl.u32 %v414, 16
      %v488 = vrot.slane %v486, 7
      %v489 = vshll.u32 %v414, 16
      %v491 = vor.u32 %v488, %v489
      %v493 = vshrl.u32 %v415, 16
      %v495 = vrot.slane %v493, 7
      %v496 = vshll.u32 %v415, 16
      %v498 = vor.u32 %v495, %v496
      %v500 = vshrl.u32 %v416, 16
      %v502 = vrot.slane %v500, 7
      %v503 = vshll.u32 %v416, 16
      %v505 = vor.u32 %v502, %v503
      %v507 = vshrl.u32 %v417, 16
      %v509 = vrot.slane %v507, 7
      %v510 = vshll.u32 %v417, 16
      %v512 = vor.u32 %v509, %v510
      %v514 = vshrl.u32 %v418, 16
      %v516 = vrot.slane %v514, 7
      %v517 = vshll.u32 %v418, 16
      %v519 = vor.u32 %v516, %v517
      %v521 = vshrl.u32 %v419, 16
      %v523 = vrot.slane %v521, 7
      %v524 = vshll.u32 %v419, 16
      %v526 = vor.u32 %v523, %v524
      %v528 = vshrl.u32 %v420, 16
      %v530 = vrot.slane %v528, 7
      %v531 = vshll.u32 %v420, 16
      %v533 = vor.u32 %v530, %v531
      %v535 = vshrl.u32 %v421, 16
      %v537 = vrot.slane %v535, 7
      %v538 = vshll.u32 %v421, 16
      %v540 = vor.u32 %v537, %v538
      %vm575 = vcmask 1040384
      %vm576 = vsmask.f32 256
      %vm577 = vmand %vm575, %vm576
      %v578 = vsel %vm577, 0, %v428
      %v579 = vsel %vm577, 0, %v435
      %v580 = vsel %vm577, 0, %v442
      %v581 = vsel %vm577, 0, %v449
      %v582 = vsel %vm577, 0, %v456
      %v583 = vsel %vm577, 0, %v463
      %v584 = vsel %vm577, 0, %v470
      %v585 = vsel %vm577, 0, %v477
      %v586 = vsel %vm577, 0, %v484
      %v587 = vsel %vm577, 0, %v491
      %v588 = vsel %vm577, 0, %v498
      %v589 = vsel %vm577, 0, %v505
      %v590 = vsel %vm577, 0, %v512
      %v591 = vsel %vm577, 0, %v519
      %v592 = vsel %vm577, 0, %v526
      %v593 = vsel %vm577, 0, %v533
      %v594 = vsel %vm577, 0, %v540
      %v595 = vsel %vm577, %v425, 0
      %v596 = vsel %vm577, %v432, 0
      %v597 = vsel %vm577, %v439, 0
      %v598 = vsel %vm577, %v446, 0
      %v599 = vsel %vm577, %v453, 0
      %v600 = vsel %vm577, %v460, 0
      %v601 = vsel %vm577, %v467, 0
      %v602 = vsel %vm577, %v474, 0
      %v603 = vsel %vm577, %v481, 0
      %v604 = vsel %vm577, %v488, 0
      %v605 = vsel %vm577, %v495, 0
      %v606 = vsel %vm577, %v502, 0
      %v607 = vsel %vm577, %v509, 0
      %v608 = vsel %vm577, %v516, 0
      %v609 = vsel %vm577, %v523, 0
      %v610 = vsel %vm577, %v530, 0
      %v611 = vsel %vm577, %v537, 0
      %vm612 = vsmask.f32 7424
      %v614 = vshrl.u32 %v578, 16
      %v616 = vshll.u32 %v578, 16
      %v618 = vrot.slane %v616, 1
      %v619 = vor.u32 %v614, %v618
      %v621 = vshll.u32 %v595, 16
      %v623 = vrot.slane %v621, 1
      %v624 = vsel %vm612, %v619, %v623
      %v626 = vshrl.u32 %v579, 16
      %v628 = vshll.u32 %v579, 16
      %v630 = vrot.slane %v628, 1
      %v631 = vor.u32 %v626, %v630
      %v633 = vshll.u32 %v596, 16
      %v635 = vrot.slane %v633, 1
      %v636 = vsel %vm612, %v631, %v635
      %v638 = vshrl.u32 %v580, 16
      %v640 = vshll.u32 %v580, 16
      %v642 = vrot.slane %v640, 1
      %v643 = vor.u32 %v638, %v642
      %v645 = vshll.u32 %v597, 16
      %v647 = vrot.slane %v645, 1
      %v648 = vsel %vm612, %v643, %v647
      %v650 = vshrl.u32 %v581, 16
      %v652 = vshll.u32 %v581, 16
      %v654 = vrot.slane %v652, 1
      %v655 = vor.u32 %v650, %v654
      %v657 = vshll.u32 %v598, 16
      %v659 = vrot.slane %v657, 1
      %v660 = vsel %vm612, %v655, %v659
      %v662 = vshrl.u32 %v582, 16
      %v664 = vshll.u32 %v582, 16
      %v666 = vrot.slane %v664, 1
      %v667 = vor.u32 %v662, %v666
      %v669 = vshll.u32 %v599, 16
      %v671 = vrot.slane %v669, 1
      %v672 = vsel %vm612, %v667, %v671
      %v674 = vshrl.u32 %v583, 16
      %v676 = vshll.u32 %v583, 16
      %v678 = vrot.slane %v676, 1
      %v679 = vor.u32 %v674, %v678
      %v681 = vshll.u32 %v600, 16
      %v683 = vrot.slane %v681, 1
      %v684 = vsel %vm612, %v679, %v683
      %v686 = vshrl.u32 %v584, 16
      %v688 = vshll.u32 %v584, 16
      %v690 = vrot.slane %v688, 1
      %v691 = vor.u32 %v686, %v690
      %v693 = vshll.u32 %v601, 16
      %v695 = vrot.slane %v693, 1
      %v696 = vsel %vm612, %v691, %v695
      %v698 = vshrl.u32 %v585, 16
      %v700 = vshll.u32 %v585, 16
      %v702 = vrot.slane %v700, 1
      %v703 = vor.u32 %v698, %v702
      %v705 = vshll.u32 %v602, 16
      %v707 = vrot.slane %v705, 1
      %v708 = vsel %vm612, %v703, %v707
      %v710 = vshrl.u32 %v586, 16
      %v712 = vshll.u32 %v586, 16
      %v714 = vrot.slane %v712, 1
      %v715 = vor.u32 %v710, %v714
      %v717 = vshll.u32 %v603, 16
      %v719 = vrot.slane %v717, 1
      %v720 = vsel %vm612, %v715, %v719
      %v722 = vshrl.u32 %v587, 16
      %v724 = vshll.u32 %v587, 16
      %v726 = vrot.slane %v724, 1
      %v727 = vor.u32 %v722, %v726
      %v729 = vshll.u32 %v604, 16
      %v731 = vrot.slane %v729, 1
      %v732 = vsel %vm612, %v727, %v731
      %v734 = vshrl.u32 %v588, 16
      %v736 = vshll.u32 %v588, 16
      %v738 = vrot.slane %v736, 1
      %v739 = vor.u32 %v734, %v738
      %v741 = vshll.u32 %v605, 16
      %v743 = vrot.slane %v741, 1
      %v744 = vsel %vm612, %v739, %v743
      %v746 = vshrl.u32 %v589, 16
      %v748 = vshll.u32 %v589, 16
      %v750 = vrot.slane %v748, 1
      %v751 = vor.u32 %v746, %v750
      %v753 = vshll.u32 %v606, 16
      %v755 = vrot.slane %v753, 1
      %v756 = vsel %vm612, %v751, %v755
      %v758 = vshrl.u32 %v590, 16
      %v760 = vshll.u32 %v590, 16
      %v762 = vrot.slane %v760, 1
      %v763 = vor.u32 %v758, %v762
      %v765 = vshll.u32 %v607, 16
      %v767 = vrot.slane %v765, 1
      %v768 = vsel %vm612, %v763, %v767
      %v770 = vshrl.u32 %v591, 16
      %v772 = vshll.u32 %v591, 16
      %v774 = vrot.slane %v772, 1
      %v775 = vor.u32 %v770, %v774
      %v777 = vshll.u32 %v608, 16
      %v779 = vrot.slane %v777, 1
      %v780 = vsel %vm612, %v775, %v779
      %v782 = vshrl.u32 %v592, 16
      %v784 = vshll.u32 %v592, 16
      %v786 = vrot.slane %v784, 1
      %v787 = vor.u32 %v782, %v786
      %v789 = vshll.u32 %v609, 16
      %v791 = vrot.slane %v789, 1
      %v792 = vsel %vm612, %v787, %v791
      %v794 = vshrl.u32 %v593, 16
      %v796 = vshll.u32 %v593, 16
      %v798 = vrot.slane %v796, 1
      %v799 = vor.u32 %v794, %v798
      %v801 = vshll.u32 %v610, 16
      %v803 = vrot.slane %v801, 1
      %v804 = vsel %vm612, %v799, %v803
      %vm837 = vcmask 1046528
      %v838 = vrot.slane %v578, 1
      %v839 = vrot.slane %v595, 1
      %v840 = vsel %vm837, %v838, %v839
      %v841 = vrot.slane %v579, 1
      %v842 = vrot.slane %v596, 1
      %v843 = vsel %vm837, %v841, %v842
      %v844 = vrot.slane %v580, 1
      %v845 = vrot.slane %v597, 1
      %v846 = vsel %vm837, %v844, %v845
      %v847 = vrot.slane %v581, 1
      %v848 = vrot.slane %v598, 1
      %v849 = vsel %vm837, %v847, %v848
      %v850 = vrot.slane %v582, 1
      %v851 = vrot.slane %v599, 1
      %v852 = vsel %vm837, %v850, %v851
      %v853 = vrot.slane %v583, 1
      %v854 = vrot.slane %v600, 1
      %v855 = vsel %vm837, %v853, %v854
      %v856 = vrot.slane %v584, 1
      %v857 = vrot.slane %v601, 1
      %v858 = vsel %vm837, %v856, %v857
      %v859 = vrot.slane %v585, 1
      %v860 = vrot.slane %v602, 1
      %v861 = vsel %vm837, %v859, %v860
      %v862 = vrot.slane %v586, 1
      %v863 = vrot.slane %v603, 1
      %v864 = vsel %vm837, %v862, %v863
      %v865 = vrot.slane %v587, 1
      %v866 = vrot.slane %v604, 1
      %v867 = vsel %vm837, %v865, %v866
      %v868 = vrot.slane %v588, 1
      %v869 = vrot.slane %v605, 1
      %v870 = vsel %vm837, %v868, %v869
      %v871 = vrot.slane %v589, 1
      %v872 = vrot.slane %v606, 1
      %v873 = vsel %vm837, %v871, %v872
      %v874 = vrot.slane %v590, 1
      %v875 = vrot.slane %v607, 1
      %v876 = vsel %vm837, %v874, %v875
      %v877 = vrot.slane %v591, 1
      %v878 = vrot.slane %v608, 1
      %v879 = vsel %vm837, %v877, %v878
      %v880 = vrot.slane %v592, 1
      %v881 = vrot.slane %v609, 1
      %v882 = vsel %vm837, %v880, %v881
      %v883 = vrot.slane %v593, 1
      %v884 = vrot.slane %v610, 1
      %v885 = vsel %vm837, %v883, %v884
      %v887 = vshrl.u32 %v594, 16
      %v889 = vshll.u32 %v594, 16
      %v891 = vrot.slane %v889, 1
      %v892 = vor.u32 %v887, %v891
      %v894 = vshll.u32 %v611, 16
      %v896 = vrot.slane %v894, 1
      %v897 = vsel %vm612, %v892, %v896
      %v900 = vrot.slane %v594, 1
      %v901 = vrot.slane %v611, 1
      %v902 = vsel %vm837, %v900, %v901
      %903 = vrot.lane.b32.xlu0 %v624, 6
      %v904 = vpop.permute.xlu0 %903
      %905 = vrot.lane.b32.xlu0 %v636, 6
      %v906 = vpop.permute.xlu0 %905
      %907 = vrot.lane.b32.xlu0 %v648, 6
      %v908 = vpop.permute.xlu0 %907
      %909 = vrot.lane.b32.xlu0 %v660, 6
      %v910 = vpop.permute.xlu0 %909
      %911 = vrot.lane.b32.xlu0 %v672, 6
      %v912 = vpop.permute.xlu0 %911
      %913 = vrot.lane.b32.xlu0 %v684, 6
      %v914 = vpop.permute.xlu0 %913
      %915 = vrot.lane.b32.xlu0 %v696, 6
      %v916 = vpop.permute.xlu0 %915
      %917 = vrot.lane.b32.xlu0 %v708, 6
      %v918 = vpop.permute.xlu0 %917
      %919 = vrot.lane.b32.xlu0 %v720, 6
      %v920 = vpop.permute.xlu0 %919
      %921 = vrot.lane.b32.xlu0 %v732, 6
      %v922 = vpop.permute.xlu0 %921
      %923 = vrot.lane.b32.xlu0 %v744, 6
      %v924 = vpop.permute.xlu0 %923
      %925 = vrot.lane.b32.xlu0 %v756, 6
      %v926 = vpop.permute.xlu0 %925
      %927 = vrot.lane.b32.xlu0 %v768, 6
      %v928 = vpop.permute.xlu0 %927
      %929 = vrot.lane.b32.xlu0 %v780, 6
      %v930 = vpop.permute.xlu0 %929
      %931 = vrot.lane.b32.xlu0 %v792, 6
      %v932 = vpop.permute.xlu0 %931
      %933 = vrot.lane.b32.xlu0 %v804, 6
      %v934 = vpop.permute.xlu0 %933
      %935 = vrot.lane.b32.xlu0 %v840, 12
      %v936 = vpop.permute.xlu0 %935
      %937 = vrot.lane.b32.xlu0 %v843, 12
      %v938 = vpop.permute.xlu0 %937
      %939 = vrot.lane.b32.xlu0 %v846, 12
      %v940 = vpop.permute.xlu0 %939
      %941 = vrot.lane.b32.xlu0 %v849, 12
      %v942 = vpop.permute.xlu0 %941
      %943 = vrot.lane.b32.xlu0 %v852, 12
      %v944 = vpop.permute.xlu0 %943
      %945 = vrot.lane.b32.xlu0 %v855, 12
      %v946 = vpop.permute.xlu0 %945
      %947 = vrot.lane.b32.xlu0 %v858, 12
      %v948 = vpop.permute.xlu0 %947
      %949 = vrot.lane.b32.xlu0 %v861, 12
      %v950 = vpop.permute.xlu0 %949
      %951 = vrot.lane.b32.xlu0 %v864, 12
      %v952 = vpop.permute.xlu0 %951
      %953 = vrot.lane.b32.xlu0 %v867, 12
      %v954 = vpop.permute.xlu0 %953
      %955 = vrot.lane.b32.xlu0 %v870, 12
      %v956 = vpop.permute.xlu0 %955
      %957 = vrot.lane.b32.xlu0 %v873, 12
      %v958 = vpop.permute.xlu0 %957
      %959 = vrot.lane.b32.xlu0 %v876, 12
      %v960 = vpop.permute.xlu0 %959
      %961 = vrot.lane.b32.xlu0 %v879, 12
      %v962 = vpop.permute.xlu0 %961
      %963 = vrot.lane.b32.xlu0 %v882, 12
      %v964 = vpop.permute.xlu0 %963
      %965 = vrot.lane.b32.xlu0 %v885, 12
      %v966 = vpop.permute.xlu0 %965
      %967 = vrot.lane.b32.xlu0 %v579, 18
      %v968 = vpop.permute.xlu0 %967
      %969 = vrot.lane.b32.xlu0 %v580, 18
      %v970 = vpop.permute.xlu0 %969
      %971 = vrot.lane.b32.xlu0 %v581, 18
      %v972 = vpop.permute.xlu0 %971
      %973 = vrot.lane.b32.xlu0 %v582, 18
      %v974 = vpop.permute.xlu0 %973
      %975 = vrot.lane.b32.xlu0 %v583, 18
      %v976 = vpop.permute.xlu0 %975
      %977 = vrot.lane.b32.xlu0 %v584, 18
      %v978 = vpop.permute.xlu0 %977
      %979 = vrot.lane.b32.xlu0 %v585, 18
      %v980 = vpop.permute.xlu0 %979
      %981 = vrot.lane.b32.xlu0 %v586, 18
      %v982 = vpop.permute.xlu0 %981
      %983 = vrot.lane.b32.xlu0 %v587, 18
      %v984 = vpop.permute.xlu0 %983
      %985 = vrot.lane.b32.xlu0 %v588, 18
      %v986 = vpop.permute.xlu0 %985
      %987 = vrot.lane.b32.xlu0 %v589, 18
      %v988 = vpop.permute.xlu0 %987
      %989 = vrot.lane.b32.xlu0 %v590, 18
      %v990 = vpop.permute.xlu0 %989
      %991 = vrot.lane.b32.xlu0 %v591, 18
      %v992 = vpop.permute.xlu0 %991
      %993 = vrot.lane.b32.xlu0 %v592, 18
      %v994 = vpop.permute.xlu0 %993
      %995 = vrot.lane.b32.xlu0 %v593, 18
      %v996 = vpop.permute.xlu0 %995
      %997 = vrot.lane.b32.xlu0 %v594, 18
      %v998 = vpop.permute.xlu0 %997
      %999 = vrot.lane.b32.xlu0 %v636, 24
      %v1000 = vpop.permute.xlu0 %999
      %1001 = vrot.lane.b32.xlu0 %v648, 24
      %v1002 = vpop.permute.xlu0 %1001
      %1003 = vrot.lane.b32.xlu0 %v660, 24
      %v1004 = vpop.permute.xlu0 %1003
      %1005 = vrot.lane.b32.xlu0 %v672, 24
      %v1006 = vpop.permute.xlu0 %1005
      %1007 = vrot.lane.b32.xlu0 %v684, 24
      %v1008 = vpop.permute.xlu0 %1007
      %1009 = vrot.lane.b32.xlu0 %v696, 24
      %v1010 = vpop.permute.xlu0 %1009
      %1011 = vrot.lane.b32.xlu0 %v708, 24
      %v1012 = vpop.permute.xlu0 %1011
      %1013 = vrot.lane.b32.xlu0 %v720, 24
      %v1014 = vpop.permute.xlu0 %1013
      %1015 = vrot.lane.b32.xlu0 %v732, 24
      %v1016 = vpop.permute.xlu0 %1015
      %1017 = vrot.lane.b32.xlu0 %v744, 24
      %v1018 = vpop.permute.xlu0 %1017
      %1019 = vrot.lane.b32.xlu0 %v756, 24
      %v1020 = vpop.permute.xlu0 %1019
      %1021 = vrot.lane.b32.xlu0 %v768, 24
      %v1022 = vpop.permute.xlu0 %1021
      %1023 = vrot.lane.b32.xlu0 %v780, 24
      %v1024 = vpop.permute.xlu0 %1023
      %1025 = vrot.lane.b32.xlu0 %v792, 24
      %v1026 = vpop.permute.xlu0 %1025
      %1027 = vrot.lane.b32.xlu0 %v804, 24
      %v1028 = vpop.permute.xlu0 %1027
      %1029 = vrot.lane.b32.xlu0 %v897, 24
      %v1030 = vpop.permute.xlu0 %1029
      %1031 = vrot.lane.b32.xlu0 %v843, 30
      %v1032 = vpop.permute.xlu0 %1031
      %1033 = vrot.lane.b32.xlu0 %v846, 30
      %v1034 = vpop.permute.xlu0 %1033
      %1035 = vrot.lane.b32.xlu0 %v849, 30
      %v1036 = vpop.permute.xlu0 %1035
      %1037 = vrot.lane.b32.xlu0 %v852, 30
      %v1038 = vpop.permute.xlu0 %1037
      %1039 = vrot.lane.b32.xlu0 %v855, 30
      %v1040 = vpop.permute.xlu0 %1039
      %1041 = vrot.lane.b32.xlu0 %v858, 30
      %v1042 = vpop.permute.xlu0 %1041
      %1043 = vrot.lane.b32.xlu0 %v861, 30
      %v1044 = vpop.permute.xlu0 %1043
      %1045 = vrot.lane.b32.xlu0 %v864, 30
      %v1046 = vpop.permute.xlu0 %1045
      %1047 = vrot.lane.b32.xlu0 %v867, 30
      %v1048 = vpop.permute.xlu0 %1047
      %1049 = vrot.lane.b32.xlu0 %v870, 30
      %v1050 = vpop.permute.xlu0 %1049
      %1051 = vrot.lane.b32.xlu0 %v873, 30
      %v1052 = vpop.permute.xlu0 %1051
      %1053 = vrot.lane.b32.xlu0 %v876, 30
      %v1054 = vpop.permute.xlu0 %1053
      %1055 = vrot.lane.b32.xlu0 %v879, 30
      %v1056 = vpop.permute.xlu0 %1055
      %1057 = vrot.lane.b32.xlu0 %v882, 30
      %v1058 = vpop.permute.xlu0 %1057
      %1059 = vrot.lane.b32.xlu0 %v885, 30
      %v1060 = vpop.permute.xlu0 %1059
      %1061 = vrot.lane.b32.xlu0 %v902, 30
      %v1062 = vpop.permute.xlu0 %1061
      %1063 = vrot.lane.b32.xlu0 %v580, 36
      %v1064 = vpop.permute.xlu0 %1063
      %1065 = vrot.lane.b32.xlu0 %v581, 36
      %v1066 = vpop.permute.xlu0 %1065
      %1067 = vrot.lane.b32.xlu0 %v582, 36
      %v1068 = vpop.permute.xlu0 %1067
      %1069 = vrot.lane.b32.xlu0 %v583, 36
      %v1070 = vpop.permute.xlu0 %1069
      %1071 = vrot.lane.b32.xlu0 %v584, 36
      %v1072 = vpop.permute.xlu0 %1071
      %1073 = vrot.lane.b32.xlu0 %v585, 36
      %v1074 = vpop.permute.xlu0 %1073
      %1075 = vrot.lane.b32.xlu0 %v586, 36
      %v1076 = vpop.permute.xlu0 %1075
      %1077 = vrot.lane.b32.xlu0 %v587, 36
      %v1078 = vpop.permute.xlu0 %1077
      %1079 = vrot.lane.b32.xlu0 %v588, 36
      %v1080 = vpop.permute.xlu0 %1079
      %1081 = vrot.lane.b32.xlu0 %v589, 36
      %v1082 = vpop.permute.xlu0 %1081
      %1083 = vrot.lane.b32.xlu0 %v590, 36
      %v1084 = vpop.permute.xlu0 %1083
      %1085 = vrot.lane.b32.xlu0 %v591, 36
      %v1086 = vpop.permute.xlu0 %1085
      %1087 = vrot.lane.b32.xlu0 %v592, 36
      %v1088 = vpop.permute.xlu0 %1087
      %1089 = vrot.lane.b32.xlu0 %v593, 36
      %v1090 = vpop.permute.xlu0 %1089
      %1091 = vrot.lane.b32.xlu0 %v594, 36
      %v1092 = vpop.permute.xlu0 %1091
      %1093 = vrot.lane.b32.xlu0 %v578, 36
      %v1094 = vpop.permute.xlu0 %1093
      %1095 = vrot.lane.b32.xlu0 %v648, 42
      %v1096 = vpop.permute.xlu0 %1095
      %1097 = vrot.lane.b32.xlu0 %v660, 42
      %v1098 = vpop.permute.xlu0 %1097
      %1099 = vrot.lane.b32.xlu0 %v672, 42
      %v1100 = vpop.permute.xlu0 %1099
      %1101 = vrot.lane.b32.xlu0 %v684, 42
      %v1102 = vpop.permute.xlu0 %1101
      %1103 = vrot.lane.b32.xlu0 %v696, 42
      %v1104 = vpop.permute.xlu0 %1103
      %1105 = vrot.lane.b32.xlu0 %v708, 42
      %v1106 = vpop.permute.xlu0 %1105
      %1107 = vrot.lane.b32.xlu0 %v720, 42
      %v1108 = vpop.permute.xlu0 %1107
      %1109 = vrot.lane.b32.xlu0 %v732, 42
      %v1110 = vpop.permute.xlu0 %1109
      %1111 = vrot.lane.b32.xlu0 %v744, 42
      %v1112 = vpop.permute.xlu0 %1111
      %1113 = vrot.lane.b32.xlu0 %v756, 42
      %v1114 = vpop.permute.xlu0 %1113
      %1115 = vrot.lane.b32.xlu0 %v768, 42
      %v1116 = vpop.permute.xlu0 %1115
      %1117 = vrot.lane.b32.xlu0 %v780, 42
      %v1118 = vpop.permute.xlu0 %1117
      %1119 = vrot.lane.b32.xlu0 %v792, 42
      %v1120 = vpop.permute.xlu0 %1119
      %1121 = vrot.lane.b32.xlu0 %v804, 42
      %v1122 = vpop.permute.xlu0 %1121
      %1123 = vrot.lane.b32.xlu0 %v897, 42
      %v1124 = vpop.permute.xlu0 %1123
      %1125 = vrot.lane.b32.xlu0 %v624, 42
      %v1126 = vpop.permute.xlu0 %1125
      %1127 = vrot.lane.b32.xlu0 %v846, 48
      %v1128 = vpop.permute.xlu0 %1127
      %1129 = vrot.lane.b32.xlu0 %v849, 48
      %v1130 = vpop.permute.xlu0 %1129
      %1131 = vrot.lane.b32.xlu0 %v852, 48
      %v1132 = vpop.permute.xlu0 %1131
      %1133 = vrot.lane.b32.xlu0 %v855, 48
      %v1134 = vpop.permute.xlu0 %1133
      %1135 = vrot.lane.b32.xlu0 %v858, 48
      %v1136 = vpop.permute.xlu0 %1135
      %1137 = vrot.lane.b32.xlu0 %v861, 48
      %v1138 = vpop.permute.xlu0 %1137
      %1139 = vrot.lane.b32.xlu0 %v864, 48
      %v1140 = vpop.permute.xlu0 %1139
      %1141 = vrot.lane.b32.xlu0 %v867, 48
      %v1142 = vpop.permute.xlu0 %1141
      %1143 = vrot.lane.b32.xlu0 %v870, 48
      %v1144 = vpop.permute.xlu0 %1143
      %1145 = vrot.lane.b32.xlu0 %v873, 48
      %v1146 = vpop.permute.xlu0 %1145
      %1147 = vrot.lane.b32.xlu0 %v876, 48
      %v1148 = vpop.permute.xlu0 %1147
      %1149 = vrot.lane.b32.xlu0 %v879, 48
      %v1150 = vpop.permute.xlu0 %1149
      %1151 = vrot.lane.b32.xlu0 %v882, 48
      %v1152 = vpop.permute.xlu0 %1151
      %1153 = vrot.lane.b32.xlu0 %v885, 48
      %v1154 = vpop.permute.xlu0 %1153
      %1155 = vrot.lane.b32.xlu0 %v902, 48
      %v1156 = vpop.permute.xlu0 %1155
      %1157 = vrot.lane.b32.xlu0 %v840, 48
      %v1158 = vpop.permute.xlu0 %1157
      %vm1159 = vcmask 48128
      %v1161 = vsel %vm1159, %v578, %v904
      %v1163 = vsel %vm1159, %v579, %v906
      %v1165 = vsel %vm1159, %v580, %v908
      %v1167 = vsel %vm1159, %v581, %v910
      %v1169 = vsel %vm1159, %v582, %v912
      %v1171 = vsel %vm1159, %v583, %v914
      %v1173 = vsel %vm1159, %v584, %v916
      %v1175 = vsel %vm1159, %v585, %v918
      %v1177 = vsel %vm1159, %v586, %v920
      %v1179 = vsel %vm1159, %v587, %v922
      %v1181 = vsel %vm1159, %v588, %v924
      %v1183 = vsel %vm1159, %v589, %v926
      %v1185 = vsel %vm1159, %v590, %v928
      %v1187 = vsel %vm1159, %v591, %v930
      %v1189 = vsel %vm1159, %v592, %v932
      %v1191 = vsel %vm1159, %v593, %v934
      %vm1192 = vcmask 97280
      %v1194 = vsel %vm1192, %v1161, %v936
      %v1196 = vsel %vm1192, %v1163, %v938
      %v1198 = vsel %vm1192, %v1165, %v940
      %v1200 = vsel %vm1192, %v1167, %v942
      %v1202 = vsel %vm1192, %v1169, %v944
      %v1204 = vsel %vm1192, %v1171, %v946
      %v1206 = vsel %vm1192, %v1173, %v948
      %v1208 = vsel %vm1192, %v1175, %v950
      %v1210 = vsel %vm1192, %v1177, %v952
      %v1212 = vsel %vm1192, %v1179, %v954
      %v1214 = vsel %vm1192, %v1181, %v956
      %v1216 = vsel %vm1192, %v1183, %v958
      %v1218 = vsel %vm1192, %v1185, %v960
      %v1220 = vsel %vm1192, %v1187, %v962
      %v1222 = vsel %vm1192, %v1189, %v964
      %v1224 = vsel %vm1192, %v1191, %v966
      %vm1225 = vcmask 146432
      %v1227 = vsel %vm1225, %v1194, %v968
      %v1229 = vsel %vm1225, %v1196, %v970
      %v1231 = vsel %vm1225, %v1198, %v972
      %v1233 = vsel %vm1225, %v1200, %v974
      %v1235 = vsel %vm1225, %v1202, %v976
      %v1237 = vsel %vm1225, %v1204, %v978
      %v1239 = vsel %vm1225, %v1206, %v980
      %v1241 = vsel %vm1225, %v1208, %v982
      %v1243 = vsel %vm1225, %v1210, %v984
      %v1245 = vsel %vm1225, %v1212, %v986
      %v1247 = vsel %vm1225, %v1214, %v988
      %v1249 = vsel %vm1225, %v1216, %v990
      %v1251 = vsel %vm1225, %v1218, %v992
      %v1253 = vsel %vm1225, %v1220, %v994
      %v1255 = vsel %vm1225, %v1222, %v996
      %v1257 = vsel %vm1225, %v1224, %v998
      %vm1258 = vcmask 195584
      %v1260 = vsel %vm1258, %v1227, %v1000
      %v1262 = vsel %vm1258, %v1229, %v1002
      %v1264 = vsel %vm1258, %v1231, %v1004
      %v1266 = vsel %vm1258, %v1233, %v1006
      %v1268 = vsel %vm1258, %v1235, %v1008
      %v1270 = vsel %vm1258, %v1237, %v1010
      %v1272 = vsel %vm1258, %v1239, %v1012
      %v1274 = vsel %vm1258, %v1241, %v1014
      %v1276 = vsel %vm1258, %v1243, %v1016
      %v1278 = vsel %vm1258, %v1245, %v1018
      %v1280 = vsel %vm1258, %v1247, %v1020
      %v1282 = vsel %vm1258, %v1249, %v1022
      %v1284 = vsel %vm1258, %v1251, %v1024
      %v1286 = vsel %vm1258, %v1253, %v1026
      %v1288 = vsel %vm1258, %v1255, %v1028
      %v1290 = vsel %vm1258, %v1257, %v1030
      %vm1291 = vcmask 244736
      %v1293 = vsel %vm1291, %v1260, %v1032
      %v1295 = vsel %vm1291, %v1262, %v1034
      %v1297 = vsel %vm1291, %v1264, %v1036
      %v1299 = vsel %vm1291, %v1266, %v1038
      %v1301 = vsel %vm1291, %v1268, %v1040
      %v1303 = vsel %vm1291, %v1270, %v1042
      %v1305 = vsel %vm1291, %v1272, %v1044
      %v1307 = vsel %vm1291, %v1274, %v1046
      %v1309 = vsel %vm1291, %v1276, %v1048
      %v1311 = vsel %vm1291, %v1278, %v1050
      %v1313 = vsel %vm1291, %v1280, %v1052
      %v1315 = vsel %vm1291, %v1282, %v1054
      %v1317 = vsel %vm1291, %v1284, %v1056
      %v1319 = vsel %vm1291, %v1286, %v1058
      %v1321 = vsel %vm1291, %v1288, %v1060
      %v1323 = vsel %vm1291, %v1290, %v1062
      %vm1324 = vcmask 293888
      %v1326 = vsel %vm1324, %v1293, %v1064
      %v1328 = vsel %vm1324, %v1295, %v1066
      %v1330 = vsel %vm1324, %v1297, %v1068
      %v1332 = vsel %vm1324, %v1299, %v1070
      %v1334 = vsel %vm1324, %v1301, %v1072
      %v1336 = vsel %vm1324, %v1303, %v1074
      %v1338 = vsel %vm1324, %v1305, %v1076
      %v1340 = vsel %vm1324, %v1307, %v1078
      %v1342 = vsel %vm1324, %v1309, %v1080
      %v1344 = vsel %vm1324, %v1311, %v1082
      %v1346 = vsel %vm1324, %v1313, %v1084
      %v1348 = vsel %vm1324, %v1315, %v1086
      %v1350 = vsel %vm1324, %v1317, %v1088
      %v1352 = vsel %vm1324, %v1319, %v1090
      %v1354 = vsel %vm1324, %v1321, %v1092
      %v1356 = vsel %vm1324, %v1323, %v1094
      %vm1357 = vcmask 343040
      %v1359 = vsel %vm1357, %v1326, %v1096
      %v1361 = vsel %vm1357, %v1328, %v1098
      %v1363 = vsel %vm1357, %v1330, %v1100
      %v1365 = vsel %vm1357, %v1332, %v1102
      %v1367 = vsel %vm1357, %v1334, %v1104
      %v1369 = vsel %vm1357, %v1336, %v1106
      %v1371 = vsel %vm1357, %v1338, %v1108
      %v1373 = vsel %vm1357, %v1340, %v1110
      %v1375 = vsel %vm1357, %v1342, %v1112
      %v1377 = vsel %vm1357, %v1344, %v1114
      %v1379 = vsel %vm1357, %v1346, %v1116
      %v1381 = vsel %vm1357, %v1348, %v1118
      %v1383 = vsel %vm1357, %v1350, %v1120
      %v1385 = vsel %vm1357, %v1352, %v1122
      %v1387 = vsel %vm1357, %v1354, %v1124
      %v1389 = vsel %vm1357, %v1356, %v1126
      %vm1390 = vcmask 392192
      %v1392 = vsel %vm1390, %v1359, %v1128
      %v1394 = vsel %vm1390, %v1361, %v1130
      %v1396 = vsel %vm1390, %v1363, %v1132
      %v1398 = vsel %vm1390, %v1365, %v1134
      %v1400 = vsel %vm1390, %v1367, %v1136
      %v1402 = vsel %vm1390, %v1369, %v1138
      %v1404 = vsel %vm1390, %v1371, %v1140
      %v1406 = vsel %vm1390, %v1373, %v1142
      %v1408 = vsel %vm1390, %v1375, %v1144
      %v1410 = vsel %vm1390, %v1377, %v1146
      %v1412 = vsel %vm1390, %v1379, %v1148
      %v1414 = vsel %vm1390, %v1381, %v1150
      %v1416 = vsel %vm1390, %v1383, %v1152
      %v1418 = vsel %vm1390, %v1385, %v1154
      %v1420 = vsel %vm1390, %v1387, %v1156
      %v1422 = vsel %vm1390, %v1389, %v1158
      %v1423 = vld [vmem:[%s3] sm:$0xf]
      %v1424 = vld [vmem:[%s3 + $0x4] sm:$0xf]
      %v1425 = vld [vmem:[%s3 + $0x8] sm:$0xf]
      %v1426 = vld [vmem:[%s3 + $0xc] sm:$0xf]
      %v1427 = vld [vmem:[%s3 + $0x10] sm:$0xf]
      %v1428 = vld [vmem:[%s3 + $0x14] sm:$0xf]
      %v1429 = vld [vmem:[%s3 + $0x18] sm:$0x7]
      %v1430 = vld [vmem:[%s4] sm:$0x1]
      %v1432 = vlaneseq
      %v1433 = vshrl.u32 %v1432, 7
      %v1434 = vsub.s32 0, %v1433
      %v1435 = vrot.slane %v1430, %v1434
      %v1444 = vunpack.c.l.b16 %v1423
      %v1445 = vunpack.c.l.b16 %v1424
      %v1446 = vunpack.c.l.b16 %v1425
      %v1447 = vunpack.c.l.b16 %v1426
      %v1448 = vunpack.c.l.b16 %v1427
      %v1449 = vunpack.c.l.b16 %v1428
      %v1450 = vunpack.c.l.b16 %v1429
      %v1451 = vpack.c.b16 %v1445, %v1444
      %v1452 = vpack.c.b16 %v1447, %v1446
      %v1453 = vpack.c.b16 %v1449, %v1448
      %v1454 = vpack.c.b16 %v1450, %v1450
      %vm1458 = vcmask 441344
      %v1459 = vsel %vm1458, %v1392, 0
      %v1461 = vsel %vm1458, %v1394, 0
      %v1463 = vsel %vm1458, %v1396, 0
      %v1465 = vsel %vm1458, %v1398, 0
      %v1467 = vsel %vm1458, %v1400, 0
      %v1469 = vsel %vm1458, %v1402, 0
      %v1471 = vsel %vm1458, %v1404, 0
      %v1473 = vsel %vm1458, %v1406, 0
      %v1475 = vsel %vm1458, %v1408, 0
      %v1477 = vsel %vm1458, %v1410, 0
      %v1479 = vsel %vm1458, %v1412, 0
      %v1481 = vsel %vm1458, %v1414, 0
      %v1483 = vsel %vm1458, %v1416, 0
      %v1485 = vsel %vm1458, %v1418, 0
      %v1487 = vsel %vm1458, %v1420, 0
      %v1489 = vsel %vm1458, %v1422, 0
      %vm1491 = vcmask 1042432
      %v1493 = vsel %vm1491, %v1454, 0
      %1495 = vmatprep.subr.bf16.mxu0 0
      %1496 = vmatpush1.bf16.msra.mxu0 %v1451
      %1497 = vmatprep.subr.bf16.mxu0 0
      %1498 = vmatpush1.bf16.msra.mxu0 %v1452
      %1499 = vmatprep.subr.bf16.mxu0 0
      %1500 = vmatpush1.bf16.msra.mxu0 %v1453
      %1501 = vmatprep.subr.bf16.mxu0 0
      %1502 = vmatpush1.bf16.msra.mxu0 %v1493
      %1503 = vmatprep.subr.bf16.mxu0 0
      %1504 = vmatpush1.bf16.msra.mxu0 0
      %1505 = vmatprep.subr.bf16.mxu0 0
      %1506 = vmatpush1.bf16.msra.mxu0 0
      %1507 = vmatprep.subr.bf16.mxu0 0
      %1508 = vmatpush1.bf16.msra.mxu0 0
      %1509 = vmatprep.subr.bf16.mxu0 0
      %1510 = vmatpush1.bf16.msra.mxu0 0
      %1511 = vmatprep.subr.bf16.mxu0 0
      %1512 = vmatpush1.bf16.msra.mxu0 0
      %1513 = vmatprep.subr.bf16.mxu0 0
      %1514 = vmatpush1.bf16.msra.mxu0 0
      %1515 = vmatprep.subr.bf16.mxu0 0
      %1516 = vmatpush1.bf16.msra.mxu0 0
      %1517 = vmatprep.subr.bf16.mxu0 0
      %1518 = vmatpush1.bf16.msra.mxu0 0
      %1519 = vmatprep.subr.bf16.mxu0 0
      %1520 = vmatpush1.bf16.msra.mxu0 0
      %1521 = vmatprep.subr.bf16.mxu0 0
      %1522 = vmatpush1.bf16.msra.mxu0 0
      %1523 = vmatprep.subr.bf16.mxu0 0
      %1524 = vmatpush1.bf16.msra.mxu0 0
      %1525 = vmatprep.subr.bf16.mxu0 0
      %1526 = vmatpush1.bf16.msra.mxu0 0
      %1527 = vmatprep.mubr.bf16.mxu0 0
      %1528 = vmatmul.mubr.bf16.gmra.mrb[0].mxu0 %v1459
      %v1529 = vpop.f32.mrb[0].mxu0
      %v1530 = vadd.f32 %v1435, %v1529
      %v1531 = vpop.f32.mrb[0].mxu0
      %v1532 = vpop.f32.mrb[0].mxu0
      %v1533 = vadd.f32 %v1435, %v1532
      %v1534 = vpop.f32.mrb[0].mxu0
      %1535 = vmatprep.mubr.bf16.mxu0 0
      %1536 = vmatmul.mubr.bf16.gmra.mrb[0].mxu0 %v1461
      %v1537 = vpop.f32.mrb[0].mxu0
      %v1538 = vadd.f32 %v1435, %v1537
      %v1539 = vpop.f32.mrb[0].mxu0
      %v1540 = vpop.f32.mrb[0].mxu0
      %v1541 = vadd.f32 %v1435, %v1540
      %v1542 = vpop.f32.mrb[0].mxu0
      %1543 = vmatprep.mubr.bf16.mxu0 0
      %1544 = vmatmul.mubr.bf16.gmra.mrb[0].mxu0 %v1463
      %v1545 = vpop.f32.mrb[0].mxu0
      %v1546 = vadd.f32 %v1435, %v1545
      %v1547 = vpop.f32.mrb[0].mxu0
      %v1548 = vpop.f32.mrb[0].mxu0
      %v1549 = vadd.f32 %v1435, %v1548
      %v1550 = vpop.f32.mrb[0].mxu0
      %1551 = vmatprep.mubr.bf16.mxu0 0
      %1552 = vmatmul.mubr.bf16.gmra.mrb[0].mxu0 %v1465
      %v1553 = vpop.f32.mrb[0].mxu0
      %v1554 = vadd.f32 %v1435, %v1553
      %v1555 = vpop.f32.mrb[0].mxu0
      %v1556 = vpop.f32.mrb[0].mxu0
      %v1557 = vadd.f32 %v1435, %v1556
      %v1558 = vpop.f32.mrb[0].mxu0
      %1559 = vmatprep.mubr.bf16.mxu0 0
      %1560 = vmatmul.mubr.bf16.gmra.mrb[0].mxu0 %v1467
      %v1561 = vpop.f32.mrb[0].mxu0
      %v1562 = vadd.f32 %v1435, %v1561
      %v1563 = vpop.f32.mrb[0].mxu0
      %v1564 = vpop.f32.mrb[0].mxu0
      %v1565 = vadd.f32 %v1435, %v1564
      %v1566 = vpop.f32.mrb[0].mxu0
      %1567 = vmatprep.mubr.bf16.mxu0 0
      %1568 = vmatmul.mubr.bf16.gmra.mrb[0].mxu0 %v1469
      %v1569 = vpop.f32.mrb[0].mxu0
      %v1570 = vadd.f32 %v1435, %v1569
      %v1571 = vpop.f32.mrb[0].mxu0
      %v1572 = vpop.f32.mrb[0].mxu0
      %v1573 = vadd.f32 %v1435, %v1572
      %v1574 = vpop.f32.mrb[0].mxu0
      %1575 = vmatprep.mubr.bf16.mxu0 0
      %1576 = vmatmul.mubr.bf16.gmra.mrb[0].mxu0 %v1471
      %v1577 = vpop.f32.mrb[0].mxu0
      %v1578 = vadd.f32 %v1435, %v1577
      %v1579 = vpop.f32.mrb[0].mxu0
      %v1580 = vpop.f32.mrb[0].mxu0
      %v1581 = vadd.f32 %v1435, %v1580
      %v1582 = vpop.f32.mrb[0].mxu0
      %1583 = vmatprep.mubr.bf16.mxu0 0
      %1584 = vmatmul.mubr.bf16.gmra.mrb[0].mxu0 %v1473
      %v1585 = vpop.f32.mrb[0].mxu0
      %v1586 = vadd.f32 %v1435, %v1585
      %v1587 = vpop.f32.mrb[0].mxu0
      %v1588 = vpop.f32.mrb[0].mxu0
      %v1589 = vadd.f32 %v1435, %v1588
      %v1590 = vpop.f32.mrb[0].mxu0
      %1591 = vmatprep.mubr.bf16.mxu0 0
      %1592 = vmatmul.mubr.bf16.gmra.mrb[0].mxu0 %v1475
      %v1593 = vpop.f32.mrb[0].mxu0
      %v1594 = vadd.f32 %v1435, %v1593
      %v1595 = vpop.f32.mrb[0].mxu0
      %v1596 = vpop.f32.mrb[0].mxu0
      %v1597 = vadd.f32 %v1435, %v1596
      %v1598 = vpop.f32.mrb[0].mxu0
      %1599 = vmatprep.mubr.bf16.mxu0 0
      %1600 = vmatmul.mubr.bf16.gmra.mrb[0].mxu0 %v1477
      %v1601 = vpop.f32.mrb[0].mxu0
      %v1602 = vadd.f32 %v1435, %v1601
      %v1603 = vpop.f32.mrb[0].mxu0
      %v1604 = vpop.f32.mrb[0].mxu0
      %v1605 = vadd.f32 %v1435, %v1604
      %v1606 = vpop.f32.mrb[0].mxu0
      %1607 = vmatprep.mubr.bf16.mxu0 0
      %1608 = vmatmul.mubr.bf16.gmra.mrb[0].mxu0 %v1479
      %v1609 = vpop.f32.mrb[0].mxu0
      %v1610 = vadd.f32 %v1435, %v1609
      %v1611 = vpop.f32.mrb[0].mxu0
      %v1612 = vpop.f32.mrb[0].mxu0
      %v1613 = vadd.f32 %v1435, %v1612
      %v1614 = vpop.f32.mrb[0].mxu0
      %1615 = vmatprep.mubr.bf16.mxu0 0
      %1616 = vmatmul.mubr.bf16.gmra.mrb[0].mxu0 %v1481
      %v1617 = vpop.f32.mrb[0].mxu0
      %v1618 = vadd.f32 %v1435, %v1617
      %v1619 = vpop.f32.mrb[0].mxu0
      %v1620 = vpop.f32.mrb[0].mxu0
      %v1621 = vadd.f32 %v1435, %v1620
      %v1622 = vpop.f32.mrb[0].mxu0
      %1623 = vmatprep.mubr.bf16.mxu0 0
      %1624 = vmatmul.mubr.bf16.gmra.mrb[0].mxu0 %v1483
      %v1625 = vpop.f32.mrb[0].mxu0
      %v1626 = vadd.f32 %v1435, %v1625
      %v1627 = vpop.f32.mrb[0].mxu0
      %v1628 = vpop.f32.mrb[0].mxu0
      %v1629 = vadd.f32 %v1435, %v1628
      %v1630 = vpop.f32.mrb[0].mxu0
      %1631 = vmatprep.mubr.bf16.mxu0 0
      %1632 = vmatmul.mubr.bf16.gmra.mrb[0].mxu0 %v1485
      %v1633 = vpop.f32.mrb[0].mxu0
      %v1634 = vadd.f32 %v1435, %v1633
      %v1635 = vpop.f32.mrb[0].mxu0
      %v1636 = vpop.f32.mrb[0].mxu0
      %v1637 = vadd.f32 %v1435, %v1636
      %v1638 = vpop.f32.mrb[0].mxu0
      %1639 = vmatprep.mubr.bf16.mxu0 0
      %1640 = vmatmul.mubr.bf16.gmra.mrb[0].mxu0 %v1487
      %v1641 = vpop.f32.mrb[0].mxu0
      %v1642 = vadd.f32 %v1435, %v1641
      %v1643 = vpop.f32.mrb[0].mxu0
      %v1644 = vpop.f32.mrb[0].mxu0
      %v1645 = vadd.f32 %v1435, %v1644
      %v1646 = vpop.f32.mrb[0].mxu0
      %1647 = vmatprep.mubr.bf16.mxu0 0
      %1648 = vmatmul.mubr.bf16.gmra.mrb[0].mxu0 %v1489
      %v1649 = vpop.f32.mrb[0].mxu0
      %v1650 = vadd.f32 %v1435, %v1649
      %v1651 = vpop.f32.mrb[0].mxu0
      %v1652 = vpop.f32.mrb[0].mxu0
      %v1653 = vadd.f32 %v1435, %v1652
      %v1654 = vpop.f32.mrb[0].mxu0
      %1655 = vdwg.mxu0
      %vm1656 = vcmask 64512
      %1657 = vst.msk [vmem:[%s258] sm:$0xff] %vm1656, %v1530
      %1658 = vst.msk [vmem:[%s258 + $0x8] sm:$0xff] %vm1656, %v1533
      %1659 = vst.msk [vmem:[%s258 + $0x10] sm:$0xff] %vm1656, %v1538
      %1660 = vst.msk [vmem:[%s258 + $0x18] sm:$0xff] %vm1656, %v1541
      %1661 = vst.msk [vmem:[%s258 + $0x20] sm:$0xff] %vm1656, %v1546
      %1662 = vst.msk [vmem:[%s258 + $0x28] sm:$0xff] %vm1656, %v1549
      %1663 = vst.msk [vmem:[%s258 + $0x30] sm:$0xff] %vm1656, %v1554
      %1664 = vst.msk [vmem:[%s258 + $0x38] sm:$0xff] %vm1656, %v1557
      %1665 = vst.msk [vmem:[%s258 + $0x40] sm:$0xff] %vm1656, %v1562
      %1666 = vst.msk [vmem:[%s258 + $0x48] sm:$0xff] %vm1656, %v1565
      %1667 = vst.msk [vmem:[%s258 + $0x50] sm:$0xff] %vm1656, %v1570
      %1668 = vst.msk [vmem:[%s258 + $0x58] sm:$0xff] %vm1656, %v1573
      %1669 = vst.msk [vmem:[%s258 + $0x60] sm:$0xff] %vm1656, %v1578
      %1670 = vst.msk [vmem:[%s258 + $0x68] sm:$0xff] %vm1656, %v1581
      %1671 = vst.msk [vmem:[%s258 + $0x70] sm:$0xff] %vm1656, %v1586
      %1672 = vst.msk [vmem:[%s258 + $0x78] sm:$0xff] %vm1656, %v1589
      %1673 = vst.msk [vmem:[%s258 + $0x80] sm:$0xff] %vm1656, %v1594
      %1674 = vst.msk [vmem:[%s258 + $0x88] sm:$0xff] %vm1656, %v1597
      %1675 = vst.msk [vmem:[%s258 + $0x90] sm:$0xff] %vm1656, %v1602
      %1676 = vst.msk [vmem:[%s258 + $0x98] sm:$0xff] %vm1656, %v1605
      %1677 = vst.msk [vmem:[%s258 + $0xa0] sm:$0xff] %vm1656, %v1610
      %1678 = vst.msk [vmem:[%s258 + $0xa8] sm:$0xff] %vm1656, %v1613
      %1679 = vst.msk [vmem:[%s258 + $0xb0] sm:$0xff] %vm1656, %v1618
      %1680 = vst.msk [vmem:[%s258 + $0xb8] sm:$0xff] %vm1656, %v1621
      %1681 = vst.msk [vmem:[%s258 + $0xc0] sm:$0xff] %vm1656, %v1626
      %1682 = vst.msk [vmem:[%s258 + $0xc8] sm:$0xff] %vm1656, %v1629
      %1683 = vst.msk [vmem:[%s258 + $0xd0] sm:$0xff] %vm1656, %v1634
      %1684 = vst.msk [vmem:[%s258 + $0xd8] sm:$0xff] %vm1656, %v1637
      %1685 = vst.msk [vmem:[%s258 + $0xe0] sm:$0xff] %vm1656, %v1642
      %1686 = vst.msk [vmem:[%s258 + $0xe8] sm:$0xff] %vm1656, %v1645
      %1687 = vst.msk [vmem:[%s258 + $0xf0] sm:$0xff] %vm1656, %v1650
      %1688 = vst.msk [vmem:[%s258 + $0xf8] sm:$0xff] %vm1656, %v1653
      %v1689 = vsel %vm1656, %v1530, 0.0
      %v1690 = vsel %vm1656, %v1533, 0.0
      %v1691 = vadd.f32 %v1689, %v1690
      %v1692 = vsel %vm1656, %v1538, 0.0
      %v1693 = vadd.f32 %v1691, %v1692
      %v1694 = vsel %vm1656, %v1541, 0.0
      %v1695 = vadd.f32 %v1693, %v1694
      %v1696 = vsel %vm1656, %v1546, 0.0
      %v1697 = vadd.f32 %v1695, %v1696
      %v1698 = vsel %vm1656, %v1549, 0.0
      %v1699 = vadd.f32 %v1697, %v1698
      %v1700 = vsel %vm1656, %v1554, 0.0
      %v1701 = vadd.f32 %v1699, %v1700
      %v1702 = vsel %vm1656, %v1557, 0.0
      %v1703 = vadd.f32 %v1701, %v1702
      %v1704 = vsel %vm1656, %v1562, 0.0
      %v1705 = vadd.f32 %v1703, %v1704
      %v1706 = vsel %vm1656, %v1565, 0.0
      %v1707 = vadd.f32 %v1705, %v1706
      %v1708 = vsel %vm1656, %v1570, 0.0
      %v1709 = vadd.f32 %v1707, %v1708
      %v1710 = vsel %vm1656, %v1573, 0.0
      %v1711 = vadd.f32 %v1709, %v1710
      %v1712 = vsel %vm1656, %v1578, 0.0
      %v1713 = vadd.f32 %v1711, %v1712
      %v1714 = vsel %vm1656, %v1581, 0.0
      %v1715 = vadd.f32 %v1713, %v1714
      %v1716 = vsel %vm1656, %v1586, 0.0
      %v1717 = vadd.f32 %v1715, %v1716
      %v1718 = vsel %vm1656, %v1589, 0.0
      %v1719 = vadd.f32 %v1717, %v1718
      %v1720 = vsel %vm1656, %v1594, 0.0
      %v1721 = vadd.f32 %v1719, %v1720
      %v1722 = vsel %vm1656, %v1597, 0.0
      %v1723 = vadd.f32 %v1721, %v1722
      %v1724 = vsel %vm1656, %v1602, 0.0
      %v1725 = vadd.f32 %v1723, %v1724
      %v1726 = vsel %vm1656, %v1605, 0.0
      %v1727 = vadd.f32 %v1725, %v1726
      %v1728 = vsel %vm1656, %v1610, 0.0
      %v1729 = vadd.f32 %v1727, %v1728
      %v1730 = vsel %vm1656, %v1613, 0.0
      %v1731 = vadd.f32 %v1729, %v1730
      %v1732 = vsel %vm1656, %v1618, 0.0
      %v1733 = vadd.f32 %v1731, %v1732
      %v1734 = vsel %vm1656, %v1621, 0.0
      %v1735 = vadd.f32 %v1733, %v1734
      %v1736 = vsel %vm1656, %v1626, 0.0
      %v1737 = vadd.f32 %v1735, %v1736
      %v1738 = vsel %vm1656, %v1629, 0.0
      %v1739 = vadd.f32 %v1737, %v1738
      %v1740 = vsel %vm1656, %v1634, 0.0
      %v1741 = vadd.f32 %v1739, %v1740
      %v1742 = vsel %vm1656, %v1637, 0.0
      %v1743 = vadd.f32 %v1741, %v1742
      %v1744 = vsel %vm1656, %v1642, 0.0
      %v1745 = vadd.f32 %v1743, %v1744
      %v1746 = vsel %vm1656, %v1645, 0.0
      %v1747 = vadd.f32 %v1745, %v1746
      %v1748 = vsel %vm1656, %v1650, 0.0
      %v1749 = vadd.f32 %v1747, %v1748
      %v1750 = vsel %vm1656, %v1653, 0.0
      %v1751 = vadd.f32 %v1749, %v1750
      %v1752 = vrot.slane %v1751, 4
      %v1753 = vadd.f32 %v1751, %v1752
      %v1754 = vrot.slane %v1753, 2
      %v1755 = vadd.f32 %v1753, %v1754
      %v1756 = vrot.slane %v1755, 1
      %v1757 = vadd.f32 %v1755, %v1756
      %v1758 = vmul.f32 %v1530, %v1530
      %v1759 = vmul.f32 %v1533, %v1533
      %v1760 = vmul.f32 %v1538, %v1538
      %v1761 = vmul.f32 %v1541, %v1541
      %v1762 = vmul.f32 %v1546, %v1546
      %v1763 = vmul.f32 %v1549, %v1549
      %v1764 = vmul.f32 %v1554, %v1554
      %v1765 = vmul.f32 %v1557, %v1557
      %v1766 = vmul.f32 %v1562, %v1562
      %v1767 = vmul.f32 %v1565, %v1565
      %v1768 = vmul.f32 %v1570, %v1570
      %v1769 = vmul.f32 %v1573, %v1573
      %v1770 = vmul.f32 %v1578, %v1578
      %v1771 = vmul.f32 %v1581, %v1581
      %v1772 = vmul.f32 %v1586, %v1586
      %v1773 = vmul.f32 %v1589, %v1589
      %v1774 = vmul.f32 %v1594, %v1594
      %v1775 = vmul.f32 %v1597, %v1597
      %v1776 = vmul.f32 %v1602, %v1602
      %v1777 = vmul.f32 %v1605, %v1605
      %v1778 = vmul.f32 %v1610, %v1610
      %v1779 = vmul.f32 %v1613, %v1613
      %v1780 = vmul.f32 %v1618, %v1618
      %v1781 = vmul.f32 %v1621, %v1621
      %v1782 = vmul.f32 %v1626, %v1626
      %v1783 = vmul.f32 %v1629, %v1629
      %v1784 = vmul.f32 %v1634, %v1634
      %v1785 = vmul.f32 %v1637, %v1637
      %v1786 = vmul.f32 %v1642, %v1642
      %v1787 = vmul.f32 %v1645, %v1645
      %v1788 = vmul.f32 %v1650, %v1650
      %v1789 = vmul.f32 %v1653, %v1653
      %v1790 = vsel %vm1656, %v1758, 0.0
      %v1791 = vsel %vm1656, %v1759, 0.0
      %v1792 = vadd.f32 %v1790, %v1791
      %v1793 = vsel %vm1656, %v1760, 0.0
      %v1794 = vadd.f32 %v1792, %v1793
      %v1795 = vsel %vm1656, %v1761, 0.0
      %v1796 = vadd.f32 %v1794, %v1795
      %v1797 = vsel %vm1656, %v1762, 0.0
      %v1798 = vadd.f32 %v1796, %v1797
      %v1799 = vsel %vm1656, %v1763, 0.0
      %v1800 = vadd.f32 %v1798, %v1799
      %v1801 = vsel %vm1656, %v1764, 0.0
      %v1802 = vadd.f32 %v1800, %v1801
      %v1803 = vsel %vm1656, %v1765, 0.0
      %v1804 = vadd.f32 %v1802, %v1803
      %v1805 = vsel %vm1656, %v1766, 0.0
      %v1806 = vadd.f32 %v1804, %v1805
      %v1807 = vsel %vm1656, %v1767, 0.0
      %v1808 = vadd.f32 %v1806, %v1807
      %v1809 = vsel %vm1656, %v1768, 0.0
      %v1810 = vadd.f32 %v1808, %v1809
      %v1811 = vsel %vm1656, %v1769, 0.0
      %v1812 = vadd.f32 %v1810, %v1811
      %v1813 = vsel %vm1656, %v1770, 0.0
      %v1814 = vadd.f32 %v1812, %v1813
      %v1815 = vsel %vm1656, %v1771, 0.0
      %v1816 = vadd.f32 %v1814, %v1815
      %v1817 = vsel %vm1656, %v1772, 0.0
      %v1818 = vadd.f32 %v1816, %v1817
      %v1819 = vsel %vm1656, %v1773, 0.0
      %v1820 = vadd.f32 %v1818, %v1819
      %v1821 = vsel %vm1656, %v1774, 0.0
      %v1822 = vadd.f32 %v1820, %v1821
      %v1823 = vsel %vm1656, %v1775, 0.0
      %v1824 = vadd.f32 %v1822, %v1823
      %v1825 = vsel %vm1656, %v1776, 0.0
      %v1826 = vadd.f32 %v1824, %v1825
      %v1827 = vsel %vm1656, %v1777, 0.0
      %v1828 = vadd.f32 %v1826, %v1827
      %v1829 = vsel %vm1656, %v1778, 0.0
      %v1830 = vadd.f32 %v1828, %v1829
      %v1831 = vsel %vm1656, %v1779, 0.0
      %v1832 = vadd.f32 %v1830, %v1831
      %v1833 = vsel %vm1656, %v1780, 0.0
      %v1834 = vadd.f32 %v1832, %v1833
      %v1835 = vsel %vm1656, %v1781, 0.0
      %v1836 = vadd.f32 %v1834, %v1835
      %v1837 = vsel %vm1656, %v1782, 0.0
      %v1838 = vadd.f32 %v1836, %v1837
      %v1839 = vsel %vm1656, %v1783, 0.0
      %v1840 = vadd.f32 %v1838, %v1839
      %v1841 = vsel %vm1656, %v1784, 0.0
      %v1842 = vadd.f32 %v1840, %v1841
      %v1843 = vsel %vm1656, %v1785, 0.0
      %v1844 = vadd.f32 %v1842, %v1843
      %v1845 = vsel %vm1656, %v1786, 0.0
      %v1846 = vadd.f32 %v1844, %v1845
      %v1847 = vsel %vm1656, %v1787, 0.0
      %v1848 = vadd.f32 %v1846, %v1847
      %v1849 = vsel %vm1656, %v1788, 0.0
      %v1850 = vadd.f32 %v1848, %v1849
      %v1851 = vsel %vm1656, %v1789, 0.0
      %v1852 = vadd.f32 %v1850, %v1851
      %v1853 = vrot.slane %v1852, 4
      %v1854 = vadd.f32 %v1852, %v1853
      %v1855 = vrot.slane %v1854, 2
      %v1856 = vadd.f32 %v1854, %v1855
      %v1857 = vrot.slane %v1856, 1
      %v1858 = vadd.f32 %v1856, %v1857
      %vm1859 = vcmask 1040384
      %v1860 = vsel %vm1859, %v1757, %v1858
      %vm1861 = vcmask 58368
      %1862 = vst.msk [vmem:[%s262] sm:$0x3] %vm1861, %v1860
      %p1863 = scmp.lt.s32.totalorder %s18, 1
      %s1864 = scalar_select %p1863, %s18, 1
      %s1865 = smul.addr %s1864, 32
      %s1866 = smul.addr %s1865, 8
      %s1867 = scalar_lea.vmem %s5, %s1866
      %p1868 = scmp.lt.s32.totalorder %s18, 1
      %s1869 = scalar_select %p1868, %s18, 1
      %s1870 = smul.addr %s1869, 2
      %s1871 = scalar_lea.vmem %s6, %s1870
      // Predicated region
      $region41: #{inception_forward.7} parent=39 // pred_check
        %p1872 = pneg %p146
      $region42: #{inception_forward.7} parent=39 // pred_check_branch
        %1874 = sbr.rel (%p1872) target = $region44
      $region43: #{inception_forward.7} parent=39 // pred_region
        _
      $region44: #{inception_forward.7} parent=39 // pred_fallthru
        _
      // Predicated region
      $region45: #{inception_forward.7} parent=39 // pred_check
        %p1875 = pneg %p172
      $region46: #{inception_forward.7} parent=39 // pred_check_branch
        %1877 = sbr.rel (%p1875) target = $region48
      $region47: #{inception_forward.7} parent=39 // pred_region
        _
      $region48: #{inception_forward.7} parent=39 // pred_fallthru
        _
    $region40: #{inception_forward.7} parent=5 // pred_fallthru
      _
    %p1878 = scmp.le.s32.totalorder 2, %s13
    // Predicated region
    $region49: #{inception_forward.7} parent=5 // pred_check
      %p1879 = pneg %p1878
    $region50: #{inception_forward.7} parent=5 // pred_check_branch
      %1881 = sbr.rel (%p1879) target = $region52
    $region51: #{inception_forward.7} parent=5 // pred_region
      %s1882 = ssub.s32 %s13, 2
      // Predicated region
      $region53: #{inception_forward.7} parent=51 // pred_check
        %p1883 = pneg %p152
      $region54: #{inception_forward.7} parent=51 // pred_check_branch
        %1885 = sbr.rel (%p1883) target = $region56
      $region55: #{inception_forward.7} parent=51 // pred_region
        %p1886 = scmp.lt.s32.totalorder %s19, 1
        %s1887 = scalar_select %p1886, %s19, 1
        %s1888 = smul.addr %s1887, 32
        %s1889 = smul.addr %s1888, 8
        %s1890 = scalar_lea.vmem %s5, %s1889
      $region56: #{inception_forward.7} parent=51 // pred_fallthru
        _
      // Predicated region
      $region57: #{inception_forward.7} parent=51 // pred_check
        %p1891 = pneg %p178
      $region58: #{inception_forward.7} parent=51 // pred_check_branch
        %1893 = sbr.rel (%p1891) target = $region60
      $region59: #{inception_forward.7} parent=51 // pred_region
        %p1894 = scmp.lt.s32.totalorder %s19, 1
        %s1895 = scalar_select %p1894, %s19, 1
        %s1896 = smul.addr %s1895, 2
        %s1897 = scalar_lea.vmem %s6, %s1896
      $region60: #{inception_forward.7} parent=51 // pred_fallthru
        _
    $region52: #{inception_forward.7} parent=5 // pred_fallthru
      _
  $region6: #{inception_forward.7} parent=0 // loop_footer
    %s17 = sadd.s32 1, %s13
  $region7: #{inception_forward.7} parent=0 // loop_footer_branch
    %12 = sbr.rel target = $region3
  $region8: #{inception_forward.7} parent=0 // loop_exit
    _

</llo_original>
